<compile_context>
chip_gen: v7x
topology: tpu7x:2x2x1
jax: 0.10.0
libtpu: 0.0.40
codegen_flags: <defaults>
</compile_context>

<pallas_src>
import functools

import jax
import jax.numpy as jnp
from jax import lax
from jax.experimental import pallas as pl
from jax.experimental.pallas import tpu as pltpu

BN_EPS = 1e-5


# ----------------------------------------------------------------------------
# Parameter setup (deterministic, per the module __init__ shapes).
# ----------------------------------------------------------------------------
def init_params(key, in_channels, growth_rate, bottleneck, group_3x3):
    c_mid = bottleneck * growth_rate
    ks = jax.random.split(key, 5)
    params = {
        # Flag3d(in_channels, c_mid, kernel_size=1, groups=4)
        "in_map": jax.random.normal(ks[0], (in_channels, 4), jnp.float32),
        "out_map": jax.random.normal(ks[1], (c_mid, 4), jnp.float32),
        "w1": 0.1 * jax.random.normal(ks[2], (c_mid, in_channels, 1, 1, 1), jnp.float32),
        "b1": 0.05 * jax.random.normal(ks[3], (c_mid,), jnp.float32),
        # Conv(c_mid, growth_rate, k=3, pad=1, groups=group_3x3): BN3d defaults + conv weight
        "bn_gamma": jnp.ones((c_mid,), jnp.float32),
        "bn_beta": jnp.zeros((c_mid,), jnp.float32),
        "w2": 0.1 * jax.random.normal(
            ks[4], (growth_rate, c_mid // group_3x3, 3, 3, 3), jnp.float32),
    }
    return params


def _binarize(p):
    # (probs == max(probs, dim=1, keepdim=True)).float()  -- ties give multiple ones
    return (p == jnp.max(p, axis=1, keepdims=True)).astype(jnp.float32)


def _build_tap_weights(w2, c_mid, growth, group_3x3):
    # Expand the grouped 3x3x3 conv weight into 27 dense per-tap matrices: shape
    # (27, Cout, Cmid), tap index kd*9 + kh*3 + kw.  Out-of-group entries are exact zeros,
    # so the dense per-tap matmuls match the grouped conv in value.
    cin_g = c_mid // group_3x3
    cout_g = growth // group_3x3
    w_full = jnp.zeros((3, 3, 3, growth, c_mid), jnp.float32)
    for g in range(group_3x3):
        wg = w2[g * cout_g:(g + 1) * cout_g]           # (Cout_g, Cin_g, 3, 3, 3)
        wg = jnp.transpose(wg, (2, 3, 4, 0, 1))        # (3, 3, 3, Cout_g, Cin_g)
        w_full = w_full.at[:, :, :,
                           g * cout_g:(g + 1) * cout_g,
                           g * cin_g:(g + 1) * cin_g].set(wg)
    return w_full.reshape(27, growth, c_mid)


# ----------------------------------------------------------------------------
# Kernel 1: per-channel sum / sum-of-squares of z = W1 @ x over all voxels.
# Spatial-pad / tail positions have x == 0, so they contribute exactly zero.
# Leading grid axis (size 2) is "parallel" -> dual-TC sharding on v7x.
# ----------------------------------------------------------------------------
def _make_stats_kernel(c_in):
    def kernel(x_ref, w1t_ref, o_ref):
        @pl.when(pl.program_id(1) == 0)
        def _init():
            o_ref[...] = jnp.zeros_like(o_ref)

        z = jnp.dot(w1t_ref[...], x_ref[:c_in, :],
                    preferred_element_type=jnp.float32)          # (Cmid, T) f32
        o_ref[0, :, 0:1] += jnp.sum(z, axis=1, keepdims=True)
        o_ref[0, :, 1:2] += jnp.sum(z * z, axis=1, keepdims=True)
    return kernel


# ----------------------------------------------------------------------------
# Kernel 2 (fused): masked 1x1x1 conv (BN scale pre-folded) + shift + ReLU on a
# [halo | tile | halo] window, then 27 accumulated per-tap matmuls (no patch buffer).
# ----------------------------------------------------------------------------
def _make_fused_kernel(c_in, c_mid, growth, tile, g_pad, shifts):
    def kernel(xp_ref, xc_ref, xn_ref, w1s_ref, shift_ref, w2t_ref,
               o_ref, act3_ref):
        # 1) activation for the (tile + 2*g_pad)-wide halo window; f32 elementwise (v5e-safe),
        #    one bf16 cast per chunk when writing to the scratch.
        def emit(chunk_ref, col0, width):
            xv = chunk_ref[:c_in, :]                              # (Cin, width) bf16
            msk = chunk_ref[c_in:c_in + 1, :].astype(jnp.float32)  # (1, width) validity
            z = jnp.dot(w1s_ref[...], xv, preferred_element_type=jnp.float32)
            act = jnp.maximum(z + shift_ref[...], 0.0) * msk
            act3_ref[:, col0:col0 + width] = act.astype(jnp.bfloat16)

        emit(xp_ref, 0, g_pad)
        emit(xc_ref, g_pad, tile)
        emit(xn_ref, g_pad + tile, g_pad)

        # 2) 27 statically-shifted windows, each folded into an accumulated matmul.
        acc = jnp.zeros((growth, tile), jnp.float32)
        for t, s in enumerate(shifts):
            acc = acc + jnp.dot(w2t_ref[t],
                                act3_ref[:, g_pad + s:g_pad + s + tile],
                                preferred_element_type=jnp.float32)
        o_ref[...] = acc                                          # lane-dense (Cout, tile)
    return kernel


# ----------------------------------------------------------------------------
# Forward pass of _DenseLayer.
# ----------------------------------------------------------------------------
@functools.partial(jax.jit, static_argnames=("group_3x3",))
def dense_layer_forward(x, params, *, group_3x3):
    n, c_in, d, h, w = x.shape
    c_mid = params["w1"].shape[0]
    growth = params["w2"].shape[0]
    dp, hp, wp = d + 2, h + 2, w + 2
    l_pad = n * dp * hp * wp                 # padded voxel count (flattened axis length)
    m_valid = n * d * h * w                  # true voxel count (BN divisor)

    halo = hp * wp + wp + 1                  # largest |tap shift| in the flattened layout
    g_pad = 128 * (-(-halo // 128))          # lane-aligned halo width
    tile = g_pad * max(1, -(-1024 // g_pad))  # ~1024-lane voxel tile, multiple of g_pad
    num_tiles = -(-l_pad // tile)
    l_r = num_tiles * tile
    r = tile // g_pad                        # halo blocks per tile

    # ---- Flag3d group-assignment map and effective 1x1x1 weight (Cmid, Cin) ----
    out_bin = _binarize(jax.nn.softmax(params["out_map"], axis=1))   # (Cmid, 4)
    in_bin = _binarize(jax.nn.softmax(params["in_map"], axis=1))     # (Cin, 4)
    ch_map = out_bin @ in_bin.T                                      # (Cmid, Cin)
    w1t = params["w1"][:, :, 0, 0, 0] * ch_map                       # (Cmid, Cin) f32

    # ---- channels-first, spatially zero-padded, flattened voxel layout (+ mask row) ----
    x_cf = jnp.transpose(x, (1, 0, 2, 3, 4))                         # (Cin, N, D, H, W)
    x_pad = jnp.pad(x_cf, ((0, 0), (0, 0), (1, 1), (1, 1), (1, 1)))  # (Cin, N, Dp, Hp, Wp)
    x_flat = x_pad.reshape(c_in, l_pad)
    mask = jnp.pad(jnp.ones((1, n, d, h, w), jnp.float32),
                   ((0, 0), (0, 0), (1, 1), (1, 1), (1, 1))).reshape(1, l_pad)
    xm = jnp.concatenate([x_flat, mask], axis=0).astype(jnp.bfloat16)  # (Cin+1, L) bf16
    # one guard tile of zeros each side + round L up to whole tiles -> width = L_r + 2*tile
    xm_ext = jnp.pad(xm, ((0, 0), (tile, l_r - l_pad + tile)))

    # ---- pass 1: BN batch statistics of the 1x1x1 conv output (2-way core split) ----
    half = -(-num_tiles // 2)
    stats2 = pl.pallas_call(
        _make_stats_kernel(c_in),
        out_shape=jax.ShapeDtypeStruct((2, c_mid, 2), jnp.float32),
        grid=(2, half),
        in_specs=[
            pl.BlockSpec((c_in + 1, tile), lambda c, i: (0, c * half + i + 1)),
            pl.BlockSpec((c_mid, c_in), lambda c, i: (0, 0)),
        ],
        out_specs=pl.BlockSpec((1, c_mid, 2), lambda c, i: (c, 0, 0)),
        compiler_params=pltpu.CompilerParams(
            dimension_semantics=("parallel", "arbitrary")),
    )(xm_ext, w1t.astype(jnp.bfloat16))
    stats = stats2.sum(axis=0)                                        # (Cmid, 2)

    # TODO(synk): E[z^2] - E[z]^2 in f32 is cancellation-prone at very large voxel counts;
    # acceptable at these sizes, switch to centered/Welford sums for production volumes.
    mean_z = stats[:, 0] / m_valid
    var = jnp.maximum(stats[:, 1] / m_valid - mean_z * mean_z, 0.0)  # biased (torch train)
    scale = params["bn_gamma"] * lax.rsqrt(var + BN_EPS)             # (Cmid,)
    shift = params["bn_beta"] - mean_z * scale                       # b1 cancels under BN

    # ---- BN scale folded into the 1x1x1 weight; per-tap 3x3x3 weights; static shifts ----
    w1s = (scale[:, None] * w1t).astype(jnp.bfloat16)                # (Cmid, Cin) bf16
    w2t = _build_tap_weights(params["w2"], c_mid, growth,
                             group_3x3).astype(jnp.bfloat16)         # (27, Cout, Cmid)
    shifts = tuple((kd - 1) * hp * wp + (kh - 1) * wp + (kw - 1)
                   for kd in range(3) for kh in range(3) for kw in range(3))

    # ---- pass 2: fused pointwise conv + BN + ReLU + 3x3x3 grouped conv ----
    y_flat = pl.pallas_call(
        _make_fused_kernel(c_in, c_mid, growth, tile, g_pad, shifts),
        out_shape=jax.ShapeDtypeStruct((growth, l_r), jnp.float32),
        grid=(num_tiles,),
        in_specs=[
            pl.BlockSpec((c_in + 1, g_pad), lambda i: (0, (i + 1) * r - 1)),  # prev halo
            pl.BlockSpec((c_in + 1, tile), lambda i: (0, i + 1)),             # cur tile
            pl.BlockSpec((c_in + 1, g_pad), lambda i: (0, (i + 2) * r)),      # next halo
            pl.BlockSpec((c_mid, c_in), lambda i: (0, 0)),                    # scale*W1 masked
            pl.BlockSpec((c_mid, 1), lambda i: (0, 0)),                       # BN shift
            pl.BlockSpec((27, growth, c_mid), lambda i: (0, 0, 0)),           # per-tap weights
        ],
        out_specs=pl.BlockSpec((growth, tile), lambda i: (0, i)),
        scratch_shapes=[
            pltpu.VMEM((c_mid, tile + 2 * g_pad), jnp.bfloat16),              # halo'd acts
        ],
        compiler_params=pltpu.CompilerParams(dimension_semantics=("parallel",)),
    )(xm_ext, xm_ext, xm_ext, w1s, shift.reshape(c_mid, 1), w2t)

    # ---- crop padded border, back to NCDHW, channel concat with the residual input ----
    y = y_flat[:, :l_pad].reshape(growth, n, dp, hp, wp)[:, :, 1:1 + d, 1:1 + h, 1:1 + w]
    y = jnp.transpose(y, (1, 0, 2, 3, 4))
    return jnp.concatenate([x, y], axis=1)


# ----------------------------------------------------------------------------
# Pure-JAX reference of the PyTorch forward (train-mode BN), for validation.
# ----------------------------------------------------------------------------
def _reference(x, params, group_3x3):
    out_bin = _binarize(jax.nn.softmax(params["out_map"], axis=1))
    in_bin = _binarize(jax.nn.softmax(params["in_map"], axis=1))
    ch_map = out_bin @ in_bin.T
    w1 = params["w1"][:, :, 0, 0, 0] * ch_map                        # (Cmid, Cin)
    mid = jnp.einsum("ncdhw,mc->nmdhw", x, w1) \
        + params["b1"][None, :, None, None, None]
    mean = mid.mean(axis=(0, 2, 3, 4), keepdims=True)
    var = mid.var(axis=(0, 2, 3, 4), keepdims=True)
    act = jnp.maximum(
        (mid - mean) * lax.rsqrt(var + BN_EPS)
        * params["bn_gamma"][None, :, None, None, None]
        + params["bn_beta"][None, :, None, None, None], 0.0)
    y = lax.conv_general_dilated(
        act, params["w2"], window_strides=(1, 1, 1),
        padding=((1, 1), (1, 1), (1, 1)),
        dimension_numbers=("NCDHW", "OIDHW", "NCDHW"),
        feature_group_count=group_3x3)
    return jnp.concatenate([x, y], axis=1)


if __name__ == "__main__":
    # Small shapes consistent with the module: 3D (hyperspectral) NCDHW input.
    in_channels, growth_rate, bottleneck, group_3x3 = 8, 8, 4, 4
    N, D, H, W = 2, 4, 8, 8

    key = jax.random.PRNGKey(0)
    k_x, k_p = jax.random.split(key)
    x = jax.random.normal(k_x, (N, in_channels, D, H, W), jnp.float32)
    params = init_params(k_p, in_channels, growth_rate, bottleneck, group_3x3)

    out = dense_layer_forward(x, params, group_3x3=group_3x3)
    out = jax.block_until_ready(out)

    assert out.shape == (N, in_channels + growth_rate, D, H, W), out.shape
    assert bool(jnp.all(jnp.isfinite(out)))

    ref = _reference(x, params, group_3x3)
    err = float(jnp.max(jnp.abs(out - ref)))
    assert err < 0.15, f"max abs err vs reference: {err}"

    print("KERNEL_OK")
</pallas_src>

<mosaic_0001>
module attributes {stable_mosaic.version = 11 : i64} {
  func.func @kernel(%arg0: i32, %arg1: i32, %arg2: memref<9x1024xbf16, #tpu.memory_space<vmem>>, %arg3: memref<32x8xbf16, #tpu.memory_space<vmem>>, %arg4: memref<1x32x2xf32, #tpu.memory_space<vmem>>) attributes {dimension_semantics = [#tpu.dimension_semantics<parallel>, #tpu.dimension_semantics<arbitrary>], iteration_bounds = array<i64: 2, 1>, scalar_prefetch = 0 : i64, scratch_operands = 0 : i64, tpu.core_type = #tpu.core_type<tc>, window_params = [{transform_indices = @transform_0, window_bounds = array<i64: 9, 1024>}, {pipeline_mode = #tpu.pipeline_mode<synchronous>, transform_indices = @transform_1, window_bounds = array<i64: 32, 8>}, {transform_indices = @transform_2, window_bounds = array<i64: 1, 32, 2>}]} {
    %c0_i32 = arith.constant 0 : i32
    %0 = arith.cmpi eq, %arg1, %c0_i32 : i32
    %1 = arith.extui %0 : i1 to i32
    %c0_i32_0 = arith.constant 0 : i32
    %2 = arith.cmpi ne, %1, %c0_i32_0 : i32
    scf.if %2 {
      %cst_17 = arith.constant 0.000000e+00 : f32
      %23 = vector.broadcast %cst_17 : f32 to vector<1x32x2xf32>
      %c0_18 = arith.constant 0 : index
      %c0_19 = arith.constant 0 : index
      %c0_20 = arith.constant 0 : index
      %24 = vector.load %arg4[%c0_18, %c0_19, %c0_20] : memref<1x32x2xf32, #tpu.memory_space<vmem>>, vector<1x32x2xf32>
      tpu.vector_store %arg4[%c0_18, %c0_19, %c0_20], %23 {strides = array<i32>} : memref<1x32x2xf32, #tpu.memory_space<vmem>>, vector<1x32x2xf32>,
    } else {
    }
    %c0 = arith.constant 0 : index
    %c0_1 = arith.constant 0 : index
    %3 = vector.load %arg3[%c0, %c0_1] : memref<32x8xbf16, #tpu.memory_space<vmem>>, vector<32x8xbf16>
    %c0_2 = arith.constant 0 : index
    %c0_3 = arith.constant 0 : index
    %4 = vector.load %arg2[%c0_2, %c0_3] : memref<9x1024xbf16, #tpu.memory_space<vmem>>, vector<8x1024xbf16>
    %cst = arith.constant dense<0.000000e+00> : vector<32x1024xf32>
    %5 = tpu.matmul %3, %4, %cst {dimension_numbers = #tpu.dot_dimension_numbers<[1], [0], [0], [1], [0, 0, 1, 1], [], []>} : vector<32x8xbf16>, vector<8x1024xbf16>, vector<32x1024xf32> -> vector<32x1024xf32>
    %c0_4 = arith.constant 0 : index
    %c0_5 = arith.constant 0 : index
    %c0_6 = arith.constant 0 : index
    %6 = vector.load %arg4[%c0_4, %c0_5, %c0_6] : memref<1x32x2xf32, #tpu.memory_space<vmem>>, vector<1x32x1xf32>
    %7 = vector.shape_cast %6 : vector<1x32x1xf32> to vector<32x1xf32>
    %cst_7 = arith.constant dense<0.000000e+00> : vector<32xf32>
    %8 = vector.multi_reduction <add>, %5, %cst_7 [1] : vector<32x1024xf32> to vector<32xf32>
    %9 = vector.shape_cast %8 : vector<32xf32> to vector<32x1xf32>
    %10 = arith.addf %7, %9 : vector<32x1xf32>
    %c0_8 = arith.constant 0 : index
    %c0_9 = arith.constant 0 : index
    %c0_10 = arith.constant 0 : index
    %11 = vector.load %arg4[%c0_8, %c0_9, %c0_10] : memref<1x32x2xf32, #tpu.memory_space<vmem>>, vector<1x32x1xf32>
    %12 = vector.shape_cast %11 : vector<1x32x1xf32> to vector<32x1xf32>
    %13 = vector.shape_cast %10 : vector<32x1xf32> to vector<1x32x1xf32>
    tpu.vector_store %arg4[%c0_8, %c0_9, %c0_10], %13 {strides = array<i32>} : memref<1x32x2xf32, #tpu.memory_space<vmem>>, vector<1x32x1xf32>,
    %c0_11 = arith.constant 0 : index
    %c0_12 = arith.constant 0 : index
    %c1 = arith.constant 1 : index
    %14 = vector.load %arg4[%c0_11, %c0_12, %c1] : memref<1x32x2xf32, #tpu.memory_space<vmem>>, vector<1x32x1xf32>
    %15 = vector.shape_cast %14 : vector<1x32x1xf32> to vector<32x1xf32>
    %16 = arith.mulf %5, %5 : vector<32x1024xf32>
    %cst_13 = arith.constant dense<0.000000e+00> : vector<32xf32>
    %17 = vector.multi_reduction <add>, %16, %cst_13 [1] : vector<32x1024xf32> to vector<32xf32>
    %18 = vector.shape_cast %17 : vector<32xf32> to vector<32x1xf32>
    %19 = arith.addf %15, %18 : vector<32x1xf32>
    %c0_14 = arith.constant 0 : index
    %c0_15 = arith.constant 0 : index
    %c1_16 = arith.constant 1 : index
    %20 = vector.load %arg4[%c0_14, %c0_15, %c1_16] : memref<1x32x2xf32, #tpu.memory_space<vmem>>, vector<1x32x1xf32>
    %21 = vector.shape_cast %20 : vector<1x32x1xf32> to vector<32x1xf32>
    %22 = vector.shape_cast %19 : vector<32x1xf32> to vector<1x32x1xf32>
    tpu.vector_store %arg4[%c0_14, %c0_15, %c1_16], %22 {strides = array<i32>} : memref<1x32x2xf32, #tpu.memory_space<vmem>>, vector<1x32x1xf32>,
    return
  }
  func.func @transform_0(%arg0: i32, %arg1: i32) -> (i32, i32) {
    %c1_i32 = arith.constant 1 : i32
    %0 = arith.muli %arg0, %c1_i32 : i32
    %1 = arith.addi %0, %arg1 : i32
    %c1_i32_0 = arith.constant 1 : i32
    %2 = arith.addi %1, %c1_i32_0 : i32
    %c0_i32 = arith.constant 0 : i32
    %c0_i32_1 = arith.constant 0 : i32
    return %c0_i32, %2 : i32, i32
  }
  func.func @transform_1(%arg0: i32, %arg1: i32) -> (i32, i32) {
    %c0_i32 = arith.constant 0 : i32
    %c0_i32_0 = arith.constant 0 : i32
    %c0_i32_1 = arith.constant 0 : i32
    return %c0_i32, %c0_i32_0 : i32, i32
  }
  func.func @transform_2(%arg0: i32, %arg1: i32) -> (i32, i32, i32) {
    %c0_i32 = arith.constant 0 : i32
    %c0_i32_0 = arith.constant 0 : i32
    %c0_i32_1 = arith.constant 0 : i32
    return %arg0, %c0_i32, %c0_i32_0 : i32, i32, i32
  }
}

module attributes {stable_mosaic.version = 11 : i64} {
  func.func @kernel(%arg0: i32, %arg1: memref<9x128xbf16, #tpu.memory_space<vmem>>, %arg2: memref<9x1024xbf16, #tpu.memory_space<vmem>>, %arg3: memref<9x128xbf16, #tpu.memory_space<vmem>>, %arg4: memref<32x8xbf16, #tpu.memory_space<vmem>>, %arg5: memref<32x1xf32, #tpu.memory_space<vmem>>, %arg6: memref<27x8x32xbf16, #tpu.memory_space<vmem>>, %arg7: memref<8x1024xf32, #tpu.memory_space<vmem>>, %arg8: memref<32x1280xbf16, #tpu.memory_space<vmem>>) attributes {dimension_semantics = [#tpu.dimension_semantics<parallel>], iteration_bounds = array<i64: 2>, scalar_prefetch = 0 : i64, scratch_operands = 1 : i64, tpu.core_type = #tpu.core_type<tc>, window_params = [{transform_indices = @transform_0, window_bounds = array<i64: 9, 128>}, {transform_indices = @transform_1, window_bounds = array<i64: 9, 1024>}, {transform_indices = @transform_2, window_bounds = array<i64: 9, 128>}, {pipeline_mode = #tpu.pipeline_mode<synchronous>, transform_indices = @transform_3, window_bounds = array<i64: 32, 8>}, {pipeline_mode = #tpu.pipeline_mode<synchronous>, transform_indices = @transform_4, window_bounds = array<i64: 32, 1>}, {pipeline_mode = #tpu.pipeline_mode<synchronous>, transform_indices = @transform_5, window_bounds = array<i64: 27, 8, 32>}, {transform_indices = @transform_6, window_bounds = array<i64: 8, 1024>}]} {
    %c0 = arith.constant 0 : index
    %c0_0 = arith.constant 0 : index
    %0 = vector.load %arg1[%c0, %c0_0] : memref<9x128xbf16, #tpu.memory_space<vmem>>, vector<8x128xbf16>
    %c8 = arith.constant 8 : index
    %c0_1 = arith.constant 0 : index
    %1 = vector.load %arg1[%c8, %c0_1] : memref<9x128xbf16, #tpu.memory_space<vmem>>, vector<1x128xbf16>
    %2 = arith.extf %1 : vector<1x128xbf16> to vector<1x128xf32>
    %c0_2 = arith.constant 0 : index
    %c0_3 = arith.constant 0 : index
    %3 = vector.load %arg4[%c0_2, %c0_3] : memref<32x8xbf16, #tpu.memory_space<vmem>>, vector<32x8xbf16>
    %cst = arith.constant dense<0.000000e+00> : vector<32x128xf32>
    %4 = tpu.matmul %3, %0, %cst {dimension_numbers = #tpu.dot_dimension_numbers<[1], [0], [0], [1], [0, 0, 1, 1], [], []>} : vector<32x8xbf16>, vector<8x128xbf16>, vector<32x128xf32> -> vector<32x128xf32>
    %c0_4 = arith.constant 0 : index
    %c0_5 = arith.constant 0 : index
    %5 = vector.load %arg5[%c0_4, %c0_5] : memref<32x1xf32, #tpu.memory_space<vmem>>, vector<32x1xf32>
    %6 = vector.broadcast %5 : vector<32x1xf32> to vector<32x128xf32>
    %7 = arith.addf %4, %6 : vector<32x128xf32>
    %cst_6 = arith.constant 0.000000e+00 : f32
    %8 = vector.broadcast %cst_6 : f32 to vector<32x128xf32>
    %9 = arith.maximumf %7, %8 : vector<32x128xf32>
    %10 = vector.broadcast %2 : vector<1x128xf32> to vector<32x128xf32>
    %11 = arith.mulf %9, %10 : vector<32x128xf32>
    %12 = arith.truncf %11 : vector<32x128xf32> to vector<32x128xbf16>
    %c0_7 = arith.constant 0 : index
    %c0_8 = arith.constant 0 : index
    %13 = vector.load %arg8[%c0_7, %c0_8] : memref<32x1280xbf16, #tpu.memory_space<vmem>>, vector<32x128xbf16>
    tpu.vector_store %arg8[%c0_7, %c0_8], %12 {strides = array<i32>} : memref<32x1280xbf16, #tpu.memory_space<vmem>>, vector<32x128xbf16>,
    %c0_9 = arith.constant 0 : index
    %c0_10 = arith.constant 0 : index
    %14 = vector.load %arg2[%c0_9, %c0_10] : memref<9x1024xbf16, #tpu.memory_space<vmem>>, vector<8x1024xbf16>
    %c8_11 = arith.constant 8 : index
    %c0_12 = arith.constant 0 : index
    %15 = vector.load %arg2[%c8_11, %c0_12] : memref<9x1024xbf16, #tpu.memory_space<vmem>>, vector<1x1024xbf16>
    %16 = arith.extf %15 : vector<1x1024xbf16> to vector<1x1024xf32>
    %c0_13 = arith.constant 0 : index
    %c0_14 = arith.constant 0 : index
    %17 = vector.load %arg4[%c0_13, %c0_14] : memref<32x8xbf16, #tpu.memory_space<vmem>>, vector<32x8xbf16>
    %cst_15 = arith.constant dense<0.000000e+00> : vector<32x1024xf32>
    %18 = tpu.matmul %17, %14, %cst_15 {dimension_numbers = #tpu.dot_dimension_numbers<[1], [0], [0], [1], [0, 0, 1, 1], [], []>} : vector<32x8xbf16>, vector<8x1024xbf16>, vector<32x1024xf32> -> vector<32x1024xf32>
    %c0_16 = arith.constant 0 : index
    %c0_17 = arith.constant 0 : index
    %19 = vector.load %arg5[%c0_16, %c0_17] : memref<32x1xf32, #tpu.memory_space<vmem>>, vector<32x1xf32>
    %20 = vector.broadcast %19 : vector<32x1xf32> to vector<32x1024xf32>
    %21 = arith.addf %18, %20 : vector<32x1024xf32>
    %cst_18 = arith.constant 0.000000e+00 : f32
    %22 = vector.broadcast %cst_18 : f32 to vector<32x1024xf32>
    %23 = arith.maximumf %21, %22 : vector<32x1024xf32>
    %24 = vector.broadcast %16 : vector<1x1024xf32> to vector<32x1024xf32>
    %25 = arith.mulf %23, %24 : vector<32x1024xf32>
    %26 = arith.truncf %25 : vector<32x1024xf32> to vector<32x1024xbf16>
    %c0_19 = arith.constant 0 : index
    %c128 = arith.constant 128 : index
    %27 = vector.load %arg8[%c0_19, %c128] : memref<32x1280xbf16, #tpu.memory_space<vmem>>, vector<32x1024xbf16>
    tpu.vector_store %arg8[%c0_19, %c128], %26 {strides = array<i32>} : memref<32x1280xbf16, #tpu.memory_space<vmem>>, vector<32x1024xbf16>,
    %c0_20 = arith.constant 0 : index
    %c0_21 = arith.constant 0 : index
    %28 = vector.load %arg3[%c0_20, %c0_21] : memref<9x128xbf16, #tpu.memory_space<vmem>>, vector<8x128xbf16>
    %c8_22 = arith.constant 8 : index
    %c0_23 = arith.constant 0 : index
    %29 = vector.load %arg3[%c8_22, %c0_23] : memref<9x128xbf16, #tpu.memory_space<vmem>>, vector<1x128xbf16>
    %30 = arith.extf %29 : vector<1x128xbf16> to vector<1x128xf32>
    %c0_24 = arith.constant 0 : index
    %c0_25 = arith.constant 0 : index
    %31 = vector.load %arg4[%c0_24, %c0_25] : memref<32x8xbf16, #tpu.memory_space<vmem>>, vector<32x8xbf16>
    %cst_26 = arith.constant dense<0.000000e+00> : vector<32x128xf32>
    %32 = tpu.matmul %31, %28, %cst_26 {dimension_numbers = #tpu.dot_dimension_numbers<[1], [0], [0], [1], [0, 0, 1, 1], [], []>} : vector<32x8xbf16>, vector<8x128xbf16>, vector<32x128xf32> -> vector<32x128xf32>
    %c0_27 = arith.constant 0 : index
    %c0_28 = arith.constant 0 : index
    %33 = vector.load %arg5[%c0_27, %c0_28] : memref<32x1xf32, #tpu.memory_space<vmem>>, vector<32x1xf32>
    %34 = vector.broadcast %33 : vector<32x1xf32> to vector<32x128xf32>
    %35 = arith.addf %32, %34 : vector<32x128xf32>
    %cst_29 = arith.constant 0.000000e+00 : f32
    %36 = vector.broadcast %cst_29 : f32 to vector<32x128xf32>
    %37 = arith.maximumf %35, %36 : vector<32x128xf32>
    %38 = vector.broadcast %30 : vector<1x128xf32> to vector<32x128xf32>
    %39 = arith.mulf %37, %38 : vector<32x128xf32>
    %40 = arith.truncf %39 : vector<32x128xf32> to vector<32x128xbf16>
    %c0_30 = arith.constant 0 : index
    %c1152 = arith.constant 1152 : index
    %41 = vector.load %arg8[%c0_30, %c1152] : memref<32x1280xbf16, #tpu.memory_space<vmem>>, vector<32x128xbf16>
    tpu.vector_store %arg8[%c0_30, %c1152], %40 {strides = array<i32>} : memref<32x1280xbf16, #tpu.memory_space<vmem>>, vector<32x128xbf16>,
    %cst_31 = arith.constant 0.000000e+00 : f32
    %42 = vector.broadcast %cst_31 : f32 to vector<8x1024xf32>
    %c0_32 = arith.constant 0 : index
    %c0_33 = arith.constant 0 : index
    %c0_34 = arith.constant 0 : index
    %43 = vector.load %arg6[%c0_32, %c0_33, %c0_34] : memref<27x8x32xbf16, #tpu.memory_space<vmem>>, vector<1x8x32xbf16>
    %44 = vector.shape_cast %43 : vector<1x8x32xbf16> to vector<8x32xbf16>
    %c0_35 = arith.constant 0 : index
    %c17 = arith.constant 17 : index
    %45 = vector.load %arg8[%c0_35, %c17] : memref<32x1280xbf16, #tpu.memory_space<vmem>>, vector<32x1024xbf16>
    %cst_36 = arith.constant dense<0.000000e+00> : vector<8x1024xf32>
    %46 = tpu.matmul %44, %45, %cst_36 {dimension_numbers = #tpu.dot_dimension_numbers<[1], [0], [0], [1], [0, 0, 1, 1], [], []>} : vector<8x32xbf16>, vector<32x1024xbf16>, vector<8x1024xf32> -> vector<8x1024xf32>
    %47 = arith.addf %42, %46 : vector<8x1024xf32>
    %c1 = arith.constant 1 : index
    %c0_37 = arith.constant 0 : index
    %c0_38 = arith.constant 0 : index
    %48 = vector.load %arg6[%c1, %c0_37, %c0_38] : memref<27x8x32xbf16, #tpu.memory_space<vmem>>, vector<1x8x32xbf16>
    %49 = vector.shape_cast %48 : vector<1x8x32xbf16> to vector<8x32xbf16>
    %c0_39 = arith.constant 0 : index
    %c18 = arith.constant 18 : index
    %50 = vector.load %arg8[%c0_39, %c18] : memref<32x1280xbf16, #tpu.memory_space<vmem>>, vector<32x1024xbf16>
    %cst_40 = arith.constant dense<0.000000e+00> : vector<8x1024xf32>
    %51 = tpu.matmul %49, %50, %cst_40 {dimension_numbers = #tpu.dot_dimension_numbers<[1], [0], [0], [1], [0, 0, 1, 1], [], []>} : vector<8x32xbf16>, vector<32x1024xbf16>, vector<8x1024xf32> -> vector<8x1024xf32>
    %52 = arith.addf %47, %51 : vector<8x1024xf32>
    %c2 = arith.constant 2 : index
    %c0_41 = arith.constant 0 : index
    %c0_42 = arith.constant 0 : index
    %53 = vector.load %arg6[%c2, %c0_41, %c0_42] : memref<27x8x32xbf16, #tpu.memory_space<vmem>>, vector<1x8x32xbf16>
    %54 = vector.shape_cast %53 : vector<1x8x32xbf16> to vector<8x32xbf16>
    %c0_43 = arith.constant 0 : index
    %c19 = arith.constant 19 : index
    %55 = vector.load %arg8[%c0_43, %c19] : memref<32x1280xbf16, #tpu.memory_space<vmem>>, vector<32x1024xbf16>
    %cst_44 = arith.constant dense<0.000000e+00> : vector<8x1024xf32>
    %56 = tpu.matmul %54, %55, %cst_44 {dimension_numbers = #tpu.dot_dimension_numbers<[1], [0], [0], [1], [0, 0, 1, 1], [], []>} : vector<8x32xbf16>, vector<32x1024xbf16>, vector<8x1024xf32> -> vector<8x1024xf32>
    %57 = arith.addf %52, %56 : vector<8x1024xf32>
    %c3 = arith.constant 3 : index
    %c0_45 = arith.constant 0 : index
    %c0_46 = arith.constant 0 : index
    %58 = vector.load %arg6[%c3, %c0_45, %c0_46] : memref<27x8x32xbf16, #tpu.memory_space<vmem>>, vector<1x8x32xbf16>
    %59 = vector.shape_cast %58 : vector<1x8x32xbf16> to vector<8x32xbf16>
    %c0_47 = arith.constant 0 : index
    %c27 = arith.constant 27 : index
    %60 = vector.load %arg8[%c0_47, %c27] : memref<32x1280xbf16, #tpu.memory_space<vmem>>, vector<32x1024xbf16>
    %cst_48 = arith.constant dense<0.000000e+00> : vector<8x1024xf32>
    %61 = tpu.matmul %59, %60, %cst_48 {dimension_numbers = #tpu.dot_dimension_numbers<[1], [0], [0], [1], [0, 0, 1, 1], [], []>} : vector<8x32xbf16>, vector<32x1024xbf16>, vector<8x1024xf32> -> vector<8x1024xf32>
    %62 = arith.addf %57, %61 : vector<8x1024xf32>
    %c4 = arith.constant 4 : index
    %c0_49 = arith.constant 0 : index
    %c0_50 = arith.constant 0 : index
    %63 = vector.load %arg6[%c4, %c0_49, %c0_50] : memref<27x8x32xbf16, #tpu.memory_space<vmem>>, vector<1x8x32xbf16>
    %64 = vector.shape_cast %63 : vector<1x8x32xbf16> to vector<8x32xbf16>
    %c0_51 = arith.constant 0 : index
    %c28 = arith.constant 28 : index
    %65 = vector.load %arg8[%c0_51, %c28] : memref<32x1280xbf16, #tpu.memory_space<vmem>>, vector<32x1024xbf16>
    %cst_52 = arith.constant dense<0.000000e+00> : vector<8x1024xf32>
    %66 = tpu.matmul %64, %65, %cst_52 {dimension_numbers = #tpu.dot_dimension_numbers<[1], [0], [0], [1], [0, 0, 1, 1], [], []>} : vector<8x32xbf16>, vector<32x1024xbf16>, vector<8x1024xf32> -> vector<8x1024xf32>
    %67 = arith.addf %62, %66 : vector<8x1024xf32>
    %c5 = arith.constant 5 : index
    %c0_53 = arith.constant 0 : index
    %c0_54 = arith.constant 0 : index
    %68 = vector.load %arg6[%c5, %c0_53, %c0_54] : memref<27x8x32xbf16, #tpu.memory_space<vmem>>, vector<1x8x32xbf16>
    %69 = vector.shape_cast %68 : vector<1x8x32xbf16> to vector<8x32xbf16>
    %c0_55 = arith.constant 0 : index
    %c29 = arith.constant 29 : index
    %70 = vector.load %arg8[%c0_55, %c29] : memref<32x1280xbf16, #tpu.memory_space<vmem>>, vector<32x1024xbf16>
    %cst_56 = arith.constant dense<0.000000e+00> : vector<8x1024xf32>
    %71 = tpu.matmul %69, %70, %cst_56 {dimension_numbers = #tpu.dot_dimension_numbers<[1], [0], [0], [1], [0, 0, 1, 1], [], []>} : vector<8x32xbf16>, vector<32x1024xbf16>, vector<8x1024xf32> -> vector<8x1024xf32>
    %72 = arith.addf %67, %71 : vector<8x1024xf32>
    %c6 = arith.constant 6 : index
    %c0_57 = arith.constant 0 : index
    %c0_58 = arith.constant 0 : index
    %73 = vector.load %arg6[%c6, %c0_57, %c0_58] : memref<27x8x32xbf16, #tpu.memory_space<vmem>>, vector<1x8x32xbf16>
    %74 = vector.shape_cast %73 : vector<1x8x32xbf16> to vector<8x32xbf16>
    %c0_59 = arith.constant 0 : index
    %c37 = arith.constant 37 : index
    %75 = vector.load %arg8[%c0_59, %c37] : memref<32x1280xbf16, #tpu.memory_space<vmem>>, vector<32x1024xbf16>
    %cst_60 = arith.constant dense<0.000000e+00> : vector<8x1024xf32>
    %76 = tpu.matmul %74, %75, %cst_60 {dimension_numbers = #tpu.dot_dimension_numbers<[1], [0], [0], [1], [0, 0, 1, 1], [], []>} : vector<8x32xbf16>, vector<32x1024xbf16>, vector<8x1024xf32> -> vector<8x1024xf32>
    %77 = arith.addf %72, %76 : vector<8x1024xf32>
    %c7 = arith.constant 7 : index
    %c0_61 = arith.constant 0 : index
    %c0_62 = arith.constant 0 : index
    %78 = vector.load %arg6[%c7, %c0_61, %c0_62] : memref<27x8x32xbf16, #tpu.memory_space<vmem>>, vector<1x8x32xbf16>
    %79 = vector.shape_cast %78 : vector<1x8x32xbf16> to vector<8x32xbf16>
    %c0_63 = arith.constant 0 : index
    %c38 = arith.constant 38 : index
    %80 = vector.load %arg8[%c0_63, %c38] : memref<32x1280xbf16, #tpu.memory_space<vmem>>, vector<32x1024xbf16>
    %cst_64 = arith.constant dense<0.000000e+00> : vector<8x1024xf32>
    %81 = tpu.matmul %79, %80, %cst_64 {dimension_numbers = #tpu.dot_dimension_numbers<[1], [0], [0], [1], [0, 0, 1, 1], [], []>} : vector<8x32xbf16>, vector<32x1024xbf16>, vector<8x1024xf32> -> vector<8x1024xf32>
    %82 = arith.addf %77, %81 : vector<8x1024xf32>
    %c8_65 = arith.constant 8 : index
    %c0_66 = arith.constant 0 : index
    %c0_67 = arith.constant 0 : index
    %83 = vector.load %arg6[%c8_65, %c0_66, %c0_67] : memref<27x8x32xbf16, #tpu.memory_space<vmem>>, vector<1x8x32xbf16>
    %84 = vector.shape_cast %83 : vector<1x8x32xbf16> to vector<8x32xbf16>
    %c0_68 = arith.constant 0 : index
    %c39 = arith.constant 39 : index
    %85 = vector.load %arg8[%c0_68, %c39] : memref<32x1280xbf16, #tpu.memory_space<vmem>>, vector<32x1024xbf16>
    %cst_69 = arith.constant dense<0.000000e+00> : vector<8x1024xf32>
    %86 = tpu.matmul %84, %85, %cst_69 {dimension_numbers = #tpu.dot_dimension_numbers<[1], [0], [0], [1], [0, 0, 1, 1], [], []>} : vector<8x32xbf16>, vector<32x1024xbf16>, vector<8x1024xf32> -> vector<8x1024xf32>
    %87 = arith.addf %82, %86 : vector<8x1024xf32>
    %c9 = arith.constant 9 : index
    %c0_70 = arith.constant 0 : index
    %c0_71 = arith.constant 0 : index
    %88 = vector.load %arg6[%c9, %c0_70, %c0_71] : memref<27x8x32xbf16, #tpu.memory_space<vmem>>, vector<1x8x32xbf16>
    %89 = vector.shape_cast %88 : vector<1x8x32xbf16> to vector<8x32xbf16>
    %c0_72 = arith.constant 0 : index
    %c117 = arith.constant 117 : index
    %90 = vector.load %arg8[%c0_72, %c117] : memref<32x1280xbf16, #tpu.memory_space<vmem>>, vector<32x1024xbf16>
    %cst_73 = arith.constant dense<0.000000e+00> : vector<8x1024xf32>
    %91 = tpu.matmul %89, %90, %cst_73 {dimension_numbers = #tpu.dot_dimension_numbers<[1], [0], [0], [1], [0, 0, 1, 1], [], []>} : vector<8x32xbf16>, vector<32x1024xbf16>, vector<8x1024xf32> -> vector<8x1024xf32>
    %92 = arith.addf %87, %91 : vector<8x1024xf32>
    %c10 = arith.constant 10 : index
    %c0_74 = arith.constant 0 : index
    %c0_75 = arith.constant 0 : index
    %93 = vector.load %arg6[%c10, %c0_74, %c0_75] : memref<27x8x32xbf16, #tpu.memory_space<vmem>>, vector<1x8x32xbf16>
    %94 = vector.shape_cast %93 : vector<1x8x32xbf16> to vector<8x32xbf16>
    %c0_76 = arith.constant 0 : index
    %c118 = arith.constant 118 : index
    %95 = vector.load %arg8[%c0_76, %c118] : memref<32x1280xbf16, #tpu.memory_space<vmem>>, vector<32x1024xbf16>
    %cst_77 = arith.constant dense<0.000000e+00> : vector<8x1024xf32>
    %96 = tpu.matmul %94, %95, %cst_77 {dimension_numbers = #tpu.dot_dimension_numbers<[1], [0], [0], [1], [0, 0, 1, 1], [], []>} : vector<8x32xbf16>, vector<32x1024xbf16>, vector<8x1024xf32> -> vector<8x1024xf32>
    %97 = arith.addf %92, %96 : vector<8x1024xf32>
    %c11 = arith.constant 11 : index
    %c0_78 = arith.constant 0 : index
    %c0_79 = arith.constant 0 : index
    %98 = vector.load %arg6[%c11, %c0_78, %c0_79] : memref<27x8x32xbf16, #tpu.memory_space<vmem>>, vector<1x8x32xbf16>
    %99 = vector.shape_cast %98 : vector<1x8x32xbf16> to vector<8x32xbf16>
    %c0_80 = arith.constant 0 : index
    %c119 = arith.constant 119 : index
    %100 = vector.load %arg8[%c0_80, %c119] : memref<32x1280xbf16, #tpu.memory_space<vmem>>, vector<32x1024xbf16>
    %cst_81 = arith.constant dense<0.000000e+00> : vector<8x1024xf32>
    %101 = tpu.matmul %99, %100, %cst_81 {dimension_numbers = #tpu.dot_dimension_numbers<[1], [0], [0], [1], [0, 0, 1, 1], [], []>} : vector<8x32xbf16>, vector<32x1024xbf16>, vector<8x1024xf32> -> vector<8x1024xf32>
    %102 = arith.addf %97, %101 : vector<8x1024xf32>
    %c12 = arith.constant 12 : index
    %c0_82 = arith.constant 0 : index
    %c0_83 = arith.constant 0 : index
    %103 = vector.load %arg6[%c12, %c0_82, %c0_83] : memref<27x8x32xbf16, #tpu.memory_space<vmem>>, vector<1x8x32xbf16>
    %104 = vector.shape_cast %103 : vector<1x8x32xbf16> to vector<8x32xbf16>
    %c0_84 = arith.constant 0 : index
    %c127 = arith.constant 127 : index
    %105 = vector.load %arg8[%c0_84, %c127] : memref<32x1280xbf16, #tpu.memory_space<vmem>>, vector<32x1024xbf16>
    %cst_85 = arith.constant dense<0.000000e+00> : vector<8x1024xf32>
    %106 = tpu.matmul %104, %105, %cst_85 {dimension_numbers = #tpu.dot_dimension_numbers<[1], [0], [0], [1], [0, 0, 1, 1], [], []>} : vector<8x32xbf16>, vector<32x1024xbf16>, vector<8x1024xf32> -> vector<8x1024xf32>
    %107 = arith.addf %102, %106 : vector<8x1024xf32>
    %c13 = arith.constant 13 : index
    %c0_86 = arith.constant 0 : index
    %c0_87 = arith.constant 0 : index
    %108 = vector.load %arg6[%c13, %c0_86, %c0_87] : memref<27x8x32xbf16, #tpu.memory_space<vmem>>, vector<1x8x32xbf16>
    %109 = vector.shape_cast %108 : vector<1x8x32xbf16> to vector<8x32xbf16>
    %c0_88 = arith.constant 0 : index
    %c128_89 = arith.constant 128 : index
    %110 = vector.load %arg8[%c0_88, %c128_89] : memref<32x1280xbf16, #tpu.memory_space<vmem>>, vector<32x1024xbf16>
    %cst_90 = arith.constant dense<0.000000e+00> : vector<8x1024xf32>
    %111 = tpu.matmul %109, %110, %cst_90 {dimension_numbers = #tpu.dot_dimension_numbers<[1], [0], [0], [1], [0, 0, 1, 1], [], []>} : vector<8x32xbf16>, vector<32x1024xbf16>, vector<8x1024xf32> -> vector<8x1024xf32>
    %112 = arith.addf %107, %111 : vector<8x1024xf32>
    %c14 = arith.constant 14 : index
    %c0_91 = arith.constant 0 : index
    %c0_92 = arith.constant 0 : index
    %113 = vector.load %arg6[%c14, %c0_91, %c0_92] : memref<27x8x32xbf16, #tpu.memory_space<vmem>>, vector<1x8x32xbf16>
    %114 = vector.shape_cast %113 : vector<1x8x32xbf16> to vector<8x32xbf16>
    %c0_93 = arith.constant 0 : index
    %c129 = arith.constant 129 : index
    %115 = vector.load %arg8[%c0_93, %c129] : memref<32x1280xbf16, #tpu.memory_space<vmem>>, vector<32x1024xbf16>
    %cst_94 = arith.constant dense<0.000000e+00> : vector<8x1024xf32>
    %116 = tpu.matmul %114, %115, %cst_94 {dimension_numbers = #tpu.dot_dimension_numbers<[1], [0], [0], [1], [0, 0, 1, 1], [], []>} : vector<8x32xbf16>, vector<32x1024xbf16>, vector<8x1024xf32> -> vector<8x1024xf32>
    %117 = arith.addf %112, %116 : vector<8x1024xf32>
    %c15 = arith.constant 15 : index
    %c0_95 = arith.constant 0 : index
    %c0_96 = arith.constant 0 : index
    %118 = vector.load %arg6[%c15, %c0_95, %c0_96] : memref<27x8x32xbf16, #tpu.memory_space<vmem>>, vector<1x8x32xbf16>
    %119 = vector.shape_cast %118 : vector<1x8x32xbf16> to vector<8x32xbf16>
    %c0_97 = arith.constant 0 : index
    %c137 = arith.constant 137 : index
    %120 = vector.load %arg8[%c0_97, %c137] : memref<32x1280xbf16, #tpu.memory_space<vmem>>, vector<32x1024xbf16>
    %cst_98 = arith.constant dense<0.000000e+00> : vector<8x1024xf32>
    %121 = tpu.matmul %119, %120, %cst_98 {dimension_numbers = #tpu.dot_dimension_numbers<[1], [0], [0], [1], [0, 0, 1, 1], [], []>} : vector<8x32xbf16>, vector<32x1024xbf16>, vector<8x1024xf32> -> vector<8x1024xf32>
    %122 = arith.addf %117, %121 : vector<8x1024xf32>
    %c16 = arith.constant 16 : index
    %c0_99 = arith.constant 0 : index
    %c0_100 = arith.constant 0 : index
    %123 = vector.load %arg6[%c16, %c0_99, %c0_100] : memref<27x8x32xbf16, #tpu.memory_space<vmem>>, vector<1x8x32xbf16>
    %124 = vector.shape_cast %123 : vector<1x8x32xbf16> to vector<8x32xbf16>
    %c0_101 = arith.constant 0 : index
    %c138 = arith.constant 138 : index
    %125 = vector.load %arg8[%c0_101, %c138] : memref<32x1280xbf16, #tpu.memory_space<vmem>>, vector<32x1024xbf16>
    %cst_102 = arith.constant dense<0.000000e+00> : vector<8x1024xf32>
    %126 = tpu.matmul %124, %125, %cst_102 {dimension_numbers = #tpu.dot_dimension_numbers<[1], [0], [0], [1], [0, 0, 1, 1], [], []>} : vector<8x32xbf16>, vector<32x1024xbf16>, vector<8x1024xf32> -> vector<8x1024xf32>
    %127 = arith.addf %122, %126 : vector<8x1024xf32>
    %c17_103 = arith.constant 17 : index
    %c0_104 = arith.constant 0 : index
    %c0_105 = arith.constant 0 : index
    %128 = vector.load %arg6[%c17_103, %c0_104, %c0_105] : memref<27x8x32xbf16, #tpu.memory_space<vmem>>, vector<1x8x32xbf16>
    %129 = vector.shape_cast %128 : vector<1x8x32xbf16> to vector<8x32xbf16>
    %c0_106 = arith.constant 0 : index
    %c139 = arith.constant 139 : index
    %130 = vector.load %arg8[%c0_106, %c139] : memref<32x1280xbf16, #tpu.memory_space<vmem>>, vector<32x1024xbf16>
    %cst_107 = arith.constant dense<0.000000e+00> : vector<8x1024xf32>
    %131 = tpu.matmul %129, %130, %cst_107 {dimension_numbers = #tpu.dot_dimension_numbers<[1], [0], [0], [1], [0, 0, 1, 1], [], []>} : vector<8x32xbf16>, vector<32x1024xbf16>, vector<8x1024xf32> -> vector<8x1024xf32>
    %132 = arith.addf %127, %131 : vector<8x1024xf32>
    %c18_108 = arith.constant 18 : index
    %c0_109 = arith.constant 0 : index
    %c0_110 = arith.constant 0 : index
    %133 = vector.load %arg6[%c18_108, %c0_109, %c0_110] : memref<27x8x32xbf16, #tpu.memory_space<vmem>>, vector<1x8x32xbf16>
    %134 = vector.shape_cast %133 : vector<1x8x32xbf16> to vector<8x32xbf16>
    %c0_111 = arith.constant 0 : index
    %c217 = arith.constant 217 : index
    %135 = vector.load %arg8[%c0_111, %c217] : memref<32x1280xbf16, #tpu.memory_space<vmem>>, vector<32x1024xbf16>
    %cst_112 = arith.constant dense<0.000000e+00> : vector<8x1024xf32>
    %136 = tpu.matmul %134, %135, %cst_112 {dimension_numbers = #tpu.dot_dimension_numbers<[1], [0], [0], [1], [0, 0, 1, 1], [], []>} : vector<8x32xbf16>, vector<32x1024xbf16>, vector<8x1024xf32> -> vector<8x1024xf32>
    %137 = arith.addf %132, %136 : vector<8x1024xf32>
    %c19_113 = arith.constant 19 : index
    %c0_114 = arith.constant 0 : index
    %c0_115 = arith.constant 0 : index
    %138 = vector.load %arg6[%c19_113, %c0_114, %c0_115] : memref<27x8x32xbf16, #tpu.memory_space<vmem>>, vector<1x8x32xbf16>
    %139 = vector.shape_cast %138 : vector<1x8x32xbf16> to vector<8x32xbf16>
    %c0_116 = arith.constant 0 : index
    %c218 = arith.constant 218 : index
    %140 = vector.load %arg8[%c0_116, %c218] : memref<32x1280xbf16, #tpu.memory_space<vmem>>, vector<32x1024xbf16>
    %cst_117 = arith.constant dense<0.000000e+00> : vector<8x1024xf32>
    %141 = tpu.matmul %139, %140, %cst_117 {dimension_numbers = #tpu.dot_dimension_numbers<[1], [0], [0], [1], [0, 0, 1, 1], [], []>} : vector<8x32xbf16>, vector<32x1024xbf16>, vector<8x1024xf32> -> vector<8x1024xf32>
    %142 = arith.addf %137, %141 : vector<8x1024xf32>
    %c20 = arith.constant 20 : index
    %c0_118 = arith.constant 0 : index
    %c0_119 = arith.constant 0 : index
    %143 = vector.load %arg6[%c20, %c0_118, %c0_119] : memref<27x8x32xbf16, #tpu.memory_space<vmem>>, vector<1x8x32xbf16>
    %144 = vector.shape_cast %143 : vector<1x8x32xbf16> to vector<8x32xbf16>
    %c0_120 = arith.constant 0 : index
    %c219 = arith.constant 219 : index
    %145 = vector.load %arg8[%c0_120, %c219] : memref<32x1280xbf16, #tpu.memory_space<vmem>>, vector<32x1024xbf16>
    %cst_121 = arith.constant dense<0.000000e+00> : vector<8x1024xf32>
    %146 = tpu.matmul %144, %145, %cst_121 {dimension_numbers = #tpu.dot_dimension_numbers<[1], [0], [0], [1], [0, 0, 1, 1], [], []>} : vector<8x32xbf16>, vector<32x1024xbf16>, vector<8x1024xf32> -> vector<8x1024xf32>
    %147 = arith.addf %142, %146 : vector<8x1024xf32>
    %c21 = arith.constant 21 : index
    %c0_122 = arith.constant 0 : index
    %c0_123 = arith.constant 0 : index
    %148 = vector.load %arg6[%c21, %c0_122, %c0_123] : memref<27x8x32xbf16, #tpu.memory_space<vmem>>, vector<1x8x32xbf16>
    %149 = vector.shape_cast %148 : vector<1x8x32xbf16> to vector<8x32xbf16>
    %c0_124 = arith.constant 0 : index
    %c227 = arith.constant 227 : index
    %150 = vector.load %arg8[%c0_124, %c227] : memref<32x1280xbf16, #tpu.memory_space<vmem>>, vector<32x1024xbf16>
    %cst_125 = arith.constant dense<0.000000e+00> : vector<8x1024xf32>
    %151 = tpu.matmul %149, %150, %cst_125 {dimension_numbers = #tpu.dot_dimension_numbers<[1], [0], [0], [1], [0, 0, 1, 1], [], []>} : vector<8x32xbf16>, vector<32x1024xbf16>, vector<8x1024xf32> -> vector<8x1024xf32>
    %152 = arith.addf %147, %151 : vector<8x1024xf32>
    %c22 = arith.constant 22 : index
    %c0_126 = arith.constant 0 : index
    %c0_127 = arith.constant 0 : index
    %153 = vector.load %arg6[%c22, %c0_126, %c0_127] : memref<27x8x32xbf16, #tpu.memory_space<vmem>>, vector<1x8x32xbf16>
    %154 = vector.shape_cast %153 : vector<1x8x32xbf16> to vector<8x32xbf16>
    %c0_128 = arith.constant 0 : index
    %c228 = arith.constant 228 : index
    %155 = vector.load %arg8[%c0_128, %c228] : memref<32x1280xbf16, #tpu.memory_space<vmem>>, vector<32x1024xbf16>
    %cst_129 = arith.constant dense<0.000000e+00> : vector<8x1024xf32>
    %156 = tpu.matmul %154, %155, %cst_129 {dimension_numbers = #tpu.dot_dimension_numbers<[1], [0], [0], [1], [0, 0, 1, 1], [], []>} : vector<8x32xbf16>, vector<32x1024xbf16>, vector<8x1024xf32> -> vector<8x1024xf32>
    %157 = arith.addf %152, %156 : vector<8x1024xf32>
    %c23 = arith.constant 23 : index
    %c0_130 = arith.constant 0 : index
    %c0_131 = arith.constant 0 : index
    %158 = vector.load %arg6[%c23, %c0_130, %c0_131] : memref<27x8x32xbf16, #tpu.memory_space<vmem>>, vector<1x8x32xbf16>
    %159 = vector.shape_cast %158 : vector<1x8x32xbf16> to vector<8x32xbf16>
    %c0_132 = arith.constant 0 : index
    %c229 = arith.constant 229 : index
    %160 = vector.load %arg8[%c0_132, %c229] : memref<32x1280xbf16, #tpu.memory_space<vmem>>, vector<32x1024xbf16>
    %cst_133 = arith.constant dense<0.000000e+00> : vector<8x1024xf32>
    %161 = tpu.matmul %159, %160, %cst_133 {dimension_numbers = #tpu.dot_dimension_numbers<[1], [0], [0], [1], [0, 0, 1, 1], [], []>} : vector<8x32xbf16>, vector<32x1024xbf16>, vector<8x1024xf32> -> vector<8x1024xf32>
    %162 = arith.addf %157, %161 : vector<8x1024xf32>
    %c24 = arith.constant 24 : index
    %c0_134 = arith.constant 0 : index
    %c0_135 = arith.constant 0 : index
    %163 = vector.load %arg6[%c24, %c0_134, %c0_135] : memref<27x8x32xbf16, #tpu.memory_space<vmem>>, vector<1x8x32xbf16>
    %164 = vector.shape_cast %163 : vector<1x8x32xbf16> to vector<8x32xbf16>
    %c0_136 = arith.constant 0 : index
    %c237 = arith.constant 237 : index
    %165 = vector.load %arg8[%c0_136, %c237] : memref<32x1280xbf16, #tpu.memory_space<vmem>>, vector<32x1024xbf16>
    %cst_137 = arith.constant dense<0.000000e+00> : vector<8x1024xf32>
    %166 = tpu.matmul %164, %165, %cst_137 {dimension_numbers = #tpu.dot_dimension_numbers<[1], [0], [0], [1], [0, 0, 1, 1], [], []>} : vector<8x32xbf16>, vector<32x1024xbf16>, vector<8x1024xf32> -> vector<8x1024xf32>
    %167 = arith.addf %162, %166 : vector<8x1024xf32>
    %c25 = arith.constant 25 : index
    %c0_138 = arith.constant 0 : index
    %c0_139 = arith.constant 0 : index
    %168 = vector.load %arg6[%c25, %c0_138, %c0_139] : memref<27x8x32xbf16, #tpu.memory_space<vmem>>, vector<1x8x32xbf16>
    %169 = vector.shape_cast %168 : vector<1x8x32xbf16> to vector<8x32xbf16>
    %c0_140 = arith.constant 0 : index
    %c238 = arith.constant 238 : index
    %170 = vector.load %arg8[%c0_140, %c238] : memref<32x1280xbf16, #tpu.memory_space<vmem>>, vector<32x1024xbf16>
    %cst_141 = arith.constant dense<0.000000e+00> : vector<8x1024xf32>
    %171 = tpu.matmul %169, %170, %cst_141 {dimension_numbers = #tpu.dot_dimension_numbers<[1], [0], [0], [1], [0, 0, 1, 1], [], []>} : vector<8x32xbf16>, vector<32x1024xbf16>, vector<8x1024xf32> -> vector<8x1024xf32>
    %172 = arith.addf %167, %171 : vector<8x1024xf32>
    %c26 = arith.constant 26 : index
    %c0_142 = arith.constant 0 : index
    %c0_143 = arith.constant 0 : index
    %173 = vector.load %arg6[%c26, %c0_142, %c0_143] : memref<27x8x32xbf16, #tpu.memory_space<vmem>>, vector<1x8x32xbf16>
    %174 = vector.shape_cast %173 : vector<1x8x32xbf16> to vector<8x32xbf16>
    %c0_144 = arith.constant 0 : index
    %c239 = arith.constant 239 : index
    %175 = vector.load %arg8[%c0_144, %c239] : memref<32x1280xbf16, #tpu.memory_space<vmem>>, vector<32x1024xbf16>
    %cst_145 = arith.constant dense<0.000000e+00> : vector<8x1024xf32>
    %176 = tpu.matmul %174, %175, %cst_145 {dimension_numbers = #tpu.dot_dimension_numbers<[1], [0], [0], [1], [0, 0, 1, 1], [], []>} : vector<8x32xbf16>, vector<32x1024xbf16>, vector<8x1024xf32> -> vector<8x1024xf32>
    %177 = arith.addf %172, %176 : vector<8x1024xf32>
    %c0_146 = arith.constant 0 : index
    %c0_147 = arith.constant 0 : index
    %178 = vector.load %arg7[%c0_146, %c0_147] : memref<8x1024xf32, #tpu.memory_space<vmem>>, vector<8x1024xf32>
    tpu.vector_store %arg7[%c0_146, %c0_147], %177 {strides = array<i32>} : memref<8x1024xf32, #tpu.memory_space<vmem>>, vector<8x1024xf32>,
    return
  }
  func.func @transform_0(%arg0: i32) -> (i32, i32) {
    %c1_i32 = arith.constant 1 : i32
    %0 = arith.addi %arg0, %c1_i32 : i32
    %c8_i32 = arith.constant 8 : i32
    %1 = arith.muli %0, %c8_i32 : i32
    %c1_i32_0 = arith.constant 1 : i32
    %2 = arith.subi %1, %c1_i32_0 : i32
    %c0_i32 = arith.constant 0 : i32
    %c0_i32_1 = arith.constant 0 : i32
    return %c0_i32, %2 : i32, i32
  }
  func.func @transform_1(%arg0: i32) -> (i32, i32) {
    %c1_i32 = arith.constant 1 : i32
    %0 = arith.addi %arg0, %c1_i32 : i32
    %c0_i32 = arith.constant 0 : i32
    %c0_i32_0 = arith.constant 0 : i32
    return %c0_i32, %0 : i32, i32
  }
  func.func @transform_2(%arg0: i32) -> (i32, i32) {
    %c2_i32 = arith.constant 2 : i32
    %0 = arith.addi %arg0, %c2_i32 : i32
    %c8_i32 = arith.constant 8 : i32
    %1 = arith.muli %0, %c8_i32 : i32
    %c0_i32 = arith.constant 0 : i32
    %c0_i32_0 = arith.constant 0 : i32
    return %c0_i32, %1 : i32, i32
  }
  func.func @transform_3(%arg0: i32) -> (i32, i32) {
    %c0_i32 = arith.constant 0 : i32
    %c0_i32_0 = arith.constant 0 : i32
    %c0_i32_1 = arith.constant 0 : i32
    return %c0_i32, %c0_i32_0 : i32, i32
  }
  func.func @transform_4(%arg0: i32) -> (i32, i32) {
    %c0_i32 = arith.constant 0 : i32
    %c0_i32_0 = arith.constant 0 : i32
    %c0_i32_1 = arith.constant 0 : i32
    return %c0_i32, %c0_i32_0 : i32, i32
  }
  func.func @transform_5(%arg0: i32) -> (i32, i32, i32) {
    %c0_i32 = arith.constant 0 : i32
    %c0_i32_0 = arith.constant 0 : i32
    %c0_i32_1 = arith.constant 0 : i32
    %c0_i32_2 = arith.constant 0 : i32
    return %c0_i32, %c0_i32_0, %c0_i32_1 : i32, i32, i32
  }
  func.func @transform_6(%arg0: i32) -> (i32, i32) {
    %c0_i32 = arith.constant 0 : i32
    %c0_i32_0 = arith.constant 0 : i32
    return %c0_i32, %arg0 : i32, i32
  }
}

</mosaic_0001>

<llo_original>
// kernel: dense_layer_forward.2
$region0: #{dense_layer_forward.2}
  #allocation0 [shape = 'u32[]', space=smem, size = 0x4, offset = 0x4, fixed_abs, tag = 'smem constant byte address 0x4 - core index']
  #allocation1 [shape = 'u32[144,128]{1,0:T(1,128)}', space=vmem, size = 0x12000, scoped, tag = 'internal scratch']
  %s0 = inlined_call_operand.vmem [shape: bf16[9,4096], index: 0, kind: input, shape index: {}]
  %s1 = inlined_call_operand.vmem [shape: bf16[32,8], index: 1, kind: input, shape index: {}]
  %s2 = inlined_call_operand.vmem [shape: f32[2,32,2], index: 2, kind: output, shape index: {}]
  %s3 = sld [smem:[#allocation0]]
  $region68: #{dense_layer_forward.2} parent=0
    _
  %s5 = ssub.s32 1, %s3
  %s6 = scalar_select 0, %s5, %s3
  $region1: #{dense_layer_forward.2} parent=0
    #allocation2 [shape = 'u8[65536]{0}', space=vmem, size = 0x10000, scoped, tag = 'input window, operand 0']
    loop: start=0, step=1, limit=4
    $region2: #{dense_layer_forward.2} parent=1 // loop_pre_header
      _
    $region3: #{dense_layer_forward.2} parent=1 // loop_header
      %s8 = sphi 0, %s12
      %p9 = scmp.ge.s32.totalorder %s8, 4
      %s15 = sphi 0, %s27
      %s16 = sphi 0, %s23
      %s17 = sphi 0, %s15
      %s18 = sphi 0, %s16
      %s19 = sphi 0, %s17
      %s20 = sphi 0, %s18
      %s34 = sphi 0, %s36
      %s37 = sphi 0, %s34
      %s38 = sphi 0, %s37
      %s54 = sphi 0, %s38
      %s58 = sphi 0, %s58
      %s60 = sphi 0, %s58
      %s61 = sphi 0, %s60
      %s75 = sphi 0, %s61
      %s81 = sphi 0, %s83
      %s84 = sphi 0, %s81
      %s85 = sphi 0, %s84
      %s101 = sphi 0, %s85
    $region4: #{dense_layer_forward.2} parent=1 // loop_header_branch
      %11 = sbr.rel (%p9) target = $region8
    $region5: #{dense_layer_forward.2} parent=1 // loop_body
      %s13 = ssub.s32 %s8, 1
      %s14 = ssub.s32 %s8, 2
      %s21 = sadd.s32 1, %s16
      %p22 = scmp.ge.s32.totalorder %s21, 1
      %s23 = scalar_select %p22, 0, %s21
      %s24 = sadd.s32 1, %s15
      %s25 = scalar_select %p22, %s24, %s15
      %p26 = scmp.ge.s32.totalorder %s25, 2
      %s27 = scalar_select %p26, 0, %s25
      %s28 = sadd.s32 %s15, %s16
      %s29 = sadd.s32 %s28, 1
      %s30 = sadd.s32 %s27, %s23
      %s31 = sadd.s32 %s30, 1
      %s32 = ssub.s32 %s29, %s31
      %p33 = scmp.eq.s32.totalorder %s32, 0
      %s35 = sadd.s32 %s34, 1
      %s36 = scalar_select %p33, %s34, %s35
      %p39 = pneg %p33
      %p40 = scmp.eq.s32.totalorder %s8, 1
      %p41 = por %p39, %p40
      %p42 = scmp.ne.s32.totalorder %s34, %s37
      %p43 = scmp.eq.s32.totalorder %s8, 0
      %p44 = por %p42, %p43
      %p45 = scmp.ne.s32.totalorder %s34, %s37
      %p46 = scmp.eq.s32.totalorder %s13, 1
      %p47 = por %p45, %p46
      %p48 = scmp.ne.s32.totalorder %s37, %s38
      %p49 = scmp.eq.s32.totalorder %s13, 0
      %p50 = por %p48, %p49
      %p51 = scmp.ne.s32.totalorder %s37, %s38
      %p52 = scmp.eq.s32.totalorder %s14, 1
      %p53 = por %p51, %p52
      %p55 = scmp.ne.s32.totalorder %s38, %s54
      %p56 = scmp.eq.s32.totalorder %s14, 0
      %p57 = por %p55, %p56
      %s59 = sadd.s32 %s58, 1
      %p62 = scmp.eq.s32.totalorder %s8, 1
      %p63 = scmp.ne.s32.totalorder %s58, %s60
      %p64 = scmp.eq.s32.totalorder %s8, 0
      %p65 = por %p63, %p64
      %p66 = scmp.ne.s32.totalorder %s58, %s60
      %p67 = scmp.eq.s32.totalorder %s13, 1
      %p68 = por %p66, %p67
      %p69 = scmp.ne.s32.totalorder %s60, %s61
      %p70 = scmp.eq.s32.totalorder %s13, 0
      %p71 = por %p69, %p70
      %p72 = scmp.ne.s32.totalorder %s60, %s61
      %p73 = scmp.eq.s32.totalorder %s14, 1
      %p74 = por %p72, %p73
      %p76 = scmp.ne.s32.totalorder %s61, %s75
      %p77 = scmp.eq.s32.totalorder %s14, 0
      %p78 = por %p76, %p77
      %s79 = ssub.s32 %s15, %s27
      %p80 = scmp.eq.s32.totalorder %s79, 0
      %s82 = sadd.s32 %s81, 1
      %s83 = scalar_select %p80, %s81, %s82
      %p86 = pneg %p80
      %p87 = scmp.eq.s32.totalorder %s8, 1
      %p88 = por %p86, %p87
      %p89 = scmp.ne.s32.totalorder %s81, %s84
      %p90 = scmp.eq.s32.totalorder %s8, 0
      %p91 = por %p89, %p90
      %p92 = scmp.ne.s32.totalorder %s81, %s84
      %p93 = scmp.eq.s32.totalorder %s13, 1
      %p94 = por %p92, %p93
      %p95 = scmp.ne.s32.totalorder %s84, %s85
      %p96 = scmp.eq.s32.totalorder %s13, 0
      %p97 = por %p95, %p96
      %p98 = scmp.ne.s32.totalorder %s84, %s85
      %p99 = scmp.eq.s32.totalorder %s14, 1
      %p100 = por %p98, %p99
      %p102 = scmp.ne.s32.totalorder %s85, %s101
      %p103 = scmp.eq.s32.totalorder %s14, 0
      %p104 = por %p102, %p103
      %p105 = scmp.le.s32.totalorder 1, %s8
      %p106 = scmp.lt.s32.totalorder %s8, 3
      %p107 = pnand %p105, %p106
      %p108 = pneg %p107
      // Predicated region
      $region9: #{dense_layer_forward.2} parent=5 // pred_check
        _
      $region10: #{dense_layer_forward.2} parent=5 // pred_check_branch
        %110 = sbr.rel (%p107) target = $region12
      $region11: #{dense_layer_forward.2} parent=5 // pred_region
        %s111 = ssub.s32 %s8, 1
        // Predicated region
        $region13: #{dense_layer_forward.2} parent=11 // pred_check
          %p112 = pneg %p71
        $region14: #{dense_layer_forward.2} parent=11 // pred_check_branch
          %114 = sbr.rel (%p112) target = $region16
        $region15: #{dense_layer_forward.2} parent=11 // pred_region
          _
        $region16: #{dense_layer_forward.2} parent=11 // pred_fallthru
          _
      $region12: #{dense_layer_forward.2} parent=5 // pred_fallthru
        _
      %p115 = scmp.lt.s32.totalorder %s8, 2
      // Predicated region
      $region17: #{dense_layer_forward.2} parent=5 // pred_check
        %p116 = pneg %p115
      $region18: #{dense_layer_forward.2} parent=5 // pred_check_branch
        %118 = sbr.rel (%p116) target = $region20
      $region19: #{dense_layer_forward.2} parent=5 // pred_region
        // Predicated region
        $region21: #{dense_layer_forward.2} parent=19 // pred_check
          %p119 = pneg %p44
        $region22: #{dense_layer_forward.2} parent=19 // pred_check_branch
          %121 = sbr.rel (%p119) target = $region24
        $region23: #{dense_layer_forward.2} parent=19 // pred_region
          %s122 = sand.u32 %s34, 1
          %s123 = sand.u32 %s34, 1
          %s124 = smul.addr %s123, 64
          %s125 = scalar_lea.vmem [#allocation2], %s124
          %s126 = sadd.s32 %s15, %s16
          %s127 = sadd.s32 %s126, 1
          %s128 = smul.u32 8, %s127
          %s129 = smul.addr %s128, 4
          %s130 = scalar_lea.vmem %s0, %s129
          // Predicated region
          $region25: #{dense_layer_forward.2} parent=23 // pred_check
            _
          $region26: #{dense_layer_forward.2} parent=23 // pred_check_branch
            %132 = sbr.rel (0) target = $region28
          $region27: #{dense_layer_forward.2} parent=23 // pred_region
            // Predicated region
            $region29: #{dense_layer_forward.2} parent=27 // pred_check
              _
            $region30: #{dense_layer_forward.2} parent=27 // pred_check_branch
              %134 = sbr.rel (0) target = $region32
            $region31: #{dense_layer_forward.2} parent=27 // pred_region
              loop: start=0, step=1, limit=1
              $region33: #{dense_layer_forward.2} parent=31 // loop_pre_header
                _
              $region34: #{dense_layer_forward.2} parent=31 // loop_header
                %s136 = sphi 0, %s140
                %p137 = scmp.ge.s32.totalorder %s136, 1
                %s141 = sphi %s130, %s130
                %s142 = sphi %s125, %s125
              $region35: #{dense_layer_forward.2} parent=31 // loop_header_branch
                %139 = sbr.rel (%p137) target = $region39
              $region36: #{dense_layer_forward.2} parent=31 // loop_body
                %v143 = vld [vmem:[%s141] sm:$0xff]
                %144 = vst [vmem:[%s142] sm:$0xff] %v143
                %v145 = vld [vmem:[%s141 + $0x8] sm:$0xff]
                %146 = vst [vmem:[%s142 + $0x8] sm:$0xff] %v145
                %v147 = vld [vmem:[%s141 + $0x10] sm:$0xff]
                %148 = vst [vmem:[%s142 + $0x10] sm:$0xff] %v147
                %v149 = vld [vmem:[%s141 + $0x18] sm:$0xff]
                %150 = vst [vmem:[%s142 + $0x18] sm:$0xff] %v149
                %v151 = vld [vmem:[%s141 + $0x80] sm:$0xff]
                %152 = vst [vmem:[%s142 + $0x20] sm:$0xff] %v151
                %v153 = vld [vmem:[%s141 + $0x88] sm:$0xff]
                %154 = vst [vmem:[%s142 + $0x28] sm:$0xff] %v153
                %v155 = vld [vmem:[%s141 + $0x90] sm:$0xff]
                %156 = vst [vmem:[%s142 + $0x30] sm:$0xff] %v155
                %v157 = vld [vmem:[%s141 + $0x98] sm:$0xff]
                %158 = vst [vmem:[%s142 + $0x38] sm:$0xff] %v157
              $region37: #{dense_layer_forward.2} parent=31 // loop_footer
                %s140 = sadd.s32 1, %s136
              $region38: #{dense_layer_forward.2} parent=31 // loop_footer_branch
                %135 = sbr.rel target = $region34
              $region39: #{dense_layer_forward.2} parent=31 // loop_exit
                _
            $region32: #{dense_layer_forward.2} parent=27 // pred_fallthru
              _
            // Predicated region
            $region40: #{dense_layer_forward.2} parent=27 // pred_check
              _
            $region41: #{dense_layer_forward.2} parent=27 // pred_check_branch
              %160 = sbr.rel target = $region43
            $region42: #{dense_layer_forward.2} parent=27 // pred_region
              _
            $region43: #{dense_layer_forward.2} parent=27 // pred_fallthru
              _
          $region28: #{dense_layer_forward.2} parent=23 // pred_fallthru
            _
          %161 = vnop
        $region24: #{dense_layer_forward.2} parent=19 // pred_fallthru
          _
      $region20: #{dense_layer_forward.2} parent=5 // pred_fallthru
        _
      %p162 = scmp.le.s32.totalorder 1, %s8
      %p163 = scmp.lt.s32.totalorder %s8, 3
      %p164 = pnand %p162, %p163
      %p165 = pneg %p164
      // Predicated region
      $region44: #{dense_layer_forward.2} parent=5 // pred_check
        _
      $region45: #{dense_layer_forward.2} parent=5 // pred_check_branch
        %167 = sbr.rel (%p164) target = $region47
      $region46: #{dense_layer_forward.2} parent=5 // pred_region
        %s168 = ssub.s32 %s8, 1
        %s169 = sand.u32 %s37, 1
        %s170 = sand.u32 %s37, 1
        %s171 = smul.addr %s170, 64
        %s172 = scalar_lea.vmem [#allocation2], %s171
        // Predicated region
        $region48: #{dense_layer_forward.2} parent=46 // pred_check
          %p173 = pneg %p50
        $region49: #{dense_layer_forward.2} parent=46 // pred_check_branch
          %175 = sbr.rel (%p173) target = $region51
        $region50: #{dense_layer_forward.2} parent=46 // pred_region
          _
        $region51: #{dense_layer_forward.2} parent=46 // pred_fallthru
          _
        %s176 = sand.u32 %s37, 1
        %s177 = sand.u32 %s37, 1
        %s178 = smul.addr %s177, 64
        %s179 = scalar_lea.vmem [#allocation2], %s178
        %p180 = pneg %p50
        %p181 = pneg %p47
        %p182 = pneg %p71
        %p183 = pneg %p68
        %p184 = pneg %p97
        %p185 = pneg %p94
        %p186 = scmp.lt.s32.totalorder %s17, 1
        %s187 = scalar_select %p186, %s17, 1
        %s188 = smul.addr %s187, 4
        %s189 = smul.addr %s188, 8
        %s190 = scalar_lea.vmem %s2, %s189
        %s191 = sadd.s32 %s17, %s18
        %s192 = sadd.s32 %s191, 1
        %s193 = smul.u32 8, %s192
        %p194 = scmp.lt.s32.totalorder %s17, 1
        %s195 = scalar_select %p194, %s17, 1
        %s196 = smul.addr %s195, 4
        %s197 = smul.addr %s196, 8
        %s198 = scalar_lea.vmem %s2, %s197
        %p200 = scmp.eq.s32.totalorder %s18, 0
        // Predicated region
        $region52: #{dense_layer_forward.2} parent=46 // pred_check
          %p201 = pneg %p200
        $region53: #{dense_layer_forward.2} parent=46 // pred_check_branch
          %203 = sbr.rel (%p201) target = $region55
        $region54: #{dense_layer_forward.2} parent=46 // pred_region
          %vm204 = vcmask 15360
          %205 = vst.msk [vmem:[%s198] sm:$0xff] %vm204, 0.0
          %206 = vst.msk [vmem:[%s198 + $0x8] sm:$0xff] %vm204, 0.0
          %207 = vst.msk [vmem:[%s198 + $0x10] sm:$0xff] %vm204, 0.0
          %208 = vst.msk [vmem:[%s198 + $0x18] sm:$0xff] %vm204, 0.0
        $region55: #{dense_layer_forward.2} parent=46 // pred_fallthru
          _
        %v209 = vld [vmem:[%s1] sm:$0xf]
        %v210 = vld [vmem:[%s1 + $0x4] sm:$0xf]
        %v211 = vld [vmem:[%s1 + $0x8] sm:$0xf]
        %v212 = vld [vmem:[%s1 + $0xc] sm:$0xf]
        %v213 = vld [vmem:[%s172] sm:$0xff]
        %v214 = vld [vmem:[%s172 + $0x8] sm:$0xff]
        %v215 = vld [vmem:[%s172 + $0x10] sm:$0xff]
        %v216 = vld [vmem:[%s172 + $0x18] sm:$0xff]
        %v221 = vunpack.c.l.b16 %v209
        %v222 = vunpack.c.l.b16 %v210
        %v223 = vunpack.c.l.b16 %v211
        %v224 = vunpack.c.l.b16 %v212
        %v225 = vpack.c.b16 %v222, %v221
        %v226 = vpack.c.b16 %v224, %v223
        %v231 = vunpack.c.l.b16 %v213
        %v232 = vunpack.c.h.b16 %v213
        %v233 = vunpack.c.l.b16 %v214
        %v234 = vunpack.c.h.b16 %v214
        %v235 = vunpack.c.l.b16 %v215
        %v236 = vunpack.c.h.b16 %v215
        %v237 = vunpack.c.l.b16 %v216
        %v238 = vunpack.c.h.b16 %v216
        %v239 = vpack.c.b16 %v231, %v231
        %v240 = vpack.c.b16 %v232, %v232
        %v241 = vpack.c.b16 %v233, %v233
        %v242 = vpack.c.b16 %v234, %v234
        %v243 = vpack.c.b16 %v235, %v235
        %v244 = vpack.c.b16 %v236, %v236
        %v245 = vpack.c.b16 %v237, %v237
        %v246 = vpack.c.b16 %v238, %v238
        %vm247 = vcmask 64512
        %v249 = vsel %vm247, %v225, 0
        %v252 = vsel %vm247, %v226, 0
        %vm254 = vcmask 1043456
        %v256 = vsel %vm254, %v239, 0
        %v259 = vsel %vm254, %v240, 0
        %v262 = vsel %vm254, %v241, 0
        %v265 = vsel %vm254, %v242, 0
        %v268 = vsel %vm254, %v243, 0
        %v271 = vsel %vm254, %v244, 0
        %v274 = vsel %vm254, %v245, 0
        %v277 = vsel %vm254, %v246, 0
        %279 = vmatprep.subr.bf16.mxu0 %v259
        %280 = vmatpush1.bf16.msra.mxu0 %v256
        %281 = vmatprep.subr.bf16.mxu0 0
        %282 = vmatpush1.bf16.msra.mxu0 0
        %283 = vmatprep.subr.bf16.mxu0 0
        %284 = vmatpush1.bf16.msra.mxu0 0
        %285 = vmatprep.subr.bf16.mxu0 0
        %286 = vmatpush1.bf16.msra.mxu0 0
        %287 = vmatprep.subr.bf16.mxu0 0
        %288 = vmatpush1.bf16.msra.mxu0 0
        %289 = vmatprep.subr.bf16.mxu0 0
        %290 = vmatpush1.bf16.msra.mxu0 0
        %291 = vmatprep.subr.bf16.mxu0 0
        %292 = vmatpush1.bf16.msra.mxu0 0
        %293 = vmatprep.subr.bf16.mxu0 0
        %294 = vmatpush1.bf16.msra.mxu0 0
        %295 = vmatprep.subr.bf16.mxu0 0
        %296 = vmatpush1.bf16.msra.mxu0 0
        %297 = vmatprep.subr.bf16.mxu0 0
        %298 = vmatpush1.bf16.msra.mxu0 0
        %299 = vmatprep.subr.bf16.mxu0 0
        %300 = vmatpush1.bf16.msra.mxu0 0
        %301 = vmatprep.subr.bf16.mxu0 0
        %302 = vmatpush1.bf16.msra.mxu0 0
        %303 = vmatprep.subr.bf16.mxu0 0
        %304 = vmatpush1.bf16.msra.mxu0 0
        %305 = vmatprep.subr.bf16.mxu0 0
        %306 = vmatpush1.bf16.msra.mxu0 0
        %307 = vmatprep.subr.bf16.mxu0 0
        %308 = vmatpush1.bf16.msra.mxu0 0
        %309 = vmatprep.subr.bf16.mxu0 0
        %310 = vmatpush1.bf16.msra.mxu0 0
        %311 = vmatprep.mubr.bf16.mxu0 0
        %312 = vmatmul.mubr.bf16.gmra.mrb[0].mxu0 %v249
        %v313 = vpop.f32.mrb[0].mxu0
        %v314 = vadd.f32 0.0, %v313
        %v315 = vpop.f32.mrb[0].mxu0
        %v316 = vadd.f32 0.0, %v315
        %v317 = vpop.f32.mrb[0].mxu0
        %v318 = vadd.f32 0.0, %v317
        %v319 = vpop.f32.mrb[0].mxu0
        %v320 = vadd.f32 0.0, %v319
        %321 = vmatprep.mubr.bf16.mxu0 0
        %322 = vmatmul.mubr.bf16.gmra.mrb[0].mxu0 %v252
        %v323 = vpop.f32.mrb[0].mxu0
        %v324 = vadd.f32 0.0, %v323
        %v325 = vpop.f32.mrb[0].mxu0
        %v326 = vadd.f32 0.0, %v325
        %v327 = vpop.f32.mrb[0].mxu0
        %v328 = vadd.f32 0.0, %v327
        %v329 = vpop.f32.mrb[0].mxu0
        %v330 = vadd.f32 0.0, %v329
        %331 = vdwg.mxu0
        %332 = vmatprep.subr.bf16.mxu0 %v265
        %333 = vmatpush1.bf16.msra.mxu0 %v262
        %334 = vmatprep.subr.bf16.mxu0 0
        %335 = vmatpush1.bf16.msra.mxu0 0
        %336 = vmatprep.subr.bf16.mxu0 0
        %337 = vmatpush1.bf16.msra.mxu0 0
        %338 = vmatprep.subr.bf16.mxu0 0
        %339 = vmatpush1.bf16.msra.mxu0 0
        %340 = vmatprep.subr.bf16.mxu0 0
        %341 = vmatpush1.bf16.msra.mxu0 0
        %342 = vmatprep.subr.bf16.mxu0 0
        %343 = vmatpush1.bf16.msra.mxu0 0
        %344 = vmatprep.subr.bf16.mxu0 0
        %345 = vmatpush1.bf16.msra.mxu0 0
        %346 = vmatprep.subr.bf16.mxu0 0
        %347 = vmatpush1.bf16.msra.mxu0 0
        %348 = vmatprep.subr.bf16.mxu0 0
        %349 = vmatpush1.bf16.msra.mxu0 0
        %350 = vmatprep.subr.bf16.mxu0 0
        %351 = vmatpush1.bf16.msra.mxu0 0
        %352 = vmatprep.subr.bf16.mxu0 0
        %353 = vmatpush1.bf16.msra.mxu0 0
        %354 = vmatprep.subr.bf16.mxu0 0
        %355 = vmatpush1.bf16.msra.mxu0 0
        %356 = vmatprep.subr.bf16.mxu0 0
        %357 = vmatpush1.bf16.msra.mxu0 0
        %358 = vmatprep.subr.bf16.mxu0 0
        %359 = vmatpush1.bf16.msra.mxu0 0
        %360 = vmatprep.subr.bf16.mxu0 0
        %361 = vmatpush1.bf16.msra.mxu0 0
        %362 = vmatprep.subr.bf16.mxu0 0
        %363 = vmatpush1.bf16.msra.mxu0 0
        %364 = vmatprep.mubr.bf16.mxu0 0
        %365 = vmatmul.mubr.bf16.gmra.mrb[0].mxu0 %v249
        %v366 = vpop.f32.mrb[0].mxu0
        %v367 = vadd.f32 0.0, %v366
        %v368 = vpop.f32.mrb[0].mxu0
        %v369 = vadd.f32 0.0, %v368
        %v370 = vpop.f32.mrb[0].mxu0
        %v371 = vadd.f32 0.0, %v370
        %v372 = vpop.f32.mrb[0].mxu0
        %v373 = vadd.f32 0.0, %v372
        %374 = vmatprep.mubr.bf16.mxu0 0
        %375 = vmatmul.mubr.bf16.gmra.mrb[0].mxu0 %v252
        %v376 = vpop.f32.mrb[0].mxu0
        %v377 = vadd.f32 0.0, %v376
        %v378 = vpop.f32.mrb[0].mxu0
        %v379 = vadd.f32 0.0, %v378
        %v380 = vpop.f32.mrb[0].mxu0
        %v381 = vadd.f32 0.0, %v380
        %v382 = vpop.f32.mrb[0].mxu0
        %v383 = vadd.f32 0.0, %v382
        %384 = vdwg.mxu0
        %385 = vmatprep.subr.bf16.mxu0 %v271
        %386 = vmatpush1.bf16.msra.mxu0 %v268
        %387 = vmatprep.subr.bf16.mxu0 0
        %388 = vmatpush1.bf16.msra.mxu0 0
        %389 = vmatprep.subr.bf16.mxu0 0
        %390 = vmatpush1.bf16.msra.mxu0 0
        %391 = vmatprep.subr.bf16.mxu0 0
        %392 = vmatpush1.bf16.msra.mxu0 0
        %393 = vmatprep.subr.bf16.mxu0 0
        %394 = vmatpush1.bf16.msra.mxu0 0
        %395 = vmatprep.subr.bf16.mxu0 0
        %396 = vmatpush1.bf16.msra.mxu0 0
        %397 = vmatprep.subr.bf16.mxu0 0
        %398 = vmatpush1.bf16.msra.mxu0 0
        %399 = vmatprep.subr.bf16.mxu0 0
        %400 = vmatpush1.bf16.msra.mxu0 0
        %401 = vmatprep.subr.bf16.mxu0 0
        %402 = vmatpush1.bf16.msra.mxu0 0
        %403 = vmatprep.subr.bf16.mxu0 0
        %404 = vmatpush1.bf16.msra.mxu0 0
        %405 = vmatprep.subr.bf16.mxu0 0
        %406 = vmatpush1.bf16.msra.mxu0 0
        %407 = vmatprep.subr.bf16.mxu0 0
        %408 = vmatpush1.bf16.msra.mxu0 0
        %409 = vmatprep.subr.bf16.mxu0 0
        %410 = vmatpush1.bf16.msra.mxu0 0
        %411 = vmatprep.subr.bf16.mxu0 0
        %412 = vmatpush1.bf16.msra.mxu0 0
        %413 = vmatprep.subr.bf16.mxu0 0
        %414 = vmatpush1.bf16.msra.mxu0 0
        %415 = vmatprep.subr.bf16.mxu0 0
        %416 = vmatpush1.bf16.msra.mxu0 0
        %417 = vmatprep.mubr.bf16.mxu0 0
        %418 = vmatmul.mubr.bf16.gmra.mrb[0].mxu0 %v249
        %v419 = vpop.f32.mrb[0].mxu0
        %v420 = vadd.f32 0.0, %v419
        %v421 = vpop.f32.mrb[0].mxu0
        %v422 = vadd.f32 0.0, %v421
        %v423 = vpop.f32.mrb[0].mxu0
        %v424 = vadd.f32 0.0, %v423
        %v425 = vpop.f32.mrb[0].mxu0
        %v426 = vadd.f32 0.0, %v425
        %427 = vmatprep.mubr.bf16.mxu0 0
        %428 = vmatmul.mubr.bf16.gmra.mrb[0].mxu0 %v252
        %v429 = vpop.f32.mrb[0].mxu0
        %v430 = vadd.f32 0.0, %v429
        %v431 = vpop.f32.mrb[0].mxu0
        %v432 = vadd.f32 0.0, %v431
        %v433 = vpop.f32.mrb[0].mxu0
        %v434 = vadd.f32 0.0, %v433
        %v435 = vpop.f32.mrb[0].mxu0
        %v436 = vadd.f32 0.0, %v435
        %437 = vdwg.mxu0
        %438 = vmatprep.subr.bf16.mxu0 %v277
        %439 = vmatpush1.bf16.msra.mxu0 %v274
        %440 = vmatprep.subr.bf16.mxu0 0
        %441 = vmatpush1.bf16.msra.mxu0 0
        %442 = vmatprep.subr.bf16.mxu0 0
        %443 = vmatpush1.bf16.msra.mxu0 0
        %444 = vmatprep.subr.bf16.mxu0 0
        %445 = vmatpush1.bf16.msra.mxu0 0
        %446 = vmatprep.subr.bf16.mxu0 0
        %447 = vmatpush1.bf16.msra.mxu0 0
        %448 = vmatprep.subr.bf16.mxu0 0
        %449 = vmatpush1.bf16.msra.mxu0 0
        %450 = vmatprep.subr.bf16.mxu0 0
        %451 = vmatpush1.bf16.msra.mxu0 0
        %452 = vmatprep.subr.bf16.mxu0 0
        %453 = vmatpush1.bf16.msra.mxu0 0
        %454 = vmatprep.subr.bf16.mxu0 0
        %455 = vmatpush1.bf16.msra.mxu0 0
        %456 = vmatprep.subr.bf16.mxu0 0
        %457 = vmatpush1.bf16.msra.mxu0 0
        %458 = vmatprep.subr.bf16.mxu0 0
        %459 = vmatpush1.bf16.msra.mxu0 0
        %460 = vmatprep.subr.bf16.mxu0 0
        %461 = vmatpush1.bf16.msra.mxu0 0
        %462 = vmatprep.subr.bf16.mxu0 0
        %463 = vmatpush1.bf16.msra.mxu0 0
        %464 = vmatprep.subr.bf16.mxu0 0
        %465 = vmatpush1.bf16.msra.mxu0 0
        %466 = vmatprep.subr.bf16.mxu0 0
        %467 = vmatpush1.bf16.msra.mxu0 0
        %468 = vmatprep.subr.bf16.mxu0 0
        %469 = vmatpush1.bf16.msra.mxu0 0
        %470 = vmatprep.mubr.bf16.mxu0 0
        %471 = vmatmul.mubr.bf16.gmra.mrb[0].mxu0 %v249
        %v472 = vpop.f32.mrb[0].mxu0
        %v473 = vadd.f32 0.0, %v472
        %v474 = vpop.f32.mrb[0].mxu0
        %v475 = vadd.f32 0.0, %v474
        %v476 = vpop.f32.mrb[0].mxu0
        %v477 = vadd.f32 0.0, %v476
        %v478 = vpop.f32.mrb[0].mxu0
        %v479 = vadd.f32 0.0, %v478
        %480 = vmatprep.mubr.bf16.mxu0 0
        %481 = vmatmul.mubr.bf16.gmra.mrb[0].mxu0 %v252
        %v482 = vpop.f32.mrb[0].mxu0
        %v483 = vadd.f32 0.0, %v482
        %v484 = vpop.f32.mrb[0].mxu0
        %v485 = vadd.f32 0.0, %v484
        %v486 = vpop.f32.mrb[0].mxu0
        %v487 = vadd.f32 0.0, %v486
        %v488 = vpop.f32.mrb[0].mxu0
        %v489 = vadd.f32 0.0, %v488
        %490 = vdwg.mxu0
        %v491 = vld [vmem:[%s198] sm:$0xff]
        %v492 = vld [vmem:[%s198 + $0x8] sm:$0xff]
        %v493 = vld [vmem:[%s198 + $0x10] sm:$0xff]
        %v494 = vld [vmem:[%s198 + $0x18] sm:$0xff]
        %v495 = vadd.f32 %v314, %v316
        %v496 = vadd.f32 %v495, %v367
        %v497 = vadd.f32 %v496, %v369
        %v498 = vadd.f32 %v497, %v420
        %v499 = vadd.f32 %v498, %v422
        %v500 = vadd.f32 %v499, %v473
        %v501 = vadd.f32 %v500, %v475
        %502 = vadd.xlane.f32.xlu0 %v501
        %v503 = vpop.xlane.xlu0 %502
        %v504 = vadd.f32 %v318, %v320
        %v505 = vadd.f32 %v504, %v371
        %v506 = vadd.f32 %v505, %v373
        %v507 = vadd.f32 %v506, %v424
        %v508 = vadd.f32 %v507, %v426
        %v509 = vadd.f32 %v508, %v477
        %v510 = vadd.f32 %v509, %v479
        %511 = vadd.xlane.f32.xlu0 %v510
        %v512 = vpop.xlane.xlu0 %511
        %v513 = vadd.f32 %v324, %v326
        %v514 = vadd.f32 %v513, %v377
        %v515 = vadd.f32 %v514, %v379
        %v516 = vadd.f32 %v515, %v430
        %v517 = vadd.f32 %v516, %v432
        %v518 = vadd.f32 %v517, %v483
        %v519 = vadd.f32 %v518, %v485
        %520 = vadd.xlane.f32.xlu0 %v519
        %v521 = vpop.xlane.xlu0 %520
        %v522 = vadd.f32 %v328, %v330
        %v523 = vadd.f32 %v522, %v381
        %v524 = vadd.f32 %v523, %v383
        %v525 = vadd.f32 %v524, %v434
        %v526 = vadd.f32 %v525, %v436
        %v527 = vadd.f32 %v526, %v487
        %v528 = vadd.f32 %v527, %v489
        %529 = vadd.xlane.f32.xlu0 %v528
        %v530 = vpop.xlane.xlu0 %529
        %v531 = vadd.f32 %v491, %v503
        %v532 = vadd.f32 %v492, %v512
        %v533 = vadd.f32 %v493, %v521
        %v534 = vadd.f32 %v494, %v530
        %vm535 = vcmask 7168
        %536 = vst.msk [vmem:[%s198] sm:$0xff] %vm535, %v531
        %537 = vst.msk [vmem:[%s198 + $0x8] sm:$0xff] %vm535, %v532
        %538 = vst.msk [vmem:[%s198 + $0x10] sm:$0xff] %vm535, %v533
        %539 = vst.msk [vmem:[%s198 + $0x18] sm:$0xff] %vm535, %v534
        %v540 = vld [vmem:[%s198] sm:$0xff]
        %v541 = vld [vmem:[%s198 + $0x8] sm:$0xff]
        %v542 = vld [vmem:[%s198 + $0x10] sm:$0xff]
        %v543 = vld [vmem:[%s198 + $0x18] sm:$0xff]
        %v544 = vmul.f32 %v314, %v314
        %v545 = vmul.f32 %v316, %v316
        %v546 = vmul.f32 %v367, %v367
        %v547 = vmul.f32 %v369, %v369
        %v548 = vmul.f32 %v420, %v420
        %v549 = vmul.f32 %v422, %v422
        %v550 = vmul.f32 %v473, %v473
        %v551 = vmul.f32 %v475, %v475
        %v552 = vmul.f32 %v318, %v318
        %v553 = vmul.f32 %v320, %v320
        %v554 = vmul.f32 %v371, %v371
        %v555 = vmul.f32 %v373, %v373
        %v556 = vmul.f32 %v424, %v424
        %v557 = vmul.f32 %v426, %v426
        %v558 = vmul.f32 %v477, %v477
        %v559 = vmul.f32 %v479, %v479
        %v560 = vmul.f32 %v324, %v324
        %v561 = vmul.f32 %v326, %v326
        %v562 = vmul.f32 %v377, %v377
        %v563 = vmul.f32 %v379, %v379
        %v564 = vmul.f32 %v430, %v430
        %v565 = vmul.f32 %v432, %v432
        %v566 = vmul.f32 %v483, %v483
        %v567 = vmul.f32 %v485, %v485
        %v568 = vmul.f32 %v328, %v328
        %v569 = vmul.f32 %v330, %v330
        %v570 = vmul.f32 %v381, %v381
        %v571 = vmul.f32 %v383, %v383
        %v572 = vmul.f32 %v434, %v434
        %v573 = vmul.f32 %v436, %v436
        %v574 = vmul.f32 %v487, %v487
        %v575 = vmul.f32 %v489, %v489
        %v576 = vadd.f32 %v544, %v545
        %v577 = vadd.f32 %v576, %v546
        %v578 = vadd.f32 %v577, %v547
        %v579 = vadd.f32 %v578, %v548
        %v580 = vadd.f32 %v579, %v549
        %v581 = vadd.f32 %v580, %v550
        %v582 = vadd.f32 %v581, %v551
        %583 = vadd.xlane.f32.xlu0 %v582
        %v584 = vpop.xlane.xlu0 %583
        %v585 = vadd.f32 %v552, %v553
        %v586 = vadd.f32 %v585, %v554
        %v587 = vadd.f32 %v586, %v555
        %v588 = vadd.f32 %v587, %v556
        %v589 = vadd.f32 %v588, %v557
        %v590 = vadd.f32 %v589, %v558
        %v591 = vadd.f32 %v590, %v559
        %592 = vadd.xlane.f32.xlu0 %v591
        %v593 = vpop.xlane.xlu0 %592
        %v594 = vadd.f32 %v560, %v561
        %v595 = vadd.f32 %v594, %v562
        %v596 = vadd.f32 %v595, %v563
        %v597 = vadd.f32 %v596, %v564
        %v598 = vadd.f32 %v597, %v565
        %v599 = vadd.f32 %v598, %v566
        %v600 = vadd.f32 %v599, %v567
        %601 = vadd.xlane.f32.xlu0 %v600
        %v602 = vpop.xlane.xlu0 %601
        %v603 = vadd.f32 %v568, %v569
        %v604 = vadd.f32 %v603, %v570
        %v605 = vadd.f32 %v604, %v571
        %v606 = vadd.f32 %v605, %v572
        %v607 = vadd.f32 %v606, %v573
        %v608 = vadd.f32 %v607, %v574
        %v609 = vadd.f32 %v608, %v575
        %610 = vadd.xlane.f32.xlu0 %v609
        %v611 = vpop.xlane.xlu0 %610
        %v612 = vadd.f32 %v540, %v584
        %v613 = vadd.f32 %v541, %v593
        %v614 = vadd.f32 %v542, %v602
        %v615 = vadd.f32 %v543, %v611
        %vm616 = vcmask 15368
        %617 = vst.msk [vmem:[%s198] sm:$0xff] %vm616, %v612
        %618 = vst.msk [vmem:[%s198 + $0x8] sm:$0xff] %vm616, %v613
        %619 = vst.msk [vmem:[%s198 + $0x10] sm:$0xff] %vm616, %v614
        %620 = vst.msk [vmem:[%s198 + $0x18] sm:$0xff] %vm616, %v615
        %p621 = scmp.lt.s32.totalorder %s17, 1
        %s622 = scalar_select %p621, %s17, 1
        %s623 = smul.addr %s622, 4
        %s624 = smul.addr %s623, 8
        %s625 = scalar_lea.vmem %s2, %s624
        // Predicated region
        $region56: #{dense_layer_forward.2} parent=46 // pred_check
          %p626 = pneg %p94
        $region57: #{dense_layer_forward.2} parent=46 // pred_check_branch
          %628 = sbr.rel (%p626) target = $region59
        $region58: #{dense_layer_forward.2} parent=46 // pred_region
          _
        $region59: #{dense_layer_forward.2} parent=46 // pred_fallthru
          _
      $region47: #{dense_layer_forward.2} parent=5 // pred_fallthru
        _
      %p629 = scmp.le.s32.totalorder 2, %s8
      // Predicated region
      $region60: #{dense_layer_forward.2} parent=5 // pred_check
        %p630 = pneg %p629
      $region61: #{dense_layer_forward.2} parent=5 // pred_check_branch
        %632 = sbr.rel (%p630) target = $region63
      $region62: #{dense_layer_forward.2} parent=5 // pred_region
        %s633 = ssub.s32 %s8, 2
        // Predicated region
        $region64: #{dense_layer_forward.2} parent=62 // pred_check
          %p634 = pneg %p100
        $region65: #{dense_layer_forward.2} parent=62 // pred_check_branch
          %636 = sbr.rel (%p634) target = $region67
        $region66: #{dense_layer_forward.2} parent=62 // pred_region
          %p637 = scmp.lt.s32.totalorder %s19, 1
          %s638 = scalar_select %p637, %s19, 1
          %s639 = smul.addr %s638, 4
          %s640 = smul.addr %s639, 8
          %s641 = scalar_lea.vmem %s2, %s640
        $region67: #{dense_layer_forward.2} parent=62 // pred_fallthru
          _
      $region63: #{dense_layer_forward.2} parent=5 // pred_fallthru
        _
    $region6: #{dense_layer_forward.2} parent=1 // loop_footer
      %s12 = sadd.s32 1, %s8
    $region7: #{dense_layer_forward.2} parent=1 // loop_footer_branch
      %7 = sbr.rel target = $region3
    $region8: #{dense_layer_forward.2} parent=1 // loop_exit
      _

// kernel: dense_layer_forward.3
$region0: #{dense_layer_forward.3}
  #allocation0 [shape = 'u32[]', space=smem, size = 0x4, offset = 0x4, fixed_abs, tag = 'smem constant byte address 0x4 - core index']
  #allocation1 [shape = 'u32[144,128]{1,0:T(1,128)}', space=vmem, size = 0x12000, scoped, tag = 'internal scratch']
  #allocation2 [shape = 'bf16[32,1280]{1,0:T(16,128)(2,1)}', space=vmem, size = 0x14000, scoped, tag = 'scratch operand']
  %s0 = inlined_call_operand.vmem [shape: bf16[9,4096], index: 0, kind: input, shape index: {}, may-alias: {0,1,2}]
  %s1 = inlined_call_operand.vmem [shape: bf16[9,4096], index: 1, kind: input, shape index: {}, may-alias: {0,1,2}]
  %s2 = inlined_call_operand.vmem [shape: bf16[9,4096], index: 2, kind: input, shape index: {}, may-alias: {0,1,2}]
  %s3 = inlined_call_operand.vmem [shape: bf16[32,8], index: 3, kind: input, shape index: {}]
  %s4 = inlined_call_operand.vmem [shape: f32[32,1], index: 4, kind: input, shape index: {}]
  %s5 = inlined_call_operand.vmem [shape: bf16[27,8,32], index: 5, kind: input, shape index: {}]
  %s6 = inlined_call_operand.vmem [shape: f32[8,2048], index: 6, kind: output, shape index: {}]
  %s7 = sld [smem:[#allocation0]]
  $region162: #{dense_layer_forward.3} parent=0
    _
  %s9 = ssub.s32 1, %s7
  %s10 = scalar_select 0, %s9, %s7
  $region1: #{dense_layer_forward.3} parent=0
    #allocation3 [shape = 'u8[8192]{0}', space=vmem, size = 0x2000, scoped, tag = 'input window, operand 0']
    #allocation4 [shape = 'u8[65536]{0}', space=vmem, size = 0x10000, scoped, tag = 'input window, operand 1']
    #allocation5 [shape = 'u8[8192]{0}', space=vmem, size = 0x2000, scoped, tag = 'input window, operand 2']
    loop: start=0, step=1, limit=4
    $region2: #{dense_layer_forward.3} parent=1 // loop_pre_header
      _
    $region3: #{dense_layer_forward.3} parent=1 // loop_header
      %s12 = sphi 0, %s16
      %p13 = scmp.ge.s32.totalorder %s12, 4
      %s28 = sphi 0, %s30
      %s31 = sphi 0, %s28
      %s32 = sphi 0, %s31
      %s48 = sphi 0, %s32
      %s56 = sphi 0, %s58
      %s59 = sphi 0, %s56
      %s60 = sphi 0, %s59
      %s76 = sphi 0, %s60
      %s86 = sphi 0, %s88
      %s89 = sphi 0, %s86
      %s90 = sphi 0, %s89
      %s106 = sphi 0, %s90
      %s110 = sphi 0, %s110
      %s112 = sphi 0, %s110
      %s113 = sphi 0, %s112
      %s127 = sphi 0, %s113
      %s131 = sphi 0, %s131
      %s133 = sphi 0, %s131
      %s134 = sphi 0, %s133
      %s148 = sphi 0, %s134
      %s152 = sphi 0, %s152
      %s154 = sphi 0, %s152
      %s155 = sphi 0, %s154
      %s169 = sphi 0, %s155
      %s175 = sphi 0, %s177
      %s178 = sphi 0, %s175
      %s179 = sphi 0, %s178
      %s195 = sphi 0, %s179
    $region4: #{dense_layer_forward.3} parent=1 // loop_header_branch
      %15 = sbr.rel (%p13) target = $region8
    $region5: #{dense_layer_forward.3} parent=1 // loop_body
      %s17 = ssub.s32 %s12, 1
      %s18 = ssub.s32 %s12, 2
      %s19 = sadd.s32 %s12, 1
      %s20 = sadd.s32 %s12, 1
      %s21 = smul.u32 %s20, 8
      %s22 = ssub.s32 %s21, 1
      %s23 = sadd.s32 %s19, 1
      %s24 = smul.u32 %s23, 8
      %s25 = ssub.s32 %s24, 1
      %s26 = ssub.s32 %s22, %s25
      %p27 = scmp.eq.s32.totalorder %s26, 0
      %s29 = sadd.s32 %s28, 1
      %s30 = scalar_select %p27, %s28, %s29
      %p33 = pneg %p27
      %p34 = scmp.eq.s32.totalorder %s12, 1
      %p35 = por %p33, %p34
      %p36 = scmp.ne.s32.totalorder %s28, %s31
      %p37 = scmp.eq.s32.totalorder %s12, 0
      %p38 = por %p36, %p37
      %p39 = scmp.ne.s32.totalorder %s28, %s31
      %p40 = scmp.eq.s32.totalorder %s17, 1
      %p41 = por %p39, %p40
      %p42 = scmp.ne.s32.totalorder %s31, %s32
      %p43 = scmp.eq.s32.totalorder %s17, 0
      %p44 = por %p42, %p43
      %p45 = scmp.ne.s32.totalorder %s31, %s32
      %p46 = scmp.eq.s32.totalorder %s18, 1
      %p47 = por %p45, %p46
      %p49 = scmp.ne.s32.totalorder %s32, %s48
      %p50 = scmp.eq.s32.totalorder %s18, 0
      %p51 = por %p49, %p50
      %s52 = sadd.s32 %s12, 1
      %s53 = sadd.s32 %s19, 1
      %s54 = ssub.s32 %s52, %s53
      %p55 = scmp.eq.s32.totalorder %s54, 0
      %s57 = sadd.s32 %s56, 1
      %s58 = scalar_select %p55, %s56, %s57
      %p61 = pneg %p55
      %p62 = scmp.eq.s32.totalorder %s12, 1
      %p63 = por %p61, %p62
      %p64 = scmp.ne.s32.totalorder %s56, %s59
      %p65 = scmp.eq.s32.totalorder %s12, 0
      %p66 = por %p64, %p65
      %p67 = scmp.ne.s32.totalorder %s56, %s59
      %p68 = scmp.eq.s32.totalorder %s17, 1
      %p69 = por %p67, %p68
      %p70 = scmp.ne.s32.totalorder %s59, %s60
      %p71 = scmp.eq.s32.totalorder %s17, 0
      %p72 = por %p70, %p71
      %p73 = scmp.ne.s32.totalorder %s59, %s60
      %p74 = scmp.eq.s32.totalorder %s18, 1
      %p75 = por %p73, %p74
      %p77 = scmp.ne.s32.totalorder %s60, %s76
      %p78 = scmp.eq.s32.totalorder %s18, 0
      %p79 = por %p77, %p78
      %s80 = sadd.s32 %s12, 2
      %s81 = smul.u32 %s80, 8
      %s82 = sadd.s32 %s19, 2
      %s83 = smul.u32 %s82, 8
      %s84 = ssub.s32 %s81, %s83
      %p85 = scmp.eq.s32.totalorder %s84, 0
      %s87 = sadd.s32 %s86, 1
      %s88 = scalar_select %p85, %s86, %s87
      %p91 = pneg %p85
      %p92 = scmp.eq.s32.totalorder %s12, 1
      %p93 = por %p91, %p92
      %p94 = scmp.ne.s32.totalorder %s86, %s89
      %p95 = scmp.eq.s32.totalorder %s12, 0
      %p96 = por %p94, %p95
      %p97 = scmp.ne.s32.totalorder %s86, %s89
      %p98 = scmp.eq.s32.totalorder %s17, 1
      %p99 = por %p97, %p98
      %p100 = scmp.ne.s32.totalorder %s89, %s90
      %p101 = scmp.eq.s32.totalorder %s17, 0
      %p102 = por %p100, %p101
      %p103 = scmp.ne.s32.totalorder %s89, %s90
      %p104 = scmp.eq.s32.totalorder %s18, 1
      %p105 = por %p103, %p104
      %p107 = scmp.ne.s32.totalorder %s90, %s106
      %p108 = scmp.eq.s32.totalorder %s18, 0
      %p109 = por %p107, %p108
      %s111 = sadd.s32 %s110, 1
      %p114 = scmp.eq.s32.totalorder %s12, 1
      %p115 = scmp.ne.s32.totalorder %s110, %s112
      %p116 = scmp.eq.s32.totalorder %s12, 0
      %p117 = por %p115, %p116
      %p118 = scmp.ne.s32.totalorder %s110, %s112
      %p119 = scmp.eq.s32.totalorder %s17, 1
      %p120 = por %p118, %p119
      %p121 = scmp.ne.s32.totalorder %s112, %s113
      %p122 = scmp.eq.s32.totalorder %s17, 0
      %p123 = por %p121, %p122
      %p124 = scmp.ne.s32.totalorder %s112, %s113
      %p125 = scmp.eq.s32.totalorder %s18, 1
      %p126 = por %p124, %p125
      %p128 = scmp.ne.s32.totalorder %s113, %s127
      %p129 = scmp.eq.s32.totalorder %s18, 0
      %p130 = por %p128, %p129
      %s132 = sadd.s32 %s131, 1
      %p135 = scmp.eq.s32.totalorder %s12, 1
      %p136 = scmp.ne.s32.totalorder %s131, %s133
      %p137 = scmp.eq.s32.totalorder %s12, 0
      %p138 = por %p136, %p137
      %p139 = scmp.ne.s32.totalorder %s131, %s133
      %p140 = scmp.eq.s32.totalorder %s17, 1
      %p141 = por %p139, %p140
      %p142 = scmp.ne.s32.totalorder %s133, %s134
      %p143 = scmp.eq.s32.totalorder %s17, 0
      %p144 = por %p142, %p143
      %p145 = scmp.ne.s32.totalorder %s133, %s134
      %p146 = scmp.eq.s32.totalorder %s18, 1
      %p147 = por %p145, %p146
      %p149 = scmp.ne.s32.totalorder %s134, %s148
      %p150 = scmp.eq.s32.totalorder %s18, 0
      %p151 = por %p149, %p150
      %s153 = sadd.s32 %s152, 1
      %p156 = scmp.eq.s32.totalorder %s12, 1
      %p157 = scmp.ne.s32.totalorder %s152, %s154
      %p158 = scmp.eq.s32.totalorder %s12, 0
      %p159 = por %p157, %p158
      %p160 = scmp.ne.s32.totalorder %s152, %s154
      %p161 = scmp.eq.s32.totalorder %s17, 1
      %p162 = por %p160, %p161
      %p163 = scmp.ne.s32.totalorder %s154, %s155
      %p164 = scmp.eq.s32.totalorder %s17, 0
      %p165 = por %p163, %p164
      %p166 = scmp.ne.s32.totalorder %s154, %s155
      %p167 = scmp.eq.s32.totalorder %s18, 1
      %p168 = por %p166, %p167
      %p170 = scmp.ne.s32.totalorder %s155, %s169
      %p171 = scmp.eq.s32.totalorder %s18, 0
      %p172 = por %p170, %p171
      %s173 = ssub.s32 %s12, %s19
      %p174 = scmp.eq.s32.totalorder %s173, 0
      %s176 = sadd.s32 %s175, 1
      %s177 = scalar_select %p174, %s175, %s176
      %p180 = pneg %p174
      %p181 = scmp.eq.s32.totalorder %s12, 1
      %p182 = por %p180, %p181
      %p183 = scmp.ne.s32.totalorder %s175, %s178
      %p184 = scmp.eq.s32.totalorder %s12, 0
      %p185 = por %p183, %p184
      %p186 = scmp.ne.s32.totalorder %s175, %s178
      %p187 = scmp.eq.s32.totalorder %s17, 1
      %p188 = por %p186, %p187
      %p189 = scmp.ne.s32.totalorder %s178, %s179
      %p190 = scmp.eq.s32.totalorder %s17, 0
      %p191 = por %p189, %p190
      %p192 = scmp.ne.s32.totalorder %s178, %s179
      %p193 = scmp.eq.s32.totalorder %s18, 1
      %p194 = por %p192, %p193
      %p196 = scmp.ne.s32.totalorder %s179, %s195
      %p197 = scmp.eq.s32.totalorder %s18, 0
      %p198 = por %p196, %p197
      %p199 = scmp.le.s32.totalorder 1, %s12
      %p200 = scmp.lt.s32.totalorder %s12, 3
      %p201 = pnand %p199, %p200
      %p202 = pneg %p201
      // Predicated region
      $region9: #{dense_layer_forward.3} parent=5 // pred_check
        _
      $region10: #{dense_layer_forward.3} parent=5 // pred_check_branch
        %204 = sbr.rel (%p201) target = $region12
      $region11: #{dense_layer_forward.3} parent=5 // pred_region
        %s205 = ssub.s32 %s12, 1
        // Predicated region
        $region13: #{dense_layer_forward.3} parent=11 // pred_check
          %p206 = pneg %p123
        $region14: #{dense_layer_forward.3} parent=11 // pred_check_branch
          %208 = sbr.rel (%p206) target = $region16
        $region15: #{dense_layer_forward.3} parent=11 // pred_region
          _
        $region16: #{dense_layer_forward.3} parent=11 // pred_fallthru
          _
        // Predicated region
        $region17: #{dense_layer_forward.3} parent=11 // pred_check
          %p209 = pneg %p144
        $region18: #{dense_layer_forward.3} parent=11 // pred_check_branch
          %211 = sbr.rel (%p209) target = $region20
        $region19: #{dense_layer_forward.3} parent=11 // pred_region
          _
        $region20: #{dense_layer_forward.3} parent=11 // pred_fallthru
          _
        // Predicated region
        $region21: #{dense_layer_forward.3} parent=11 // pred_check
          %p212 = pneg %p165
        $region22: #{dense_layer_forward.3} parent=11 // pred_check_branch
          %214 = sbr.rel (%p212) target = $region24
        $region23: #{dense_layer_forward.3} parent=11 // pred_region
          _
        $region24: #{dense_layer_forward.3} parent=11 // pred_fallthru
          _
      $region12: #{dense_layer_forward.3} parent=5 // pred_fallthru
        _
      %p215 = scmp.lt.s32.totalorder %s12, 2
      // Predicated region
      $region25: #{dense_layer_forward.3} parent=5 // pred_check
        %p216 = pneg %p215
      $region26: #{dense_layer_forward.3} parent=5 // pred_check_branch
        %218 = sbr.rel (%p216) target = $region28
      $region27: #{dense_layer_forward.3} parent=5 // pred_region
        // Predicated region
        $region29: #{dense_layer_forward.3} parent=27 // pred_check
          %p219 = pneg %p38
        $region30: #{dense_layer_forward.3} parent=27 // pred_check_branch
          %221 = sbr.rel (%p219) target = $region32
        $region31: #{dense_layer_forward.3} parent=27 // pred_region
          %s222 = sand.u32 %s28, 1
          %s223 = sand.u32 %s28, 1
          %s224 = smul.addr %s223, 8
          %s225 = scalar_lea.vmem [#allocation3], %s224
          %s226 = sadd.s32 %s12, 1
          %s227 = smul.u32 %s226, 8
          %s228 = ssub.s32 %s227, 1
          %s229 = smul.addr %s228, 4
          %s230 = scalar_lea.vmem %s0, %s229
          // Predicated region
          $region33: #{dense_layer_forward.3} parent=31 // pred_check
            _
          $region34: #{dense_layer_forward.3} parent=31 // pred_check_branch
            %232 = sbr.rel (0) target = $region36
          $region35: #{dense_layer_forward.3} parent=31 // pred_region
            // Predicated region
            $region37: #{dense_layer_forward.3} parent=35 // pred_check
              _
            $region38: #{dense_layer_forward.3} parent=35 // pred_check_branch
              %234 = sbr.rel target = $region40
            $region39: #{dense_layer_forward.3} parent=35 // pred_region
              // Predicated region
              $region52: #{dense_layer_forward.3} parent=39 // pred_check
                _
              $region53: #{dense_layer_forward.3} parent=39 // pred_check_branch
                %251 = sbr.rel (0) target = $region55
              $region54: #{dense_layer_forward.3} parent=39 // pred_region
                loop: start=0, step=1, limit=1
                $region56: #{dense_layer_forward.3} parent=54 // loop_pre_header
                  _
                $region57: #{dense_layer_forward.3} parent=54 // loop_header
                  %s253 = sphi 0, %s257
                  %p254 = scmp.ge.s32.totalorder %s253, 1
                  %s258 = sphi %s230, %s230
                  %s259 = sphi %s225, %s225
                $region58: #{dense_layer_forward.3} parent=54 // loop_header_branch
                  %256 = sbr.rel (%p254) target = $region62
                $region59: #{dense_layer_forward.3} parent=54 // loop_body
                  _
                $region60: #{dense_layer_forward.3} parent=54 // loop_footer
                  %s257 = sadd.s32 1, %s253
                $region61: #{dense_layer_forward.3} parent=54 // loop_footer_branch
                  %252 = sbr.rel target = $region57
                $region62: #{dense_layer_forward.3} parent=54 // loop_exit
                  _
                loop: start=0, step=1, limit=1
                $region63: #{dense_layer_forward.3} parent=54 // loop_pre_header
                  _
                $region64: #{dense_layer_forward.3} parent=54 // loop_header
                  %s262 = sphi 0, %s266
                  %p263 = scmp.ge.s32.totalorder %s262, 1
                  %s267 = sphi %s230, %s230
                  %s268 = sphi %s225, %s225
                $region65: #{dense_layer_forward.3} parent=54 // loop_header_branch
                  %265 = sbr.rel (%p263) target = $region69
                $region66: #{dense_layer_forward.3} parent=54 // loop_body
                  %v269 = vld [vmem:[%s267] sm:$0xf]
                  %270 = vst [vmem:[%s268] sm:$0xf] %v269
                  %v271 = vld [vmem:[%s267 + $0x80] sm:$0xf]
                  %272 = vst [vmem:[%s268 + $0x4] sm:$0xf] %v271
                $region67: #{dense_layer_forward.3} parent=54 // loop_footer
                  %s266 = sadd.s32 1, %s262
                $region68: #{dense_layer_forward.3} parent=54 // loop_footer_branch
                  %261 = sbr.rel target = $region64
                $region69: #{dense_layer_forward.3} parent=54 // loop_exit
                  _
              $region55: #{dense_layer_forward.3} parent=39 // pred_fallthru
                _
            $region40: #{dense_layer_forward.3} parent=35 // pred_fallthru
              _
            // Predicated region
            $region41: #{dense_layer_forward.3} parent=35 // pred_check
              _
            $region42: #{dense_layer_forward.3} parent=35 // pred_check_branch
              %236 = sbr.rel (0) target = $region44
            $region43: #{dense_layer_forward.3} parent=35 // pred_region
              loop: start=0, step=1, limit=1
              $region45: #{dense_layer_forward.3} parent=43 // loop_pre_header
                _
              $region46: #{dense_layer_forward.3} parent=43 // loop_header
                %s239 = sphi 0, %s243
                %p240 = scmp.ge.s32.totalorder %s239, 1
                %s244 = sphi %s230, %s230
                %s245 = sphi %s225, %s225
              $region47: #{dense_layer_forward.3} parent=43 // loop_header_branch
                %242 = sbr.rel (%p240) target = $region51
              $region48: #{dense_layer_forward.3} parent=43 // loop_body
                %v246 = vld [vmem:[%s244] sm:$0xf]
                %247 = vst [vmem:[%s245] sm:$0xf] %v246
                %v248 = vld [vmem:[%s244 + $0x80] sm:$0xf]
                %249 = vst [vmem:[%s245 + $0x4] sm:$0xf] %v248
              $region49: #{dense_layer_forward.3} parent=43 // loop_footer
                %s243 = sadd.s32 1, %s239
              $region50: #{dense_layer_forward.3} parent=43 // loop_footer_branch
                %238 = sbr.rel target = $region46
              $region51: #{dense_layer_forward.3} parent=43 // loop_exit
                _
            $region44: #{dense_layer_forward.3} parent=35 // pred_fallthru
              _
          $region36: #{dense_layer_forward.3} parent=31 // pred_fallthru
            _
          %273 = vnop
        $region32: #{dense_layer_forward.3} parent=27 // pred_fallthru
          _
        // Predicated region
        $region70: #{dense_layer_forward.3} parent=27 // pred_check
          %p274 = pneg %p66
        $region71: #{dense_layer_forward.3} parent=27 // pred_check_branch
          %276 = sbr.rel (%p274) target = $region73
        $region72: #{dense_layer_forward.3} parent=27 // pred_region
          %s277 = sand.u32 %s56, 1
          %s278 = sand.u32 %s56, 1
          %s279 = smul.addr %s278, 64
          %s280 = scalar_lea.vmem [#allocation4], %s279
          %s281 = sadd.s32 %s12, 1
          %s282 = smul.u32 8, %s281
          %s283 = smul.addr %s282, 4
          %s284 = scalar_lea.vmem %s1, %s283
          // Predicated region
          $region74: #{dense_layer_forward.3} parent=72 // pred_check
            _
          $region75: #{dense_layer_forward.3} parent=72 // pred_check_branch
            %286 = sbr.rel (0) target = $region77
          $region76: #{dense_layer_forward.3} parent=72 // pred_region
            // Predicated region
            $region78: #{dense_layer_forward.3} parent=76 // pred_check
              _
            $region79: #{dense_layer_forward.3} parent=76 // pred_check_branch
              %288 = sbr.rel (0) target = $region81
            $region80: #{dense_layer_forward.3} parent=76 // pred_region
              loop: start=0, step=1, limit=1
              $region82: #{dense_layer_forward.3} parent=80 // loop_pre_header
                _
              $region83: #{dense_layer_forward.3} parent=80 // loop_header
                %s290 = sphi 0, %s294
                %p291 = scmp.ge.s32.totalorder %s290, 1
                %s295 = sphi %s284, %s284
                %s296 = sphi %s280, %s280
              $region84: #{dense_layer_forward.3} parent=80 // loop_header_branch
                %293 = sbr.rel (%p291) target = $region88
              $region85: #{dense_layer_forward.3} parent=80 // loop_body
                %v297 = vld [vmem:[%s295] sm:$0xff]
                %298 = vst [vmem:[%s296] sm:$0xff] %v297
                %v299 = vld [vmem:[%s295 + $0x8] sm:$0xff]
                %300 = vst [vmem:[%s296 + $0x8] sm:$0xff] %v299
                %v301 = vld [vmem:[%s295 + $0x10] sm:$0xff]
                %302 = vst [vmem:[%s296 + $0x10] sm:$0xff] %v301
                %v303 = vld [vmem:[%s295 + $0x18] sm:$0xff]
                %304 = vst [vmem:[%s296 + $0x18] sm:$0xff] %v303
                %v305 = vld [vmem:[%s295 + $0x80] sm:$0xff]
                %306 = vst [vmem:[%s296 + $0x20] sm:$0xff] %v305
                %v307 = vld [vmem:[%s295 + $0x88] sm:$0xff]
                %308 = vst [vmem:[%s296 + $0x28] sm:$0xff] %v307
                %v309 = vld [vmem:[%s295 + $0x90] sm:$0xff]
                %310 = vst [vmem:[%s296 + $0x30] sm:$0xff] %v309
                %v311 = vld [vmem:[%s295 + $0x98] sm:$0xff]
                %312 = vst [vmem:[%s296 + $0x38] sm:$0xff] %v311
              $region86: #{dense_layer_forward.3} parent=80 // loop_footer
                %s294 = sadd.s32 1, %s290
              $region87: #{dense_layer_forward.3} parent=80 // loop_footer_branch
                %289 = sbr.rel target = $region83
              $region88: #{dense_layer_forward.3} parent=80 // loop_exit
                _
            $region81: #{dense_layer_forward.3} parent=76 // pred_fallthru
              _
            // Predicated region
            $region89: #{dense_layer_forward.3} parent=76 // pred_check
              _
            $region90: #{dense_layer_forward.3} parent=76 // pred_check_branch
              %314 = sbr.rel target = $region92
            $region91: #{dense_layer_forward.3} parent=76 // pred_region
              _
            $region92: #{dense_layer_forward.3} parent=76 // pred_fallthru
              _
          $region77: #{dense_layer_forward.3} parent=72 // pred_fallthru
            _
          %315 = vnop
        $region73: #{dense_layer_forward.3} parent=27 // pred_fallthru
          _
        // Predicated region
        $region93: #{dense_layer_forward.3} parent=27 // pred_check
          %p316 = pneg %p96
        $region94: #{dense_layer_forward.3} parent=27 // pred_check_branch
          %318 = sbr.rel (%p316) target = $region96
        $region95: #{dense_layer_forward.3} parent=27 // pred_region
          %s319 = sand.u32 %s86, 1
          %s320 = sand.u32 %s86, 1
          %s321 = smul.addr %s320, 8
          %s322 = scalar_lea.vmem [#allocation5], %s321
          %s323 = sadd.s32 %s12, 2
          %s324 = smul.u32 %s323, 8
          %s325 = smul.addr %s324, 4
          %s326 = scalar_lea.vmem %s2, %s325
          // Predicated region
          $region97: #{dense_layer_forward.3} parent=95 // pred_check
            _
          $region98: #{dense_layer_forward.3} parent=95 // pred_check_branch
            %328 = sbr.rel (0) target = $region100
          $region99: #{dense_layer_forward.3} parent=95 // pred_region
            // Predicated region
            $region101: #{dense_layer_forward.3} parent=99 // pred_check
              _
            $region102: #{dense_layer_forward.3} parent=99 // pred_check_branch
              %330 = sbr.rel target = $region104
            $region103: #{dense_layer_forward.3} parent=99 // pred_region
              // Predicated region
              $region116: #{dense_layer_forward.3} parent=103 // pred_check
                _
              $region117: #{dense_layer_forward.3} parent=103 // pred_check_branch
                %347 = sbr.rel (0) target = $region119
              $region118: #{dense_layer_forward.3} parent=103 // pred_region
                loop: start=0, step=1, limit=1
                $region120: #{dense_layer_forward.3} parent=118 // loop_pre_header
                  _
                $region121: #{dense_layer_forward.3} parent=118 // loop_header
                  %s349 = sphi 0, %s353
                  %p350 = scmp.ge.s32.totalorder %s349, 1
                  %s354 = sphi %s326, %s326
                  %s355 = sphi %s322, %s322
                $region122: #{dense_layer_forward.3} parent=118 // loop_header_branch
                  %352 = sbr.rel (%p350) target = $region126
                $region123: #{dense_layer_forward.3} parent=118 // loop_body
                  _
                $region124: #{dense_layer_forward.3} parent=118 // loop_footer
                  %s353 = sadd.s32 1, %s349
                $region125: #{dense_layer_forward.3} parent=118 // loop_footer_branch
                  %348 = sbr.rel target = $region121
                $region126: #{dense_layer_forward.3} parent=118 // loop_exit
                  _
                loop: start=0, step=1, limit=1
                $region127: #{dense_layer_forward.3} parent=118 // loop_pre_header
                  _
                $region128: #{dense_layer_forward.3} parent=118 // loop_header
                  %s358 = sphi 0, %s362
                  %p359 = scmp.ge.s32.totalorder %s358, 1
                  %s363 = sphi %s326, %s326
                  %s364 = sphi %s322, %s322
                $region129: #{dense_layer_forward.3} parent=118 // loop_header_branch
                  %361 = sbr.rel (%p359) target = $region133
                $region130: #{dense_layer_forward.3} parent=118 // loop_body
                  %v365 = vld [vmem:[%s363] sm:$0xf]
                  %366 = vst [vmem:[%s364] sm:$0xf] %v365
                  %v367 = vld [vmem:[%s363 + $0x80] sm:$0xf]
                  %368 = vst [vmem:[%s364 + $0x4] sm:$0xf] %v367
                $region131: #{dense_layer_forward.3} parent=118 // loop_footer
                  %s362 = sadd.s32 1, %s358
                $region132: #{dense_layer_forward.3} parent=118 // loop_footer_branch
                  %357 = sbr.rel target = $region128
                $region133: #{dense_layer_forward.3} parent=118 // loop_exit
                  _
              $region119: #{dense_layer_forward.3} parent=103 // pred_fallthru
                _
            $region104: #{dense_layer_forward.3} parent=99 // pred_fallthru
              _
            // Predicated region
            $region105: #{dense_layer_forward.3} parent=99 // pred_check
              _
            $region106: #{dense_layer_forward.3} parent=99 // pred_check_branch
              %332 = sbr.rel (0) target = $region108
            $region107: #{dense_layer_forward.3} parent=99 // pred_region
              loop: start=0, step=1, limit=1
              $region109: #{dense_layer_forward.3} parent=107 // loop_pre_header
                _
              $region110: #{dense_layer_forward.3} parent=107 // loop_header
                %s335 = sphi 0, %s339
                %p336 = scmp.ge.s32.totalorder %s335, 1
                %s340 = sphi %s326, %s326
                %s341 = sphi %s322, %s322
              $region111: #{dense_layer_forward.3} parent=107 // loop_header_branch
                %338 = sbr.rel (%p336) target = $region115
              $region112: #{dense_layer_forward.3} parent=107 // loop_body
                %v342 = vld [vmem:[%s340] sm:$0xf]
                %343 = vst [vmem:[%s341] sm:$0xf] %v342
                %v344 = vld [vmem:[%s340 + $0x80] sm:$0xf]
                %345 = vst [vmem:[%s341 + $0x4] sm:$0xf] %v344
              $region113: #{dense_layer_forward.3} parent=107 // loop_footer
                %s339 = sadd.s32 1, %s335
              $region114: #{dense_layer_forward.3} parent=107 // loop_footer_branch
                %334 = sbr.rel target = $region110
              $region115: #{dense_layer_forward.3} parent=107 // loop_exit
                _
            $region108: #{dense_layer_forward.3} parent=99 // pred_fallthru
              _
          $region100: #{dense_layer_forward.3} parent=95 // pred_fallthru
            _
          %369 = vnop
        $region96: #{dense_layer_forward.3} parent=27 // pred_fallthru
          _
      $region28: #{dense_layer_forward.3} parent=5 // pred_fallthru
        _
      %p370 = scmp.le.s32.totalorder 1, %s12
      %p371 = scmp.lt.s32.totalorder %s12, 3
      %p372 = pnand %p370, %p371
      %p373 = pneg %p372
      // Predicated region
      $region134: #{dense_layer_forward.3} parent=5 // pred_check
        _
      $region135: #{dense_layer_forward.3} parent=5 // pred_check_branch
        %375 = sbr.rel (%p372) target = $region137
      $region136: #{dense_layer_forward.3} parent=5 // pred_region
        %s376 = ssub.s32 %s12, 1
        %s377 = sand.u32 %s31, 1
        %s378 = sand.u32 %s31, 1
        %s379 = smul.addr %s378, 8
        %s380 = scalar_lea.vmem [#allocation3], %s379
        // Predicated region
        $region138: #{dense_layer_forward.3} parent=136 // pred_check
          %p381 = pneg %p44
        $region139: #{dense_layer_forward.3} parent=136 // pred_check_branch
          %383 = sbr.rel (%p381) target = $region141
        $region140: #{dense_layer_forward.3} parent=136 // pred_region
          _
        $region141: #{dense_layer_forward.3} parent=136 // pred_fallthru
          _
        %s384 = sand.u32 %s59, 1
        %s385 = sand.u32 %s59, 1
        %s386 = smul.addr %s385, 64
        %s387 = scalar_lea.vmem [#allocation4], %s386
        // Predicated region
        $region142: #{dense_layer_forward.3} parent=136 // pred_check
          %p388 = pneg %p72
        $region143: #{dense_layer_forward.3} parent=136 // pred_check_branch
          %390 = sbr.rel (%p388) target = $region145
        $region144: #{dense_layer_forward.3} parent=136 // pred_region
          _
        $region145: #{dense_layer_forward.3} parent=136 // pred_fallthru
          _
        %s391 = sand.u32 %s89, 1
        %s392 = sand.u32 %s89, 1
        %s393 = smul.addr %s392, 8
        %s394 = scalar_lea.vmem [#allocation5], %s393
        // Predicated region
        $region146: #{dense_layer_forward.3} parent=136 // pred_check
          %p395 = pneg %p102
        $region147: #{dense_layer_forward.3} parent=136 // pred_check_branch
          %397 = sbr.rel (%p395) target = $region149
        $region148: #{dense_layer_forward.3} parent=136 // pred_region
          _
        $region149: #{dense_layer_forward.3} parent=136 // pred_fallthru
          _
        %s398 = sand.u32 %s31, 1
        %s399 = sand.u32 %s31, 1
        %s400 = smul.addr %s399, 8
        %s401 = scalar_lea.vmem [#allocation3], %s400
        %p402 = pneg %p44
        %p403 = pneg %p41
        %s404 = sand.u32 %s59, 1
        %s405 = sand.u32 %s59, 1
        %s406 = smul.addr %s405, 64
        %s407 = scalar_lea.vmem [#allocation4], %s406
        %p408 = pneg %p72
        %p409 = pneg %p69
        %s410 = sand.u32 %s89, 1
        %s411 = sand.u32 %s89, 1
        %s412 = smul.addr %s411, 8
        %s413 = scalar_lea.vmem [#allocation5], %s412
        %p414 = pneg %p102
        %p415 = pneg %p99
        %p416 = pneg %p123
        %p417 = pneg %p120
        %p418 = pneg %p144
        %p419 = pneg %p141
        %p420 = pneg %p165
        %p421 = pneg %p162
        %p422 = pneg %p191
        %p423 = pneg %p188
        %s424 = smul.u32 8, %s17
        %p425 = scmp.lt.s32.totalorder %s424, 15
        %s426 = scalar_select %p425, %s424, 15
        %s427 = smul.addr %s426, 8
        %s428 = scalar_lea.vmem %s6, %s427
        %s429 = sadd.s32 %s17, 1
        %s430 = smul.u32 %s429, 8
        %s431 = ssub.s32 %s430, 1
        %s432 = sadd.s32 %s17, 1
        %s433 = smul.u32 8, %s432
        %s434 = sadd.s32 %s17, 2
        %s435 = smul.u32 %s434, 8
        %s436 = smul.u32 8, %s17
        %p437 = scmp.lt.s32.totalorder %s436, 15
        %s438 = scalar_select %p437, %s436, 15
        %s439 = smul.addr %s438, 8
        %s440 = scalar_lea.vmem %s6, %s439
        %s441 = smul.u32 8, %s17
        %v443 = vld [vmem:[%s380] sm:$0xf]
        %v444 = vld [vmem:[%s380 + $0x4] sm:$0x1]
        %v445 = vunpack.c.l.bf16 %v444
        %v446 = vld [vmem:[%s3] sm:$0xf]
        %v447 = vld [vmem:[%s3 + $0x4] sm:$0xf]
        %v448 = vld [vmem:[%s3 + $0x8] sm:$0xf]
        %v449 = vld [vmem:[%s3 + $0xc] sm:$0xf]
        %v450 = vld [vmem:[%s4] sm:$0xff]
        %v451 = vld [vmem:[%s4 + $0x8] sm:$0xff]
        %v452 = vld [vmem:[%s4 + $0x10] sm:$0xff]
        %v453 = vld [vmem:[%s4 + $0x18] sm:$0xff]
        %455 = vset.pattern.permute.xlu0 0
        %456 = vperm.xlu0 %455, %v450
        %v457 = vpop.permute.xlu0 %456
        %460 = vset.pattern.permute.xlu0 0
        %461 = vperm.xlu0 %460, %v451
        %v462 = vpop.permute.xlu0 %461
        %465 = vset.pattern.permute.xlu0 0
        %466 = vperm.xlu0 %465, %v452
        %v467 = vpop.permute.xlu0 %466
        %470 = vset.pattern.permute.xlu0 0
        %471 = vperm.xlu0 %470, %v453
        %v472 = vpop.permute.xlu0 %471
        %v478 = vunpack.c.l.b16 %v446
        %v479 = vunpack.c.l.b16 %v447
        %v480 = vunpack.c.l.b16 %v448
        %v481 = vunpack.c.l.b16 %v449
        %v482 = vpack.c.b16 %v479, %v478
        %v483 = vpack.c.b16 %v481, %v480
        %vm484 = vcmask 64512
        %v486 = vsel %vm484, %v482, 0
        %v489 = vsel %vm484, %v483, 0
        %vm491 = vcmask 1043456
        %v493 = vsel %vm491, %v443, 0
        %495 = vmatprep.subr.bf16.mxu0 0
        %496 = vmatpush1.bf16.msra.mxu0 %v493
        %497 = vmatprep.subr.bf16.mxu0 0
        %498 = vmatpush1.bf16.msra.mxu0 0
        %499 = vmatprep.subr.bf16.mxu0 0
        %500 = vmatpush1.bf16.msra.mxu0 0
        %501 = vmatprep.subr.bf16.mxu0 0
        %502 = vmatpush1.bf16.msra.mxu0 0
        %503 = vmatprep.subr.bf16.mxu0 0
        %504 = vmatpush1.bf16.msra.mxu0 0
        %505 = vmatprep.subr.bf16.mxu0 0
        %506 = vmatpush1.bf16.msra.mxu0 0
        %507 = vmatprep.subr.bf16.mxu0 0
        %508 = vmatpush1.bf16.msra.mxu0 0
        %509 = vmatprep.subr.bf16.mxu0 0
        %510 = vmatpush1.bf16.msra.mxu0 0
        %511 = vmatprep.subr.bf16.mxu0 0
        %512 = vmatpush1.bf16.msra.mxu0 0
        %513 = vmatprep.subr.bf16.mxu0 0
        %514 = vmatpush1.bf16.msra.mxu0 0
        %515 = vmatprep.subr.bf16.mxu0 0
        %516 = vmatpush1.bf16.msra.mxu0 0
        %517 = vmatprep.subr.bf16.mxu0 0
        %518 = vmatpush1.bf16.msra.mxu0 0
        %519 = vmatprep.subr.bf16.mxu0 0
        %520 = vmatpush1.bf16.msra.mxu0 0
        %521 = vmatprep.subr.bf16.mxu0 0
        %522 = vmatpush1.bf16.msra.mxu0 0
        %523 = vmatprep.subr.bf16.mxu0 0
        %524 = vmatpush1.bf16.msra.mxu0 0
        %525 = vmatprep.subr.bf16.mxu0 0
        %526 = vmatpush1.bf16.msra.mxu0 0
        %527 = vmatprep.mubr.bf16.mxu0 0
        %528 = vmatmul.mubr.bf16.gmra.mrb[0].mxu0 %v486
        %v529 = vpop.f32.mrb[0].mxu0
        %v530 = vadd.f32 %v457, %v529
        %v531 = vpop.f32.mrb[0].mxu0
        %v532 = vpop.f32.mrb[0].mxu0
        %v533 = vadd.f32 %v462, %v532
        %v534 = vpop.f32.mrb[0].mxu0
        %535 = vmatprep.mubr.bf16.mxu0 0
        %536 = vmatmul.mubr.bf16.gmra.mrb[0].mxu0 %v489
        %v537 = vpop.f32.mrb[0].mxu0
        %v538 = vadd.f32 %v467, %v537
        %v539 = vpop.f32.mrb[0].mxu0
        %v540 = vpop.f32.mrb[0].mxu0
        %v541 = vadd.f32 %v472, %v540
        %v542 = vpop.f32.mrb[0].mxu0
        %543 = vdwg.mxu0
        %v544 = vmax.f32 %v530, 0.0
        %v545 = vmax.f32 %v533, 0.0
        %v546 = vmax.f32 %v538, 0.0
        %v547 = vmax.f32 %v541, 0.0
        %v548 = vlaneseq
        %v549 = vshrl.u32 %v548, 7
        %v550 = vsub.s32 0, %v549
        %v551 = vrot.slane %v445, %v550
        %v552 = vmul.f32 %v544, %v551
        %v553 = vmul.f32 %v545, %v551
        %v554 = vmul.f32 %v546, %v551
        %v555 = vmul.f32 %v547, %v551
        %v556 = vpack.c.bf16 %v553, %v552
        %v557 = vpack.c.bf16 %v555, %v554
        %558 = vst [vmem:[#allocation2] sm:$0xff] %v556
        %559 = vst [vmem:[#allocation2 + $0x50] sm:$0xff] %v557
        %v560 = vld [vmem:[%s387] sm:$0xff]
        %v561 = vld [vmem:[%s387 + $0x8] sm:$0xff]
        %v562 = vld [vmem:[%s387 + $0x10] sm:$0xff]
        %v563 = vld [vmem:[%s387 + $0x18] sm:$0xff]
        %v564 = vld [vmem:[%s387 + $0x20] sm:$0x11]
        %v565 = vld [vmem:[%s387 + $0x28] sm:$0x11]
        %v566 = vld [vmem:[%s387 + $0x30] sm:$0x11]
        %v567 = vld [vmem:[%s387 + $0x38] sm:$0x11]
        %v568 = vunpack.c.l.bf16 %v564
        %v569 = vunpack.c.h.bf16 %v564
        %v570 = vunpack.c.l.bf16 %v565
        %v571 = vunpack.c.h.bf16 %v565
        %v572 = vunpack.c.l.bf16 %v566
        %v573 = vunpack.c.h.bf16 %v566
        %v574 = vunpack.c.l.bf16 %v567
        %v575 = vunpack.c.h.bf16 %v567
        %v576 = vld [vmem:[%s3] sm:$0xf]
        %v577 = vld [vmem:[%s3 + $0x4] sm:$0xf]
        %v578 = vld [vmem:[%s3 + $0x8] sm:$0xf]
        %v579 = vld [vmem:[%s3 + $0xc] sm:$0xf]
        %v580 = vld [vmem:[%s4] sm:$0xff]
        %v581 = vld [vmem:[%s4 + $0x8] sm:$0xff]
        %v582 = vld [vmem:[%s4 + $0x10] sm:$0xff]
        %v583 = vld [vmem:[%s4 + $0x18] sm:$0xff]
        %585 = vset.pattern.permute.xlu0 0
        %586 = vperm.xlu0 %585, %v580
        %v587 = vpop.permute.xlu0 %586
        %590 = vset.pattern.permute.xlu0 0
        %591 = vperm.xlu0 %590, %v581
        %v592 = vpop.permute.xlu0 %591
        %595 = vset.pattern.permute.xlu0 0
        %596 = vperm.xlu0 %595, %v582
        %v597 = vpop.permute.xlu0 %596
        %600 = vset.pattern.permute.xlu0 0
        %601 = vperm.xlu0 %600, %v583
        %v602 = vpop.permute.xlu0 %601
        %v608 = vunpack.c.l.b16 %v576
        %v609 = vunpack.c.l.b16 %v577
        %v610 = vunpack.c.l.b16 %v578
        %v611 = vunpack.c.l.b16 %v579
        %v612 = vpack.c.b16 %v609, %v608
        %v613 = vpack.c.b16 %v611, %v610
        %v618 = vunpack.c.l.b16 %v560
        %v619 = vunpack.c.h.b16 %v560
        %v620 = vunpack.c.l.b16 %v561
        %v621 = vunpack.c.h.b16 %v561
        %v622 = vunpack.c.l.b16 %v562
        %v623 = vunpack.c.h.b16 %v562
        %v624 = vunpack.c.l.b16 %v563
        %v625 = vunpack.c.h.b16 %v563
        %v626 = vpack.c.b16 %v618, %v618
        %v627 = vpack.c.b16 %v619, %v619
        %v628 = vpack.c.b16 %v620, %v620
        %v629 = vpack.c.b16 %v621, %v621
        %v630 = vpack.c.b16 %v622, %v622
        %v631 = vpack.c.b16 %v623, %v623
        %v632 = vpack.c.b16 %v624, %v624
        %v633 = vpack.c.b16 %v625, %v625
        %v635 = vsel %vm484, %v612, 0
        %v638 = vsel %vm484, %v613, 0
        %v641 = vsel %vm491, %v626, 0
        %v644 = vsel %vm491, %v627, 0
        %v647 = vsel %vm491, %v628, 0
        %v650 = vsel %vm491, %v629, 0
        %v653 = vsel %vm491, %v630, 0
        %v656 = vsel %vm491, %v631, 0
        %v659 = vsel %vm491, %v632, 0
        %v662 = vsel %vm491, %v633, 0
        %664 = vmatprep.subr.bf16.mxu0 %v644
        %665 = vmatpush1.bf16.msra.mxu0 %v641
        %666 = vmatprep.subr.bf16.mxu0 0
        %667 = vmatpush1.bf16.msra.mxu0 0
        %668 = vmatprep.subr.bf16.mxu0 0
        %669 = vmatpush1.bf16.msra.mxu0 0
        %670 = vmatprep.subr.bf16.mxu0 0
        %671 = vmatpush1.bf16.msra.mxu0 0
        %672 = vmatprep.subr.bf16.mxu0 0
        %673 = vmatpush1.bf16.msra.mxu0 0
        %674 = vmatprep.subr.bf16.mxu0 0
        %675 = vmatpush1.bf16.msra.mxu0 0
        %676 = vmatprep.subr.bf16.mxu0 0
        %677 = vmatpush1.bf16.msra.mxu0 0
        %678 = vmatprep.subr.bf16.mxu0 0
        %679 = vmatpush1.bf16.msra.mxu0 0
        %680 = vmatprep.subr.bf16.mxu0 0
        %681 = vmatpush1.bf16.msra.mxu0 0
        %682 = vmatprep.subr.bf16.mxu0 0
        %683 = vmatpush1.bf16.msra.mxu0 0
        %684 = vmatprep.subr.bf16.mxu0 0
        %685 = vmatpush1.bf16.msra.mxu0 0
        %686 = vmatprep.subr.bf16.mxu0 0
        %687 = vmatpush1.bf16.msra.mxu0 0
        %688 = vmatprep.subr.bf16.mxu0 0
        %689 = vmatpush1.bf16.msra.mxu0 0
        %690 = vmatprep.subr.bf16.mxu0 0
        %691 = vmatpush1.bf16.msra.mxu0 0
        %692 = vmatprep.subr.bf16.mxu0 0
        %693 = vmatpush1.bf16.msra.mxu0 0
        %694 = vmatprep.subr.bf16.mxu0 0
        %695 = vmatpush1.bf16.msra.mxu0 0
        %696 = vmatprep.mubr.bf16.mxu0 0
        %697 = vmatmul.mubr.bf16.gmra.mrb[0].mxu0 %v635
        %v698 = vpop.f32.mrb[0].mxu0
        %v699 = vadd.f32 %v587, %v698
        %v700 = vpop.f32.mrb[0].mxu0
        %v701 = vadd.f32 %v587, %v700
        %v702 = vpop.f32.mrb[0].mxu0
        %v703 = vadd.f32 %v592, %v702
        %v704 = vpop.f32.mrb[0].mxu0
        %v705 = vadd.f32 %v592, %v704
        %706 = vmatprep.mubr.bf16.mxu0 0
        %707 = vmatmul.mubr.bf16.gmra.mrb[0].mxu0 %v638
        %v708 = vpop.f32.mrb[0].mxu0
        %v709 = vadd.f32 %v597, %v708
        %v710 = vpop.f32.mrb[0].mxu0
        %v711 = vadd.f32 %v597, %v710
        %v712 = vpop.f32.mrb[0].mxu0
        %v713 = vadd.f32 %v602, %v712
        %v714 = vpop.f32.mrb[0].mxu0
        %v715 = vadd.f32 %v602, %v714
        %716 = vdwg.mxu0
        %717 = vmatprep.subr.bf16.mxu0 %v650
        %718 = vmatpush1.bf16.msra.mxu0 %v647
        %719 = vmatprep.subr.bf16.mxu0 0
        %720 = vmatpush1.bf16.msra.mxu0 0
        %721 = vmatprep.subr.bf16.mxu0 0
        %722 = vmatpush1.bf16.msra.mxu0 0
        %723 = vmatprep.subr.bf16.mxu0 0
        %724 = vmatpush1.bf16.msra.mxu0 0
        %725 = vmatprep.subr.bf16.mxu0 0
        %726 = vmatpush1.bf16.msra.mxu0 0
        %727 = vmatprep.subr.bf16.mxu0 0
        %728 = vmatpush1.bf16.msra.mxu0 0
        %729 = vmatprep.subr.bf16.mxu0 0
        %730 = vmatpush1.bf16.msra.mxu0 0
        %731 = vmatprep.subr.bf16.mxu0 0
        %732 = vmatpush1.bf16.msra.mxu0 0
        %733 = vmatprep.subr.bf16.mxu0 0
        %734 = vmatpush1.bf16.msra.mxu0 0
        %735 = vmatprep.subr.bf16.mxu0 0
        %736 = vmatpush1.bf16.msra.mxu0 0
        %737 = vmatprep.subr.bf16.mxu0 0
        %738 = vmatpush1.bf16.msra.mxu0 0
        %739 = vmatprep.subr.bf16.mxu0 0
        %740 = vmatpush1.bf16.msra.mxu0 0
        %741 = vmatprep.subr.bf16.mxu0 0
        %742 = vmatpush1.bf16.msra.mxu0 0
        %743 = vmatprep.subr.bf16.mxu0 0
        %744 = vmatpush1.bf16.msra.mxu0 0
        %745 = vmatprep.subr.bf16.mxu0 0
        %746 = vmatpush1.bf16.msra.mxu0 0
        %747 = vmatprep.subr.bf16.mxu0 0
        %748 = vmatpush1.bf16.msra.mxu0 0
        %749 = vmatprep.mubr.bf16.mxu0 0
        %750 = vmatmul.mubr.bf16.gmra.mrb[0].mxu0 %v635
        %v751 = vpop.f32.mrb[0].mxu0
        %v752 = vadd.f32 %v587, %v751
        %v753 = vpop.f32.mrb[0].mxu0
        %v754 = vadd.f32 %v587, %v753
        %v755 = vpop.f32.mrb[0].mxu0
        %v756 = vadd.f32 %v592, %v755
        %v757 = vpop.f32.mrb[0].mxu0
        %v758 = vadd.f32 %v592, %v757
        %759 = vmatprep.mubr.bf16.mxu0 0
        %760 = vmatmul.mubr.bf16.gmra.mrb[0].mxu0 %v638
        %v761 = vpop.f32.mrb[0].mxu0
        %v762 = vadd.f32 %v597, %v761
        %v763 = vpop.f32.mrb[0].mxu0
        %v764 = vadd.f32 %v597, %v763
        %v765 = vpop.f32.mrb[0].mxu0
        %v766 = vadd.f32 %v602, %v765
        %v767 = vpop.f32.mrb[0].mxu0
        %v768 = vadd.f32 %v602, %v767
        %769 = vdwg.mxu0
        %770 = vmatprep.subr.bf16.mxu0 %v656
        %771 = vmatpush1.bf16.msra.mxu0 %v653
        %772 = vmatprep.subr.bf16.mxu0 0
        %773 = vmatpush1.bf16.msra.mxu0 0
        %774 = vmatprep.subr.bf16.mxu0 0
        %775 = vmatpush1.bf16.msra.mxu0 0
        %776 = vmatprep.subr.bf16.mxu0 0
        %777 = vmatpush1.bf16.msra.mxu0 0
        %778 = vmatprep.subr.bf16.mxu0 0
        %779 = vmatpush1.bf16.msra.mxu0 0
        %780 = vmatprep.subr.bf16.mxu0 0
        %781 = vmatpush1.bf16.msra.mxu0 0
        %782 = vmatprep.subr.bf16.mxu0 0
        %783 = vmatpush1.bf16.msra.mxu0 0
        %784 = vmatprep.subr.bf16.mxu0 0
        %785 = vmatpush1.bf16.msra.mxu0 0
        %786 = vmatprep.subr.bf16.mxu0 0
        %787 = vmatpush1.bf16.msra.mxu0 0
        %788 = vmatprep.subr.bf16.mxu0 0
        %789 = vmatpush1.bf16.msra.mxu0 0
        %790 = vmatprep.subr.bf16.mxu0 0
        %791 = vmatpush1.bf16.msra.mxu0 0
        %792 = vmatprep.subr.bf16.mxu0 0
        %793 = vmatpush1.bf16.msra.mxu0 0
        %794 = vmatprep.subr.bf16.mxu0 0
        %795 = vmatpush1.bf16.msra.mxu0 0
        %796 = vmatprep.subr.bf16.mxu0 0
        %797 = vmatpush1.bf16.msra.mxu0 0
        %798 = vmatprep.subr.bf16.mxu0 0
        %799 = vmatpush1.bf16.msra.mxu0 0
        %800 = vmatprep.subr.bf16.mxu0 0
        %801 = vmatpush1.bf16.msra.mxu0 0
        %802 = vmatprep.mubr.bf16.mxu0 0
        %803 = vmatmul.mubr.bf16.gmra.mrb[0].mxu0 %v635
        %v804 = vpop.f32.mrb[0].mxu0
        %v805 = vadd.f32 %v587, %v804
        %v806 = vpop.f32.mrb[0].mxu0
        %v807 = vadd.f32 %v587, %v806
        %v808 = vpop.f32.mrb[0].mxu0
        %v809 = vadd.f32 %v592, %v808
        %v810 = vpop.f32.mrb[0].mxu0
        %v811 = vadd.f32 %v592, %v810
        %812 = vmatprep.mubr.bf16.mxu0 0
        %813 = vmatmul.mubr.bf16.gmra.mrb[0].mxu0 %v638
        %v814 = vpop.f32.mrb[0].mxu0
        %v815 = vadd.f32 %v597, %v814
        %v816 = vpop.f32.mrb[0].mxu0
        %v817 = vadd.f32 %v597, %v816
        %v818 = vpop.f32.mrb[0].mxu0
        %v819 = vadd.f32 %v602, %v818
        %v820 = vpop.f32.mrb[0].mxu0
        %v821 = vadd.f32 %v602, %v820
        %822 = vdwg.mxu0
        %823 = vmatprep.subr.bf16.mxu0 %v662
        %824 = vmatpush1.bf16.msra.mxu0 %v659
        %825 = vmatprep.subr.bf16.mxu0 0
        %826 = vmatpush1.bf16.msra.mxu0 0
        %827 = vmatprep.subr.bf16.mxu0 0
        %828 = vmatpush1.bf16.msra.mxu0 0
        %829 = vmatprep.subr.bf16.mxu0 0
        %830 = vmatpush1.bf16.msra.mxu0 0
        %831 = vmatprep.subr.bf16.mxu0 0
        %832 = vmatpush1.bf16.msra.mxu0 0
        %833 = vmatprep.subr.bf16.mxu0 0
        %834 = vmatpush1.bf16.msra.mxu0 0
        %835 = vmatprep.subr.bf16.mxu0 0
        %836 = vmatpush1.bf16.msra.mxu0 0
        %837 = vmatprep.subr.bf16.mxu0 0
        %838 = vmatpush1.bf16.msra.mxu0 0
        %839 = vmatprep.subr.bf16.mxu0 0
        %840 = vmatpush1.bf16.msra.mxu0 0
        %841 = vmatprep.subr.bf16.mxu0 0
        %842 = vmatpush1.bf16.msra.mxu0 0
        %843 = vmatprep.subr.bf16.mxu0 0
        %844 = vmatpush1.bf16.msra.mxu0 0
        %845 = vmatprep.subr.bf16.mxu0 0
        %846 = vmatpush1.bf16.msra.mxu0 0
        %847 = vmatprep.subr.bf16.mxu0 0
        %848 = vmatpush1.bf16.msra.mxu0 0
        %849 = vmatprep.subr.bf16.mxu0 0
        %850 = vmatpush1.bf16.msra.mxu0 0
        %851 = vmatprep.subr.bf16.mxu0 0
        %852 = vmatpush1.bf16.msra.mxu0 0
        %853 = vmatprep.subr.bf16.mxu0 0
        %854 = vmatpush1.bf16.msra.mxu0 0
        %855 = vmatprep.mubr.bf16.mxu0 0
        %856 = vmatmul.mubr.bf16.gmra.mrb[0].mxu0 %v635
        %v857 = vpop.f32.mrb[0].mxu0
        %v858 = vadd.f32 %v587, %v857
        %v859 = vpop.f32.mrb[0].mxu0
        %v860 = vadd.f32 %v587, %v859
        %v861 = vpop.f32.mrb[0].mxu0
        %v862 = vadd.f32 %v592, %v861
        %v863 = vpop.f32.mrb[0].mxu0
        %v864 = vadd.f32 %v592, %v863
        %865 = vmatprep.mubr.bf16.mxu0 0
        %866 = vmatmul.mubr.bf16.gmra.mrb[0].mxu0 %v638
        %v867 = vpop.f32.mrb[0].mxu0
        %v868 = vadd.f32 %v597, %v867
        %v869 = vpop.f32.mrb[0].mxu0
        %v870 = vadd.f32 %v597, %v869
        %v871 = vpop.f32.mrb[0].mxu0
        %v872 = vadd.f32 %v602, %v871
        %v873 = vpop.f32.mrb[0].mxu0
        %v874 = vadd.f32 %v602, %v873
        %875 = vdwg.mxu0
        %v876 = vmax.f32 %v699, 0.0
        %v877 = vmax.f32 %v701, 0.0
        %v878 = vmax.f32 %v752, 0.0
        %v879 = vmax.f32 %v754, 0.0
        %v880 = vmax.f32 %v805, 0.0
        %v881 = vmax.f32 %v807, 0.0
        %v882 = vmax.f32 %v858, 0.0
        %v883 = vmax.f32 %v860, 0.0
        %v884 = vmax.f32 %v703, 0.0
        %v885 = vmax.f32 %v705, 0.0
        %v886 = vmax.f32 %v756, 0.0
        %v887 = vmax.f32 %v758, 0.0
        %v888 = vmax.f32 %v809, 0.0
        %v889 = vmax.f32 %v811, 0.0
        %v890 = vmax.f32 %v862, 0.0
        %v891 = vmax.f32 %v864, 0.0
        %v892 = vmax.f32 %v709, 0.0
        %v893 = vmax.f32 %v711, 0.0
        %v894 = vmax.f32 %v762, 0.0
        %v895 = vmax.f32 %v764, 0.0
        %v896 = vmax.f32 %v815, 0.0
        %v897 = vmax.f32 %v817, 0.0
        %v898 = vmax.f32 %v868, 0.0
        %v899 = vmax.f32 %v870, 0.0
        %v900 = vmax.f32 %v713, 0.0
        %v901 = vmax.f32 %v715, 0.0
        %v902 = vmax.f32 %v766, 0.0
        %v903 = vmax.f32 %v768, 0.0
        %v904 = vmax.f32 %v819, 0.0
        %v905 = vmax.f32 %v821, 0.0
        %v906 = vmax.f32 %v872, 0.0
        %v907 = vmax.f32 %v874, 0.0
        %v908 = vlaneseq
        %v909 = vshrl.u32 %v908, 7
        %v910 = vsub.s32 0, %v909
        %v911 = vrot.slane %v568, %v910
        %v912 = vlaneseq
        %v913 = vshrl.u32 %v912, 7
        %v914 = vsub.s32 0, %v913
        %v915 = vrot.slane %v569, %v914
        %v916 = vlaneseq
        %v917 = vshrl.u32 %v916, 7
        %v918 = vsub.s32 0, %v917
        %v919 = vrot.slane %v570, %v918
        %v920 = vlaneseq
        %v921 = vshrl.u32 %v920, 7
        %v922 = vsub.s32 0, %v921
        %v923 = vrot.slane %v571, %v922
        %v924 = vlaneseq
        %v925 = vshrl.u32 %v924, 7
        %v926 = vsub.s32 0, %v925
        %v927 = vrot.slane %v572, %v926
        %v928 = vlaneseq
        %v929 = vshrl.u32 %v928, 7
        %v930 = vsub.s32 0, %v929
        %v931 = vrot.slane %v573, %v930
        %v932 = vlaneseq
        %v933 = vshrl.u32 %v932, 7
        %v934 = vsub.s32 0, %v933
        %v935 = vrot.slane %v574, %v934
        %v936 = vlaneseq
        %v937 = vshrl.u32 %v936, 7
        %v938 = vsub.s32 0, %v937
        %v939 = vrot.slane %v575, %v938
        %v940 = vmul.f32 %v876, %v911
        %v941 = vmul.f32 %v877, %v915
        %v942 = vmul.f32 %v878, %v919
        %v943 = vmul.f32 %v879, %v923
        %v944 = vmul.f32 %v880, %v927
        %v945 = vmul.f32 %v881, %v931
        %v946 = vmul.f32 %v882, %v935
        %v947 = vmul.f32 %v883, %v939
        %v948 = vmul.f32 %v884, %v911
        %v949 = vmul.f32 %v885, %v915
        %v950 = vmul.f32 %v886, %v919
        %v951 = vmul.f32 %v887, %v923
        %v952 = vmul.f32 %v888, %v927
        %v953 = vmul.f32 %v889, %v931
        %v954 = vmul.f32 %v890, %v935
        %v955 = vmul.f32 %v891, %v939
        %v956 = vmul.f32 %v892, %v911
        %v957 = vmul.f32 %v893, %v915
        %v958 = vmul.f32 %v894, %v919
        %v959 = vmul.f32 %v895, %v923
        %v960 = vmul.f32 %v896, %v927
        %v961 = vmul.f32 %v897, %v931
        %v962 = vmul.f32 %v898, %v935
        %v963 = vmul.f32 %v899, %v939
        %v964 = vmul.f32 %v900, %v911
        %v965 = vmul.f32 %v901, %v915
        %v966 = vmul.f32 %v902, %v919
        %v967 = vmul.f32 %v903, %v923
        %v968 = vmul.f32 %v904, %v927
        %v969 = vmul.f32 %v905, %v931
        %v970 = vmul.f32 %v906, %v935
        %v971 = vmul.f32 %v907, %v939
        %v972 = vpack.c.bf16 %v948, %v940
        %v973 = vpack.c.bf16 %v949, %v941
        %v974 = vpack.c.bf16 %v950, %v942
        %v975 = vpack.c.bf16 %v951, %v943
        %v976 = vpack.c.bf16 %v952, %v944
        %v977 = vpack.c.bf16 %v953, %v945
        %v978 = vpack.c.bf16 %v954, %v946
        %v979 = vpack.c.bf16 %v955, %v947
        %v980 = vpack.c.bf16 %v964, %v956
        %v981 = vpack.c.bf16 %v965, %v957
        %v982 = vpack.c.bf16 %v966, %v958
        %v983 = vpack.c.bf16 %v967, %v959
        %v984 = vpack.c.bf16 %v968, %v960
        %v985 = vpack.c.bf16 %v969, %v961
        %v986 = vpack.c.bf16 %v970, %v962
        %v987 = vpack.c.bf16 %v971, %v963
        %988 = vst [vmem:[#allocation2 + $0x8] sm:$0xff] %v972
        %989 = vst [vmem:[#allocation2 + $0x10] sm:$0xff] %v973
        %990 = vst [vmem:[#allocation2 + $0x18] sm:$0xff] %v974
        %991 = vst [vmem:[#allocation2 + $0x20] sm:$0xff] %v975
        %992 = vst [vmem:[#allocation2 + $0x28] sm:$0xff] %v976
        %993 = vst [vmem:[#allocation2 + $0x30] sm:$0xff] %v977
        %994 = vst [vmem:[#allocation2 + $0x38] sm:$0xff] %v978
        %995 = vst [vmem:[#allocation2 + $0x40] sm:$0xff] %v979
        %996 = vst [vmem:[#allocation2 + $0x58] sm:$0xff] %v980
        %997 = vst [vmem:[#allocation2 + $0x60] sm:$0xff] %v981
        %998 = vst [vmem:[#allocation2 + $0x68] sm:$0xff] %v982
        %999 = vst [vmem:[#allocation2 + $0x70] sm:$0xff] %v983
        %1000 = vst [vmem:[#allocation2 + $0x78] sm:$0xff] %v984
        %1001 = vst [vmem:[#allocation2 + $0x80] sm:$0xff] %v985
        %1002 = vst [vmem:[#allocation2 + $0x88] sm:$0xff] %v986
        %1003 = vst [vmem:[#allocation2 + $0x90] sm:$0xff] %v987
        %v1004 = vld [vmem:[%s394] sm:$0xf]
        %v1005 = vld [vmem:[%s394 + $0x4] sm:$0x1]
        %v1006 = vunpack.c.l.bf16 %v1005
        %v1007 = vld [vmem:[%s3] sm:$0xf]
        %v1008 = vld [vmem:[%s3 + $0x4] sm:$0xf]
        %v1009 = vld [vmem:[%s3 + $0x8] sm:$0xf]
        %v1010 = vld [vmem:[%s3 + $0xc] sm:$0xf]
        %v1011 = vld [vmem:[%s4] sm:$0xff]
        %v1012 = vld [vmem:[%s4 + $0x8] sm:$0xff]
        %v1013 = vld [vmem:[%s4 + $0x10] sm:$0xff]
        %v1014 = vld [vmem:[%s4 + $0x18] sm:$0xff]
        %1016 = vset.pattern.permute.xlu0 0
        %1017 = vperm.xlu0 %1016, %v1011
        %v1018 = vpop.permute.xlu0 %1017
        %1021 = vset.pattern.permute.xlu0 0
        %1022 = vperm.xlu0 %1021, %v1012
        %v1023 = vpop.permute.xlu0 %1022
        %1026 = vset.pattern.permute.xlu0 0
        %1027 = vperm.xlu0 %1026, %v1013
        %v1028 = vpop.permute.xlu0 %1027
        %1031 = vset.pattern.permute.xlu0 0
        %1032 = vperm.xlu0 %1031, %v1014
        %v1033 = vpop.permute.xlu0 %1032
        %v1039 = vunpack.c.l.b16 %v1007
        %v1040 = vunpack.c.l.b16 %v1008
        %v1041 = vunpack.c.l.b16 %v1009
        %v1042 = vunpack.c.l.b16 %v1010
        %v1043 = vpack.c.b16 %v1040, %v1039
        %v1044 = vpack.c.b16 %v1042, %v1041
        %v1046 = vsel %vm484, %v1043, 0
        %v1049 = vsel %vm484, %v1044, 0
        %v1052 = vsel %vm491, %v1004, 0
        %1054 = vmatprep.subr.bf16.mxu0 0
        %1055 = vmatpush1.bf16.msra.mxu0 %v1052
        %1056 = vmatprep.subr.bf16.mxu0 0
        %1057 = vmatpush1.bf16.msra.mxu0 0
        %1058 = vmatprep.subr.bf16.mxu0 0
        %1059 = vmatpush1.bf16.msra.mxu0 0
        %1060 = vmatprep.subr.bf16.mxu0 0
        %1061 = vmatpush1.bf16.msra.mxu0 0
        %1062 = vmatprep.subr.bf16.mxu0 0
        %1063 = vmatpush1.bf16.msra.mxu0 0
        %1064 = vmatprep.subr.bf16.mxu0 0
        %1065 = vmatpush1.bf16.msra.mxu0 0
        %1066 = vmatprep.subr.bf16.mxu0 0
        %1067 = vmatpush1.bf16.msra.mxu0 0
        %1068 = vmatprep.subr.bf16.mxu0 0
        %1069 = vmatpush1.bf16.msra.mxu0 0
        %1070 = vmatprep.subr.bf16.mxu0 0
        %1071 = vmatpush1.bf16.msra.mxu0 0
        %1072 = vmatprep.subr.bf16.mxu0 0
        %1073 = vmatpush1.bf16.msra.mxu0 0
        %1074 = vmatprep.subr.bf16.mxu0 0
        %1075 = vmatpush1.bf16.msra.mxu0 0
        %1076 = vmatprep.subr.bf16.mxu0 0
        %1077 = vmatpush1.bf16.msra.mxu0 0
        %1078 = vmatprep.subr.bf16.mxu0 0
        %1079 = vmatpush1.bf16.msra.mxu0 0
        %1080 = vmatprep.subr.bf16.mxu0 0
        %1081 = vmatpush1.bf16.msra.mxu0 0
        %1082 = vmatprep.subr.bf16.mxu0 0
        %1083 = vmatpush1.bf16.msra.mxu0 0
        %1084 = vmatprep.subr.bf16.mxu0 0
        %1085 = vmatpush1.bf16.msra.mxu0 0
        %1086 = vmatprep.mubr.bf16.mxu0 0
        %1087 = vmatmul.mubr.bf16.gmra.mrb[0].mxu0 %v1046
        %v1088 = vpop.f32.mrb[0].mxu0
        %v1089 = vadd.f32 %v1018, %v1088
        %v1090 = vpop.f32.mrb[0].mxu0
        %v1091 = vpop.f32.mrb[0].mxu0
        %v1092 = vadd.f32 %v1023, %v1091
        %v1093 = vpop.f32.mrb[0].mxu0
        %1094 = vmatprep.mubr.bf16.mxu0 0
        %1095 = vmatmul.mubr.bf16.gmra.mrb[0].mxu0 %v1049
        %v1096 = vpop.f32.mrb[0].mxu0
        %v1097 = vadd.f32 %v1028, %v1096
        %v1098 = vpop.f32.mrb[0].mxu0
        %v1099 = vpop.f32.mrb[0].mxu0
        %v1100 = vadd.f32 %v1033, %v1099
        %v1101 = vpop.f32.mrb[0].mxu0
        %1102 = vdwg.mxu0
        %v1103 = vmax.f32 %v1089, 0.0
        %v1104 = vmax.f32 %v1092, 0.0
        %v1105 = vmax.f32 %v1097, 0.0
        %v1106 = vmax.f32 %v1100, 0.0
        %v1107 = vlaneseq
        %v1108 = vshrl.u32 %v1107, 7
        %v1109 = vsub.s32 0, %v1108
        %v1110 = vrot.slane %v1006, %v1109
        %v1111 = vmul.f32 %v1103, %v1110
        %v1112 = vmul.f32 %v1104, %v1110
        %v1113 = vmul.f32 %v1105, %v1110
        %v1114 = vmul.f32 %v1106, %v1110
        %v1115 = vpack.c.bf16 %v1112, %v1111
        %v1116 = vpack.c.bf16 %v1114, %v1113
        %1117 = vst [vmem:[#allocation2 + $0x48] sm:$0xff] %v1115
        %1118 = vst [vmem:[#allocation2 + $0x98] sm:$0xff] %v1116
        %v1119 = vld [vmem:[%s5] sm:$0xf]
        %v1120 = vld [vmem:[#allocation2] sm:$0xff]
        %v1121 = vld [vmem:[#allocation2 + $0x8] sm:$0xff]
        %v1122 = vld [vmem:[#allocation2 + $0x10] sm:$0xff]
        %v1123 = vld [vmem:[#allocation2 + $0x18] sm:$0xff]
        %v1124 = vld [vmem:[#allocation2 + $0x20] sm:$0xff]
        %v1125 = vld [vmem:[#allocation2 + $0x28] sm:$0xff]
        %v1126 = vld [vmem:[#allocation2 + $0x30] sm:$0xff]
        %v1127 = vld [vmem:[#allocation2 + $0x38] sm:$0xff]
        %v1128 = vld [vmem:[#allocation2 + $0x40] sm:$0xff]
        %v1129 = vld [vmem:[#allocation2 + $0x50] sm:$0xff]
        %v1130 = vld [vmem:[#allocation2 + $0x58] sm:$0xff]
        %v1131 = vld [vmem:[#allocation2 + $0x60] sm:$0xff]
        %v1132 = vld [vmem:[#allocation2 + $0x68] sm:$0xff]
        %v1133 = vld [vmem:[#allocation2 + $0x70] sm:$0xff]
        %v1134 = vld [vmem:[#allocation2 + $0x78] sm:$0xff]
        %v1135 = vld [vmem:[#allocation2 + $0x80] sm:$0xff]
        %v1136 = vld [vmem:[#allocation2 + $0x88] sm:$0xff]
        %v1137 = vld [vmem:[#allocation2 + $0x90] sm:$0xff]
        %s1138 = scalar_lea.vmem %s5, 4
        %v1139 = vld [vmem:[%s1138] sm:$0xf]
        %1158 = vrot.lane.b32.xlu0 %v1120, 110
        %v1159 = vpop.permute.xlu0 %1158
        %1160 = vrot.lane.b32.xlu0 %v1121, 110
        %v1161 = vpop.permute.xlu0 %1160
        %1162 = vrot.lane.b32.xlu0 %v1122, 110
        %v1163 = vpop.permute.xlu0 %1162
        %1164 = vrot.lane.b32.xlu0 %v1123, 110
        %v1165 = vpop.permute.xlu0 %1164
        %1166 = vrot.lane.b32.xlu0 %v1124, 110
        %v1167 = vpop.permute.xlu0 %1166
        %1168 = vrot.lane.b32.xlu0 %v1125, 110
        %v1169 = vpop.permute.xlu0 %1168
        %1170 = vrot.lane.b32.xlu0 %v1126, 110
        %v1171 = vpop.permute.xlu0 %1170
        %1172 = vrot.lane.b32.xlu0 %v1127, 110
        %v1173 = vpop.permute.xlu0 %1172
        %1174 = vrot.lane.b32.xlu0 %v1128, 110
        %v1175 = vpop.permute.xlu0 %1174
        %1176 = vrot.lane.b32.xlu0 %v1129, 110
        %v1177 = vpop.permute.xlu0 %1176
        %1178 = vrot.lane.b32.xlu0 %v1130, 110
        %v1179 = vpop.permute.xlu0 %1178
        %1180 = vrot.lane.b32.xlu0 %v1131, 110
        %v1181 = vpop.permute.xlu0 %1180
        %1182 = vrot.lane.b32.xlu0 %v1132, 110
        %v1183 = vpop.permute.xlu0 %1182
        %1184 = vrot.lane.b32.xlu0 %v1133, 110
        %v1185 = vpop.permute.xlu0 %1184
        %1186 = vrot.lane.b32.xlu0 %v1134, 110
        %v1187 = vpop.permute.xlu0 %1186
        %1188 = vrot.lane.b32.xlu0 %v1135, 110
        %v1189 = vpop.permute.xlu0 %1188
        %1190 = vrot.lane.b32.xlu0 %v1136, 110
        %v1191 = vpop.permute.xlu0 %1190
        %1192 = vrot.lane.b32.xlu0 %v1137, 110
        %v1193 = vpop.permute.xlu0 %1192
        %vm1194 = vcmask 900096
        %v1195 = vsel %vm1194, %v1159, %v1161
        %v1196 = vsel %vm1194, %v1161, %v1163
        %v1197 = vsel %vm1194, %v1163, %v1165
        %v1198 = vsel %vm1194, %v1165, %v1167
        %v1199 = vsel %vm1194, %v1167, %v1169
        %v1200 = vsel %vm1194, %v1169, %v1171
        %v1201 = vsel %vm1194, %v1171, %v1173
        %v1202 = vsel %vm1194, %v1173, %v1175
        %v1203 = vsel %vm1194, %v1177, %v1179
        %v1204 = vsel %vm1194, %v1179, %v1181
        %v1205 = vsel %vm1194, %v1181, %v1183
        %v1206 = vsel %vm1194, %v1183, %v1185
        %v1207 = vsel %vm1194, %v1185, %v1187
        %v1208 = vsel %vm1194, %v1187, %v1189
        %v1209 = vsel %vm1194, %v1189, %v1191
        %v1210 = vsel %vm1194, %v1191, %v1193
        %vm1227 = vcmask 261120
        %v1229 = vsel %vm1227, %v1139, 0
        %1231 = vmatprep.subr.bf16.mxu0 %v1196
        %1232 = vmatpush1.bf16.msra.mxu0 %v1195
        %1233 = vmatprep.subr.bf16.mxu0 %v1204
        %1234 = vmatpush1.bf16.msra.mxu0 %v1203
        %1235 = vmatprep.subr.bf16.mxu0 0
        %1236 = vmatpush1.bf16.msra.mxu0 0
        %1237 = vmatprep.subr.bf16.mxu0 0
        %1238 = vmatpush1.bf16.msra.mxu0 0
        %1239 = vmatprep.subr.bf16.mxu0 0
        %1240 = vmatpush1.bf16.msra.mxu0 0
        %1241 = vmatprep.subr.bf16.mxu0 0
        %1242 = vmatpush1.bf16.msra.mxu0 0
        %1243 = vmatprep.subr.bf16.mxu0 0
        %1244 = vmatpush1.bf16.msra.mxu0 0
        %1245 = vmatprep.subr.bf16.mxu0 0
        %1246 = vmatpush1.bf16.msra.mxu0 0
        %1247 = vmatprep.subr.bf16.mxu0 0
        %1248 = vmatpush1.bf16.msra.mxu0 0
        %1249 = vmatprep.subr.bf16.mxu0 0
        %1250 = vmatpush1.bf16.msra.mxu0 0
        %1251 = vmatprep.subr.bf16.mxu0 0
        %1252 = vmatpush1.bf16.msra.mxu0 0
        %1253 = vmatprep.subr.bf16.mxu0 0
        %1254 = vmatpush1.bf16.msra.mxu0 0
        %1255 = vmatprep.subr.bf16.mxu0 0
        %1256 = vmatpush1.bf16.msra.mxu0 0
        %1257 = vmatprep.subr.bf16.mxu0 0
        %1258 = vmatpush1.bf16.msra.mxu0 0
        %1259 = vmatprep.subr.bf16.mxu0 0
        %1260 = vmatpush1.bf16.msra.mxu0 0
        %1261 = vmatprep.subr.bf16.mxu0 0
        %1262 = vmatpush1.bf16.msra.mxu0 0
        %1263 = vmatprep.mubr.bf16.mxu0 0
        %1264 = vmatmul.mubr.bf16.gmra.mrb[0].mxu0 %v1229
        %v1265 = vpop.f32.mrb[0].mxu0
        %v1266 = vadd.f32 0.0, %v1265
        %v1267 = vpop.f32.mrb[0].mxu0
        %v1268 = vadd.f32 0.0, %v1267
        %v1269 = vpop.f32.mrb[0].mxu0
        %v1270 = vpop.f32.mrb[0].mxu0
        %1271 = vdwg.mxu0
        %1272 = vmatprep.subr.bf16.mxu0 %v1198
        %1273 = vmatpush1.bf16.msra.mxu0 %v1197
        %1274 = vmatprep.subr.bf16.mxu0 %v1206
        %1275 = vmatpush1.bf16.msra.mxu0 %v1205
        %1276 = vmatprep.subr.bf16.mxu0 0
        %1277 = vmatpush1.bf16.msra.mxu0 0
        %1278 = vmatprep.subr.bf16.mxu0 0
        %1279 = vmatpush1.bf16.msra.mxu0 0
        %1280 = vmatprep.subr.bf16.mxu0 0
        %1281 = vmatpush1.bf16.msra.mxu0 0
        %1282 = vmatprep.subr.bf16.mxu0 0
        %1283 = vmatpush1.bf16.msra.mxu0 0
        %1284 = vmatprep.subr.bf16.mxu0 0
        %1285 = vmatpush1.bf16.msra.mxu0 0
        %1286 = vmatprep.subr.bf16.mxu0 0
        %1287 = vmatpush1.bf16.msra.mxu0 0
        %1288 = vmatprep.subr.bf16.mxu0 0
        %1289 = vmatpush1.bf16.msra.mxu0 0
        %1290 = vmatprep.subr.bf16.mxu0 0
        %1291 = vmatpush1.bf16.msra.mxu0 0
        %1292 = vmatprep.subr.bf16.mxu0 0
        %1293 = vmatpush1.bf16.msra.mxu0 0
        %1294 = vmatprep.subr.bf16.mxu0 0
        %1295 = vmatpush1.bf16.msra.mxu0 0
        %1296 = vmatprep.subr.bf16.mxu0 0
        %1297 = vmatpush1.bf16.msra.mxu0 0
        %1298 = vmatprep.subr.bf16.mxu0 0
        %1299 = vmatpush1.bf16.msra.mxu0 0
        %1300 = vmatprep.subr.bf16.mxu0 0
        %1301 = vmatpush1.bf16.msra.mxu0 0
        %1302 = vmatprep.subr.bf16.mxu0 0
        %1303 = vmatpush1.bf16.msra.mxu0 0
        %1304 = vmatprep.mubr.bf16.mxu0 0
        %1305 = vmatmul.mubr.bf16.gmra.mrb[0].mxu0 %v1229
        %v1306 = vpop.f32.mrb[0].mxu0
        %v1307 = vadd.f32 0.0, %v1306
        %v1308 = vpop.f32.mrb[0].mxu0
        %v1309 = vadd.f32 0.0, %v1308
        %v1310 = vpop.f32.mrb[0].mxu0
        %v1311 = vpop.f32.mrb[0].mxu0
        %1312 = vdwg.mxu0
        %1313 = vmatprep.subr.bf16.mxu0 %v1200
        %1314 = vmatpush1.bf16.msra.mxu0 %v1199
        %1315 = vmatprep.subr.bf16.mxu0 %v1208
        %1316 = vmatpush1.bf16.msra.mxu0 %v1207
        %1317 = vmatprep.subr.bf16.mxu0 0
        %1318 = vmatpush1.bf16.msra.mxu0 0
        %1319 = vmatprep.subr.bf16.mxu0 0
        %1320 = vmatpush1.bf16.msra.mxu0 0
        %1321 = vmatprep.subr.bf16.mxu0 0
        %1322 = vmatpush1.bf16.msra.mxu0 0
        %1323 = vmatprep.subr.bf16.mxu0 0
        %1324 = vmatpush1.bf16.msra.mxu0 0
        %1325 = vmatprep.subr.bf16.mxu0 0
        %1326 = vmatpush1.bf16.msra.mxu0 0
        %1327 = vmatprep.subr.bf16.mxu0 0
        %1328 = vmatpush1.bf16.msra.mxu0 0
        %1329 = vmatprep.subr.bf16.mxu0 0
        %1330 = vmatpush1.bf16.msra.mxu0 0
        %1331 = vmatprep.subr.bf16.mxu0 0
        %1332 = vmatpush1.bf16.msra.mxu0 0
        %1333 = vmatprep.subr.bf16.mxu0 0
        %1334 = vmatpush1.bf16.msra.mxu0 0
        %1335 = vmatprep.subr.bf16.mxu0 0
        %1336 = vmatpush1.bf16.msra.mxu0 0
        %1337 = vmatprep.subr.bf16.mxu0 0
        %1338 = vmatpush1.bf16.msra.mxu0 0
        %1339 = vmatprep.subr.bf16.mxu0 0
        %1340 = vmatpush1.bf16.msra.mxu0 0
        %1341 = vmatprep.subr.bf16.mxu0 0
        %1342 = vmatpush1.bf16.msra.mxu0 0
        %1343 = vmatprep.subr.bf16.mxu0 0
        %1344 = vmatpush1.bf16.msra.mxu0 0
        %1345 = vmatprep.mubr.bf16.mxu0 0
        %1346 = vmatmul.mubr.bf16.gmra.mrb[0].mxu0 %v1229
        %v1347 = vpop.f32.mrb[0].mxu0
        %v1348 = vadd.f32 0.0, %v1347
        %v1349 = vpop.f32.mrb[0].mxu0
        %v1350 = vadd.f32 0.0, %v1349
        %v1351 = vpop.f32.mrb[0].mxu0
        %v1352 = vpop.f32.mrb[0].mxu0
        %1353 = vdwg.mxu0
        %1354 = vmatprep.subr.bf16.mxu0 %v1202
        %1355 = vmatpush1.bf16.msra.mxu0 %v1201
        %1356 = vmatprep.subr.bf16.mxu0 %v1210
        %1357 = vmatpush1.bf16.msra.mxu0 %v1209
        %1358 = vmatprep.subr.bf16.mxu0 0
        %1359 = vmatpush1.bf16.msra.mxu0 0
        %1360 = vmatprep.subr.bf16.mxu0 0
        %1361 = vmatpush1.bf16.msra.mxu0 0
        %1362 = vmatprep.subr.bf16.mxu0 0
        %1363 = vmatpush1.bf16.msra.mxu0 0
        %1364 = vmatprep.subr.bf16.mxu0 0
        %1365 = vmatpush1.bf16.msra.mxu0 0
        %1366 = vmatprep.subr.bf16.mxu0 0
        %1367 = vmatpush1.bf16.msra.mxu0 0
        %1368 = vmatprep.subr.bf16.mxu0 0
        %1369 = vmatpush1.bf16.msra.mxu0 0
        %1370 = vmatprep.subr.bf16.mxu0 0
        %1371 = vmatpush1.bf16.msra.mxu0 0
        %1372 = vmatprep.subr.bf16.mxu0 0
        %1373 = vmatpush1.bf16.msra.mxu0 0
        %1374 = vmatprep.subr.bf16.mxu0 0
        %1375 = vmatpush1.bf16.msra.mxu0 0
        %1376 = vmatprep.subr.bf16.mxu0 0
        %1377 = vmatpush1.bf16.msra.mxu0 0
        %1378 = vmatprep.subr.bf16.mxu0 0
        %1379 = vmatpush1.bf16.msra.mxu0 0
        %1380 = vmatprep.subr.bf16.mxu0 0
        %1381 = vmatpush1.bf16.msra.mxu0 0
        %1382 = vmatprep.subr.bf16.mxu0 0
        %1383 = vmatpush1.bf16.msra.mxu0 0
        %1384 = vmatprep.subr.bf16.mxu0 0
        %1385 = vmatpush1.bf16.msra.mxu0 0
        %1386 = vmatprep.mubr.bf16.mxu0 0
        %1387 = vmatmul.mubr.bf16.gmra.mrb[0].mxu0 %v1229
        %v1388 = vpop.f32.mrb[0].mxu0
        %v1389 = vadd.f32 0.0, %v1388
        %v1390 = vpop.f32.mrb[0].mxu0
        %v1391 = vadd.f32 0.0, %v1390
        %v1392 = vpop.f32.mrb[0].mxu0
        %v1393 = vpop.f32.mrb[0].mxu0
        %1394 = vdwg.mxu0
        %1395 = vrot.lane.b32.xlu0 %v1120, 111
        %v1396 = vpop.permute.xlu0 %1395
        %1397 = vrot.lane.b32.xlu0 %v1121, 111
        %v1398 = vpop.permute.xlu0 %1397
        %1399 = vrot.lane.b32.xlu0 %v1122, 111
        %v1400 = vpop.permute.xlu0 %1399
        %1401 = vrot.lane.b32.xlu0 %v1123, 111
        %v1402 = vpop.permute.xlu0 %1401
        %1403 = vrot.lane.b32.xlu0 %v1124, 111
        %v1404 = vpop.permute.xlu0 %1403
        %1405 = vrot.lane.b32.xlu0 %v1125, 111
        %v1406 = vpop.permute.xlu0 %1405
        %1407 = vrot.lane.b32.xlu0 %v1126, 111
        %v1408 = vpop.permute.xlu0 %1407
        %1409 = vrot.lane.b32.xlu0 %v1127, 111
        %v1410 = vpop.permute.xlu0 %1409
        %1411 = vrot.lane.b32.xlu0 %v1128, 111
        %v1412 = vpop.permute.xlu0 %1411
        %1413 = vrot.lane.b32.xlu0 %v1129, 111
        %v1414 = vpop.permute.xlu0 %1413
        %1415 = vrot.lane.b32.xlu0 %v1130, 111
        %v1416 = vpop.permute.xlu0 %1415
        %1417 = vrot.lane.b32.xlu0 %v1131, 111
        %v1418 = vpop.permute.xlu0 %1417
        %1419 = vrot.lane.b32.xlu0 %v1132, 111
        %v1420 = vpop.permute.xlu0 %1419
        %1421 = vrot.lane.b32.xlu0 %v1133, 111
        %v1422 = vpop.permute.xlu0 %1421
        %1423 = vrot.lane.b32.xlu0 %v1134, 111
        %v1424 = vpop.permute.xlu0 %1423
        %1425 = vrot.lane.b32.xlu0 %v1135, 111
        %v1426 = vpop.permute.xlu0 %1425
        %1427 = vrot.lane.b32.xlu0 %v1136, 111
        %v1428 = vpop.permute.xlu0 %1427
        %1429 = vrot.lane.b32.xlu0 %v1137, 111
        %v1430 = vpop.permute.xlu0 %1429
        %vm1431 = vcmask 908288
        %v1432 = vsel %vm1431, %v1396, %v1398
        %v1433 = vsel %vm1431, %v1398, %v1400
        %v1434 = vsel %vm1431, %v1400, %v1402
        %v1435 = vsel %vm1431, %v1402, %v1404
        %v1436 = vsel %vm1431, %v1404, %v1406
        %v1437 = vsel %vm1431, %v1406, %v1408
        %v1438 = vsel %vm1431, %v1408, %v1410
        %v1439 = vsel %vm1431, %v1410, %v1412
        %v1440 = vsel %vm1431, %v1414, %v1416
        %v1441 = vsel %vm1431, %v1416, %v1418
        %v1442 = vsel %vm1431, %v1418, %v1420
        %v1443 = vsel %vm1431, %v1420, %v1422
        %v1444 = vsel %vm1431, %v1422, %v1424
        %v1445 = vsel %vm1431, %v1424, %v1426
        %v1446 = vsel %vm1431, %v1426, %v1428
        %v1447 = vsel %vm1431, %v1428, %v1430
        %v1465 = vsel %vm1227, %v1119, 0
        %1467 = vmatprep.subr.bf16.mxu0 %v1433
        %1468 = vmatpush1.bf16.msra.mxu0 %v1432
        %1469 = vmatprep.subr.bf16.mxu0 %v1441
        %1470 = vmatpush1.bf16.msra.mxu0 %v1440
        %1471 = vmatprep.subr.bf16.mxu0 0
        %1472 = vmatpush1.bf16.msra.mxu0 0
        %1473 = vmatprep.subr.bf16.mxu0 0
        %1474 = vmatpush1.bf16.msra.mxu0 0
        %1475 = vmatprep.subr.bf16.mxu0 0
        %1476 = vmatpush1.bf16.msra.mxu0 0
        %1477 = vmatprep.subr.bf16.mxu0 0
        %1478 = vmatpush1.bf16.msra.mxu0 0
        %1479 = vmatprep.subr.bf16.mxu0 0
        %1480 = vmatpush1.bf16.msra.mxu0 0
        %1481 = vmatprep.subr.bf16.mxu0 0
        %1482 = vmatpush1.bf16.msra.mxu0 0
        %1483 = vmatprep.subr.bf16.mxu0 0
        %1484 = vmatpush1.bf16.msra.mxu0 0
        %1485 = vmatprep.subr.bf16.mxu0 0
        %1486 = vmatpush1.bf16.msra.mxu0 0
        %1487 = vmatprep.subr.bf16.mxu0 0
        %1488 = vmatpush1.bf16.msra.mxu0 0
        %1489 = vmatprep.subr.bf16.mxu0 0
        %1490 = vmatpush1.bf16.msra.mxu0 0
        %1491 = vmatprep.subr.bf16.mxu0 0
        %1492 = vmatpush1.bf16.msra.mxu0 0
        %1493 = vmatprep.subr.bf16.mxu0 0
        %1494 = vmatpush1.bf16.msra.mxu0 0
        %1495 = vmatprep.subr.bf16.mxu0 0
        %1496 = vmatpush1.bf16.msra.mxu0 0
        %1497 = vmatprep.subr.bf16.mxu0 0
        %1498 = vmatpush1.bf16.msra.mxu0 0
        %1499 = vmatprep.mubr.bf16.mxu0 0
        %1500 = vmatmul.mubr.bf16.gmra.mrb[0].mxu0 %v1465
        %v1501 = vpop.f32.mrb[0].mxu0
        %v1502 = vadd.f32 %v1266, %v1501
        %v1503 = vpop.f32.mrb[0].mxu0
        %v1504 = vadd.f32 %v1268, %v1503
        %v1505 = vpop.f32.mrb[0].mxu0
        %v1506 = vpop.f32.mrb[0].mxu0
        %1507 = vdwg.mxu0
        %1508 = vmatprep.subr.bf16.mxu0 %v1435
        %1509 = vmatpush1.bf16.msra.mxu0 %v1434
        %1510 = vmatprep.subr.bf16.mxu0 %v1443
        %1511 = vmatpush1.bf16.msra.mxu0 %v1442
        %1512 = vmatprep.subr.bf16.mxu0 0
        %1513 = vmatpush1.bf16.msra.mxu0 0
        %1514 = vmatprep.subr.bf16.mxu0 0
        %1515 = vmatpush1.bf16.msra.mxu0 0
        %1516 = vmatprep.subr.bf16.mxu0 0
        %1517 = vmatpush1.bf16.msra.mxu0 0
        %1518 = vmatprep.subr.bf16.mxu0 0
        %1519 = vmatpush1.bf16.msra.mxu0 0
        %1520 = vmatprep.subr.bf16.mxu0 0
        %1521 = vmatpush1.bf16.msra.mxu0 0
        %1522 = vmatprep.subr.bf16.mxu0 0
        %1523 = vmatpush1.bf16.msra.mxu0 0
        %1524 = vmatprep.subr.bf16.mxu0 0
        %1525 = vmatpush1.bf16.msra.mxu0 0
        %1526 = vmatprep.subr.bf16.mxu0 0
        %1527 = vmatpush1.bf16.msra.mxu0 0
        %1528 = vmatprep.subr.bf16.mxu0 0
        %1529 = vmatpush1.bf16.msra.mxu0 0
        %1530 = vmatprep.subr.bf16.mxu0 0
        %1531 = vmatpush1.bf16.msra.mxu0 0
        %1532 = vmatprep.subr.bf16.mxu0 0
        %1533 = vmatpush1.bf16.msra.mxu0 0
        %1534 = vmatprep.subr.bf16.mxu0 0
        %1535 = vmatpush1.bf16.msra.mxu0 0
        %1536 = vmatprep.subr.bf16.mxu0 0
        %1537 = vmatpush1.bf16.msra.mxu0 0
        %1538 = vmatprep.subr.bf16.mxu0 0
        %1539 = vmatpush1.bf16.msra.mxu0 0
        %1540 = vmatprep.mubr.bf16.mxu0 0
        %1541 = vmatmul.mubr.bf16.gmra.mrb[0].mxu0 %v1465
        %v1542 = vpop.f32.mrb[0].mxu0
        %v1543 = vadd.f32 %v1307, %v1542
        %v1544 = vpop.f32.mrb[0].mxu0
        %v1545 = vadd.f32 %v1309, %v1544
        %v1546 = vpop.f32.mrb[0].mxu0
        %v1547 = vpop.f32.mrb[0].mxu0
        %1548 = vdwg.mxu0
        %1549 = vmatprep.subr.bf16.mxu0 %v1437
        %1550 = vmatpush1.bf16.msra.mxu0 %v1436
        %1551 = vmatprep.subr.bf16.mxu0 %v1445
        %1552 = vmatpush1.bf16.msra.mxu0 %v1444
        %1553 = vmatprep.subr.bf16.mxu0 0
        %1554 = vmatpush1.bf16.msra.mxu0 0
        %1555 = vmatprep.subr.bf16.mxu0 0
        %1556 = vmatpush1.bf16.msra.mxu0 0
        %1557 = vmatprep.subr.bf16.mxu0 0
        %1558 = vmatpush1.bf16.msra.mxu0 0
        %1559 = vmatprep.subr.bf16.mxu0 0
        %1560 = vmatpush1.bf16.msra.mxu0 0
        %1561 = vmatprep.subr.bf16.mxu0 0
        %1562 = vmatpush1.bf16.msra.mxu0 0
        %1563 = vmatprep.subr.bf16.mxu0 0
        %1564 = vmatpush1.bf16.msra.mxu0 0
        %1565 = vmatprep.subr.bf16.mxu0 0
        %1566 = vmatpush1.bf16.msra.mxu0 0
        %1567 = vmatprep.subr.bf16.mxu0 0
        %1568 = vmatpush1.bf16.msra.mxu0 0
        %1569 = vmatprep.subr.bf16.mxu0 0
        %1570 = vmatpush1.bf16.msra.mxu0 0
        %1571 = vmatprep.subr.bf16.mxu0 0
        %1572 = vmatpush1.bf16.msra.mxu0 0
        %1573 = vmatprep.subr.bf16.mxu0 0
        %1574 = vmatpush1.bf16.msra.mxu0 0
        %1575 = vmatprep.subr.bf16.mxu0 0
        %1576 = vmatpush1.bf16.msra.mxu0 0
        %1577 = vmatprep.subr.bf16.mxu0 0
        %1578 = vmatpush1.bf16.msra.mxu0 0
        %1579 = vmatprep.subr.bf16.mxu0 0
        %1580 = vmatpush1.bf16.msra.mxu0 0
        %1581 = vmatprep.mubr.bf16.mxu0 0
        %1582 = vmatmul.mubr.bf16.gmra.mrb[0].mxu0 %v1465
        %v1583 = vpop.f32.mrb[0].mxu0
        %v1584 = vadd.f32 %v1348, %v1583
        %v1585 = vpop.f32.mrb[0].mxu0
        %v1586 = vadd.f32 %v1350, %v1585
        %v1587 = vpop.f32.mrb[0].mxu0
        %v1588 = vpop.f32.mrb[0].mxu0
        %1589 = vdwg.mxu0
        %1590 = vmatprep.subr.bf16.mxu0 %v1439
        %1591 = vmatpush1.bf16.msra.mxu0 %v1438
        %1592 = vmatprep.subr.bf16.mxu0 %v1447
        %1593 = vmatpush1.bf16.msra.mxu0 %v1446
        %1594 = vmatprep.subr.bf16.mxu0 0
        %1595 = vmatpush1.bf16.msra.mxu0 0
        %1596 = vmatprep.subr.bf16.mxu0 0
        %1597 = vmatpush1.bf16.msra.mxu0 0
        %1598 = vmatprep.subr.bf16.mxu0 0
        %1599 = vmatpush1.bf16.msra.mxu0 0
        %1600 = vmatprep.subr.bf16.mxu0 0
        %1601 = vmatpush1.bf16.msra.mxu0 0
        %1602 = vmatprep.subr.bf16.mxu0 0
        %1603 = vmatpush1.bf16.msra.mxu0 0
        %1604 = vmatprep.subr.bf16.mxu0 0
        %1605 = vmatpush1.bf16.msra.mxu0 0
        %1606 = vmatprep.subr.bf16.mxu0 0
        %1607 = vmatpush1.bf16.msra.mxu0 0
        %1608 = vmatprep.subr.bf16.mxu0 0
        %1609 = vmatpush1.bf16.msra.mxu0 0
        %1610 = vmatprep.subr.bf16.mxu0 0
        %1611 = vmatpush1.bf16.msra.mxu0 0
        %1612 = vmatprep.subr.bf16.mxu0 0
        %1613 = vmatpush1.bf16.msra.mxu0 0
        %1614 = vmatprep.subr.bf16.mxu0 0
        %1615 = vmatpush1.bf16.msra.mxu0 0
        %1616 = vmatprep.subr.bf16.mxu0 0
        %1617 = vmatpush1.bf16.msra.mxu0 0
        %1618 = vmatprep.subr.bf16.mxu0 0
        %1619 = vmatpush1.bf16.msra.mxu0 0
        %1620 = vmatprep.subr.bf16.mxu0 0
        %1621 = vmatpush1.bf16.msra.mxu0 0
        %1622 = vmatprep.mubr.bf16.mxu0 0
        %1623 = vmatmul.mubr.bf16.gmra.mrb[0].mxu0 %v1465
        %v1624 = vpop.f32.mrb[0].mxu0
        %v1625 = vadd.f32 %v1389, %v1624
        %v1626 = vpop.f32.mrb[0].mxu0
        %v1627 = vadd.f32 %v1391, %v1626
        %v1628 = vpop.f32.mrb[0].mxu0
        %v1629 = vpop.f32.mrb[0].mxu0
        %1630 = vdwg.mxu0
        %s1631 = scalar_lea.vmem %s5, 8
        %v1632 = vld [vmem:[%s1631] sm:$0xf]
        %1633 = vrot.lane.b32.xlu0 %v1120, 109
        %v1634 = vpop.permute.xlu0 %1633
        %1635 = vrot.lane.b32.xlu0 %v1121, 109
        %v1636 = vpop.permute.xlu0 %1635
        %1637 = vrot.lane.b32.xlu0 %v1122, 109
        %v1638 = vpop.permute.xlu0 %1637
        %1639 = vrot.lane.b32.xlu0 %v1123, 109
        %v1640 = vpop.permute.xlu0 %1639
        %1641 = vrot.lane.b32.xlu0 %v1124, 109
        %v1642 = vpop.permute.xlu0 %1641
        %1643 = vrot.lane.b32.xlu0 %v1125, 109
        %v1644 = vpop.permute.xlu0 %1643
        %1645 = vrot.lane.b32.xlu0 %v1126, 109
        %v1646 = vpop.permute.xlu0 %1645
        %1647 = vrot.lane.b32.xlu0 %v1127, 109
        %v1648 = vpop.permute.xlu0 %1647
        %1649 = vrot.lane.b32.xlu0 %v1128, 109
        %v1650 = vpop.permute.xlu0 %1649
        %1651 = vrot.lane.b32.xlu0 %v1129, 109
        %v1652 = vpop.permute.xlu0 %1651
        %1653 = vrot.lane.b32.xlu0 %v1130, 109
        %v1654 = vpop.permute.xlu0 %1653
        %1655 = vrot.lane.b32.xlu0 %v1131, 109
        %v1656 = vpop.permute.xlu0 %1655
        %1657 = vrot.lane.b32.xlu0 %v1132, 109
        %v1658 = vpop.permute.xlu0 %1657
        %1659 = vrot.lane.b32.xlu0 %v1133, 109
        %v1660 = vpop.permute.xlu0 %1659
        %1661 = vrot.lane.b32.xlu0 %v1134, 109
        %v1662 = vpop.permute.xlu0 %1661
        %1663 = vrot.lane.b32.xlu0 %v1135, 109
        %v1664 = vpop.permute.xlu0 %1663
        %1665 = vrot.lane.b32.xlu0 %v1136, 109
        %v1666 = vpop.permute.xlu0 %1665
        %1667 = vrot.lane.b32.xlu0 %v1137, 109
        %v1668 = vpop.permute.xlu0 %1667
        %vm1669 = vcmask 891904
        %v1670 = vsel %vm1669, %v1634, %v1636
        %v1671 = vsel %vm1669, %v1636, %v1638
        %v1672 = vsel %vm1669, %v1638, %v1640
        %v1673 = vsel %vm1669, %v1640, %v1642
        %v1674 = vsel %vm1669, %v1642, %v1644
        %v1675 = vsel %vm1669, %v1644, %v1646
        %v1676 = vsel %vm1669, %v1646, %v1648
        %v1677 = vsel %vm1669, %v1648, %v1650
        %v1678 = vsel %vm1669, %v1652, %v1654
        %v1679 = vsel %vm1669, %v1654, %v1656
        %v1680 = vsel %vm1669, %v1656, %v1658
        %v1681 = vsel %vm1669, %v1658, %v1660
        %v1682 = vsel %vm1669, %v1660, %v1662
        %v1683 = vsel %vm1669, %v1662, %v1664
        %v1684 = vsel %vm1669, %v1664, %v1666
        %v1685 = vsel %vm1669, %v1666, %v1668
        %v1703 = vsel %vm1227, %v1632, 0
        %1705 = vmatprep.subr.bf16.mxu0 %v1671
        %1706 = vmatpush1.bf16.msra.mxu0 %v1670
        %1707 = vmatprep.subr.bf16.mxu0 %v1679
        %1708 = vmatpush1.bf16.msra.mxu0 %v1678
        %1709 = vmatprep.subr.bf16.mxu0 0
        %1710 = vmatpush1.bf16.msra.mxu0 0
        %1711 = vmatprep.subr.bf16.mxu0 0
        %1712 = vmatpush1.bf16.msra.mxu0 0
        %1713 = vmatprep.subr.bf16.mxu0 0
        %1714 = vmatpush1.bf16.msra.mxu0 0
        %1715 = vmatprep.subr.bf16.mxu0 0
        %1716 = vmatpush1.bf16.msra.mxu0 0
        %1717 = vmatprep.subr.bf16.mxu0 0
        %1718 = vmatpush1.bf16.msra.mxu0 0
        %1719 = vmatprep.subr.bf16.mxu0 0
        %1720 = vmatpush1.bf16.msra.mxu0 0
        %1721 = vmatprep.subr.bf16.mxu0 0
        %1722 = vmatpush1.bf16.msra.mxu0 0
        %1723 = vmatprep.subr.bf16.mxu0 0
        %1724 = vmatpush1.bf16.msra.mxu0 0
        %1725 = vmatprep.subr.bf16.mxu0 0
        %1726 = vmatpush1.bf16.msra.mxu0 0
        %1727 = vmatprep.subr.bf16.mxu0 0
        %1728 = vmatpush1.bf16.msra.mxu0 0
        %1729 = vmatprep.subr.bf16.mxu0 0
        %1730 = vmatpush1.bf16.msra.mxu0 0
        %1731 = vmatprep.subr.bf16.mxu0 0
        %1732 = vmatpush1.bf16.msra.mxu0 0
        %1733 = vmatprep.subr.bf16.mxu0 0
        %1734 = vmatpush1.bf16.msra.mxu0 0
        %1735 = vmatprep.subr.bf16.mxu0 0
        %1736 = vmatpush1.bf16.msra.mxu0 0
        %1737 = vmatprep.mubr.bf16.mxu0 0
        %1738 = vmatmul.mubr.bf16.gmra.mrb[0].mxu0 %v1703
        %v1739 = vpop.f32.mrb[0].mxu0
        %v1740 = vadd.f32 0.0, %v1739
        %v1741 = vpop.f32.mrb[0].mxu0
        %v1742 = vadd.f32 0.0, %v1741
        %v1743 = vpop.f32.mrb[0].mxu0
        %v1744 = vpop.f32.mrb[0].mxu0
        %1745 = vdwg.mxu0
        %1746 = vmatprep.subr.bf16.mxu0 %v1673
        %1747 = vmatpush1.bf16.msra.mxu0 %v1672
        %1748 = vmatprep.subr.bf16.mxu0 %v1681
        %1749 = vmatpush1.bf16.msra.mxu0 %v1680
        %1750 = vmatprep.subr.bf16.mxu0 0
        %1751 = vmatpush1.bf16.msra.mxu0 0
        %1752 = vmatprep.subr.bf16.mxu0 0
        %1753 = vmatpush1.bf16.msra.mxu0 0
        %1754 = vmatprep.subr.bf16.mxu0 0
        %1755 = vmatpush1.bf16.msra.mxu0 0
        %1756 = vmatprep.subr.bf16.mxu0 0
        %1757 = vmatpush1.bf16.msra.mxu0 0
        %1758 = vmatprep.subr.bf16.mxu0 0
        %1759 = vmatpush1.bf16.msra.mxu0 0
        %1760 = vmatprep.subr.bf16.mxu0 0
        %1761 = vmatpush1.bf16.msra.mxu0 0
        %1762 = vmatprep.subr.bf16.mxu0 0
        %1763 = vmatpush1.bf16.msra.mxu0 0
        %1764 = vmatprep.subr.bf16.mxu0 0
        %1765 = vmatpush1.bf16.msra.mxu0 0
        %1766 = vmatprep.subr.bf16.mxu0 0
        %1767 = vmatpush1.bf16.msra.mxu0 0
        %1768 = vmatprep.subr.bf16.mxu0 0
        %1769 = vmatpush1.bf16.msra.mxu0 0
        %1770 = vmatprep.subr.bf16.mxu0 0
        %1771 = vmatpush1.bf16.msra.mxu0 0
        %1772 = vmatprep.subr.bf16.mxu0 0
        %1773 = vmatpush1.bf16.msra.mxu0 0
        %1774 = vmatprep.subr.bf16.mxu0 0
        %1775 = vmatpush1.bf16.msra.mxu0 0
        %1776 = vmatprep.subr.bf16.mxu0 0
        %1777 = vmatpush1.bf16.msra.mxu0 0
        %1778 = vmatprep.mubr.bf16.mxu0 0
        %1779 = vmatmul.mubr.bf16.gmra.mrb[0].mxu0 %v1703
        %v1780 = vpop.f32.mrb[0].mxu0
        %v1781 = vadd.f32 0.0, %v1780
        %v1782 = vpop.f32.mrb[0].mxu0
        %v1783 = vadd.f32 0.0, %v1782
        %v1784 = vpop.f32.mrb[0].mxu0
        %v1785 = vpop.f32.mrb[0].mxu0
        %1786 = vdwg.mxu0
        %1787 = vmatprep.subr.bf16.mxu0 %v1675
        %1788 = vmatpush1.bf16.msra.mxu0 %v1674
        %1789 = vmatprep.subr.bf16.mxu0 %v1683
        %1790 = vmatpush1.bf16.msra.mxu0 %v1682
        %1791 = vmatprep.subr.bf16.mxu0 0
        %1792 = vmatpush1.bf16.msra.mxu0 0
        %1793 = vmatprep.subr.bf16.mxu0 0
        %1794 = vmatpush1.bf16.msra.mxu0 0
        %1795 = vmatprep.subr.bf16.mxu0 0
        %1796 = vmatpush1.bf16.msra.mxu0 0
        %1797 = vmatprep.subr.bf16.mxu0 0
        %1798 = vmatpush1.bf16.msra.mxu0 0
        %1799 = vmatprep.subr.bf16.mxu0 0
        %1800 = vmatpush1.bf16.msra.mxu0 0
        %1801 = vmatprep.subr.bf16.mxu0 0
        %1802 = vmatpush1.bf16.msra.mxu0 0
        %1803 = vmatprep.subr.bf16.mxu0 0
        %1804 = vmatpush1.bf16.msra.mxu0 0
        %1805 = vmatprep.subr.bf16.mxu0 0
        %1806 = vmatpush1.bf16.msra.mxu0 0
        %1807 = vmatprep.subr.bf16.mxu0 0
        %1808 = vmatpush1.bf16.msra.mxu0 0
        %1809 = vmatprep.subr.bf16.mxu0 0
        %1810 = vmatpush1.bf16.msra.mxu0 0
        %1811 = vmatprep.subr.bf16.mxu0 0
        %1812 = vmatpush1.bf16.msra.mxu0 0
        %1813 = vmatprep.subr.bf16.mxu0 0
        %1814 = vmatpush1.bf16.msra.mxu0 0
        %1815 = vmatprep.subr.bf16.mxu0 0
        %1816 = vmatpush1.bf16.msra.mxu0 0
        %1817 = vmatprep.subr.bf16.mxu0 0
        %1818 = vmatpush1.bf16.msra.mxu0 0
        %1819 = vmatprep.mubr.bf16.mxu0 0
        %1820 = vmatmul.mubr.bf16.gmra.mrb[0].mxu0 %v1703
        %v1821 = vpop.f32.mrb[0].mxu0
        %v1822 = vadd.f32 0.0, %v1821
        %v1823 = vpop.f32.mrb[0].mxu0
        %v1824 = vadd.f32 0.0, %v1823
        %v1825 = vpop.f32.mrb[0].mxu0
        %v1826 = vpop.f32.mrb[0].mxu0
        %1827 = vdwg.mxu0
        %1828 = vmatprep.subr.bf16.mxu0 %v1677
        %1829 = vmatpush1.bf16.msra.mxu0 %v1676
        %1830 = vmatprep.subr.bf16.mxu0 %v1685
        %1831 = vmatpush1.bf16.msra.mxu0 %v1684
        %1832 = vmatprep.subr.bf16.mxu0 0
        %1833 = vmatpush1.bf16.msra.mxu0 0
        %1834 = vmatprep.subr.bf16.mxu0 0
        %1835 = vmatpush1.bf16.msra.mxu0 0
        %1836 = vmatprep.subr.bf16.mxu0 0
        %1837 = vmatpush1.bf16.msra.mxu0 0
        %1838 = vmatprep.subr.bf16.mxu0 0
        %1839 = vmatpush1.bf16.msra.mxu0 0
        %1840 = vmatprep.subr.bf16.mxu0 0
        %1841 = vmatpush1.bf16.msra.mxu0 0
        %1842 = vmatprep.subr.bf16.mxu0 0
        %1843 = vmatpush1.bf16.msra.mxu0 0
        %1844 = vmatprep.subr.bf16.mxu0 0
        %1845 = vmatpush1.bf16.msra.mxu0 0
        %1846 = vmatprep.subr.bf16.mxu0 0
        %1847 = vmatpush1.bf16.msra.mxu0 0
        %1848 = vmatprep.subr.bf16.mxu0 0
        %1849 = vmatpush1.bf16.msra.mxu0 0
        %1850 = vmatprep.subr.bf16.mxu0 0
        %1851 = vmatpush1.bf16.msra.mxu0 0
        %1852 = vmatprep.subr.bf16.mxu0 0
        %1853 = vmatpush1.bf16.msra.mxu0 0
        %1854 = vmatprep.subr.bf16.mxu0 0
        %1855 = vmatpush1.bf16.msra.mxu0 0
        %1856 = vmatprep.subr.bf16.mxu0 0
        %1857 = vmatpush1.bf16.msra.mxu0 0
        %1858 = vmatprep.subr.bf16.mxu0 0
        %1859 = vmatpush1.bf16.msra.mxu0 0
        %1860 = vmatprep.mubr.bf16.mxu0 0
        %1861 = vmatmul.mubr.bf16.gmra.mrb[0].mxu0 %v1703
        %v1862 = vpop.f32.mrb[0].mxu0
        %v1863 = vadd.f32 0.0, %v1862
        %v1864 = vpop.f32.mrb[0].mxu0
        %v1865 = vadd.f32 0.0, %v1864
        %v1866 = vpop.f32.mrb[0].mxu0
        %v1867 = vpop.f32.mrb[0].mxu0
        %1868 = vdwg.mxu0
        %v1869 = vadd.f32 %v1502, %v1740
        %v1870 = vadd.f32 %v1504, %v1742
        %v1871 = vadd.f32 %v1543, %v1781
        %v1872 = vadd.f32 %v1545, %v1783
        %v1873 = vadd.f32 %v1584, %v1822
        %v1874 = vadd.f32 %v1586, %v1824
        %v1875 = vadd.f32 %v1625, %v1863
        %v1876 = vadd.f32 %v1627, %v1865
        %s1877 = scalar_lea.vmem %s5, 12
        %v1878 = vld [vmem:[%s1877] sm:$0xf]
        %1879 = vrot.lane.b32.xlu0 %v1120, 101
        %v1880 = vpop.permute.xlu0 %1879
        %1881 = vrot.lane.b32.xlu0 %v1121, 101
        %v1882 = vpop.permute.xlu0 %1881
        %1883 = vrot.lane.b32.xlu0 %v1122, 101
        %v1884 = vpop.permute.xlu0 %1883
        %1885 = vrot.lane.b32.xlu0 %v1123, 101
        %v1886 = vpop.permute.xlu0 %1885
        %1887 = vrot.lane.b32.xlu0 %v1124, 101
        %v1888 = vpop.permute.xlu0 %1887
        %1889 = vrot.lane.b32.xlu0 %v1125, 101
        %v1890 = vpop.permute.xlu0 %1889
        %1891 = vrot.lane.b32.xlu0 %v1126, 101
        %v1892 = vpop.permute.xlu0 %1891
        %1893 = vrot.lane.b32.xlu0 %v1127, 101
        %v1894 = vpop.permute.xlu0 %1893
        %1895 = vrot.lane.b32.xlu0 %v1128, 101
        %v1896 = vpop.permute.xlu0 %1895
        %1897 = vrot.lane.b32.xlu0 %v1129, 101
        %v1898 = vpop.permute.xlu0 %1897
        %1899 = vrot.lane.b32.xlu0 %v1130, 101
        %v1900 = vpop.permute.xlu0 %1899
        %1901 = vrot.lane.b32.xlu0 %v1131, 101
        %v1902 = vpop.permute.xlu0 %1901
        %1903 = vrot.lane.b32.xlu0 %v1132, 101
        %v1904 = vpop.permute.xlu0 %1903
        %1905 = vrot.lane.b32.xlu0 %v1133, 101
        %v1906 = vpop.permute.xlu0 %1905
        %1907 = vrot.lane.b32.xlu0 %v1134, 101
        %v1908 = vpop.permute.xlu0 %1907
        %1909 = vrot.lane.b32.xlu0 %v1135, 101
        %v1910 = vpop.permute.xlu0 %1909
        %1911 = vrot.lane.b32.xlu0 %v1136, 101
        %v1912 = vpop.permute.xlu0 %1911
        %1913 = vrot.lane.b32.xlu0 %v1137, 101
        %v1914 = vpop.permute.xlu0 %1913
        %vm1915 = vcmask 826368
        %v1916 = vsel %vm1915, %v1880, %v1882
        %v1917 = vsel %vm1915, %v1882, %v1884
        %v1918 = vsel %vm1915, %v1884, %v1886
        %v1919 = vsel %vm1915, %v1886, %v1888
        %v1920 = vsel %vm1915, %v1888, %v1890
        %v1921 = vsel %vm1915, %v1890, %v1892
        %v1922 = vsel %vm1915, %v1892, %v1894
        %v1923 = vsel %vm1915, %v1894, %v1896
        %v1924 = vsel %vm1915, %v1898, %v1900
        %v1925 = vsel %vm1915, %v1900, %v1902
        %v1926 = vsel %vm1915, %v1902, %v1904
        %v1927 = vsel %vm1915, %v1904, %v1906
        %v1928 = vsel %vm1915, %v1906, %v1908
        %v1929 = vsel %vm1915, %v1908, %v1910
        %v1930 = vsel %vm1915, %v1910, %v1912
        %v1931 = vsel %vm1915, %v1912, %v1914
        %v1949 = vsel %vm1227, %v1878, 0
        %1951 = vmatprep.subr.bf16.mxu0 %v1917
        %1952 = vmatpush1.bf16.msra.mxu0 %v1916
        %1953 = vmatprep.subr.bf16.mxu0 %v1925
        %1954 = vmatpush1.bf16.msra.mxu0 %v1924
        %1955 = vmatprep.subr.bf16.mxu0 0
        %1956 = vmatpush1.bf16.msra.mxu0 0
        %1957 = vmatprep.subr.bf16.mxu0 0
        %1958 = vmatpush1.bf16.msra.mxu0 0
        %1959 = vmatprep.subr.bf16.mxu0 0
        %1960 = vmatpush1.bf16.msra.mxu0 0
        %1961 = vmatprep.subr.bf16.mxu0 0
        %1962 = vmatpush1.bf16.msra.mxu0 0
        %1963 = vmatprep.subr.bf16.mxu0 0
        %1964 = vmatpush1.bf16.msra.mxu0 0
        %1965 = vmatprep.subr.bf16.mxu0 0
        %1966 = vmatpush1.bf16.msra.mxu0 0
        %1967 = vmatprep.subr.bf16.mxu0 0
        %1968 = vmatpush1.bf16.msra.mxu0 0
        %1969 = vmatprep.subr.bf16.mxu0 0
        %1970 = vmatpush1.bf16.msra.mxu0 0
        %1971 = vmatprep.subr.bf16.mxu0 0
        %1972 = vmatpush1.bf16.msra.mxu0 0
        %1973 = vmatprep.subr.bf16.mxu0 0
        %1974 = vmatpush1.bf16.msra.mxu0 0
        %1975 = vmatprep.subr.bf16.mxu0 0
        %1976 = vmatpush1.bf16.msra.mxu0 0
        %1977 = vmatprep.subr.bf16.mxu0 0
        %1978 = vmatpush1.bf16.msra.mxu0 0
        %1979 = vmatprep.subr.bf16.mxu0 0
        %1980 = vmatpush1.bf16.msra.mxu0 0
        %1981 = vmatprep.subr.bf16.mxu0 0
        %1982 = vmatpush1.bf16.msra.mxu0 0
        %1983 = vmatprep.mubr.bf16.mxu0 0
        %1984 = vmatmul.mubr.bf16.gmra.mrb[0].mxu0 %v1949
        %v1985 = vpop.f32.mrb[0].mxu0
        %v1986 = vadd.f32 0.0, %v1985
        %v1987 = vpop.f32.mrb[0].mxu0
        %v1988 = vadd.f32 0.0, %v1987
        %v1989 = vpop.f32.mrb[0].mxu0
        %v1990 = vpop.f32.mrb[0].mxu0
        %1991 = vdwg.mxu0
        %1992 = vmatprep.subr.bf16.mxu0 %v1919
        %1993 = vmatpush1.bf16.msra.mxu0 %v1918
        %1994 = vmatprep.subr.bf16.mxu0 %v1927
        %1995 = vmatpush1.bf16.msra.mxu0 %v1926
        %1996 = vmatprep.subr.bf16.mxu0 0
        %1997 = vmatpush1.bf16.msra.mxu0 0
        %1998 = vmatprep.subr.bf16.mxu0 0
        %1999 = vmatpush1.bf16.msra.mxu0 0
        %2000 = vmatprep.subr.bf16.mxu0 0
        %2001 = vmatpush1.bf16.msra.mxu0 0
        %2002 = vmatprep.subr.bf16.mxu0 0
        %2003 = vmatpush1.bf16.msra.mxu0 0
        %2004 = vmatprep.subr.bf16.mxu0 0
        %2005 = vmatpush1.bf16.msra.mxu0 0
        %2006 = vmatprep.subr.bf16.mxu0 0
        %2007 = vmatpush1.bf16.msra.mxu0 0
        %2008 = vmatprep.subr.bf16.mxu0 0
        %2009 = vmatpush1.bf16.msra.mxu0 0
        %2010 = vmatprep.subr.bf16.mxu0 0
        %2011 = vmatpush1.bf16.msra.mxu0 0
        %2012 = vmatprep.subr.bf16.mxu0 0
        %2013 = vmatpush1.bf16.msra.mxu0 0
        %2014 = vmatprep.subr.bf16.mxu0 0
        %2015 = vmatpush1.bf16.msra.mxu0 0
        %2016 = vmatprep.subr.bf16.mxu0 0
        %2017 = vmatpush1.bf16.msra.mxu0 0
        %2018 = vmatprep.subr.bf16.mxu0 0
        %2019 = vmatpush1.bf16.msra.mxu0 0
        %2020 = vmatprep.subr.bf16.mxu0 0
        %2021 = vmatpush1.bf16.msra.mxu0 0
        %2022 = vmatprep.subr.bf16.mxu0 0
        %2023 = vmatpush1.bf16.msra.mxu0 0
        %2024 = vmatprep.mubr.bf16.mxu0 0
        %2025 = vmatmul.mubr.bf16.gmra.mrb[0].mxu0 %v1949
        %v2026 = vpop.f32.mrb[0].mxu0
        %v2027 = vadd.f32 0.0, %v2026
        %v2028 = vpop.f32.mrb[0].mxu0
        %v2029 = vadd.f32 0.0, %v2028
        %v2030 = vpop.f32.mrb[0].mxu0
        %v2031 = vpop.f32.mrb[0].mxu0
        %2032 = vdwg.mxu0
        %2033 = vmatprep.subr.bf16.mxu0 %v1921
        %2034 = vmatpush1.bf16.msra.mxu0 %v1920
        %2035 = vmatprep.subr.bf16.mxu0 %v1929
        %2036 = vmatpush1.bf16.msra.mxu0 %v1928
        %2037 = vmatprep.subr.bf16.mxu0 0
        %2038 = vmatpush1.bf16.msra.mxu0 0
        %2039 = vmatprep.subr.bf16.mxu0 0
        %2040 = vmatpush1.bf16.msra.mxu0 0
        %2041 = vmatprep.subr.bf16.mxu0 0
        %2042 = vmatpush1.bf16.msra.mxu0 0
        %2043 = vmatprep.subr.bf16.mxu0 0
        %2044 = vmatpush1.bf16.msra.mxu0 0
        %2045 = vmatprep.subr.bf16.mxu0 0
        %2046 = vmatpush1.bf16.msra.mxu0 0
        %2047 = vmatprep.subr.bf16.mxu0 0
        %2048 = vmatpush1.bf16.msra.mxu0 0
        %2049 = vmatprep.subr.bf16.mxu0 0
        %2050 = vmatpush1.bf16.msra.mxu0 0
        %2051 = vmatprep.subr.bf16.mxu0 0
        %2052 = vmatpush1.bf16.msra.mxu0 0
        %2053 = vmatprep.subr.bf16.mxu0 0
        %2054 = vmatpush1.bf16.msra.mxu0 0
        %2055 = vmatprep.subr.bf16.mxu0 0
        %2056 = vmatpush1.bf16.msra.mxu0 0
        %2057 = vmatprep.subr.bf16.mxu0 0
        %2058 = vmatpush1.bf16.msra.mxu0 0
        %2059 = vmatprep.subr.bf16.mxu0 0
        %2060 = vmatpush1.bf16.msra.mxu0 0
        %2061 = vmatprep.subr.bf16.mxu0 0
        %2062 = vmatpush1.bf16.msra.mxu0 0
        %2063 = vmatprep.subr.bf16.mxu0 0
        %2064 = vmatpush1.bf16.msra.mxu0 0
        %2065 = vmatprep.mubr.bf16.mxu0 0
        %2066 = vmatmul.mubr.bf16.gmra.mrb[0].mxu0 %v1949
        %v2067 = vpop.f32.mrb[0].mxu0
        %v2068 = vadd.f32 0.0, %v2067
        %v2069 = vpop.f32.mrb[0].mxu0
        %v2070 = vadd.f32 0.0, %v2069
        %v2071 = vpop.f32.mrb[0].mxu0
        %v2072 = vpop.f32.mrb[0].mxu0
        %2073 = vdwg.mxu0
        %2074 = vmatprep.subr.bf16.mxu0 %v1923
        %2075 = vmatpush1.bf16.msra.mxu0 %v1922
        %2076 = vmatprep.subr.bf16.mxu0 %v1931
        %2077 = vmatpush1.bf16.msra.mxu0 %v1930
        %2078 = vmatprep.subr.bf16.mxu0 0
        %2079 = vmatpush1.bf16.msra.mxu0 0
        %2080 = vmatprep.subr.bf16.mxu0 0
        %2081 = vmatpush1.bf16.msra.mxu0 0
        %2082 = vmatprep.subr.bf16.mxu0 0
        %2083 = vmatpush1.bf16.msra.mxu0 0
        %2084 = vmatprep.subr.bf16.mxu0 0
        %2085 = vmatpush1.bf16.msra.mxu0 0
        %2086 = vmatprep.subr.bf16.mxu0 0
        %2087 = vmatpush1.bf16.msra.mxu0 0
        %2088 = vmatprep.subr.bf16.mxu0 0
        %2089 = vmatpush1.bf16.msra.mxu0 0
        %2090 = vmatprep.subr.bf16.mxu0 0
        %2091 = vmatpush1.bf16.msra.mxu0 0
        %2092 = vmatprep.subr.bf16.mxu0 0
        %2093 = vmatpush1.bf16.msra.mxu0 0
        %2094 = vmatprep.subr.bf16.mxu0 0
        %2095 = vmatpush1.bf16.msra.mxu0 0
        %2096 = vmatprep.subr.bf16.mxu0 0
        %2097 = vmatpush1.bf16.msra.mxu0 0
        %2098 = vmatprep.subr.bf16.mxu0 0
        %2099 = vmatpush1.bf16.msra.mxu0 0
        %2100 = vmatprep.subr.bf16.mxu0 0
        %2101 = vmatpush1.bf16.msra.mxu0 0
        %2102 = vmatprep.subr.bf16.mxu0 0
        %2103 = vmatpush1.bf16.msra.mxu0 0
        %2104 = vmatprep.subr.bf16.mxu0 0
        %2105 = vmatpush1.bf16.msra.mxu0 0
        %2106 = vmatprep.mubr.bf16.mxu0 0
        %2107 = vmatmul.mubr.bf16.gmra.mrb[0].mxu0 %v1949
        %v2108 = vpop.f32.mrb[0].mxu0
        %v2109 = vadd.f32 0.0, %v2108
        %v2110 = vpop.f32.mrb[0].mxu0
        %v2111 = vadd.f32 0.0, %v2110
        %v2112 = vpop.f32.mrb[0].mxu0
        %v2113 = vpop.f32.mrb[0].mxu0
        %2114 = vdwg.mxu0
        %v2115 = vadd.f32 %v1869, %v1986
        %v2116 = vadd.f32 %v1870, %v1988
        %v2117 = vadd.f32 %v1871, %v2027
        %v2118 = vadd.f32 %v1872, %v2029
        %v2119 = vadd.f32 %v1873, %v2068
        %v2120 = vadd.f32 %v1874, %v2070
        %v2121 = vadd.f32 %v1875, %v2109
        %v2122 = vadd.f32 %v1876, %v2111
        %s2123 = scalar_lea.vmem %s5, 16
        %v2124 = vld [vmem:[%s2123] sm:$0xf]
        %2125 = vrot.lane.b32.xlu0 %v1120, 100
        %v2126 = vpop.permute.xlu0 %2125
        %2127 = vrot.lane.b32.xlu0 %v1121, 100
        %v2128 = vpop.permute.xlu0 %2127
        %2129 = vrot.lane.b32.xlu0 %v1122, 100
        %v2130 = vpop.permute.xlu0 %2129
        %2131 = vrot.lane.b32.xlu0 %v1123, 100
        %v2132 = vpop.permute.xlu0 %2131
        %2133 = vrot.lane.b32.xlu0 %v1124, 100
        %v2134 = vpop.permute.xlu0 %2133
        %2135 = vrot.lane.b32.xlu0 %v1125, 100
        %v2136 = vpop.permute.xlu0 %2135
        %2137 = vrot.lane.b32.xlu0 %v1126, 100
        %v2138 = vpop.permute.xlu0 %2137
        %2139 = vrot.lane.b32.xlu0 %v1127, 100
        %v2140 = vpop.permute.xlu0 %2139
        %2141 = vrot.lane.b32.xlu0 %v1128, 100
        %v2142 = vpop.permute.xlu0 %2141
        %2143 = vrot.lane.b32.xlu0 %v1129, 100
        %v2144 = vpop.permute.xlu0 %2143
        %2145 = vrot.lane.b32.xlu0 %v1130, 100
        %v2146 = vpop.permute.xlu0 %2145
        %2147 = vrot.lane.b32.xlu0 %v1131, 100
        %v2148 = vpop.permute.xlu0 %2147
        %2149 = vrot.lane.b32.xlu0 %v1132, 100
        %v2150 = vpop.permute.xlu0 %2149
        %2151 = vrot.lane.b32.xlu0 %v1133, 100
        %v2152 = vpop.permute.xlu0 %2151
        %2153 = vrot.lane.b32.xlu0 %v1134, 100
        %v2154 = vpop.permute.xlu0 %2153
        %2155 = vrot.lane.b32.xlu0 %v1135, 100
        %v2156 = vpop.permute.xlu0 %2155
        %2157 = vrot.lane.b32.xlu0 %v1136, 100
        %v2158 = vpop.permute.xlu0 %2157
        %2159 = vrot.lane.b32.xlu0 %v1137, 100
        %v2160 = vpop.permute.xlu0 %2159
        %vm2161 = vcmask 818176
        %v2162 = vsel %vm2161, %v2126, %v2128
        %v2163 = vsel %vm2161, %v2128, %v2130
        %v2164 = vsel %vm2161, %v2130, %v2132
        %v2165 = vsel %vm2161, %v2132, %v2134
        %v2166 = vsel %vm2161, %v2134, %v2136
        %v2167 = vsel %vm2161, %v2136, %v2138
        %v2168 = vsel %vm2161, %v2138, %v2140
        %v2169 = vsel %vm2161, %v2140, %v2142
        %v2170 = vsel %vm2161, %v2144, %v2146
        %v2171 = vsel %vm2161, %v2146, %v2148
        %v2172 = vsel %vm2161, %v2148, %v2150
        %v2173 = vsel %vm2161, %v2150, %v2152
        %v2174 = vsel %vm2161, %v2152, %v2154
        %v2175 = vsel %vm2161, %v2154, %v2156
        %v2176 = vsel %vm2161, %v2156, %v2158
        %v2177 = vsel %vm2161, %v2158, %v2160
        %v2195 = vsel %vm1227, %v2124, 0
        %2197 = vmatprep.subr.bf16.mxu0 %v2163
        %2198 = vmatpush1.bf16.msra.mxu0 %v2162
        %2199 = vmatprep.subr.bf16.mxu0 %v2171
        %2200 = vmatpush1.bf16.msra.mxu0 %v2170
        %2201 = vmatprep.subr.bf16.mxu0 0
        %2202 = vmatpush1.bf16.msra.mxu0 0
        %2203 = vmatprep.subr.bf16.mxu0 0
        %2204 = vmatpush1.bf16.msra.mxu0 0
        %2205 = vmatprep.subr.bf16.mxu0 0
        %2206 = vmatpush1.bf16.msra.mxu0 0
        %2207 = vmatprep.subr.bf16.mxu0 0
        %2208 = vmatpush1.bf16.msra.mxu0 0
        %2209 = vmatprep.subr.bf16.mxu0 0
        %2210 = vmatpush1.bf16.msra.mxu0 0
        %2211 = vmatprep.subr.bf16.mxu0 0
        %2212 = vmatpush1.bf16.msra.mxu0 0
        %2213 = vmatprep.subr.bf16.mxu0 0
        %2214 = vmatpush1.bf16.msra.mxu0 0
        %2215 = vmatprep.subr.bf16.mxu0 0
        %2216 = vmatpush1.bf16.msra.mxu0 0
        %2217 = vmatprep.subr.bf16.mxu0 0
        %2218 = vmatpush1.bf16.msra.mxu0 0
        %2219 = vmatprep.subr.bf16.mxu0 0
        %2220 = vmatpush1.bf16.msra.mxu0 0
        %2221 = vmatprep.subr.bf16.mxu0 0
        %2222 = vmatpush1.bf16.msra.mxu0 0
        %2223 = vmatprep.subr.bf16.mxu0 0
        %2224 = vmatpush1.bf16.msra.mxu0 0
        %2225 = vmatprep.subr.bf16.mxu0 0
        %2226 = vmatpush1.bf16.msra.mxu0 0
        %2227 = vmatprep.subr.bf16.mxu0 0
        %2228 = vmatpush1.bf16.msra.mxu0 0
        %2229 = vmatprep.mubr.bf16.mxu0 0
        %2230 = vmatmul.mubr.bf16.gmra.mrb[0].mxu0 %v2195
        %v2231 = vpop.f32.mrb[0].mxu0
        %v2232 = vadd.f32 0.0, %v2231
        %v2233 = vpop.f32.mrb[0].mxu0
        %v2234 = vadd.f32 0.0, %v2233
        %v2235 = vpop.f32.mrb[0].mxu0
        %v2236 = vpop.f32.mrb[0].mxu0
        %2237 = vdwg.mxu0
        %2238 = vmatprep.subr.bf16.mxu0 %v2165
        %2239 = vmatpush1.bf16.msra.mxu0 %v2164
        %2240 = vmatprep.subr.bf16.mxu0 %v2173
        %2241 = vmatpush1.bf16.msra.mxu0 %v2172
        %2242 = vmatprep.subr.bf16.mxu0 0
        %2243 = vmatpush1.bf16.msra.mxu0 0
        %2244 = vmatprep.subr.bf16.mxu0 0
        %2245 = vmatpush1.bf16.msra.mxu0 0
        %2246 = vmatprep.subr.bf16.mxu0 0
        %2247 = vmatpush1.bf16.msra.mxu0 0
        %2248 = vmatprep.subr.bf16.mxu0 0
        %2249 = vmatpush1.bf16.msra.mxu0 0
        %2250 = vmatprep.subr.bf16.mxu0 0
        %2251 = vmatpush1.bf16.msra.mxu0 0
        %2252 = vmatprep.subr.bf16.mxu0 0
        %2253 = vmatpush1.bf16.msra.mxu0 0
        %2254 = vmatprep.subr.bf16.mxu0 0
        %2255 = vmatpush1.bf16.msra.mxu0 0
        %2256 = vmatprep.subr.bf16.mxu0 0
        %2257 = vmatpush1.bf16.msra.mxu0 0
        %2258 = vmatprep.subr.bf16.mxu0 0
        %2259 = vmatpush1.bf16.msra.mxu0 0
        %2260 = vmatprep.subr.bf16.mxu0 0
        %2261 = vmatpush1.bf16.msra.mxu0 0
        %2262 = vmatprep.subr.bf16.mxu0 0
        %2263 = vmatpush1.bf16.msra.mxu0 0
        %2264 = vmatprep.subr.bf16.mxu0 0
        %2265 = vmatpush1.bf16.msra.mxu0 0
        %2266 = vmatprep.subr.bf16.mxu0 0
        %2267 = vmatpush1.bf16.msra.mxu0 0
        %2268 = vmatprep.subr.bf16.mxu0 0
        %2269 = vmatpush1.bf16.msra.mxu0 0
        %2270 = vmatprep.mubr.bf16.mxu0 0
        %2271 = vmatmul.mubr.bf16.gmra.mrb[0].mxu0 %v2195
        %v2272 = vpop.f32.mrb[0].mxu0
        %v2273 = vadd.f32 0.0, %v2272
        %v2274 = vpop.f32.mrb[0].mxu0
        %v2275 = vadd.f32 0.0, %v2274
        %v2276 = vpop.f32.mrb[0].mxu0
        %v2277 = vpop.f32.mrb[0].mxu0
        %2278 = vdwg.mxu0
        %2279 = vmatprep.subr.bf16.mxu0 %v2167
        %2280 = vmatpush1.bf16.msra.mxu0 %v2166
        %2281 = vmatprep.subr.bf16.mxu0 %v2175
        %2282 = vmatpush1.bf16.msra.mxu0 %v2174
        %2283 = vmatprep.subr.bf16.mxu0 0
        %2284 = vmatpush1.bf16.msra.mxu0 0
        %2285 = vmatprep.subr.bf16.mxu0 0
        %2286 = vmatpush1.bf16.msra.mxu0 0
        %2287 = vmatprep.subr.bf16.mxu0 0
        %2288 = vmatpush1.bf16.msra.mxu0 0
        %2289 = vmatprep.subr.bf16.mxu0 0
        %2290 = vmatpush1.bf16.msra.mxu0 0
        %2291 = vmatprep.subr.bf16.mxu0 0
        %2292 = vmatpush1.bf16.msra.mxu0 0
        %2293 = vmatprep.subr.bf16.mxu0 0
        %2294 = vmatpush1.bf16.msra.mxu0 0
        %2295 = vmatprep.subr.bf16.mxu0 0
        %2296 = vmatpush1.bf16.msra.mxu0 0
        %2297 = vmatprep.subr.bf16.mxu0 0
        %2298 = vmatpush1.bf16.msra.mxu0 0
        %2299 = vmatprep.subr.bf16.mxu0 0
        %2300 = vmatpush1.bf16.msra.mxu0 0
        %2301 = vmatprep.subr.bf16.mxu0 0
        %2302 = vmatpush1.bf16.msra.mxu0 0
        %2303 = vmatprep.subr.bf16.mxu0 0
        %2304 = vmatpush1.bf16.msra.mxu0 0
        %2305 = vmatprep.subr.bf16.mxu0 0
        %2306 = vmatpush1.bf16.msra.mxu0 0
        %2307 = vmatprep.subr.bf16.mxu0 0
        %2308 = vmatpush1.bf16.msra.mxu0 0
        %2309 = vmatprep.subr.bf16.mxu0 0
        %2310 = vmatpush1.bf16.msra.mxu0 0
        %2311 = vmatprep.mubr.bf16.mxu0 0
        %2312 = vmatmul.mubr.bf16.gmra.mrb[0].mxu0 %v2195
        %v2313 = vpop.f32.mrb[0].mxu0
        %v2314 = vadd.f32 0.0, %v2313
        %v2315 = vpop.f32.mrb[0].mxu0
        %v2316 = vadd.f32 0.0, %v2315
        %v2317 = vpop.f32.mrb[0].mxu0
        %v2318 = vpop.f32.mrb[0].mxu0
        %2319 = vdwg.mxu0
        %2320 = vmatprep.subr.bf16.mxu0 %v2169
        %2321 = vmatpush1.bf16.msra.mxu0 %v2168
        %2322 = vmatprep.subr.bf16.mxu0 %v2177
        %2323 = vmatpush1.bf16.msra.mxu0 %v2176
        %2324 = vmatprep.subr.bf16.mxu0 0
        %2325 = vmatpush1.bf16.msra.mxu0 0
        %2326 = vmatprep.subr.bf16.mxu0 0
        %2327 = vmatpush1.bf16.msra.mxu0 0
        %2328 = vmatprep.subr.bf16.mxu0 0
        %2329 = vmatpush1.bf16.msra.mxu0 0
        %2330 = vmatprep.subr.bf16.mxu0 0
        %2331 = vmatpush1.bf16.msra.mxu0 0
        %2332 = vmatprep.subr.bf16.mxu0 0
        %2333 = vmatpush1.bf16.msra.mxu0 0
        %2334 = vmatprep.subr.bf16.mxu0 0
        %2335 = vmatpush1.bf16.msra.mxu0 0
        %2336 = vmatprep.subr.bf16.mxu0 0
        %2337 = vmatpush1.bf16.msra.mxu0 0
        %2338 = vmatprep.subr.bf16.mxu0 0
        %2339 = vmatpush1.bf16.msra.mxu0 0
        %2340 = vmatprep.subr.bf16.mxu0 0
        %2341 = vmatpush1.bf16.msra.mxu0 0
        %2342 = vmatprep.subr.bf16.mxu0 0
        %2343 = vmatpush1.bf16.msra.mxu0 0
        %2344 = vmatprep.subr.bf16.mxu0 0
        %2345 = vmatpush1.bf16.msra.mxu0 0
        %2346 = vmatprep.subr.bf16.mxu0 0
        %2347 = vmatpush1.bf16.msra.mxu0 0
        %2348 = vmatprep.subr.bf16.mxu0 0
        %2349 = vmatpush1.bf16.msra.mxu0 0
        %2350 = vmatprep.subr.bf16.mxu0 0
        %2351 = vmatpush1.bf16.msra.mxu0 0
        %2352 = vmatprep.mubr.bf16.mxu0 0
        %2353 = vmatmul.mubr.bf16.gmra.mrb[0].mxu0 %v2195
        %v2354 = vpop.f32.mrb[0].mxu0
        %v2355 = vadd.f32 0.0, %v2354
        %v2356 = vpop.f32.mrb[0].mxu0
        %v2357 = vadd.f32 0.0, %v2356
        %v2358 = vpop.f32.mrb[0].mxu0
        %v2359 = vpop.f32.mrb[0].mxu0
        %2360 = vdwg.mxu0
        %v2361 = vadd.f32 %v2115, %v2232
        %v2362 = vadd.f32 %v2116, %v2234
        %v2363 = vadd.f32 %v2117, %v2273
        %v2364 = vadd.f32 %v2118, %v2275
        %v2365 = vadd.f32 %v2119, %v2314
        %v2366 = vadd.f32 %v2120, %v2316
        %v2367 = vadd.f32 %v2121, %v2355
        %v2368 = vadd.f32 %v2122, %v2357
        %s2369 = scalar_lea.vmem %s5, 20
        %v2370 = vld [vmem:[%s2369] sm:$0xf]
        %2371 = vrot.lane.b32.xlu0 %v1120, 99
        %v2372 = vpop.permute.xlu0 %2371
        %2373 = vrot.lane.b32.xlu0 %v1121, 99
        %v2374 = vpop.permute.xlu0 %2373
        %2375 = vrot.lane.b32.xlu0 %v1122, 99
        %v2376 = vpop.permute.xlu0 %2375
        %2377 = vrot.lane.b32.xlu0 %v1123, 99
        %v2378 = vpop.permute.xlu0 %2377
        %2379 = vrot.lane.b32.xlu0 %v1124, 99
        %v2380 = vpop.permute.xlu0 %2379
        %2381 = vrot.lane.b32.xlu0 %v1125, 99
        %v2382 = vpop.permute.xlu0 %2381
        %2383 = vrot.lane.b32.xlu0 %v1126, 99
        %v2384 = vpop.permute.xlu0 %2383
        %2385 = vrot.lane.b32.xlu0 %v1127, 99
        %v2386 = vpop.permute.xlu0 %2385
        %2387 = vrot.lane.b32.xlu0 %v1128, 99
        %v2388 = vpop.permute.xlu0 %2387
        %2389 = vrot.lane.b32.xlu0 %v1129, 99
        %v2390 = vpop.permute.xlu0 %2389
        %2391 = vrot.lane.b32.xlu0 %v1130, 99
        %v2392 = vpop.permute.xlu0 %2391
        %2393 = vrot.lane.b32.xlu0 %v1131, 99
        %v2394 = vpop.permute.xlu0 %2393
        %2395 = vrot.lane.b32.xlu0 %v1132, 99
        %v2396 = vpop.permute.xlu0 %2395
        %2397 = vrot.lane.b32.xlu0 %v1133, 99
        %v2398 = vpop.permute.xlu0 %2397
        %2399 = vrot.lane.b32.xlu0 %v1134, 99
        %v2400 = vpop.permute.xlu0 %2399
        %2401 = vrot.lane.b32.xlu0 %v1135, 99
        %v2402 = vpop.permute.xlu0 %2401
        %2403 = vrot.lane.b32.xlu0 %v1136, 99
        %v2404 = vpop.permute.xlu0 %2403
        %2405 = vrot.lane.b32.xlu0 %v1137, 99
        %v2406 = vpop.permute.xlu0 %2405
        %vm2407 = vcmask 809984
        %v2408 = vsel %vm2407, %v2372, %v2374
        %v2409 = vsel %vm2407, %v2374, %v2376
        %v2410 = vsel %vm2407, %v2376, %v2378
        %v2411 = vsel %vm2407, %v2378, %v2380
        %v2412 = vsel %vm2407, %v2380, %v2382
        %v2413 = vsel %vm2407, %v2382, %v2384
        %v2414 = vsel %vm2407, %v2384, %v2386
        %v2415 = vsel %vm2407, %v2386, %v2388
        %v2416 = vsel %vm2407, %v2390, %v2392
        %v2417 = vsel %vm2407, %v2392, %v2394
        %v2418 = vsel %vm2407, %v2394, %v2396
        %v2419 = vsel %vm2407, %v2396, %v2398
        %v2420 = vsel %vm2407, %v2398, %v2400
        %v2421 = vsel %vm2407, %v2400, %v2402
        %v2422 = vsel %vm2407, %v2402, %v2404
        %v2423 = vsel %vm2407, %v2404, %v2406
        %v2441 = vsel %vm1227, %v2370, 0
        %2443 = vmatprep.subr.bf16.mxu0 %v2409
        %2444 = vmatpush1.bf16.msra.mxu0 %v2408
        %2445 = vmatprep.subr.bf16.mxu0 %v2417
        %2446 = vmatpush1.bf16.msra.mxu0 %v2416
        %2447 = vmatprep.subr.bf16.mxu0 0
        %2448 = vmatpush1.bf16.msra.mxu0 0
        %2449 = vmatprep.subr.bf16.mxu0 0
        %2450 = vmatpush1.bf16.msra.mxu0 0
        %2451 = vmatprep.subr.bf16.mxu0 0
        %2452 = vmatpush1.bf16.msra.mxu0 0
        %2453 = vmatprep.subr.bf16.mxu0 0
        %2454 = vmatpush1.bf16.msra.mxu0 0
        %2455 = vmatprep.subr.bf16.mxu0 0
        %2456 = vmatpush1.bf16.msra.mxu0 0
        %2457 = vmatprep.subr.bf16.mxu0 0
        %2458 = vmatpush1.bf16.msra.mxu0 0
        %2459 = vmatprep.subr.bf16.mxu0 0
        %2460 = vmatpush1.bf16.msra.mxu0 0
        %2461 = vmatprep.subr.bf16.mxu0 0
        %2462 = vmatpush1.bf16.msra.mxu0 0
        %2463 = vmatprep.subr.bf16.mxu0 0
        %2464 = vmatpush1.bf16.msra.mxu0 0
        %2465 = vmatprep.subr.bf16.mxu0 0
        %2466 = vmatpush1.bf16.msra.mxu0 0
        %2467 = vmatprep.subr.bf16.mxu0 0
        %2468 = vmatpush1.bf16.msra.mxu0 0
        %2469 = vmatprep.subr.bf16.mxu0 0
        %2470 = vmatpush1.bf16.msra.mxu0 0
        %2471 = vmatprep.subr.bf16.mxu0 0
        %2472 = vmatpush1.bf16.msra.mxu0 0
        %2473 = vmatprep.subr.bf16.mxu0 0
        %2474 = vmatpush1.bf16.msra.mxu0 0
        %2475 = vmatprep.mubr.bf16.mxu0 0
        %2476 = vmatmul.mubr.bf16.gmra.mrb[0].mxu0 %v2441
        %v2477 = vpop.f32.mrb[0].mxu0
        %v2478 = vadd.f32 0.0, %v2477
        %v2479 = vpop.f32.mrb[0].mxu0
        %v2480 = vadd.f32 0.0, %v2479
        %v2481 = vpop.f32.mrb[0].mxu0
        %v2482 = vpop.f32.mrb[0].mxu0
        %2483 = vdwg.mxu0
        %2484 = vmatprep.subr.bf16.mxu0 %v2411
        %2485 = vmatpush1.bf16.msra.mxu0 %v2410
        %2486 = vmatprep.subr.bf16.mxu0 %v2419
        %2487 = vmatpush1.bf16.msra.mxu0 %v2418
        %2488 = vmatprep.subr.bf16.mxu0 0
        %2489 = vmatpush1.bf16.msra.mxu0 0
        %2490 = vmatprep.subr.bf16.mxu0 0
        %2491 = vmatpush1.bf16.msra.mxu0 0
        %2492 = vmatprep.subr.bf16.mxu0 0
        %2493 = vmatpush1.bf16.msra.mxu0 0
        %2494 = vmatprep.subr.bf16.mxu0 0
        %2495 = vmatpush1.bf16.msra.mxu0 0
        %2496 = vmatprep.subr.bf16.mxu0 0
        %2497 = vmatpush1.bf16.msra.mxu0 0
        %2498 = vmatprep.subr.bf16.mxu0 0
        %2499 = vmatpush1.bf16.msra.mxu0 0
        %2500 = vmatprep.subr.bf16.mxu0 0
        %2501 = vmatpush1.bf16.msra.mxu0 0
        %2502 = vmatprep.subr.bf16.mxu0 0
        %2503 = vmatpush1.bf16.msra.mxu0 0
        %2504 = vmatprep.subr.bf16.mxu0 0
        %2505 = vmatpush1.bf16.msra.mxu0 0
        %2506 = vmatprep.subr.bf16.mxu0 0
        %2507 = vmatpush1.bf16.msra.mxu0 0
        %2508 = vmatprep.subr.bf16.mxu0 0
        %2509 = vmatpush1.bf16.msra.mxu0 0
        %2510 = vmatprep.subr.bf16.mxu0 0
        %2511 = vmatpush1.bf16.msra.mxu0 0
        %2512 = vmatprep.subr.bf16.mxu0 0
        %2513 = vmatpush1.bf16.msra.mxu0 0
        %2514 = vmatprep.subr.bf16.mxu0 0
        %2515 = vmatpush1.bf16.msra.mxu0 0
        %2516 = vmatprep.mubr.bf16.mxu0 0
        %2517 = vmatmul.mubr.bf16.gmra.mrb[0].mxu0 %v2441
        %v2518 = vpop.f32.mrb[0].mxu0
        %v2519 = vadd.f32 0.0, %v2518
        %v2520 = vpop.f32.mrb[0].mxu0
        %v2521 = vadd.f32 0.0, %v2520
        %v2522 = vpop.f32.mrb[0].mxu0
        %v2523 = vpop.f32.mrb[0].mxu0
        %2524 = vdwg.mxu0
        %2525 = vmatprep.subr.bf16.mxu0 %v2413
        %2526 = vmatpush1.bf16.msra.mxu0 %v2412
        %2527 = vmatprep.subr.bf16.mxu0 %v2421
        %2528 = vmatpush1.bf16.msra.mxu0 %v2420
        %2529 = vmatprep.subr.bf16.mxu0 0
        %2530 = vmatpush1.bf16.msra.mxu0 0
        %2531 = vmatprep.subr.bf16.mxu0 0
        %2532 = vmatpush1.bf16.msra.mxu0 0
        %2533 = vmatprep.subr.bf16.mxu0 0
        %2534 = vmatpush1.bf16.msra.mxu0 0
        %2535 = vmatprep.subr.bf16.mxu0 0
        %2536 = vmatpush1.bf16.msra.mxu0 0
        %2537 = vmatprep.subr.bf16.mxu0 0
        %2538 = vmatpush1.bf16.msra.mxu0 0
        %2539 = vmatprep.subr.bf16.mxu0 0
        %2540 = vmatpush1.bf16.msra.mxu0 0
        %2541 = vmatprep.subr.bf16.mxu0 0
        %2542 = vmatpush1.bf16.msra.mxu0 0
        %2543 = vmatprep.subr.bf16.mxu0 0
        %2544 = vmatpush1.bf16.msra.mxu0 0
        %2545 = vmatprep.subr.bf16.mxu0 0
        %2546 = vmatpush1.bf16.msra.mxu0 0
        %2547 = vmatprep.subr.bf16.mxu0 0
        %2548 = vmatpush1.bf16.msra.mxu0 0
        %2549 = vmatprep.subr.bf16.mxu0 0
        %2550 = vmatpush1.bf16.msra.mxu0 0
        %2551 = vmatprep.subr.bf16.mxu0 0
        %2552 = vmatpush1.bf16.msra.mxu0 0
        %2553 = vmatprep.subr.bf16.mxu0 0
        %2554 = vmatpush1.bf16.msra.mxu0 0
        %2555 = vmatprep.subr.bf16.mxu0 0
        %2556 = vmatpush1.bf16.msra.mxu0 0
        %2557 = vmatprep.mubr.bf16.mxu0 0
        %2558 = vmatmul.mubr.bf16.gmra.mrb[0].mxu0 %v2441
        %v2559 = vpop.f32.mrb[0].mxu0
        %v2560 = vadd.f32 0.0, %v2559
        %v2561 = vpop.f32.mrb[0].mxu0
        %v2562 = vadd.f32 0.0, %v2561
        %v2563 = vpop.f32.mrb[0].mxu0
        %v2564 = vpop.f32.mrb[0].mxu0
        %2565 = vdwg.mxu0
        %2566 = vmatprep.subr.bf16.mxu0 %v2415
        %2567 = vmatpush1.bf16.msra.mxu0 %v2414
        %2568 = vmatprep.subr.bf16.mxu0 %v2423
        %2569 = vmatpush1.bf16.msra.mxu0 %v2422
        %2570 = vmatprep.subr.bf16.mxu0 0
        %2571 = vmatpush1.bf16.msra.mxu0 0
        %2572 = vmatprep.subr.bf16.mxu0 0
        %2573 = vmatpush1.bf16.msra.mxu0 0
        %2574 = vmatprep.subr.bf16.mxu0 0
        %2575 = vmatpush1.bf16.msra.mxu0 0
        %2576 = vmatprep.subr.bf16.mxu0 0
        %2577 = vmatpush1.bf16.msra.mxu0 0
        %2578 = vmatprep.subr.bf16.mxu0 0
        %2579 = vmatpush1.bf16.msra.mxu0 0
        %2580 = vmatprep.subr.bf16.mxu0 0
        %2581 = vmatpush1.bf16.msra.mxu0 0
        %2582 = vmatprep.subr.bf16.mxu0 0
        %2583 = vmatpush1.bf16.msra.mxu0 0
        %2584 = vmatprep.subr.bf16.mxu0 0
        %2585 = vmatpush1.bf16.msra.mxu0 0
        %2586 = vmatprep.subr.bf16.mxu0 0
        %2587 = vmatpush1.bf16.msra.mxu0 0
        %2588 = vmatprep.subr.bf16.mxu0 0
        %2589 = vmatpush1.bf16.msra.mxu0 0
        %2590 = vmatprep.subr.bf16.mxu0 0
        %2591 = vmatpush1.bf16.msra.mxu0 0
        %2592 = vmatprep.subr.bf16.mxu0 0
        %2593 = vmatpush1.bf16.msra.mxu0 0
        %2594 = vmatprep.subr.bf16.mxu0 0
        %2595 = vmatpush1.bf16.msra.mxu0 0
        %2596 = vmatprep.subr.bf16.mxu0 0
        %2597 = vmatpush1.bf16.msra.mxu0 0
        %2598 = vmatprep.mubr.bf16.mxu0 0
        %2599 = vmatmul.mubr.bf16.gmra.mrb[0].mxu0 %v2441
        %v2600 = vpop.f32.mrb[0].mxu0
        %v2601 = vadd.f32 0.0, %v2600
        %v2602 = vpop.f32.mrb[0].mxu0
        %v2603 = vadd.f32 0.0, %v2602
        %v2604 = vpop.f32.mrb[0].mxu0
        %v2605 = vpop.f32.mrb[0].mxu0
        %2606 = vdwg.mxu0
        %v2607 = vadd.f32 %v2361, %v2478
        %v2608 = vadd.f32 %v2362, %v2480
        %v2609 = vadd.f32 %v2363, %v2519
        %v2610 = vadd.f32 %v2364, %v2521
        %v2611 = vadd.f32 %v2365, %v2560
        %v2612 = vadd.f32 %v2366, %v2562
        %v2613 = vadd.f32 %v2367, %v2601
        %v2614 = vadd.f32 %v2368, %v2603
        %s2615 = scalar_lea.vmem %s5, 24
        %v2616 = vld [vmem:[%s2615] sm:$0xf]
        %2617 = vrot.lane.b32.xlu0 %v1120, 91
        %v2618 = vpop.permute.xlu0 %2617
        %2619 = vrot.lane.b32.xlu0 %v1121, 91
        %v2620 = vpop.permute.xlu0 %2619
        %2621 = vrot.lane.b32.xlu0 %v1122, 91
        %v2622 = vpop.permute.xlu0 %2621
        %2623 = vrot.lane.b32.xlu0 %v1123, 91
        %v2624 = vpop.permute.xlu0 %2623
        %2625 = vrot.lane.b32.xlu0 %v1124, 91
        %v2626 = vpop.permute.xlu0 %2625
        %2627 = vrot.lane.b32.xlu0 %v1125, 91
        %v2628 = vpop.permute.xlu0 %2627
        %2629 = vrot.lane.b32.xlu0 %v1126, 91
        %v2630 = vpop.permute.xlu0 %2629
        %2631 = vrot.lane.b32.xlu0 %v1127, 91
        %v2632 = vpop.permute.xlu0 %2631
        %2633 = vrot.lane.b32.xlu0 %v1128, 91
        %v2634 = vpop.permute.xlu0 %2633
        %2635 = vrot.lane.b32.xlu0 %v1129, 91
        %v2636 = vpop.permute.xlu0 %2635
        %2637 = vrot.lane.b32.xlu0 %v1130, 91
        %v2638 = vpop.permute.xlu0 %2637
        %2639 = vrot.lane.b32.xlu0 %v1131, 91
        %v2640 = vpop.permute.xlu0 %2639
        %2641 = vrot.lane.b32.xlu0 %v1132, 91
        %v2642 = vpop.permute.xlu0 %2641
        %2643 = vrot.lane.b32.xlu0 %v1133, 91
        %v2644 = vpop.permute.xlu0 %2643
        %2645 = vrot.lane.b32.xlu0 %v1134, 91
        %v2646 = vpop.permute.xlu0 %2645
        %2647 = vrot.lane.b32.xlu0 %v1135, 91
        %v2648 = vpop.permute.xlu0 %2647
        %2649 = vrot.lane.b32.xlu0 %v1136, 91
        %v2650 = vpop.permute.xlu0 %2649
        %2651 = vrot.lane.b32.xlu0 %v1137, 91
        %v2652 = vpop.permute.xlu0 %2651
        %vm2653 = vcmask 744448
        %v2654 = vsel %vm2653, %v2618, %v2620
        %v2655 = vsel %vm2653, %v2620, %v2622
        %v2656 = vsel %vm2653, %v2622, %v2624
        %v2657 = vsel %vm2653, %v2624, %v2626
        %v2658 = vsel %vm2653, %v2626, %v2628
        %v2659 = vsel %vm2653, %v2628, %v2630
        %v2660 = vsel %vm2653, %v2630, %v2632
        %v2661 = vsel %vm2653, %v2632, %v2634
        %v2662 = vsel %vm2653, %v2636, %v2638
        %v2663 = vsel %vm2653, %v2638, %v2640
        %v2664 = vsel %vm2653, %v2640, %v2642
        %v2665 = vsel %vm2653, %v2642, %v2644
        %v2666 = vsel %vm2653, %v2644, %v2646
        %v2667 = vsel %vm2653, %v2646, %v2648
        %v2668 = vsel %vm2653, %v2648, %v2650
        %v2669 = vsel %vm2653, %v2650, %v2652
        %v2687 = vsel %vm1227, %v2616, 0
        %2689 = vmatprep.subr.bf16.mxu0 %v2655
        %2690 = vmatpush1.bf16.msra.mxu0 %v2654
        %2691 = vmatprep.subr.bf16.mxu0 %v2663
        %2692 = vmatpush1.bf16.msra.mxu0 %v2662
        %2693 = vmatprep.subr.bf16.mxu0 0
        %2694 = vmatpush1.bf16.msra.mxu0 0
        %2695 = vmatprep.subr.bf16.mxu0 0
        %2696 = vmatpush1.bf16.msra.mxu0 0
        %2697 = vmatprep.subr.bf16.mxu0 0
        %2698 = vmatpush1.bf16.msra.mxu0 0
        %2699 = vmatprep.subr.bf16.mxu0 0
        %2700 = vmatpush1.bf16.msra.mxu0 0
        %2701 = vmatprep.subr.bf16.mxu0 0
        %2702 = vmatpush1.bf16.msra.mxu0 0
        %2703 = vmatprep.subr.bf16.mxu0 0
        %2704 = vmatpush1.bf16.msra.mxu0 0
        %2705 = vmatprep.subr.bf16.mxu0 0
        %2706 = vmatpush1.bf16.msra.mxu0 0
        %2707 = vmatprep.subr.bf16.mxu0 0
        %2708 = vmatpush1.bf16.msra.mxu0 0
        %2709 = vmatprep.subr.bf16.mxu0 0
        %2710 = vmatpush1.bf16.msra.mxu0 0
        %2711 = vmatprep.subr.bf16.mxu0 0
        %2712 = vmatpush1.bf16.msra.mxu0 0
        %2713 = vmatprep.subr.bf16.mxu0 0
        %2714 = vmatpush1.bf16.msra.mxu0 0
        %2715 = vmatprep.subr.bf16.mxu0 0
        %2716 = vmatpush1.bf16.msra.mxu0 0
        %2717 = vmatprep.subr.bf16.mxu0 0
        %2718 = vmatpush1.bf16.msra.mxu0 0
        %2719 = vmatprep.subr.bf16.mxu0 0
        %2720 = vmatpush1.bf16.msra.mxu0 0
        %2721 = vmatprep.mubr.bf16.mxu0 0
        %2722 = vmatmul.mubr.bf16.gmra.mrb[0].mxu0 %v2687
        %v2723 = vpop.f32.mrb[0].mxu0
        %v2724 = vadd.f32 0.0, %v2723
        %v2725 = vpop.f32.mrb[0].mxu0
        %v2726 = vadd.f32 0.0, %v2725
        %v2727 = vpop.f32.mrb[0].mxu0
        %v2728 = vpop.f32.mrb[0].mxu0
        %2729 = vdwg.mxu0
        %2730 = vmatprep.subr.bf16.mxu0 %v2657
        %2731 = vmatpush1.bf16.msra.mxu0 %v2656
        %2732 = vmatprep.subr.bf16.mxu0 %v2665
        %2733 = vmatpush1.bf16.msra.mxu0 %v2664
        %2734 = vmatprep.subr.bf16.mxu0 0
        %2735 = vmatpush1.bf16.msra.mxu0 0
        %2736 = vmatprep.subr.bf16.mxu0 0
        %2737 = vmatpush1.bf16.msra.mxu0 0
        %2738 = vmatprep.subr.bf16.mxu0 0
        %2739 = vmatpush1.bf16.msra.mxu0 0
        %2740 = vmatprep.subr.bf16.mxu0 0
        %2741 = vmatpush1.bf16.msra.mxu0 0
        %2742 = vmatprep.subr.bf16.mxu0 0
        %2743 = vmatpush1.bf16.msra.mxu0 0
        %2744 = vmatprep.subr.bf16.mxu0 0
        %2745 = vmatpush1.bf16.msra.mxu0 0
        %2746 = vmatprep.subr.bf16.mxu0 0
        %2747 = vmatpush1.bf16.msra.mxu0 0
        %2748 = vmatprep.subr.bf16.mxu0 0
        %2749 = vmatpush1.bf16.msra.mxu0 0
        %2750 = vmatprep.subr.bf16.mxu0 0
        %2751 = vmatpush1.bf16.msra.mxu0 0
        %2752 = vmatprep.subr.bf16.mxu0 0
        %2753 = vmatpush1.bf16.msra.mxu0 0
        %2754 = vmatprep.subr.bf16.mxu0 0
        %2755 = vmatpush1.bf16.msra.mxu0 0
        %2756 = vmatprep.subr.bf16.mxu0 0
        %2757 = vmatpush1.bf16.msra.mxu0 0
        %2758 = vmatprep.subr.bf16.mxu0 0
        %2759 = vmatpush1.bf16.msra.mxu0 0
        %2760 = vmatprep.subr.bf16.mxu0 0
        %2761 = vmatpush1.bf16.msra.mxu0 0
        %2762 = vmatprep.mubr.bf16.mxu0 0
        %2763 = vmatmul.mubr.bf16.gmra.mrb[0].mxu0 %v2687
        %v2764 = vpop.f32.mrb[0].mxu0
        %v2765 = vadd.f32 0.0, %v2764
        %v2766 = vpop.f32.mrb[0].mxu0
        %v2767 = vadd.f32 0.0, %v2766
        %v2768 = vpop.f32.mrb[0].mxu0
        %v2769 = vpop.f32.mrb[0].mxu0
        %2770 = vdwg.mxu0
        %2771 = vmatprep.subr.bf16.mxu0 %v2659
        %2772 = vmatpush1.bf16.msra.mxu0 %v2658
        %2773 = vmatprep.subr.bf16.mxu0 %v2667
        %2774 = vmatpush1.bf16.msra.mxu0 %v2666
        %2775 = vmatprep.subr.bf16.mxu0 0
        %2776 = vmatpush1.bf16.msra.mxu0 0
        %2777 = vmatprep.subr.bf16.mxu0 0
        %2778 = vmatpush1.bf16.msra.mxu0 0
        %2779 = vmatprep.subr.bf16.mxu0 0
        %2780 = vmatpush1.bf16.msra.mxu0 0
        %2781 = vmatprep.subr.bf16.mxu0 0
        %2782 = vmatpush1.bf16.msra.mxu0 0
        %2783 = vmatprep.subr.bf16.mxu0 0
        %2784 = vmatpush1.bf16.msra.mxu0 0
        %2785 = vmatprep.subr.bf16.mxu0 0
        %2786 = vmatpush1.bf16.msra.mxu0 0
        %2787 = vmatprep.subr.bf16.mxu0 0
        %2788 = vmatpush1.bf16.msra.mxu0 0
        %2789 = vmatprep.subr.bf16.mxu0 0
        %2790 = vmatpush1.bf16.msra.mxu0 0
        %2791 = vmatprep.subr.bf16.mxu0 0
        %2792 = vmatpush1.bf16.msra.mxu0 0
        %2793 = vmatprep.subr.bf16.mxu0 0
        %2794 = vmatpush1.bf16.msra.mxu0 0
        %2795 = vmatprep.subr.bf16.mxu0 0
        %2796 = vmatpush1.bf16.msra.mxu0 0
        %2797 = vmatprep.subr.bf16.mxu0 0
        %2798 = vmatpush1.bf16.msra.mxu0 0
        %2799 = vmatprep.subr.bf16.mxu0 0
        %2800 = vmatpush1.bf16.msra.mxu0 0
        %2801 = vmatprep.subr.bf16.mxu0 0
        %2802 = vmatpush1.bf16.msra.mxu0 0
        %2803 = vmatprep.mubr.bf16.mxu0 0
        %2804 = vmatmul.mubr.bf16.gmra.mrb[0].mxu0 %v2687
        %v2805 = vpop.f32.mrb[0].mxu0
        %v2806 = vadd.f32 0.0, %v2805
        %v2807 = vpop.f32.mrb[0].mxu0
        %v2808 = vadd.f32 0.0, %v2807
        %v2809 = vpop.f32.mrb[0].mxu0
        %v2810 = vpop.f32.mrb[0].mxu0
        %2811 = vdwg.mxu0
        %2812 = vmatprep.subr.bf16.mxu0 %v2661
        %2813 = vmatpush1.bf16.msra.mxu0 %v2660
        %2814 = vmatprep.subr.bf16.mxu0 %v2669
        %2815 = vmatpush1.bf16.msra.mxu0 %v2668
        %2816 = vmatprep.subr.bf16.mxu0 0
        %2817 = vmatpush1.bf16.msra.mxu0 0
        %2818 = vmatprep.subr.bf16.mxu0 0
        %2819 = vmatpush1.bf16.msra.mxu0 0
        %2820 = vmatprep.subr.bf16.mxu0 0
        %2821 = vmatpush1.bf16.msra.mxu0 0
        %2822 = vmatprep.subr.bf16.mxu0 0
        %2823 = vmatpush1.bf16.msra.mxu0 0
        %2824 = vmatprep.subr.bf16.mxu0 0
        %2825 = vmatpush1.bf16.msra.mxu0 0
        %2826 = vmatprep.subr.bf16.mxu0 0
        %2827 = vmatpush1.bf16.msra.mxu0 0
        %2828 = vmatprep.subr.bf16.mxu0 0
        %2829 = vmatpush1.bf16.msra.mxu0 0
        %2830 = vmatprep.subr.bf16.mxu0 0
        %2831 = vmatpush1.bf16.msra.mxu0 0
        %2832 = vmatprep.subr.bf16.mxu0 0
        %2833 = vmatpush1.bf16.msra.mxu0 0
        %2834 = vmatprep.subr.bf16.mxu0 0
        %2835 = vmatpush1.bf16.msra.mxu0 0
        %2836 = vmatprep.subr.bf16.mxu0 0
        %2837 = vmatpush1.bf16.msra.mxu0 0
        %2838 = vmatprep.subr.bf16.mxu0 0
        %2839 = vmatpush1.bf16.msra.mxu0 0
        %2840 = vmatprep.subr.bf16.mxu0 0
        %2841 = vmatpush1.bf16.msra.mxu0 0
        %2842 = vmatprep.subr.bf16.mxu0 0
        %2843 = vmatpush1.bf16.msra.mxu0 0
        %2844 = vmatprep.mubr.bf16.mxu0 0
        %2845 = vmatmul.mubr.bf16.gmra.mrb[0].mxu0 %v2687
        %v2846 = vpop.f32.mrb[0].mxu0
        %v2847 = vadd.f32 0.0, %v2846
        %v2848 = vpop.f32.mrb[0].mxu0
        %v2849 = vadd.f32 0.0, %v2848
        %v2850 = vpop.f32.mrb[0].mxu0
        %v2851 = vpop.f32.mrb[0].mxu0
        %2852 = vdwg.mxu0
        %v2853 = vadd.f32 %v2607, %v2724
        %v2854 = vadd.f32 %v2608, %v2726
        %v2855 = vadd.f32 %v2609, %v2765
        %v2856 = vadd.f32 %v2610, %v2767
        %v2857 = vadd.f32 %v2611, %v2806
        %v2858 = vadd.f32 %v2612, %v2808
        %v2859 = vadd.f32 %v2613, %v2847
        %v2860 = vadd.f32 %v2614, %v2849
        %s2861 = scalar_lea.vmem %s5, 28
        %v2862 = vld [vmem:[%s2861] sm:$0xf]
        %2863 = vrot.lane.b32.xlu0 %v1120, 90
        %v2864 = vpop.permute.xlu0 %2863
        %2865 = vrot.lane.b32.xlu0 %v1121, 90
        %v2866 = vpop.permute.xlu0 %2865
        %2867 = vrot.lane.b32.xlu0 %v1122, 90
        %v2868 = vpop.permute.xlu0 %2867
        %2869 = vrot.lane.b32.xlu0 %v1123, 90
        %v2870 = vpop.permute.xlu0 %2869
        %2871 = vrot.lane.b32.xlu0 %v1124, 90
        %v2872 = vpop.permute.xlu0 %2871
        %2873 = vrot.lane.b32.xlu0 %v1125, 90
        %v2874 = vpop.permute.xlu0 %2873
        %2875 = vrot.lane.b32.xlu0 %v1126, 90
        %v2876 = vpop.permute.xlu0 %2875
        %2877 = vrot.lane.b32.xlu0 %v1127, 90
        %v2878 = vpop.permute.xlu0 %2877
        %2879 = vrot.lane.b32.xlu0 %v1128, 90
        %v2880 = vpop.permute.xlu0 %2879
        %2881 = vrot.lane.b32.xlu0 %v1129, 90
        %v2882 = vpop.permute.xlu0 %2881
        %2883 = vrot.lane.b32.xlu0 %v1130, 90
        %v2884 = vpop.permute.xlu0 %2883
        %2885 = vrot.lane.b32.xlu0 %v1131, 90
        %v2886 = vpop.permute.xlu0 %2885
        %2887 = vrot.lane.b32.xlu0 %v1132, 90
        %v2888 = vpop.permute.xlu0 %2887
        %2889 = vrot.lane.b32.xlu0 %v1133, 90
        %v2890 = vpop.permute.xlu0 %2889
        %2891 = vrot.lane.b32.xlu0 %v1134, 90
        %v2892 = vpop.permute.xlu0 %2891
        %2893 = vrot.lane.b32.xlu0 %v1135, 90
        %v2894 = vpop.permute.xlu0 %2893
        %2895 = vrot.lane.b32.xlu0 %v1136, 90
        %v2896 = vpop.permute.xlu0 %2895
        %2897 = vrot.lane.b32.xlu0 %v1137, 90
        %v2898 = vpop.permute.xlu0 %2897
        %vm2899 = vcmask 736256
        %v2900 = vsel %vm2899, %v2864, %v2866
        %v2901 = vsel %vm2899, %v2866, %v2868
        %v2902 = vsel %vm2899, %v2868, %v2870
        %v2903 = vsel %vm2899, %v2870, %v2872
        %v2904 = vsel %vm2899, %v2872, %v2874
        %v2905 = vsel %vm2899, %v2874, %v2876
        %v2906 = vsel %vm2899, %v2876, %v2878
        %v2907 = vsel %vm2899, %v2878, %v2880
        %v2908 = vsel %vm2899, %v2882, %v2884
        %v2909 = vsel %vm2899, %v2884, %v2886
        %v2910 = vsel %vm2899, %v2886, %v2888
        %v2911 = vsel %vm2899, %v2888, %v2890
        %v2912 = vsel %vm2899, %v2890, %v2892
        %v2913 = vsel %vm2899, %v2892, %v2894
        %v2914 = vsel %vm2899, %v2894, %v2896
        %v2915 = vsel %vm2899, %v2896, %v2898
        %v2933 = vsel %vm1227, %v2862, 0
        %2935 = vmatprep.subr.bf16.mxu0 %v2901
        %2936 = vmatpush1.bf16.msra.mxu0 %v2900
        %2937 = vmatprep.subr.bf16.mxu0 %v2909
        %2938 = vmatpush1.bf16.msra.mxu0 %v2908
        %2939 = vmatprep.subr.bf16.mxu0 0
        %2940 = vmatpush1.bf16.msra.mxu0 0
        %2941 = vmatprep.subr.bf16.mxu0 0
        %2942 = vmatpush1.bf16.msra.mxu0 0
        %2943 = vmatprep.subr.bf16.mxu0 0
        %2944 = vmatpush1.bf16.msra.mxu0 0
        %2945 = vmatprep.subr.bf16.mxu0 0
        %2946 = vmatpush1.bf16.msra.mxu0 0
        %2947 = vmatprep.subr.bf16.mxu0 0
        %2948 = vmatpush1.bf16.msra.mxu0 0
        %2949 = vmatprep.subr.bf16.mxu0 0
        %2950 = vmatpush1.bf16.msra.mxu0 0
        %2951 = vmatprep.subr.bf16.mxu0 0
        %2952 = vmatpush1.bf16.msra.mxu0 0
        %2953 = vmatprep.subr.bf16.mxu0 0
        %2954 = vmatpush1.bf16.msra.mxu0 0
        %2955 = vmatprep.subr.bf16.mxu0 0
        %2956 = vmatpush1.bf16.msra.mxu0 0
        %2957 = vmatprep.subr.bf16.mxu0 0
        %2958 = vmatpush1.bf16.msra.mxu0 0
        %2959 = vmatprep.subr.bf16.mxu0 0
        %2960 = vmatpush1.bf16.msra.mxu0 0
        %2961 = vmatprep.subr.bf16.mxu0 0
        %2962 = vmatpush1.bf16.msra.mxu0 0
        %2963 = vmatprep.subr.bf16.mxu0 0
        %2964 = vmatpush1.bf16.msra.mxu0 0
        %2965 = vmatprep.subr.bf16.mxu0 0
        %2966 = vmatpush1.bf16.msra.mxu0 0
        %2967 = vmatprep.mubr.bf16.mxu0 0
        %2968 = vmatmul.mubr.bf16.gmra.mrb[0].mxu0 %v2933
        %v2969 = vpop.f32.mrb[0].mxu0
        %v2970 = vadd.f32 0.0, %v2969
        %v2971 = vpop.f32.mrb[0].mxu0
        %v2972 = vadd.f32 0.0, %v2971
        %v2973 = vpop.f32.mrb[0].mxu0
        %v2974 = vpop.f32.mrb[0].mxu0
        %2975 = vdwg.mxu0
        %2976 = vmatprep.subr.bf16.mxu0 %v2903
        %2977 = vmatpush1.bf16.msra.mxu0 %v2902
        %2978 = vmatprep.subr.bf16.mxu0 %v2911
        %2979 = vmatpush1.bf16.msra.mxu0 %v2910
        %2980 = vmatprep.subr.bf16.mxu0 0
        %2981 = vmatpush1.bf16.msra.mxu0 0
        %2982 = vmatprep.subr.bf16.mxu0 0
        %2983 = vmatpush1.bf16.msra.mxu0 0
        %2984 = vmatprep.subr.bf16.mxu0 0
        %2985 = vmatpush1.bf16.msra.mxu0 0
        %2986 = vmatprep.subr.bf16.mxu0 0
        %2987 = vmatpush1.bf16.msra.mxu0 0
        %2988 = vmatprep.subr.bf16.mxu0 0
        %2989 = vmatpush1.bf16.msra.mxu0 0
        %2990 = vmatprep.subr.bf16.mxu0 0
        %2991 = vmatpush1.bf16.msra.mxu0 0
        %2992 = vmatprep.subr.bf16.mxu0 0
        %2993 = vmatpush1.bf16.msra.mxu0 0
        %2994 = vmatprep.subr.bf16.mxu0 0
        %2995 = vmatpush1.bf16.msra.mxu0 0
        %2996 = vmatprep.subr.bf16.mxu0 0
        %2997 = vmatpush1.bf16.msra.mxu0 0
        %2998 = vmatprep.subr.bf16.mxu0 0
        %2999 = vmatpush1.bf16.msra.mxu0 0
        %3000 = vmatprep.subr.bf16.mxu0 0
        %3001 = vmatpush1.bf16.msra.mxu0 0
        %3002 = vmatprep.subr.bf16.mxu0 0
        %3003 = vmatpush1.bf16.msra.mxu0 0
        %3004 = vmatprep.subr.bf16.mxu0 0
        %3005 = vmatpush1.bf16.msra.mxu0 0
        %3006 = vmatprep.subr.bf16.mxu0 0
        %3007 = vmatpush1.bf16.msra.mxu0 0
        %3008 = vmatprep.mubr.bf16.mxu0 0
        %3009 = vmatmul.mubr.bf16.gmra.mrb[0].mxu0 %v2933
        %v3010 = vpop.f32.mrb[0].mxu0
        %v3011 = vadd.f32 0.0, %v3010
        %v3012 = vpop.f32.mrb[0].mxu0
        %v3013 = vadd.f32 0.0, %v3012
        %v3014 = vpop.f32.mrb[0].mxu0
        %v3015 = vpop.f32.mrb[0].mxu0
        %3016 = vdwg.mxu0
        %3017 = vmatprep.subr.bf16.mxu0 %v2905
        %3018 = vmatpush1.bf16.msra.mxu0 %v2904
        %3019 = vmatprep.subr.bf16.mxu0 %v2913
        %3020 = vmatpush1.bf16.msra.mxu0 %v2912
        %3021 = vmatprep.subr.bf16.mxu0 0
        %3022 = vmatpush1.bf16.msra.mxu0 0
        %3023 = vmatprep.subr.bf16.mxu0 0
        %3024 = vmatpush1.bf16.msra.mxu0 0
        %3025 = vmatprep.subr.bf16.mxu0 0
        %3026 = vmatpush1.bf16.msra.mxu0 0
        %3027 = vmatprep.subr.bf16.mxu0 0
        %3028 = vmatpush1.bf16.msra.mxu0 0
        %3029 = vmatprep.subr.bf16.mxu0 0
        %3030 = vmatpush1.bf16.msra.mxu0 0
        %3031 = vmatprep.subr.bf16.mxu0 0
        %3032 = vmatpush1.bf16.msra.mxu0 0
        %3033 = vmatprep.subr.bf16.mxu0 0
        %3034 = vmatpush1.bf16.msra.mxu0 0
        %3035 = vmatprep.subr.bf16.mxu0 0
        %3036 = vmatpush1.bf16.msra.mxu0 0
        %3037 = vmatprep.subr.bf16.mxu0 0
        %3038 = vmatpush1.bf16.msra.mxu0 0
        %3039 = vmatprep.subr.bf16.mxu0 0
        %3040 = vmatpush1.bf16.msra.mxu0 0
        %3041 = vmatprep.subr.bf16.mxu0 0
        %3042 = vmatpush1.bf16.msra.mxu0 0
        %3043 = vmatprep.subr.bf16.mxu0 0
        %3044 = vmatpush1.bf16.msra.mxu0 0
        %3045 = vmatprep.subr.bf16.mxu0 0
        %3046 = vmatpush1.bf16.msra.mxu0 0
        %3047 = vmatprep.subr.bf16.mxu0 0
        %3048 = vmatpush1.bf16.msra.mxu0 0
        %3049 = vmatprep.mubr.bf16.mxu0 0
        %3050 = vmatmul.mubr.bf16.gmra.mrb[0].mxu0 %v2933
        %v3051 = vpop.f32.mrb[0].mxu0
        %v3052 = vadd.f32 0.0, %v3051
        %v3053 = vpop.f32.mrb[0].mxu0
        %v3054 = vadd.f32 0.0, %v3053
        %v3055 = vpop.f32.mrb[0].mxu0
        %v3056 = vpop.f32.mrb[0].mxu0
        %3057 = vdwg.mxu0
        %3058 = vmatprep.subr.bf16.mxu0 %v2907
        %3059 = vmatpush1.bf16.msra.mxu0 %v2906
        %3060 = vmatprep.subr.bf16.mxu0 %v2915
        %3061 = vmatpush1.bf16.msra.mxu0 %v2914
        %3062 = vmatprep.subr.bf16.mxu0 0
        %3063 = vmatpush1.bf16.msra.mxu0 0
        %3064 = vmatprep.subr.bf16.mxu0 0
        %3065 = vmatpush1.bf16.msra.mxu0 0
        %3066 = vmatprep.subr.bf16.mxu0 0
        %3067 = vmatpush1.bf16.msra.mxu0 0
        %3068 = vmatprep.subr.bf16.mxu0 0
        %3069 = vmatpush1.bf16.msra.mxu0 0
        %3070 = vmatprep.subr.bf16.mxu0 0
        %3071 = vmatpush1.bf16.msra.mxu0 0
        %3072 = vmatprep.subr.bf16.mxu0 0
        %3073 = vmatpush1.bf16.msra.mxu0 0
        %3074 = vmatprep.subr.bf16.mxu0 0
        %3075 = vmatpush1.bf16.msra.mxu0 0
        %3076 = vmatprep.subr.bf16.mxu0 0
        %3077 = vmatpush1.bf16.msra.mxu0 0
        %3078 = vmatprep.subr.bf16.mxu0 0
        %3079 = vmatpush1.bf16.msra.mxu0 0
        %3080 = vmatprep.subr.bf16.mxu0 0
        %3081 = vmatpush1.bf16.msra.mxu0 0
        %3082 = vmatprep.subr.bf16.mxu0 0
        %3083 = vmatpush1.bf16.msra.mxu0 0
        %3084 = vmatprep.subr.bf16.mxu0 0
        %3085 = vmatpush1.bf16.msra.mxu0 0
        %3086 = vmatprep.subr.bf16.mxu0 0
        %3087 = vmatpush1.bf16.msra.mxu0 0
        %3088 = vmatprep.subr.bf16.mxu0 0
        %3089 = vmatpush1.bf16.msra.mxu0 0
        %3090 = vmatprep.mubr.bf16.mxu0 0
        %3091 = vmatmul.mubr.bf16.gmra.mrb[0].mxu0 %v2933
        %v3092 = vpop.f32.mrb[0].mxu0
        %v3093 = vadd.f32 0.0, %v3092
        %v3094 = vpop.f32.mrb[0].mxu0
        %v3095 = vadd.f32 0.0, %v3094
        %v3096 = vpop.f32.mrb[0].mxu0
        %v3097 = vpop.f32.mrb[0].mxu0
        %3098 = vdwg.mxu0
        %v3099 = vadd.f32 %v2853, %v2970
        %v3100 = vadd.f32 %v2854, %v2972
        %v3101 = vadd.f32 %v2855, %v3011
        %v3102 = vadd.f32 %v2856, %v3013
        %v3103 = vadd.f32 %v2857, %v3052
        %v3104 = vadd.f32 %v2858, %v3054
        %v3105 = vadd.f32 %v2859, %v3093
        %v3106 = vadd.f32 %v2860, %v3095
        %s3107 = scalar_lea.vmem %s5, 32
        %v3108 = vld [vmem:[%s3107] sm:$0xf]
        %3109 = vrot.lane.b32.xlu0 %v1120, 89
        %v3110 = vpop.permute.xlu0 %3109
        %3111 = vrot.lane.b32.xlu0 %v1121, 89
        %v3112 = vpop.permute.xlu0 %3111
        %3113 = vrot.lane.b32.xlu0 %v1122, 89
        %v3114 = vpop.permute.xlu0 %3113
        %3115 = vrot.lane.b32.xlu0 %v1123, 89
        %v3116 = vpop.permute.xlu0 %3115
        %3117 = vrot.lane.b32.xlu0 %v1124, 89
        %v3118 = vpop.permute.xlu0 %3117
        %3119 = vrot.lane.b32.xlu0 %v1125, 89
        %v3120 = vpop.permute.xlu0 %3119
        %3121 = vrot.lane.b32.xlu0 %v1126, 89
        %v3122 = vpop.permute.xlu0 %3121
        %3123 = vrot.lane.b32.xlu0 %v1127, 89
        %v3124 = vpop.permute.xlu0 %3123
        %3125 = vrot.lane.b32.xlu0 %v1128, 89
        %v3126 = vpop.permute.xlu0 %3125
        %3127 = vrot.lane.b32.xlu0 %v1129, 89
        %v3128 = vpop.permute.xlu0 %3127
        %3129 = vrot.lane.b32.xlu0 %v1130, 89
        %v3130 = vpop.permute.xlu0 %3129
        %3131 = vrot.lane.b32.xlu0 %v1131, 89
        %v3132 = vpop.permute.xlu0 %3131
        %3133 = vrot.lane.b32.xlu0 %v1132, 89
        %v3134 = vpop.permute.xlu0 %3133
        %3135 = vrot.lane.b32.xlu0 %v1133, 89
        %v3136 = vpop.permute.xlu0 %3135
        %3137 = vrot.lane.b32.xlu0 %v1134, 89
        %v3138 = vpop.permute.xlu0 %3137
        %3139 = vrot.lane.b32.xlu0 %v1135, 89
        %v3140 = vpop.permute.xlu0 %3139
        %3141 = vrot.lane.b32.xlu0 %v1136, 89
        %v3142 = vpop.permute.xlu0 %3141
        %3143 = vrot.lane.b32.xlu0 %v1137, 89
        %v3144 = vpop.permute.xlu0 %3143
        %vm3145 = vcmask 728064
        %v3146 = vsel %vm3145, %v3110, %v3112
        %v3147 = vsel %vm3145, %v3112, %v3114
        %v3148 = vsel %vm3145, %v3114, %v3116
        %v3149 = vsel %vm3145, %v3116, %v3118
        %v3150 = vsel %vm3145, %v3118, %v3120
        %v3151 = vsel %vm3145, %v3120, %v3122
        %v3152 = vsel %vm3145, %v3122, %v3124
        %v3153 = vsel %vm3145, %v3124, %v3126
        %v3154 = vsel %vm3145, %v3128, %v3130
        %v3155 = vsel %vm3145, %v3130, %v3132
        %v3156 = vsel %vm3145, %v3132, %v3134
        %v3157 = vsel %vm3145, %v3134, %v3136
        %v3158 = vsel %vm3145, %v3136, %v3138
        %v3159 = vsel %vm3145, %v3138, %v3140
        %v3160 = vsel %vm3145, %v3140, %v3142
        %v3161 = vsel %vm3145, %v3142, %v3144
        %v3179 = vsel %vm1227, %v3108, 0
        %3181 = vmatprep.subr.bf16.mxu0 %v3147
        %3182 = vmatpush1.bf16.msra.mxu0 %v3146
        %3183 = vmatprep.subr.bf16.mxu0 %v3155
        %3184 = vmatpush1.bf16.msra.mxu0 %v3154
        %3185 = vmatprep.subr.bf16.mxu0 0
        %3186 = vmatpush1.bf16.msra.mxu0 0
        %3187 = vmatprep.subr.bf16.mxu0 0
        %3188 = vmatpush1.bf16.msra.mxu0 0
        %3189 = vmatprep.subr.bf16.mxu0 0
        %3190 = vmatpush1.bf16.msra.mxu0 0
        %3191 = vmatprep.subr.bf16.mxu0 0
        %3192 = vmatpush1.bf16.msra.mxu0 0
        %3193 = vmatprep.subr.bf16.mxu0 0
        %3194 = vmatpush1.bf16.msra.mxu0 0
        %3195 = vmatprep.subr.bf16.mxu0 0
        %3196 = vmatpush1.bf16.msra.mxu0 0
        %3197 = vmatprep.subr.bf16.mxu0 0
        %3198 = vmatpush1.bf16.msra.mxu0 0
        %3199 = vmatprep.subr.bf16.mxu0 0
        %3200 = vmatpush1.bf16.msra.mxu0 0
        %3201 = vmatprep.subr.bf16.mxu0 0
        %3202 = vmatpush1.bf16.msra.mxu0 0
        %3203 = vmatprep.subr.bf16.mxu0 0
        %3204 = vmatpush1.bf16.msra.mxu0 0
        %3205 = vmatprep.subr.bf16.mxu0 0
        %3206 = vmatpush1.bf16.msra.mxu0 0
        %3207 = vmatprep.subr.bf16.mxu0 0
        %3208 = vmatpush1.bf16.msra.mxu0 0
        %3209 = vmatprep.subr.bf16.mxu0 0
        %3210 = vmatpush1.bf16.msra.mxu0 0
        %3211 = vmatprep.subr.bf16.mxu0 0
        %3212 = vmatpush1.bf16.msra.mxu0 0
        %3213 = vmatprep.mubr.bf16.mxu0 0
        %3214 = vmatmul.mubr.bf16.gmra.mrb[0].mxu0 %v3179
        %v3215 = vpop.f32.mrb[0].mxu0
        %v3216 = vadd.f32 0.0, %v3215
        %v3217 = vpop.f32.mrb[0].mxu0
        %v3218 = vadd.f32 0.0, %v3217
        %v3219 = vpop.f32.mrb[0].mxu0
        %v3220 = vpop.f32.mrb[0].mxu0
        %3221 = vdwg.mxu0
        %3222 = vmatprep.subr.bf16.mxu0 %v3149
        %3223 = vmatpush1.bf16.msra.mxu0 %v3148
        %3224 = vmatprep.subr.bf16.mxu0 %v3157
        %3225 = vmatpush1.bf16.msra.mxu0 %v3156
        %3226 = vmatprep.subr.bf16.mxu0 0
        %3227 = vmatpush1.bf16.msra.mxu0 0
        %3228 = vmatprep.subr.bf16.mxu0 0
        %3229 = vmatpush1.bf16.msra.mxu0 0
        %3230 = vmatprep.subr.bf16.mxu0 0
        %3231 = vmatpush1.bf16.msra.mxu0 0
        %3232 = vmatprep.subr.bf16.mxu0 0
        %3233 = vmatpush1.bf16.msra.mxu0 0
        %3234 = vmatprep.subr.bf16.mxu0 0
        %3235 = vmatpush1.bf16.msra.mxu0 0
        %3236 = vmatprep.subr.bf16.mxu0 0
        %3237 = vmatpush1.bf16.msra.mxu0 0
        %3238 = vmatprep.subr.bf16.mxu0 0
        %3239 = vmatpush1.bf16.msra.mxu0 0
        %3240 = vmatprep.subr.bf16.mxu0 0
        %3241 = vmatpush1.bf16.msra.mxu0 0
        %3242 = vmatprep.subr.bf16.mxu0 0
        %3243 = vmatpush1.bf16.msra.mxu0 0
        %3244 = vmatprep.subr.bf16.mxu0 0
        %3245 = vmatpush1.bf16.msra.mxu0 0
        %3246 = vmatprep.subr.bf16.mxu0 0
        %3247 = vmatpush1.bf16.msra.mxu0 0
        %3248 = vmatprep.subr.bf16.mxu0 0
        %3249 = vmatpush1.bf16.msra.mxu0 0
        %3250 = vmatprep.subr.bf16.mxu0 0
        %3251 = vmatpush1.bf16.msra.mxu0 0
        %3252 = vmatprep.subr.bf16.mxu0 0
        %3253 = vmatpush1.bf16.msra.mxu0 0
        %3254 = vmatprep.mubr.bf16.mxu0 0
        %3255 = vmatmul.mubr.bf16.gmra.mrb[0].mxu0 %v3179
        %v3256 = vpop.f32.mrb[0].mxu0
        %v3257 = vadd.f32 0.0, %v3256
        %v3258 = vpop.f32.mrb[0].mxu0
        %v3259 = vadd.f32 0.0, %v3258
        %v3260 = vpop.f32.mrb[0].mxu0
        %v3261 = vpop.f32.mrb[0].mxu0
        %3262 = vdwg.mxu0
        %3263 = vmatprep.subr.bf16.mxu0 %v3151
        %3264 = vmatpush1.bf16.msra.mxu0 %v3150
        %3265 = vmatprep.subr.bf16.mxu0 %v3159
        %3266 = vmatpush1.bf16.msra.mxu0 %v3158
        %3267 = vmatprep.subr.bf16.mxu0 0
        %3268 = vmatpush1.bf16.msra.mxu0 0
        %3269 = vmatprep.subr.bf16.mxu0 0
        %3270 = vmatpush1.bf16.msra.mxu0 0
        %3271 = vmatprep.subr.bf16.mxu0 0
        %3272 = vmatpush1.bf16.msra.mxu0 0
        %3273 = vmatprep.subr.bf16.mxu0 0
        %3274 = vmatpush1.bf16.msra.mxu0 0
        %3275 = vmatprep.subr.bf16.mxu0 0
        %3276 = vmatpush1.bf16.msra.mxu0 0
        %3277 = vmatprep.subr.bf16.mxu0 0
        %3278 = vmatpush1.bf16.msra.mxu0 0
        %3279 = vmatprep.subr.bf16.mxu0 0
        %3280 = vmatpush1.bf16.msra.mxu0 0
        %3281 = vmatprep.subr.bf16.mxu0 0
        %3282 = vmatpush1.bf16.msra.mxu0 0
        %3283 = vmatprep.subr.bf16.mxu0 0
        %3284 = vmatpush1.bf16.msra.mxu0 0
        %3285 = vmatprep.subr.bf16.mxu0 0
        %3286 = vmatpush1.bf16.msra.mxu0 0
        %3287 = vmatprep.subr.bf16.mxu0 0
        %3288 = vmatpush1.bf16.msra.mxu0 0
        %3289 = vmatprep.subr.bf16.mxu0 0
        %3290 = vmatpush1.bf16.msra.mxu0 0
        %3291 = vmatprep.subr.bf16.mxu0 0
        %3292 = vmatpush1.bf16.msra.mxu0 0
        %3293 = vmatprep.subr.bf16.mxu0 0
        %3294 = vmatpush1.bf16.msra.mxu0 0
        %3295 = vmatprep.mubr.bf16.mxu0 0
        %3296 = vmatmul.mubr.bf16.gmra.mrb[0].mxu0 %v3179
        %v3297 = vpop.f32.mrb[0].mxu0
        %v3298 = vadd.f32 0.0, %v3297
        %v3299 = vpop.f32.mrb[0].mxu0
        %v3300 = vadd.f32 0.0, %v3299
        %v3301 = vpop.f32.mrb[0].mxu0
        %v3302 = vpop.f32.mrb[0].mxu0
        %3303 = vdwg.mxu0
        %3304 = vmatprep.subr.bf16.mxu0 %v3153
        %3305 = vmatpush1.bf16.msra.mxu0 %v3152
        %3306 = vmatprep.subr.bf16.mxu0 %v3161
        %3307 = vmatpush1.bf16.msra.mxu0 %v3160
        %3308 = vmatprep.subr.bf16.mxu0 0
        %3309 = vmatpush1.bf16.msra.mxu0 0
        %3310 = vmatprep.subr.bf16.mxu0 0
        %3311 = vmatpush1.bf16.msra.mxu0 0
        %3312 = vmatprep.subr.bf16.mxu0 0
        %3313 = vmatpush1.bf16.msra.mxu0 0
        %3314 = vmatprep.subr.bf16.mxu0 0
        %3315 = vmatpush1.bf16.msra.mxu0 0
        %3316 = vmatprep.subr.bf16.mxu0 0
        %3317 = vmatpush1.bf16.msra.mxu0 0
        %3318 = vmatprep.subr.bf16.mxu0 0
        %3319 = vmatpush1.bf16.msra.mxu0 0
        %3320 = vmatprep.subr.bf16.mxu0 0
        %3321 = vmatpush1.bf16.msra.mxu0 0
        %3322 = vmatprep.subr.bf16.mxu0 0
        %3323 = vmatpush1.bf16.msra.mxu0 0
        %3324 = vmatprep.subr.bf16.mxu0 0
        %3325 = vmatpush1.bf16.msra.mxu0 0
        %3326 = vmatprep.subr.bf16.mxu0 0
        %3327 = vmatpush1.bf16.msra.mxu0 0
        %3328 = vmatprep.subr.bf16.mxu0 0
        %3329 = vmatpush1.bf16.msra.mxu0 0
        %3330 = vmatprep.subr.bf16.mxu0 0
        %3331 = vmatpush1.bf16.msra.mxu0 0
        %3332 = vmatprep.subr.bf16.mxu0 0
        %3333 = vmatpush1.bf16.msra.mxu0 0
        %3334 = vmatprep.subr.bf16.mxu0 0
        %3335 = vmatpush1.bf16.msra.mxu0 0
        %3336 = vmatprep.mubr.bf16.mxu0 0
        %3337 = vmatmul.mubr.bf16.gmra.mrb[0].mxu0 %v3179
        %v3338 = vpop.f32.mrb[0].mxu0
        %v3339 = vadd.f32 0.0, %v3338
        %v3340 = vpop.f32.mrb[0].mxu0
        %v3341 = vadd.f32 0.0, %v3340
        %v3342 = vpop.f32.mrb[0].mxu0
        %v3343 = vpop.f32.mrb[0].mxu0
        %3344 = vdwg.mxu0
        %v3345 = vadd.f32 %v3099, %v3216
        %v3346 = vadd.f32 %v3100, %v3218
        %v3347 = vadd.f32 %v3101, %v3257
        %v3348 = vadd.f32 %v3102, %v3259
        %v3349 = vadd.f32 %v3103, %v3298
        %v3350 = vadd.f32 %v3104, %v3300
        %v3351 = vadd.f32 %v3105, %v3339
        %v3352 = vadd.f32 %v3106, %v3341
        %s3353 = scalar_lea.vmem %s5, 36
        %v3354 = vld [vmem:[%s3353] sm:$0xf]
        %3355 = vrot.lane.b32.xlu0 %v1120, 11
        %v3356 = vpop.permute.xlu0 %3355
        %3357 = vrot.lane.b32.xlu0 %v1121, 11
        %v3358 = vpop.permute.xlu0 %3357
        %3359 = vrot.lane.b32.xlu0 %v1122, 11
        %v3360 = vpop.permute.xlu0 %3359
        %3361 = vrot.lane.b32.xlu0 %v1123, 11
        %v3362 = vpop.permute.xlu0 %3361
        %3363 = vrot.lane.b32.xlu0 %v1124, 11
        %v3364 = vpop.permute.xlu0 %3363
        %3365 = vrot.lane.b32.xlu0 %v1125, 11
        %v3366 = vpop.permute.xlu0 %3365
        %3367 = vrot.lane.b32.xlu0 %v1126, 11
        %v3368 = vpop.permute.xlu0 %3367
        %3369 = vrot.lane.b32.xlu0 %v1127, 11
        %v3370 = vpop.permute.xlu0 %3369
        %3371 = vrot.lane.b32.xlu0 %v1128, 11
        %v3372 = vpop.permute.xlu0 %3371
        %3373 = vrot.lane.b32.xlu0 %v1129, 11
        %v3374 = vpop.permute.xlu0 %3373
        %3375 = vrot.lane.b32.xlu0 %v1130, 11
        %v3376 = vpop.permute.xlu0 %3375
        %3377 = vrot.lane.b32.xlu0 %v1131, 11
        %v3378 = vpop.permute.xlu0 %3377
        %3379 = vrot.lane.b32.xlu0 %v1132, 11
        %v3380 = vpop.permute.xlu0 %3379
        %3381 = vrot.lane.b32.xlu0 %v1133, 11
        %v3382 = vpop.permute.xlu0 %3381
        %3383 = vrot.lane.b32.xlu0 %v1134, 11
        %v3384 = vpop.permute.xlu0 %3383
        %3385 = vrot.lane.b32.xlu0 %v1135, 11
        %v3386 = vpop.permute.xlu0 %3385
        %3387 = vrot.lane.b32.xlu0 %v1136, 11
        %v3388 = vpop.permute.xlu0 %3387
        %3389 = vrot.lane.b32.xlu0 %v1137, 11
        %v3390 = vpop.permute.xlu0 %3389
        %vm3391 = vcmask 89088
        %v3392 = vsel %vm3391, %v3356, %v3358
        %v3393 = vsel %vm3391, %v3358, %v3360
        %v3394 = vsel %vm3391, %v3360, %v3362
        %v3395 = vsel %vm3391, %v3362, %v3364
        %v3396 = vsel %vm3391, %v3364, %v3366
        %v3397 = vsel %vm3391, %v3366, %v3368
        %v3398 = vsel %vm3391, %v3368, %v3370
        %v3399 = vsel %vm3391, %v3370, %v3372
        %v3400 = vsel %vm3391, %v3374, %v3376
        %v3401 = vsel %vm3391, %v3376, %v3378
        %v3402 = vsel %vm3391, %v3378, %v3380
        %v3403 = vsel %vm3391, %v3380, %v3382
        %v3404 = vsel %vm3391, %v3382, %v3384
        %v3405 = vsel %vm3391, %v3384, %v3386
        %v3406 = vsel %vm3391, %v3386, %v3388
        %v3407 = vsel %vm3391, %v3388, %v3390
        %v3425 = vsel %vm1227, %v3354, 0
        %3427 = vmatprep.subr.bf16.mxu0 %v3393
        %3428 = vmatpush1.bf16.msra.mxu0 %v3392
        %3429 = vmatprep.subr.bf16.mxu0 %v3401
        %3430 = vmatpush1.bf16.msra.mxu0 %v3400
        %3431 = vmatprep.subr.bf16.mxu0 0
        %3432 = vmatpush1.bf16.msra.mxu0 0
        %3433 = vmatprep.subr.bf16.mxu0 0
        %3434 = vmatpush1.bf16.msra.mxu0 0
        %3435 = vmatprep.subr.bf16.mxu0 0
        %3436 = vmatpush1.bf16.msra.mxu0 0
        %3437 = vmatprep.subr.bf16.mxu0 0
        %3438 = vmatpush1.bf16.msra.mxu0 0
        %3439 = vmatprep.subr.bf16.mxu0 0
        %3440 = vmatpush1.bf16.msra.mxu0 0
        %3441 = vmatprep.subr.bf16.mxu0 0
        %3442 = vmatpush1.bf16.msra.mxu0 0
        %3443 = vmatprep.subr.bf16.mxu0 0
        %3444 = vmatpush1.bf16.msra.mxu0 0
        %3445 = vmatprep.subr.bf16.mxu0 0
        %3446 = vmatpush1.bf16.msra.mxu0 0
        %3447 = vmatprep.subr.bf16.mxu0 0
        %3448 = vmatpush1.bf16.msra.mxu0 0
        %3449 = vmatprep.subr.bf16.mxu0 0
        %3450 = vmatpush1.bf16.msra.mxu0 0
        %3451 = vmatprep.subr.bf16.mxu0 0
        %3452 = vmatpush1.bf16.msra.mxu0 0
        %3453 = vmatprep.subr.bf16.mxu0 0
        %3454 = vmatpush1.bf16.msra.mxu0 0
        %3455 = vmatprep.subr.bf16.mxu0 0
        %3456 = vmatpush1.bf16.msra.mxu0 0
        %3457 = vmatprep.subr.bf16.mxu0 0
        %3458 = vmatpush1.bf16.msra.mxu0 0
        %3459 = vmatprep.mubr.bf16.mxu0 0
        %3460 = vmatmul.mubr.bf16.gmra.mrb[0].mxu0 %v3425
        %v3461 = vpop.f32.mrb[0].mxu0
        %v3462 = vadd.f32 0.0, %v3461
        %v3463 = vpop.f32.mrb[0].mxu0
        %v3464 = vadd.f32 0.0, %v3463
        %v3465 = vpop.f32.mrb[0].mxu0
        %v3466 = vpop.f32.mrb[0].mxu0
        %3467 = vdwg.mxu0
        %3468 = vmatprep.subr.bf16.mxu0 %v3395
        %3469 = vmatpush1.bf16.msra.mxu0 %v3394
        %3470 = vmatprep.subr.bf16.mxu0 %v3403
        %3471 = vmatpush1.bf16.msra.mxu0 %v3402
        %3472 = vmatprep.subr.bf16.mxu0 0
        %3473 = vmatpush1.bf16.msra.mxu0 0
        %3474 = vmatprep.subr.bf16.mxu0 0
        %3475 = vmatpush1.bf16.msra.mxu0 0
        %3476 = vmatprep.subr.bf16.mxu0 0
        %3477 = vmatpush1.bf16.msra.mxu0 0
        %3478 = vmatprep.subr.bf16.mxu0 0
        %3479 = vmatpush1.bf16.msra.mxu0 0
        %3480 = vmatprep.subr.bf16.mxu0 0
        %3481 = vmatpush1.bf16.msra.mxu0 0
        %3482 = vmatprep.subr.bf16.mxu0 0
        %3483 = vmatpush1.bf16.msra.mxu0 0
        %3484 = vmatprep.subr.bf16.mxu0 0
        %3485 = vmatpush1.bf16.msra.mxu0 0
        %3486 = vmatprep.subr.bf16.mxu0 0
        %3487 = vmatpush1.bf16.msra.mxu0 0
        %3488 = vmatprep.subr.bf16.mxu0 0
        %3489 = vmatpush1.bf16.msra.mxu0 0
        %3490 = vmatprep.subr.bf16.mxu0 0
        %3491 = vmatpush1.bf16.msra.mxu0 0
        %3492 = vmatprep.subr.bf16.mxu0 0
        %3493 = vmatpush1.bf16.msra.mxu0 0
        %3494 = vmatprep.subr.bf16.mxu0 0
        %3495 = vmatpush1.bf16.msra.mxu0 0
        %3496 = vmatprep.subr.bf16.mxu0 0
        %3497 = vmatpush1.bf16.msra.mxu0 0
        %3498 = vmatprep.subr.bf16.mxu0 0
        %3499 = vmatpush1.bf16.msra.mxu0 0
        %3500 = vmatprep.mubr.bf16.mxu0 0
        %3501 = vmatmul.mubr.bf16.gmra.mrb[0].mxu0 %v3425
        %v3502 = vpop.f32.mrb[0].mxu0
        %v3503 = vadd.f32 0.0, %v3502
        %v3504 = vpop.f32.mrb[0].mxu0
        %v3505 = vadd.f32 0.0, %v3504
        %v3506 = vpop.f32.mrb[0].mxu0
        %v3507 = vpop.f32.mrb[0].mxu0
        %3508 = vdwg.mxu0
        %3509 = vmatprep.subr.bf16.mxu0 %v3397
        %3510 = vmatpush1.bf16.msra.mxu0 %v3396
        %3511 = vmatprep.subr.bf16.mxu0 %v3405
        %3512 = vmatpush1.bf16.msra.mxu0 %v3404
        %3513 = vmatprep.subr.bf16.mxu0 0
        %3514 = vmatpush1.bf16.msra.mxu0 0
        %3515 = vmatprep.subr.bf16.mxu0 0
        %3516 = vmatpush1.bf16.msra.mxu0 0
        %3517 = vmatprep.subr.bf16.mxu0 0
        %3518 = vmatpush1.bf16.msra.mxu0 0
        %3519 = vmatprep.subr.bf16.mxu0 0
        %3520 = vmatpush1.bf16.msra.mxu0 0
        %3521 = vmatprep.subr.bf16.mxu0 0
        %3522 = vmatpush1.bf16.msra.mxu0 0
        %3523 = vmatprep.subr.bf16.mxu0 0
        %3524 = vmatpush1.bf16.msra.mxu0 0
        %3525 = vmatprep.subr.bf16.mxu0 0
        %3526 = vmatpush1.bf16.msra.mxu0 0
        %3527 = vmatprep.subr.bf16.mxu0 0
        %3528 = vmatpush1.bf16.msra.mxu0 0
        %3529 = vmatprep.subr.bf16.mxu0 0
        %3530 = vmatpush1.bf16.msra.mxu0 0
        %3531 = vmatprep.subr.bf16.mxu0 0
        %3532 = vmatpush1.bf16.msra.mxu0 0
        %3533 = vmatprep.subr.bf16.mxu0 0
        %3534 = vmatpush1.bf16.msra.mxu0 0
        %3535 = vmatprep.subr.bf16.mxu0 0
        %3536 = vmatpush1.bf16.msra.mxu0 0
        %3537 = vmatprep.subr.bf16.mxu0 0
        %3538 = vmatpush1.bf16.msra.mxu0 0
        %3539 = vmatprep.subr.bf16.mxu0 0
        %3540 = vmatpush1.bf16.msra.mxu0 0
        %3541 = vmatprep.mubr.bf16.mxu0 0
        %3542 = vmatmul.mubr.bf16.gmra.mrb[0].mxu0 %v3425
        %v3543 = vpop.f32.mrb[0].mxu0
        %v3544 = vadd.f32 0.0, %v3543
        %v3545 = vpop.f32.mrb[0].mxu0
        %v3546 = vadd.f32 0.0, %v3545
        %v3547 = vpop.f32.mrb[0].mxu0
        %v3548 = vpop.f32.mrb[0].mxu0
        %3549 = vdwg.mxu0
        %3550 = vmatprep.subr.bf16.mxu0 %v3399
        %3551 = vmatpush1.bf16.msra.mxu0 %v3398
        %3552 = vmatprep.subr.bf16.mxu0 %v3407
        %3553 = vmatpush1.bf16.msra.mxu0 %v3406
        %3554 = vmatprep.subr.bf16.mxu0 0
        %3555 = vmatpush1.bf16.msra.mxu0 0
        %3556 = vmatprep.subr.bf16.mxu0 0
        %3557 = vmatpush1.bf16.msra.mxu0 0
        %3558 = vmatprep.subr.bf16.mxu0 0
        %3559 = vmatpush1.bf16.msra.mxu0 0
        %3560 = vmatprep.subr.bf16.mxu0 0
        %3561 = vmatpush1.bf16.msra.mxu0 0
        %3562 = vmatprep.subr.bf16.mxu0 0
        %3563 = vmatpush1.bf16.msra.mxu0 0
        %3564 = vmatprep.subr.bf16.mxu0 0
        %3565 = vmatpush1.bf16.msra.mxu0 0
        %3566 = vmatprep.subr.bf16.mxu0 0
        %3567 = vmatpush1.bf16.msra.mxu0 0
        %3568 = vmatprep.subr.bf16.mxu0 0
        %3569 = vmatpush1.bf16.msra.mxu0 0
        %3570 = vmatprep.subr.bf16.mxu0 0
        %3571 = vmatpush1.bf16.msra.mxu0 0
        %3572 = vmatprep.subr.bf16.mxu0 0
        %3573 = vmatpush1.bf16.msra.mxu0 0
        %3574 = vmatprep.subr.bf16.mxu0 0
        %3575 = vmatpush1.bf16.msra.mxu0 0
        %3576 = vmatprep.subr.bf16.mxu0 0
        %3577 = vmatpush1.bf16.msra.mxu0 0
        %3578 = vmatprep.subr.bf16.mxu0 0
        %3579 = vmatpush1.bf16.msra.mxu0 0
        %3580 = vmatprep.subr.bf16.mxu0 0
        %3581 = vmatpush1.bf16.msra.mxu0 0
        %3582 = vmatprep.mubr.bf16.mxu0 0
        %3583 = vmatmul.mubr.bf16.gmra.mrb[0].mxu0 %v3425
        %v3584 = vpop.f32.mrb[0].mxu0
        %v3585 = vadd.f32 0.0, %v3584
        %v3586 = vpop.f32.mrb[0].mxu0
        %v3587 = vadd.f32 0.0, %v3586
        %v3588 = vpop.f32.mrb[0].mxu0
        %v3589 = vpop.f32.mrb[0].mxu0
        %3590 = vdwg.mxu0
        %v3591 = vadd.f32 %v3345, %v3462
        %v3592 = vadd.f32 %v3346, %v3464
        %v3593 = vadd.f32 %v3347, %v3503
        %v3594 = vadd.f32 %v3348, %v3505
        %v3595 = vadd.f32 %v3349, %v3544
        %v3596 = vadd.f32 %v3350, %v3546
        %v3597 = vadd.f32 %v3351, %v3585
        %v3598 = vadd.f32 %v3352, %v3587
        %s3599 = scalar_lea.vmem %s5, 40
        %v3600 = vld [vmem:[%s3599] sm:$0xf]
        %3601 = vrot.lane.b32.xlu0 %v1120, 10
        %v3602 = vpop.permute.xlu0 %3601
        %3603 = vrot.lane.b32.xlu0 %v1121, 10
        %v3604 = vpop.permute.xlu0 %3603
        %3605 = vrot.lane.b32.xlu0 %v1122, 10
        %v3606 = vpop.permute.xlu0 %3605
        %3607 = vrot.lane.b32.xlu0 %v1123, 10
        %v3608 = vpop.permute.xlu0 %3607
        %3609 = vrot.lane.b32.xlu0 %v1124, 10
        %v3610 = vpop.permute.xlu0 %3609
        %3611 = vrot.lane.b32.xlu0 %v1125, 10
        %v3612 = vpop.permute.xlu0 %3611
        %3613 = vrot.lane.b32.xlu0 %v1126, 10
        %v3614 = vpop.permute.xlu0 %3613
        %3615 = vrot.lane.b32.xlu0 %v1127, 10
        %v3616 = vpop.permute.xlu0 %3615
        %3617 = vrot.lane.b32.xlu0 %v1128, 10
        %v3618 = vpop.permute.xlu0 %3617
        %3619 = vrot.lane.b32.xlu0 %v1129, 10
        %v3620 = vpop.permute.xlu0 %3619
        %3621 = vrot.lane.b32.xlu0 %v1130, 10
        %v3622 = vpop.permute.xlu0 %3621
        %3623 = vrot.lane.b32.xlu0 %v1131, 10
        %v3624 = vpop.permute.xlu0 %3623
        %3625 = vrot.lane.b32.xlu0 %v1132, 10
        %v3626 = vpop.permute.xlu0 %3625
        %3627 = vrot.lane.b32.xlu0 %v1133, 10
        %v3628 = vpop.permute.xlu0 %3627
        %3629 = vrot.lane.b32.xlu0 %v1134, 10
        %v3630 = vpop.permute.xlu0 %3629
        %3631 = vrot.lane.b32.xlu0 %v1135, 10
        %v3632 = vpop.permute.xlu0 %3631
        %3633 = vrot.lane.b32.xlu0 %v1136, 10
        %v3634 = vpop.permute.xlu0 %3633
        %3635 = vrot.lane.b32.xlu0 %v1137, 10
        %v3636 = vpop.permute.xlu0 %3635
        %vm3637 = vcmask 80896
        %v3638 = vsel %vm3637, %v3602, %v3604
        %v3639 = vsel %vm3637, %v3604, %v3606
        %v3640 = vsel %vm3637, %v3606, %v3608
        %v3641 = vsel %vm3637, %v3608, %v3610
        %v3642 = vsel %vm3637, %v3610, %v3612
        %v3643 = vsel %vm3637, %v3612, %v3614
        %v3644 = vsel %vm3637, %v3614, %v3616
        %v3645 = vsel %vm3637, %v3616, %v3618
        %v3646 = vsel %vm3637, %v3620, %v3622
        %v3647 = vsel %vm3637, %v3622, %v3624
        %v3648 = vsel %vm3637, %v3624, %v3626
        %v3649 = vsel %vm3637, %v3626, %v3628
        %v3650 = vsel %vm3637, %v3628, %v3630
        %v3651 = vsel %vm3637, %v3630, %v3632
        %v3652 = vsel %vm3637, %v3632, %v3634
        %v3653 = vsel %vm3637, %v3634, %v3636
        %v3671 = vsel %vm1227, %v3600, 0
        %3673 = vmatprep.subr.bf16.mxu0 %v3639
        %3674 = vmatpush1.bf16.msra.mxu0 %v3638
        %3675 = vmatprep.subr.bf16.mxu0 %v3647
        %3676 = vmatpush1.bf16.msra.mxu0 %v3646
        %3677 = vmatprep.subr.bf16.mxu0 0
        %3678 = vmatpush1.bf16.msra.mxu0 0
        %3679 = vmatprep.subr.bf16.mxu0 0
        %3680 = vmatpush1.bf16.msra.mxu0 0
        %3681 = vmatprep.subr.bf16.mxu0 0
        %3682 = vmatpush1.bf16.msra.mxu0 0
        %3683 = vmatprep.subr.bf16.mxu0 0
        %3684 = vmatpush1.bf16.msra.mxu0 0
        %3685 = vmatprep.subr.bf16.mxu0 0
        %3686 = vmatpush1.bf16.msra.mxu0 0
        %3687 = vmatprep.subr.bf16.mxu0 0
        %3688 = vmatpush1.bf16.msra.mxu0 0
        %3689 = vmatprep.subr.bf16.mxu0 0
        %3690 = vmatpush1.bf16.msra.mxu0 0
        %3691 = vmatprep.subr.bf16.mxu0 0
        %3692 = vmatpush1.bf16.msra.mxu0 0
        %3693 = vmatprep.subr.bf16.mxu0 0
        %3694 = vmatpush1.bf16.msra.mxu0 0
        %3695 = vmatprep.subr.bf16.mxu0 0
        %3696 = vmatpush1.bf16.msra.mxu0 0
        %3697 = vmatprep.subr.bf16.mxu0 0
        %3698 = vmatpush1.bf16.msra.mxu0 0
        %3699 = vmatprep.subr.bf16.mxu0 0
        %3700 = vmatpush1.bf16.msra.mxu0 0
        %3701 = vmatprep.subr.bf16.mxu0 0
        %3702 = vmatpush1.bf16.msra.mxu0 0
        %3703 = vmatprep.subr.bf16.mxu0 0
        %3704 = vmatpush1.bf16.msra.mxu0 0
        %3705 = vmatprep.mubr.bf16.mxu0 0
        %3706 = vmatmul.mubr.bf16.gmra.mrb[0].mxu0 %v3671
        %v3707 = vpop.f32.mrb[0].mxu0
        %v3708 = vadd.f32 0.0, %v3707
        %v3709 = vpop.f32.mrb[0].mxu0
        %v3710 = vadd.f32 0.0, %v3709
        %v3711 = vpop.f32.mrb[0].mxu0
        %v3712 = vpop.f32.mrb[0].mxu0
        %3713 = vdwg.mxu0
        %3714 = vmatprep.subr.bf16.mxu0 %v3641
        %3715 = vmatpush1.bf16.msra.mxu0 %v3640
        %3716 = vmatprep.subr.bf16.mxu0 %v3649
        %3717 = vmatpush1.bf16.msra.mxu0 %v3648
        %3718 = vmatprep.subr.bf16.mxu0 0
        %3719 = vmatpush1.bf16.msra.mxu0 0
        %3720 = vmatprep.subr.bf16.mxu0 0
        %3721 = vmatpush1.bf16.msra.mxu0 0
        %3722 = vmatprep.subr.bf16.mxu0 0
        %3723 = vmatpush1.bf16.msra.mxu0 0
        %3724 = vmatprep.subr.bf16.mxu0 0
        %3725 = vmatpush1.bf16.msra.mxu0 0
        %3726 = vmatprep.subr.bf16.mxu0 0
        %3727 = vmatpush1.bf16.msra.mxu0 0
        %3728 = vmatprep.subr.bf16.mxu0 0
        %3729 = vmatpush1.bf16.msra.mxu0 0
        %3730 = vmatprep.subr.bf16.mxu0 0
        %3731 = vmatpush1.bf16.msra.mxu0 0
        %3732 = vmatprep.subr.bf16.mxu0 0
        %3733 = vmatpush1.bf16.msra.mxu0 0
        %3734 = vmatprep.subr.bf16.mxu0 0
        %3735 = vmatpush1.bf16.msra.mxu0 0
        %3736 = vmatprep.subr.bf16.mxu0 0
        %3737 = vmatpush1.bf16.msra.mxu0 0
        %3738 = vmatprep.subr.bf16.mxu0 0
        %3739 = vmatpush1.bf16.msra.mxu0 0
        %3740 = vmatprep.subr.bf16.mxu0 0
        %3741 = vmatpush1.bf16.msra.mxu0 0
        %3742 = vmatprep.subr.bf16.mxu0 0
        %3743 = vmatpush1.bf16.msra.mxu0 0
        %3744 = vmatprep.subr.bf16.mxu0 0
        %3745 = vmatpush1.bf16.msra.mxu0 0
        %3746 = vmatprep.mubr.bf16.mxu0 0
        %3747 = vmatmul.mubr.bf16.gmra.mrb[0].mxu0 %v3671
        %v3748 = vpop.f32.mrb[0].mxu0
        %v3749 = vadd.f32 0.0, %v3748
        %v3750 = vpop.f32.mrb[0].mxu0
        %v3751 = vadd.f32 0.0, %v3750
        %v3752 = vpop.f32.mrb[0].mxu0
        %v3753 = vpop.f32.mrb[0].mxu0
        %3754 = vdwg.mxu0
        %3755 = vmatprep.subr.bf16.mxu0 %v3643
        %3756 = vmatpush1.bf16.msra.mxu0 %v3642
        %3757 = vmatprep.subr.bf16.mxu0 %v3651
        %3758 = vmatpush1.bf16.msra.mxu0 %v3650
        %3759 = vmatprep.subr.bf16.mxu0 0
        %3760 = vmatpush1.bf16.msra.mxu0 0
        %3761 = vmatprep.subr.bf16.mxu0 0
        %3762 = vmatpush1.bf16.msra.mxu0 0
        %3763 = vmatprep.subr.bf16.mxu0 0
        %3764 = vmatpush1.bf16.msra.mxu0 0
        %3765 = vmatprep.subr.bf16.mxu0 0
        %3766 = vmatpush1.bf16.msra.mxu0 0
        %3767 = vmatprep.subr.bf16.mxu0 0
        %3768 = vmatpush1.bf16.msra.mxu0 0
        %3769 = vmatprep.subr.bf16.mxu0 0
        %3770 = vmatpush1.bf16.msra.mxu0 0
        %3771 = vmatprep.subr.bf16.mxu0 0
        %3772 = vmatpush1.bf16.msra.mxu0 0
        %3773 = vmatprep.subr.bf16.mxu0 0
        %3774 = vmatpush1.bf16.msra.mxu0 0
        %3775 = vmatprep.subr.bf16.mxu0 0
        %3776 = vmatpush1.bf16.msra.mxu0 0
        %3777 = vmatprep.subr.bf16.mxu0 0
        %3778 = vmatpush1.bf16.msra.mxu0 0
        %3779 = vmatprep.subr.bf16.mxu0 0
        %3780 = vmatpush1.bf16.msra.mxu0 0
        %3781 = vmatprep.subr.bf16.mxu0 0
        %3782 = vmatpush1.bf16.msra.mxu0 0
        %3783 = vmatprep.subr.bf16.mxu0 0
        %3784 = vmatpush1.bf16.msra.mxu0 0
        %3785 = vmatprep.subr.bf16.mxu0 0
        %3786 = vmatpush1.bf16.msra.mxu0 0
        %3787 = vmatprep.mubr.bf16.mxu0 0
        %3788 = vmatmul.mubr.bf16.gmra.mrb[0].mxu0 %v3671
        %v3789 = vpop.f32.mrb[0].mxu0
        %v3790 = vadd.f32 0.0, %v3789
        %v3791 = vpop.f32.mrb[0].mxu0
        %v3792 = vadd.f32 0.0, %v3791
        %v3793 = vpop.f32.mrb[0].mxu0
        %v3794 = vpop.f32.mrb[0].mxu0
        %3795 = vdwg.mxu0
        %3796 = vmatprep.subr.bf16.mxu0 %v3645
        %3797 = vmatpush1.bf16.msra.mxu0 %v3644
        %3798 = vmatprep.subr.bf16.mxu0 %v3653
        %3799 = vmatpush1.bf16.msra.mxu0 %v3652
        %3800 = vmatprep.subr.bf16.mxu0 0
        %3801 = vmatpush1.bf16.msra.mxu0 0
        %3802 = vmatprep.subr.bf16.mxu0 0
        %3803 = vmatpush1.bf16.msra.mxu0 0
        %3804 = vmatprep.subr.bf16.mxu0 0
        %3805 = vmatpush1.bf16.msra.mxu0 0
        %3806 = vmatprep.subr.bf16.mxu0 0
        %3807 = vmatpush1.bf16.msra.mxu0 0
        %3808 = vmatprep.subr.bf16.mxu0 0
        %3809 = vmatpush1.bf16.msra.mxu0 0
        %3810 = vmatprep.subr.bf16.mxu0 0
        %3811 = vmatpush1.bf16.msra.mxu0 0
        %3812 = vmatprep.subr.bf16.mxu0 0
        %3813 = vmatpush1.bf16.msra.mxu0 0
        %3814 = vmatprep.subr.bf16.mxu0 0
        %3815 = vmatpush1.bf16.msra.mxu0 0
        %3816 = vmatprep.subr.bf16.mxu0 0
        %3817 = vmatpush1.bf16.msra.mxu0 0
        %3818 = vmatprep.subr.bf16.mxu0 0
        %3819 = vmatpush1.bf16.msra.mxu0 0
        %3820 = vmatprep.subr.bf16.mxu0 0
        %3821 = vmatpush1.bf16.msra.mxu0 0
        %3822 = vmatprep.subr.bf16.mxu0 0
        %3823 = vmatpush1.bf16.msra.mxu0 0
        %3824 = vmatprep.subr.bf16.mxu0 0
        %3825 = vmatpush1.bf16.msra.mxu0 0
        %3826 = vmatprep.subr.bf16.mxu0 0
        %3827 = vmatpush1.bf16.msra.mxu0 0
        %3828 = vmatprep.mubr.bf16.mxu0 0
        %3829 = vmatmul.mubr.bf16.gmra.mrb[0].mxu0 %v3671
        %v3830 = vpop.f32.mrb[0].mxu0
        %v3831 = vadd.f32 0.0, %v3830
        %v3832 = vpop.f32.mrb[0].mxu0
        %v3833 = vadd.f32 0.0, %v3832
        %v3834 = vpop.f32.mrb[0].mxu0
        %v3835 = vpop.f32.mrb[0].mxu0
        %3836 = vdwg.mxu0
        %v3837 = vadd.f32 %v3591, %v3708
        %v3838 = vadd.f32 %v3592, %v3710
        %v3839 = vadd.f32 %v3593, %v3749
        %v3840 = vadd.f32 %v3594, %v3751
        %v3841 = vadd.f32 %v3595, %v3790
        %v3842 = vadd.f32 %v3596, %v3792
        %v3843 = vadd.f32 %v3597, %v3831
        %v3844 = vadd.f32 %v3598, %v3833
        %s3845 = scalar_lea.vmem %s5, 44
        %v3846 = vld [vmem:[%s3845] sm:$0xf]
        %3847 = vrot.lane.b32.xlu0 %v1120, 9
        %v3848 = vpop.permute.xlu0 %3847
        %3849 = vrot.lane.b32.xlu0 %v1121, 9
        %v3850 = vpop.permute.xlu0 %3849
        %3851 = vrot.lane.b32.xlu0 %v1122, 9
        %v3852 = vpop.permute.xlu0 %3851
        %3853 = vrot.lane.b32.xlu0 %v1123, 9
        %v3854 = vpop.permute.xlu0 %3853
        %3855 = vrot.lane.b32.xlu0 %v1124, 9
        %v3856 = vpop.permute.xlu0 %3855
        %3857 = vrot.lane.b32.xlu0 %v1125, 9
        %v3858 = vpop.permute.xlu0 %3857
        %3859 = vrot.lane.b32.xlu0 %v1126, 9
        %v3860 = vpop.permute.xlu0 %3859
        %3861 = vrot.lane.b32.xlu0 %v1127, 9
        %v3862 = vpop.permute.xlu0 %3861
        %3863 = vrot.lane.b32.xlu0 %v1128, 9
        %v3864 = vpop.permute.xlu0 %3863
        %3865 = vrot.lane.b32.xlu0 %v1129, 9
        %v3866 = vpop.permute.xlu0 %3865
        %3867 = vrot.lane.b32.xlu0 %v1130, 9
        %v3868 = vpop.permute.xlu0 %3867
        %3869 = vrot.lane.b32.xlu0 %v1131, 9
        %v3870 = vpop.permute.xlu0 %3869
        %3871 = vrot.lane.b32.xlu0 %v1132, 9
        %v3872 = vpop.permute.xlu0 %3871
        %3873 = vrot.lane.b32.xlu0 %v1133, 9
        %v3874 = vpop.permute.xlu0 %3873
        %3875 = vrot.lane.b32.xlu0 %v1134, 9
        %v3876 = vpop.permute.xlu0 %3875
        %3877 = vrot.lane.b32.xlu0 %v1135, 9
        %v3878 = vpop.permute.xlu0 %3877
        %3879 = vrot.lane.b32.xlu0 %v1136, 9
        %v3880 = vpop.permute.xlu0 %3879
        %3881 = vrot.lane.b32.xlu0 %v1137, 9
        %v3882 = vpop.permute.xlu0 %3881
        %vm3883 = vcmask 72704
        %v3884 = vsel %vm3883, %v3848, %v3850
        %v3885 = vsel %vm3883, %v3850, %v3852
        %v3886 = vsel %vm3883, %v3852, %v3854
        %v3887 = vsel %vm3883, %v3854, %v3856
        %v3888 = vsel %vm3883, %v3856, %v3858
        %v3889 = vsel %vm3883, %v3858, %v3860
        %v3890 = vsel %vm3883, %v3860, %v3862
        %v3891 = vsel %vm3883, %v3862, %v3864
        %v3892 = vsel %vm3883, %v3866, %v3868
        %v3893 = vsel %vm3883, %v3868, %v3870
        %v3894 = vsel %vm3883, %v3870, %v3872
        %v3895 = vsel %vm3883, %v3872, %v3874
        %v3896 = vsel %vm3883, %v3874, %v3876
        %v3897 = vsel %vm3883, %v3876, %v3878
        %v3898 = vsel %vm3883, %v3878, %v3880
        %v3899 = vsel %vm3883, %v3880, %v3882
        %v3917 = vsel %vm1227, %v3846, 0
        %3919 = vmatprep.subr.bf16.mxu0 %v3885
        %3920 = vmatpush1.bf16.msra.mxu0 %v3884
        %3921 = vmatprep.subr.bf16.mxu0 %v3893
        %3922 = vmatpush1.bf16.msra.mxu0 %v3892
        %3923 = vmatprep.subr.bf16.mxu0 0
        %3924 = vmatpush1.bf16.msra.mxu0 0
        %3925 = vmatprep.subr.bf16.mxu0 0
        %3926 = vmatpush1.bf16.msra.mxu0 0
        %3927 = vmatprep.subr.bf16.mxu0 0
        %3928 = vmatpush1.bf16.msra.mxu0 0
        %3929 = vmatprep.subr.bf16.mxu0 0
        %3930 = vmatpush1.bf16.msra.mxu0 0
        %3931 = vmatprep.subr.bf16.mxu0 0
        %3932 = vmatpush1.bf16.msra.mxu0 0
        %3933 = vmatprep.subr.bf16.mxu0 0
        %3934 = vmatpush1.bf16.msra.mxu0 0
        %3935 = vmatprep.subr.bf16.mxu0 0
        %3936 = vmatpush1.bf16.msra.mxu0 0
        %3937 = vmatprep.subr.bf16.mxu0 0
        %3938 = vmatpush1.bf16.msra.mxu0 0
        %3939 = vmatprep.subr.bf16.mxu0 0
        %3940 = vmatpush1.bf16.msra.mxu0 0
        %3941 = vmatprep.subr.bf16.mxu0 0
        %3942 = vmatpush1.bf16.msra.mxu0 0
        %3943 = vmatprep.subr.bf16.mxu0 0
        %3944 = vmatpush1.bf16.msra.mxu0 0
        %3945 = vmatprep.subr.bf16.mxu0 0
        %3946 = vmatpush1.bf16.msra.mxu0 0
        %3947 = vmatprep.subr.bf16.mxu0 0
        %3948 = vmatpush1.bf16.msra.mxu0 0
        %3949 = vmatprep.subr.bf16.mxu0 0
        %3950 = vmatpush1.bf16.msra.mxu0 0
        %3951 = vmatprep.mubr.bf16.mxu0 0
        %3952 = vmatmul.mubr.bf16.gmra.mrb[0].mxu0 %v3917
        %v3953 = vpop.f32.mrb[0].mxu0
        %v3954 = vadd.f32 0.0, %v3953
        %v3955 = vpop.f32.mrb[0].mxu0
        %v3956 = vadd.f32 0.0, %v3955
        %v3957 = vpop.f32.mrb[0].mxu0
        %v3958 = vpop.f32.mrb[0].mxu0
        %3959 = vdwg.mxu0
        %3960 = vmatprep.subr.bf16.mxu0 %v3887
        %3961 = vmatpush1.bf16.msra.mxu0 %v3886
        %3962 = vmatprep.subr.bf16.mxu0 %v3895
        %3963 = vmatpush1.bf16.msra.mxu0 %v3894
        %3964 = vmatprep.subr.bf16.mxu0 0
        %3965 = vmatpush1.bf16.msra.mxu0 0
        %3966 = vmatprep.subr.bf16.mxu0 0
        %3967 = vmatpush1.bf16.msra.mxu0 0
        %3968 = vmatprep.subr.bf16.mxu0 0
        %3969 = vmatpush1.bf16.msra.mxu0 0
        %3970 = vmatprep.subr.bf16.mxu0 0
        %3971 = vmatpush1.bf16.msra.mxu0 0
        %3972 = vmatprep.subr.bf16.mxu0 0
        %3973 = vmatpush1.bf16.msra.mxu0 0
        %3974 = vmatprep.subr.bf16.mxu0 0
        %3975 = vmatpush1.bf16.msra.mxu0 0
        %3976 = vmatprep.subr.bf16.mxu0 0
        %3977 = vmatpush1.bf16.msra.mxu0 0
        %3978 = vmatprep.subr.bf16.mxu0 0
        %3979 = vmatpush1.bf16.msra.mxu0 0
        %3980 = vmatprep.subr.bf16.mxu0 0
        %3981 = vmatpush1.bf16.msra.mxu0 0
        %3982 = vmatprep.subr.bf16.mxu0 0
        %3983 = vmatpush1.bf16.msra.mxu0 0
        %3984 = vmatprep.subr.bf16.mxu0 0
        %3985 = vmatpush1.bf16.msra.mxu0 0
        %3986 = vmatprep.subr.bf16.mxu0 0
        %3987 = vmatpush1.bf16.msra.mxu0 0
        %3988 = vmatprep.subr.bf16.mxu0 0
        %3989 = vmatpush1.bf16.msra.mxu0 0
        %3990 = vmatprep.subr.bf16.mxu0 0
        %3991 = vmatpush1.bf16.msra.mxu0 0
        %3992 = vmatprep.mubr.bf16.mxu0 0
        %3993 = vmatmul.mubr.bf16.gmra.mrb[0].mxu0 %v3917
        %v3994 = vpop.f32.mrb[0].mxu0
        %v3995 = vadd.f32 0.0, %v3994
        %v3996 = vpop.f32.mrb[0].mxu0
        %v3997 = vadd.f32 0.0, %v3996
        %v3998 = vpop.f32.mrb[0].mxu0
        %v3999 = vpop.f32.mrb[0].mxu0
        %4000 = vdwg.mxu0
        %4001 = vmatprep.subr.bf16.mxu0 %v3889
        %4002 = vmatpush1.bf16.msra.mxu0 %v3888
        %4003 = vmatprep.subr.bf16.mxu0 %v3897
        %4004 = vmatpush1.bf16.msra.mxu0 %v3896
        %4005 = vmatprep.subr.bf16.mxu0 0
        %4006 = vmatpush1.bf16.msra.mxu0 0
        %4007 = vmatprep.subr.bf16.mxu0 0
        %4008 = vmatpush1.bf16.msra.mxu0 0
        %4009 = vmatprep.subr.bf16.mxu0 0
        %4010 = vmatpush1.bf16.msra.mxu0 0
        %4011 = vmatprep.subr.bf16.mxu0 0
        %4012 = vmatpush1.bf16.msra.mxu0 0
        %4013 = vmatprep.subr.bf16.mxu0 0
        %4014 = vmatpush1.bf16.msra.mxu0 0
        %4015 = vmatprep.subr.bf16.mxu0 0
        %4016 = vmatpush1.bf16.msra.mxu0 0
        %4017 = vmatprep.subr.bf16.mxu0 0
        %4018 = vmatpush1.bf16.msra.mxu0 0
        %4019 = vmatprep.subr.bf16.mxu0 0
        %4020 = vmatpush1.bf16.msra.mxu0 0
        %4021 = vmatprep.subr.bf16.mxu0 0
        %4022 = vmatpush1.bf16.msra.mxu0 0
        %4023 = vmatprep.subr.bf16.mxu0 0
        %4024 = vmatpush1.bf16.msra.mxu0 0
        %4025 = vmatprep.subr.bf16.mxu0 0
        %4026 = vmatpush1.bf16.msra.mxu0 0
        %4027 = vmatprep.subr.bf16.mxu0 0
        %4028 = vmatpush1.bf16.msra.mxu0 0
        %4029 = vmatprep.subr.bf16.mxu0 0
        %4030 = vmatpush1.bf16.msra.mxu0 0
        %4031 = vmatprep.subr.bf16.mxu0 0
        %4032 = vmatpush1.bf16.msra.mxu0 0
        %4033 = vmatprep.mubr.bf16.mxu0 0
        %4034 = vmatmul.mubr.bf16.gmra.mrb[0].mxu0 %v3917
        %v4035 = vpop.f32.mrb[0].mxu0
        %v4036 = vadd.f32 0.0, %v4035
        %v4037 = vpop.f32.mrb[0].mxu0
        %v4038 = vadd.f32 0.0, %v4037
        %v4039 = vpop.f32.mrb[0].mxu0
        %v4040 = vpop.f32.mrb[0].mxu0
        %4041 = vdwg.mxu0
        %4042 = vmatprep.subr.bf16.mxu0 %v3891
        %4043 = vmatpush1.bf16.msra.mxu0 %v3890
        %4044 = vmatprep.subr.bf16.mxu0 %v3899
        %4045 = vmatpush1.bf16.msra.mxu0 %v3898
        %4046 = vmatprep.subr.bf16.mxu0 0
        %4047 = vmatpush1.bf16.msra.mxu0 0
        %4048 = vmatprep.subr.bf16.mxu0 0
        %4049 = vmatpush1.bf16.msra.mxu0 0
        %4050 = vmatprep.subr.bf16.mxu0 0
        %4051 = vmatpush1.bf16.msra.mxu0 0
        %4052 = vmatprep.subr.bf16.mxu0 0
        %4053 = vmatpush1.bf16.msra.mxu0 0
        %4054 = vmatprep.subr.bf16.mxu0 0
        %4055 = vmatpush1.bf16.msra.mxu0 0
        %4056 = vmatprep.subr.bf16.mxu0 0
        %4057 = vmatpush1.bf16.msra.mxu0 0
        %4058 = vmatprep.subr.bf16.mxu0 0
        %4059 = vmatpush1.bf16.msra.mxu0 0
        %4060 = vmatprep.subr.bf16.mxu0 0
        %4061 = vmatpush1.bf16.msra.mxu0 0
        %4062 = vmatprep.subr.bf16.mxu0 0
        %4063 = vmatpush1.bf16.msra.mxu0 0
        %4064 = vmatprep.subr.bf16.mxu0 0
        %4065 = vmatpush1.bf16.msra.mxu0 0
        %4066 = vmatprep.subr.bf16.mxu0 0
        %4067 = vmatpush1.bf16.msra.mxu0 0
        %4068 = vmatprep.subr.bf16.mxu0 0
        %4069 = vmatpush1.bf16.msra.mxu0 0
        %4070 = vmatprep.subr.bf16.mxu0 0
        %4071 = vmatpush1.bf16.msra.mxu0 0
        %4072 = vmatprep.subr.bf16.mxu0 0
        %4073 = vmatpush1.bf16.msra.mxu0 0
        %4074 = vmatprep.mubr.bf16.mxu0 0
        %4075 = vmatmul.mubr.bf16.gmra.mrb[0].mxu0 %v3917
        %v4076 = vpop.f32.mrb[0].mxu0
        %v4077 = vadd.f32 0.0, %v4076
        %v4078 = vpop.f32.mrb[0].mxu0
        %v4079 = vadd.f32 0.0, %v4078
        %v4080 = vpop.f32.mrb[0].mxu0
        %v4081 = vpop.f32.mrb[0].mxu0
        %4082 = vdwg.mxu0
        %v4083 = vadd.f32 %v3837, %v3954
        %v4084 = vadd.f32 %v3838, %v3956
        %v4085 = vadd.f32 %v3839, %v3995
        %v4086 = vadd.f32 %v3840, %v3997
        %v4087 = vadd.f32 %v3841, %v4036
        %v4088 = vadd.f32 %v3842, %v4038
        %v4089 = vadd.f32 %v3843, %v4077
        %v4090 = vadd.f32 %v3844, %v4079
        %s4091 = scalar_lea.vmem %s5, 48
        %v4092 = vld [vmem:[%s4091] sm:$0xf]
        %4093 = vrot.lane.b32.xlu0 %v1120, 1
        %v4094 = vpop.permute.xlu0 %4093
        %4095 = vrot.lane.b32.xlu0 %v1121, 1
        %v4096 = vpop.permute.xlu0 %4095
        %4097 = vrot.lane.b32.xlu0 %v1122, 1
        %v4098 = vpop.permute.xlu0 %4097
        %4099 = vrot.lane.b32.xlu0 %v1123, 1
        %v4100 = vpop.permute.xlu0 %4099
        %4101 = vrot.lane.b32.xlu0 %v1124, 1
        %v4102 = vpop.permute.xlu0 %4101
        %4103 = vrot.lane.b32.xlu0 %v1125, 1
        %v4104 = vpop.permute.xlu0 %4103
        %4105 = vrot.lane.b32.xlu0 %v1126, 1
        %v4106 = vpop.permute.xlu0 %4105
        %4107 = vrot.lane.b32.xlu0 %v1127, 1
        %v4108 = vpop.permute.xlu0 %4107
        %4109 = vrot.lane.b32.xlu0 %v1128, 1
        %v4110 = vpop.permute.xlu0 %4109
        %4111 = vrot.lane.b32.xlu0 %v1129, 1
        %v4112 = vpop.permute.xlu0 %4111
        %4113 = vrot.lane.b32.xlu0 %v1130, 1
        %v4114 = vpop.permute.xlu0 %4113
        %4115 = vrot.lane.b32.xlu0 %v1131, 1
        %v4116 = vpop.permute.xlu0 %4115
        %4117 = vrot.lane.b32.xlu0 %v1132, 1
        %v4118 = vpop.permute.xlu0 %4117
        %4119 = vrot.lane.b32.xlu0 %v1133, 1
        %v4120 = vpop.permute.xlu0 %4119
        %4121 = vrot.lane.b32.xlu0 %v1134, 1
        %v4122 = vpop.permute.xlu0 %4121
        %4123 = vrot.lane.b32.xlu0 %v1135, 1
        %v4124 = vpop.permute.xlu0 %4123
        %4125 = vrot.lane.b32.xlu0 %v1136, 1
        %v4126 = vpop.permute.xlu0 %4125
        %4127 = vrot.lane.b32.xlu0 %v1137, 1
        %v4128 = vpop.permute.xlu0 %4127
        %vm4129 = vcmask 7168
        %v4130 = vsel %vm4129, %v4094, %v4096
        %v4131 = vsel %vm4129, %v4096, %v4098
        %v4132 = vsel %vm4129, %v4098, %v4100
        %v4133 = vsel %vm4129, %v4100, %v4102
        %v4134 = vsel %vm4129, %v4102, %v4104
        %v4135 = vsel %vm4129, %v4104, %v4106
        %v4136 = vsel %vm4129, %v4106, %v4108
        %v4137 = vsel %vm4129, %v4108, %v4110
        %v4138 = vsel %vm4129, %v4112, %v4114
        %v4139 = vsel %vm4129, %v4114, %v4116
        %v4140 = vsel %vm4129, %v4116, %v4118
        %v4141 = vsel %vm4129, %v4118, %v4120
        %v4142 = vsel %vm4129, %v4120, %v4122
        %v4143 = vsel %vm4129, %v4122, %v4124
        %v4144 = vsel %vm4129, %v4124, %v4126
        %v4145 = vsel %vm4129, %v4126, %v4128
        %v4163 = vsel %vm1227, %v4092, 0
        %4165 = vmatprep.subr.bf16.mxu0 %v4131
        %4166 = vmatpush1.bf16.msra.mxu0 %v4130
        %4167 = vmatprep.subr.bf16.mxu0 %v4139
        %4168 = vmatpush1.bf16.msra.mxu0 %v4138
        %4169 = vmatprep.subr.bf16.mxu0 0
        %4170 = vmatpush1.bf16.msra.mxu0 0
        %4171 = vmatprep.subr.bf16.mxu0 0
        %4172 = vmatpush1.bf16.msra.mxu0 0
        %4173 = vmatprep.subr.bf16.mxu0 0
        %4174 = vmatpush1.bf16.msra.mxu0 0
        %4175 = vmatprep.subr.bf16.mxu0 0
        %4176 = vmatpush1.bf16.msra.mxu0 0
        %4177 = vmatprep.subr.bf16.mxu0 0
        %4178 = vmatpush1.bf16.msra.mxu0 0
        %4179 = vmatprep.subr.bf16.mxu0 0
        %4180 = vmatpush1.bf16.msra.mxu0 0
        %4181 = vmatprep.subr.bf16.mxu0 0
        %4182 = vmatpush1.bf16.msra.mxu0 0
        %4183 = vmatprep.subr.bf16.mxu0 0
        %4184 = vmatpush1.bf16.msra.mxu0 0
        %4185 = vmatprep.subr.bf16.mxu0 0
        %4186 = vmatpush1.bf16.msra.mxu0 0
        %4187 = vmatprep.subr.bf16.mxu0 0
        %4188 = vmatpush1.bf16.msra.mxu0 0
        %4189 = vmatprep.subr.bf16.mxu0 0
        %4190 = vmatpush1.bf16.msra.mxu0 0
        %4191 = vmatprep.subr.bf16.mxu0 0
        %4192 = vmatpush1.bf16.msra.mxu0 0
        %4193 = vmatprep.subr.bf16.mxu0 0
        %4194 = vmatpush1.bf16.msra.mxu0 0
        %4195 = vmatprep.subr.bf16.mxu0 0
        %4196 = vmatpush1.bf16.msra.mxu0 0
        %4197 = vmatprep.mubr.bf16.mxu0 0
        %4198 = vmatmul.mubr.bf16.gmra.mrb[0].mxu0 %v4163
        %v4199 = vpop.f32.mrb[0].mxu0
        %v4200 = vadd.f32 0.0, %v4199
        %v4201 = vpop.f32.mrb[0].mxu0
        %v4202 = vadd.f32 0.0, %v4201
        %v4203 = vpop.f32.mrb[0].mxu0
        %v4204 = vpop.f32.mrb[0].mxu0
        %4205 = vdwg.mxu0
        %4206 = vmatprep.subr.bf16.mxu0 %v4133
        %4207 = vmatpush1.bf16.msra.mxu0 %v4132
        %4208 = vmatprep.subr.bf16.mxu0 %v4141
        %4209 = vmatpush1.bf16.msra.mxu0 %v4140
        %4210 = vmatprep.subr.bf16.mxu0 0
        %4211 = vmatpush1.bf16.msra.mxu0 0
        %4212 = vmatprep.subr.bf16.mxu0 0
        %4213 = vmatpush1.bf16.msra.mxu0 0
        %4214 = vmatprep.subr.bf16.mxu0 0
        %4215 = vmatpush1.bf16.msra.mxu0 0
        %4216 = vmatprep.subr.bf16.mxu0 0
        %4217 = vmatpush1.bf16.msra.mxu0 0
        %4218 = vmatprep.subr.bf16.mxu0 0
        %4219 = vmatpush1.bf16.msra.mxu0 0
        %4220 = vmatprep.subr.bf16.mxu0 0
        %4221 = vmatpush1.bf16.msra.mxu0 0
        %4222 = vmatprep.subr.bf16.mxu0 0
        %4223 = vmatpush1.bf16.msra.mxu0 0
        %4224 = vmatprep.subr.bf16.mxu0 0
        %4225 = vmatpush1.bf16.msra.mxu0 0
        %4226 = vmatprep.subr.bf16.mxu0 0
        %4227 = vmatpush1.bf16.msra.mxu0 0
        %4228 = vmatprep.subr.bf16.mxu0 0
        %4229 = vmatpush1.bf16.msra.mxu0 0
        %4230 = vmatprep.subr.bf16.mxu0 0
        %4231 = vmatpush1.bf16.msra.mxu0 0
        %4232 = vmatprep.subr.bf16.mxu0 0
        %4233 = vmatpush1.bf16.msra.mxu0 0
        %4234 = vmatprep.subr.bf16.mxu0 0
        %4235 = vmatpush1.bf16.msra.mxu0 0
        %4236 = vmatprep.subr.bf16.mxu0 0
        %4237 = vmatpush1.bf16.msra.mxu0 0
        %4238 = vmatprep.mubr.bf16.mxu0 0
        %4239 = vmatmul.mubr.bf16.gmra.mrb[0].mxu0 %v4163
        %v4240 = vpop.f32.mrb[0].mxu0
        %v4241 = vadd.f32 0.0, %v4240
        %v4242 = vpop.f32.mrb[0].mxu0
        %v4243 = vadd.f32 0.0, %v4242
        %v4244 = vpop.f32.mrb[0].mxu0
        %v4245 = vpop.f32.mrb[0].mxu0
        %4246 = vdwg.mxu0
        %4247 = vmatprep.subr.bf16.mxu0 %v4135
        %4248 = vmatpush1.bf16.msra.mxu0 %v4134
        %4249 = vmatprep.subr.bf16.mxu0 %v4143
        %4250 = vmatpush1.bf16.msra.mxu0 %v4142
        %4251 = vmatprep.subr.bf16.mxu0 0
        %4252 = vmatpush1.bf16.msra.mxu0 0
        %4253 = vmatprep.subr.bf16.mxu0 0
        %4254 = vmatpush1.bf16.msra.mxu0 0
        %4255 = vmatprep.subr.bf16.mxu0 0
        %4256 = vmatpush1.bf16.msra.mxu0 0
        %4257 = vmatprep.subr.bf16.mxu0 0
        %4258 = vmatpush1.bf16.msra.mxu0 0
        %4259 = vmatprep.subr.bf16.mxu0 0
        %4260 = vmatpush1.bf16.msra.mxu0 0
        %4261 = vmatprep.subr.bf16.mxu0 0
        %4262 = vmatpush1.bf16.msra.mxu0 0
        %4263 = vmatprep.subr.bf16.mxu0 0
        %4264 = vmatpush1.bf16.msra.mxu0 0
        %4265 = vmatprep.subr.bf16.mxu0 0
        %4266 = vmatpush1.bf16.msra.mxu0 0
        %4267 = vmatprep.subr.bf16.mxu0 0
        %4268 = vmatpush1.bf16.msra.mxu0 0
        %4269 = vmatprep.subr.bf16.mxu0 0
        %4270 = vmatpush1.bf16.msra.mxu0 0
        %4271 = vmatprep.subr.bf16.mxu0 0
        %4272 = vmatpush1.bf16.msra.mxu0 0
        %4273 = vmatprep.subr.bf16.mxu0 0
        %4274 = vmatpush1.bf16.msra.mxu0 0
        %4275 = vmatprep.subr.bf16.mxu0 0
        %4276 = vmatpush1.bf16.msra.mxu0 0
        %4277 = vmatprep.subr.bf16.mxu0 0
        %4278 = vmatpush1.bf16.msra.mxu0 0
        %4279 = vmatprep.mubr.bf16.mxu0 0
        %4280 = vmatmul.mubr.bf16.gmra.mrb[0].mxu0 %v4163
        %v4281 = vpop.f32.mrb[0].mxu0
        %v4282 = vadd.f32 0.0, %v4281
        %v4283 = vpop.f32.mrb[0].mxu0
        %v4284 = vadd.f32 0.0, %v4283
        %v4285 = vpop.f32.mrb[0].mxu0
        %v4286 = vpop.f32.mrb[0].mxu0
        %4287 = vdwg.mxu0
        %4288 = vmatprep.subr.bf16.mxu0 %v4137
        %4289 = vmatpush1.bf16.msra.mxu0 %v4136
        %4290 = vmatprep.subr.bf16.mxu0 %v4145
        %4291 = vmatpush1.bf16.msra.mxu0 %v4144
        %4292 = vmatprep.subr.bf16.mxu0 0
        %4293 = vmatpush1.bf16.msra.mxu0 0
        %4294 = vmatprep.subr.bf16.mxu0 0
        %4295 = vmatpush1.bf16.msra.mxu0 0
        %4296 = vmatprep.subr.bf16.mxu0 0
        %4297 = vmatpush1.bf16.msra.mxu0 0
        %4298 = vmatprep.subr.bf16.mxu0 0
        %4299 = vmatpush1.bf16.msra.mxu0 0
        %4300 = vmatprep.subr.bf16.mxu0 0
        %4301 = vmatpush1.bf16.msra.mxu0 0
        %4302 = vmatprep.subr.bf16.mxu0 0
        %4303 = vmatpush1.bf16.msra.mxu0 0
        %4304 = vmatprep.subr.bf16.mxu0 0
        %4305 = vmatpush1.bf16.msra.mxu0 0
        %4306 = vmatprep.subr.bf16.mxu0 0
        %4307 = vmatpush1.bf16.msra.mxu0 0
        %4308 = vmatprep.subr.bf16.mxu0 0
        %4309 = vmatpush1.bf16.msra.mxu0 0
        %4310 = vmatprep.subr.bf16.mxu0 0
        %4311 = vmatpush1.bf16.msra.mxu0 0
        %4312 = vmatprep.subr.bf16.mxu0 0
        %4313 = vmatpush1.bf16.msra.mxu0 0
        %4314 = vmatprep.subr.bf16.mxu0 0
        %4315 = vmatpush1.bf16.msra.mxu0 0
        %4316 = vmatprep.subr.bf16.mxu0 0
        %4317 = vmatpush1.bf16.msra.mxu0 0
        %4318 = vmatprep.subr.bf16.mxu0 0
        %4319 = vmatpush1.bf16.msra.mxu0 0
        %4320 = vmatprep.mubr.bf16.mxu0 0
        %4321 = vmatmul.mubr.bf16.gmra.mrb[0].mxu0 %v4163
        %v4322 = vpop.f32.mrb[0].mxu0
        %v4323 = vadd.f32 0.0, %v4322
        %v4324 = vpop.f32.mrb[0].mxu0
        %v4325 = vadd.f32 0.0, %v4324
        %v4326 = vpop.f32.mrb[0].mxu0
        %v4327 = vpop.f32.mrb[0].mxu0
        %4328 = vdwg.mxu0
        %v4329 = vadd.f32 %v4083, %v4200
        %v4330 = vadd.f32 %v4084, %v4202
        %v4331 = vadd.f32 %v4085, %v4241
        %v4332 = vadd.f32 %v4086, %v4243
        %v4333 = vadd.f32 %v4087, %v4282
        %v4334 = vadd.f32 %v4088, %v4284
        %v4335 = vadd.f32 %v4089, %v4323
        %v4336 = vadd.f32 %v4090, %v4325
        %s4337 = scalar_lea.vmem %s5, 52
        %v4338 = vld [vmem:[%s4337] sm:$0xf]
        %v4340 = vsel %vm1227, %v4338, 0
        %4342 = vmatprep.subr.bf16.mxu0 %v1122
        %4343 = vmatpush1.bf16.msra.mxu0 %v1121
        %4344 = vmatprep.subr.bf16.mxu0 %v1131
        %4345 = vmatpush1.bf16.msra.mxu0 %v1130
        %4346 = vmatprep.subr.bf16.mxu0 0
        %4347 = vmatpush1.bf16.msra.mxu0 0
        %4348 = vmatprep.subr.bf16.mxu0 0
        %4349 = vmatpush1.bf16.msra.mxu0 0
        %4350 = vmatprep.subr.bf16.mxu0 0
        %4351 = vmatpush1.bf16.msra.mxu0 0
        %4352 = vmatprep.subr.bf16.mxu0 0
        %4353 = vmatpush1.bf16.msra.mxu0 0
        %4354 = vmatprep.subr.bf16.mxu0 0
        %4355 = vmatpush1.bf16.msra.mxu0 0
        %4356 = vmatprep.subr.bf16.mxu0 0
        %4357 = vmatpush1.bf16.msra.mxu0 0
        %4358 = vmatprep.subr.bf16.mxu0 0
        %4359 = vmatpush1.bf16.msra.mxu0 0
        %4360 = vmatprep.subr.bf16.mxu0 0
        %4361 = vmatpush1.bf16.msra.mxu0 0
        %4362 = vmatprep.subr.bf16.mxu0 0
        %4363 = vmatpush1.bf16.msra.mxu0 0
        %4364 = vmatprep.subr.bf16.mxu0 0
        %4365 = vmatpush1.bf16.msra.mxu0 0
        %4366 = vmatprep.subr.bf16.mxu0 0
        %4367 = vmatpush1.bf16.msra.mxu0 0
        %4368 = vmatprep.subr.bf16.mxu0 0
        %4369 = vmatpush1.bf16.msra.mxu0 0
        %4370 = vmatprep.subr.bf16.mxu0 0
        %4371 = vmatpush1.bf16.msra.mxu0 0
        %4372 = vmatprep.subr.bf16.mxu0 0
        %4373 = vmatpush1.bf16.msra.mxu0 0
        %4374 = vmatprep.mubr.bf16.mxu0 0
        %4375 = vmatmul.mubr.bf16.gmra.mrb[0].mxu0 %v4340
        %v4376 = vpop.f32.mrb[0].mxu0
        %v4377 = vadd.f32 0.0, %v4376
        %v4378 = vpop.f32.mrb[0].mxu0
        %v4379 = vadd.f32 0.0, %v4378
        %v4380 = vpop.f32.mrb[0].mxu0
        %v4381 = vpop.f32.mrb[0].mxu0
        %4382 = vdwg.mxu0
        %4383 = vmatprep.subr.bf16.mxu0 %v1124
        %4384 = vmatpush1.bf16.msra.mxu0 %v1123
        %4385 = vmatprep.subr.bf16.mxu0 %v1133
        %4386 = vmatpush1.bf16.msra.mxu0 %v1132
        %4387 = vmatprep.subr.bf16.mxu0 0
        %4388 = vmatpush1.bf16.msra.mxu0 0
        %4389 = vmatprep.subr.bf16.mxu0 0
        %4390 = vmatpush1.bf16.msra.mxu0 0
        %4391 = vmatprep.subr.bf16.mxu0 0
        %4392 = vmatpush1.bf16.msra.mxu0 0
        %4393 = vmatprep.subr.bf16.mxu0 0
        %4394 = vmatpush1.bf16.msra.mxu0 0
        %4395 = vmatprep.subr.bf16.mxu0 0
        %4396 = vmatpush1.bf16.msra.mxu0 0
        %4397 = vmatprep.subr.bf16.mxu0 0
        %4398 = vmatpush1.bf16.msra.mxu0 0
        %4399 = vmatprep.subr.bf16.mxu0 0
        %4400 = vmatpush1.bf16.msra.mxu0 0
        %4401 = vmatprep.subr.bf16.mxu0 0
        %4402 = vmatpush1.bf16.msra.mxu0 0
        %4403 = vmatprep.subr.bf16.mxu0 0
        %4404 = vmatpush1.bf16.msra.mxu0 0
        %4405 = vmatprep.subr.bf16.mxu0 0
        %4406 = vmatpush1.bf16.msra.mxu0 0
        %4407 = vmatprep.subr.bf16.mxu0 0
        %4408 = vmatpush1.bf16.msra.mxu0 0
        %4409 = vmatprep.subr.bf16.mxu0 0
        %4410 = vmatpush1.bf16.msra.mxu0 0
        %4411 = vmatprep.subr.bf16.mxu0 0
        %4412 = vmatpush1.bf16.msra.mxu0 0
        %4413 = vmatprep.subr.bf16.mxu0 0
        %4414 = vmatpush1.bf16.msra.mxu0 0
        %4415 = vmatprep.mubr.bf16.mxu0 0
        %4416 = vmatmul.mubr.bf16.gmra.mrb[0].mxu0 %v4340
        %v4417 = vpop.f32.mrb[0].mxu0
        %v4418 = vadd.f32 0.0, %v4417
        %v4419 = vpop.f32.mrb[0].mxu0
        %v4420 = vadd.f32 0.0, %v4419
        %v4421 = vpop.f32.mrb[0].mxu0
        %v4422 = vpop.f32.mrb[0].mxu0
        %4423 = vdwg.mxu0
        %4424 = vmatprep.subr.bf16.mxu0 %v1126
        %4425 = vmatpush1.bf16.msra.mxu0 %v1125
        %4426 = vmatprep.subr.bf16.mxu0 %v1135
        %4427 = vmatpush1.bf16.msra.mxu0 %v1134
        %4428 = vmatprep.subr.bf16.mxu0 0
        %4429 = vmatpush1.bf16.msra.mxu0 0
        %4430 = vmatprep.subr.bf16.mxu0 0
        %4431 = vmatpush1.bf16.msra.mxu0 0
        %4432 = vmatprep.subr.bf16.mxu0 0
        %4433 = vmatpush1.bf16.msra.mxu0 0
        %4434 = vmatprep.subr.bf16.mxu0 0
        %4435 = vmatpush1.bf16.msra.mxu0 0
        %4436 = vmatprep.subr.bf16.mxu0 0
        %4437 = vmatpush1.bf16.msra.mxu0 0
        %4438 = vmatprep.subr.bf16.mxu0 0
        %4439 = vmatpush1.bf16.msra.mxu0 0
        %4440 = vmatprep.subr.bf16.mxu0 0
        %4441 = vmatpush1.bf16.msra.mxu0 0
        %4442 = vmatprep.subr.bf16.mxu0 0
        %4443 = vmatpush1.bf16.msra.mxu0 0
        %4444 = vmatprep.subr.bf16.mxu0 0
        %4445 = vmatpush1.bf16.msra.mxu0 0
        %4446 = vmatprep.subr.bf16.mxu0 0
        %4447 = vmatpush1.bf16.msra.mxu0 0
        %4448 = vmatprep.subr.bf16.mxu0 0
        %4449 = vmatpush1.bf16.msra.mxu0 0
        %4450 = vmatprep.subr.bf16.mxu0 0
        %4451 = vmatpush1.bf16.msra.mxu0 0
        %4452 = vmatprep.subr.bf16.mxu0 0
        %4453 = vmatpush1.bf16.msra.mxu0 0
        %4454 = vmatprep.subr.bf16.mxu0 0
        %4455 = vmatpush1.bf16.msra.mxu0 0
        %4456 = vmatprep.mubr.bf16.mxu0 0
        %4457 = vmatmul.mubr.bf16.gmra.mrb[0].mxu0 %v4340
        %v4458 = vpop.f32.mrb[0].mxu0
        %v4459 = vadd.f32 0.0, %v4458
        %v4460 = vpop.f32.mrb[0].mxu0
        %v4461 = vadd.f32 0.0, %v4460
        %v4462 = vpop.f32.mrb[0].mxu0
        %v4463 = vpop.f32.mrb[0].mxu0
        %4464 = vdwg.mxu0
        %4465 = vmatprep.subr.bf16.mxu0 %v1128
        %4466 = vmatpush1.bf16.msra.mxu0 %v1127
        %4467 = vmatprep.subr.bf16.mxu0 %v1137
        %4468 = vmatpush1.bf16.msra.mxu0 %v1136
        %4469 = vmatprep.subr.bf16.mxu0 0
        %4470 = vmatpush1.bf16.msra.mxu0 0
        %4471 = vmatprep.subr.bf16.mxu0 0
        %4472 = vmatpush1.bf16.msra.mxu0 0
        %4473 = vmatprep.subr.bf16.mxu0 0
        %4474 = vmatpush1.bf16.msra.mxu0 0
        %4475 = vmatprep.subr.bf16.mxu0 0
        %4476 = vmatpush1.bf16.msra.mxu0 0
        %4477 = vmatprep.subr.bf16.mxu0 0
        %4478 = vmatpush1.bf16.msra.mxu0 0
        %4479 = vmatprep.subr.bf16.mxu0 0
        %4480 = vmatpush1.bf16.msra.mxu0 0
        %4481 = vmatprep.subr.bf16.mxu0 0
        %4482 = vmatpush1.bf16.msra.mxu0 0
        %4483 = vmatprep.subr.bf16.mxu0 0
        %4484 = vmatpush1.bf16.msra.mxu0 0
        %4485 = vmatprep.subr.bf16.mxu0 0
        %4486 = vmatpush1.bf16.msra.mxu0 0
        %4487 = vmatprep.subr.bf16.mxu0 0
        %4488 = vmatpush1.bf16.msra.mxu0 0
        %4489 = vmatprep.subr.bf16.mxu0 0
        %4490 = vmatpush1.bf16.msra.mxu0 0
        %4491 = vmatprep.subr.bf16.mxu0 0
        %4492 = vmatpush1.bf16.msra.mxu0 0
        %4493 = vmatprep.subr.bf16.mxu0 0
        %4494 = vmatpush1.bf16.msra.mxu0 0
        %4495 = vmatprep.subr.bf16.mxu0 0
        %4496 = vmatpush1.bf16.msra.mxu0 0
        %4497 = vmatprep.mubr.bf16.mxu0 0
        %4498 = vmatmul.mubr.bf16.gmra.mrb[0].mxu0 %v4340
        %v4499 = vpop.f32.mrb[0].mxu0
        %v4500 = vadd.f32 0.0, %v4499
        %v4501 = vpop.f32.mrb[0].mxu0
        %v4502 = vadd.f32 0.0, %v4501
        %v4503 = vpop.f32.mrb[0].mxu0
        %v4504 = vpop.f32.mrb[0].mxu0
        %4505 = vdwg.mxu0
        %v4506 = vadd.f32 %v4329, %v4377
        %v4507 = vadd.f32 %v4330, %v4379
        %v4508 = vadd.f32 %v4331, %v4418
        %v4509 = vadd.f32 %v4332, %v4420
        %v4510 = vadd.f32 %v4333, %v4459
        %v4511 = vadd.f32 %v4334, %v4461
        %v4512 = vadd.f32 %v4335, %v4500
        %v4513 = vadd.f32 %v4336, %v4502
        %s4514 = scalar_lea.vmem %s5, 56
        %v4515 = vld [vmem:[%s4514] sm:$0xf]
        %v4516 = vld [vmem:[#allocation2 + $0x8] sm:$0xff]
        %v4517 = vld [vmem:[#allocation2 + $0x10] sm:$0xff]
        %v4518 = vld [vmem:[#allocation2 + $0x18] sm:$0xff]
        %v4519 = vld [vmem:[#allocation2 + $0x20] sm:$0xff]
        %v4520 = vld [vmem:[#allocation2 + $0x28] sm:$0xff]
        %v4521 = vld [vmem:[#allocation2 + $0x30] sm:$0xff]
        %v4522 = vld [vmem:[#allocation2 + $0x38] sm:$0xff]
        %v4523 = vld [vmem:[#allocation2 + $0x40] sm:$0xff]
        %v4524 = vld [vmem:[#allocation2 + $0x48] sm:$0xff]
        %v4525 = vld [vmem:[#allocation2 + $0x58] sm:$0xff]
        %v4526 = vld [vmem:[#allocation2 + $0x60] sm:$0xff]
        %v4527 = vld [vmem:[#allocation2 + $0x68] sm:$0xff]
        %v4528 = vld [vmem:[#allocation2 + $0x70] sm:$0xff]
        %v4529 = vld [vmem:[#allocation2 + $0x78] sm:$0xff]
        %v4530 = vld [vmem:[#allocation2 + $0x80] sm:$0xff]
        %v4531 = vld [vmem:[#allocation2 + $0x88] sm:$0xff]
        %v4532 = vld [vmem:[#allocation2 + $0x90] sm:$0xff]
        %v4533 = vld [vmem:[#allocation2 + $0x98] sm:$0xff]
        %4552 = vrot.lane.b32.xlu0 %v4516, 127
        %v4553 = vpop.permute.xlu0 %4552
        %4554 = vrot.lane.b32.xlu0 %v4517, 127
        %v4555 = vpop.permute.xlu0 %4554
        %4556 = vrot.lane.b32.xlu0 %v4518, 127
        %v4557 = vpop.permute.xlu0 %4556
        %4558 = vrot.lane.b32.xlu0 %v4519, 127
        %v4559 = vpop.permute.xlu0 %4558
        %4560 = vrot.lane.b32.xlu0 %v4520, 127
        %v4561 = vpop.permute.xlu0 %4560
        %4562 = vrot.lane.b32.xlu0 %v4521, 127
        %v4563 = vpop.permute.xlu0 %4562
        %4564 = vrot.lane.b32.xlu0 %v4522, 127
        %v4565 = vpop.permute.xlu0 %4564
        %4566 = vrot.lane.b32.xlu0 %v4523, 127
        %v4567 = vpop.permute.xlu0 %4566
        %4568 = vrot.lane.b32.xlu0 %v4524, 127
        %v4569 = vpop.permute.xlu0 %4568
        %4570 = vrot.lane.b32.xlu0 %v4525, 127
        %v4571 = vpop.permute.xlu0 %4570
        %4572 = vrot.lane.b32.xlu0 %v4526, 127
        %v4573 = vpop.permute.xlu0 %4572
        %4574 = vrot.lane.b32.xlu0 %v4527, 127
        %v4575 = vpop.permute.xlu0 %4574
        %4576 = vrot.lane.b32.xlu0 %v4528, 127
        %v4577 = vpop.permute.xlu0 %4576
        %4578 = vrot.lane.b32.xlu0 %v4529, 127
        %v4579 = vpop.permute.xlu0 %4578
        %4580 = vrot.lane.b32.xlu0 %v4530, 127
        %v4581 = vpop.permute.xlu0 %4580
        %4582 = vrot.lane.b32.xlu0 %v4531, 127
        %v4583 = vpop.permute.xlu0 %4582
        %4584 = vrot.lane.b32.xlu0 %v4532, 127
        %v4585 = vpop.permute.xlu0 %4584
        %4586 = vrot.lane.b32.xlu0 %v4533, 127
        %v4587 = vpop.permute.xlu0 %4586
        %vm4588 = vcmask 1039360
        %v4589 = vsel %vm4588, %v4553, %v4555
        %v4590 = vsel %vm4588, %v4555, %v4557
        %v4591 = vsel %vm4588, %v4557, %v4559
        %v4592 = vsel %vm4588, %v4559, %v4561
        %v4593 = vsel %vm4588, %v4561, %v4563
        %v4594 = vsel %vm4588, %v4563, %v4565
        %v4595 = vsel %vm4588, %v4565, %v4567
        %v4596 = vsel %vm4588, %v4567, %v4569
        %v4597 = vsel %vm4588, %v4571, %v4573
        %v4598 = vsel %vm4588, %v4573, %v4575
        %v4599 = vsel %vm4588, %v4575, %v4577
        %v4600 = vsel %vm4588, %v4577, %v4579
        %v4601 = vsel %vm4588, %v4579, %v4581
        %v4602 = vsel %vm4588, %v4581, %v4583
        %v4603 = vsel %vm4588, %v4583, %v4585
        %v4604 = vsel %vm4588, %v4585, %v4587
        %v4622 = vsel %vm1227, %v4515, 0
        %4624 = vmatprep.subr.bf16.mxu0 %v4590
        %4625 = vmatpush1.bf16.msra.mxu0 %v4589
        %4626 = vmatprep.subr.bf16.mxu0 %v4598
        %4627 = vmatpush1.bf16.msra.mxu0 %v4597
        %4628 = vmatprep.subr.bf16.mxu0 0
        %4629 = vmatpush1.bf16.msra.mxu0 0
        %4630 = vmatprep.subr.bf16.mxu0 0
        %4631 = vmatpush1.bf16.msra.mxu0 0
        %4632 = vmatprep.subr.bf16.mxu0 0
        %4633 = vmatpush1.bf16.msra.mxu0 0
        %4634 = vmatprep.subr.bf16.mxu0 0
        %4635 = vmatpush1.bf16.msra.mxu0 0
        %4636 = vmatprep.subr.bf16.mxu0 0
        %4637 = vmatpush1.bf16.msra.mxu0 0
        %4638 = vmatprep.subr.bf16.mxu0 0
        %4639 = vmatpush1.bf16.msra.mxu0 0
        %4640 = vmatprep.subr.bf16.mxu0 0
        %4641 = vmatpush1.bf16.msra.mxu0 0
        %4642 = vmatprep.subr.bf16.mxu0 0
        %4643 = vmatpush1.bf16.msra.mxu0 0
        %4644 = vmatprep.subr.bf16.mxu0 0
        %4645 = vmatpush1.bf16.msra.mxu0 0
        %4646 = vmatprep.subr.bf16.mxu0 0
        %4647 = vmatpush1.bf16.msra.mxu0 0
        %4648 = vmatprep.subr.bf16.mxu0 0
        %4649 = vmatpush1.bf16.msra.mxu0 0
        %4650 = vmatprep.subr.bf16.mxu0 0
        %4651 = vmatpush1.bf16.msra.mxu0 0
        %4652 = vmatprep.subr.bf16.mxu0 0
        %4653 = vmatpush1.bf16.msra.mxu0 0
        %4654 = vmatprep.subr.bf16.mxu0 0
        %4655 = vmatpush1.bf16.msra.mxu0 0
        %4656 = vmatprep.mubr.bf16.mxu0 0
        %4657 = vmatmul.mubr.bf16.gmra.mrb[0].mxu0 %v4622
        %v4658 = vpop.f32.mrb[0].mxu0
        %v4659 = vadd.f32 0.0, %v4658
        %v4660 = vpop.f32.mrb[0].mxu0
        %v4661 = vadd.f32 0.0, %v4660
        %v4662 = vpop.f32.mrb[0].mxu0
        %v4663 = vpop.f32.mrb[0].mxu0
        %4664 = vdwg.mxu0
        %4665 = vmatprep.subr.bf16.mxu0 %v4592
        %4666 = vmatpush1.bf16.msra.mxu0 %v4591
        %4667 = vmatprep.subr.bf16.mxu0 %v4600
        %4668 = vmatpush1.bf16.msra.mxu0 %v4599
        %4669 = vmatprep.subr.bf16.mxu0 0
        %4670 = vmatpush1.bf16.msra.mxu0 0
        %4671 = vmatprep.subr.bf16.mxu0 0
        %4672 = vmatpush1.bf16.msra.mxu0 0
        %4673 = vmatprep.subr.bf16.mxu0 0
        %4674 = vmatpush1.bf16.msra.mxu0 0
        %4675 = vmatprep.subr.bf16.mxu0 0
        %4676 = vmatpush1.bf16.msra.mxu0 0
        %4677 = vmatprep.subr.bf16.mxu0 0
        %4678 = vmatpush1.bf16.msra.mxu0 0
        %4679 = vmatprep.subr.bf16.mxu0 0
        %4680 = vmatpush1.bf16.msra.mxu0 0
        %4681 = vmatprep.subr.bf16.mxu0 0
        %4682 = vmatpush1.bf16.msra.mxu0 0
        %4683 = vmatprep.subr.bf16.mxu0 0
        %4684 = vmatpush1.bf16.msra.mxu0 0
        %4685 = vmatprep.subr.bf16.mxu0 0
        %4686 = vmatpush1.bf16.msra.mxu0 0
        %4687 = vmatprep.subr.bf16.mxu0 0
        %4688 = vmatpush1.bf16.msra.mxu0 0
        %4689 = vmatprep.subr.bf16.mxu0 0
        %4690 = vmatpush1.bf16.msra.mxu0 0
        %4691 = vmatprep.subr.bf16.mxu0 0
        %4692 = vmatpush1.bf16.msra.mxu0 0
        %4693 = vmatprep.subr.bf16.mxu0 0
        %4694 = vmatpush1.bf16.msra.mxu0 0
        %4695 = vmatprep.subr.bf16.mxu0 0
        %4696 = vmatpush1.bf16.msra.mxu0 0
        %4697 = vmatprep.mubr.bf16.mxu0 0
        %4698 = vmatmul.mubr.bf16.gmra.mrb[0].mxu0 %v4622
        %v4699 = vpop.f32.mrb[0].mxu0
        %v4700 = vadd.f32 0.0, %v4699
        %v4701 = vpop.f32.mrb[0].mxu0
        %v4702 = vadd.f32 0.0, %v4701
        %v4703 = vpop.f32.mrb[0].mxu0
        %v4704 = vpop.f32.mrb[0].mxu0
        %4705 = vdwg.mxu0
        %4706 = vmatprep.subr.bf16.mxu0 %v4594
        %4707 = vmatpush1.bf16.msra.mxu0 %v4593
        %4708 = vmatprep.subr.bf16.mxu0 %v4602
        %4709 = vmatpush1.bf16.msra.mxu0 %v4601
        %4710 = vmatprep.subr.bf16.mxu0 0
        %4711 = vmatpush1.bf16.msra.mxu0 0
        %4712 = vmatprep.subr.bf16.mxu0 0
        %4713 = vmatpush1.bf16.msra.mxu0 0
        %4714 = vmatprep.subr.bf16.mxu0 0
        %4715 = vmatpush1.bf16.msra.mxu0 0
        %4716 = vmatprep.subr.bf16.mxu0 0
        %4717 = vmatpush1.bf16.msra.mxu0 0
        %4718 = vmatprep.subr.bf16.mxu0 0
        %4719 = vmatpush1.bf16.msra.mxu0 0
        %4720 = vmatprep.subr.bf16.mxu0 0
        %4721 = vmatpush1.bf16.msra.mxu0 0
        %4722 = vmatprep.subr.bf16.mxu0 0
        %4723 = vmatpush1.bf16.msra.mxu0 0
        %4724 = vmatprep.subr.bf16.mxu0 0
        %4725 = vmatpush1.bf16.msra.mxu0 0
        %4726 = vmatprep.subr.bf16.mxu0 0
        %4727 = vmatpush1.bf16.msra.mxu0 0
        %4728 = vmatprep.subr.bf16.mxu0 0
        %4729 = vmatpush1.bf16.msra.mxu0 0
        %4730 = vmatprep.subr.bf16.mxu0 0
        %4731 = vmatpush1.bf16.msra.mxu0 0
        %4732 = vmatprep.subr.bf16.mxu0 0
        %4733 = vmatpush1.bf16.msra.mxu0 0
        %4734 = vmatprep.subr.bf16.mxu0 0
        %4735 = vmatpush1.bf16.msra.mxu0 0
        %4736 = vmatprep.subr.bf16.mxu0 0
        %4737 = vmatpush1.bf16.msra.mxu0 0
        %4738 = vmatprep.mubr.bf16.mxu0 0
        %4739 = vmatmul.mubr.bf16.gmra.mrb[0].mxu0 %v4622
        %v4740 = vpop.f32.mrb[0].mxu0
        %v4741 = vadd.f32 0.0, %v4740
        %v4742 = vpop.f32.mrb[0].mxu0
        %v4743 = vadd.f32 0.0, %v4742
        %v4744 = vpop.f32.mrb[0].mxu0
        %v4745 = vpop.f32.mrb[0].mxu0
        %4746 = vdwg.mxu0
        %4747 = vmatprep.subr.bf16.mxu0 %v4596
        %4748 = vmatpush1.bf16.msra.mxu0 %v4595
        %4749 = vmatprep.subr.bf16.mxu0 %v4604
        %4750 = vmatpush1.bf16.msra.mxu0 %v4603
        %4751 = vmatprep.subr.bf16.mxu0 0
        %4752 = vmatpush1.bf16.msra.mxu0 0
        %4753 = vmatprep.subr.bf16.mxu0 0
        %4754 = vmatpush1.bf16.msra.mxu0 0
        %4755 = vmatprep.subr.bf16.mxu0 0
        %4756 = vmatpush1.bf16.msra.mxu0 0
        %4757 = vmatprep.subr.bf16.mxu0 0
        %4758 = vmatpush1.bf16.msra.mxu0 0
        %4759 = vmatprep.subr.bf16.mxu0 0
        %4760 = vmatpush1.bf16.msra.mxu0 0
        %4761 = vmatprep.subr.bf16.mxu0 0
        %4762 = vmatpush1.bf16.msra.mxu0 0
        %4763 = vmatprep.subr.bf16.mxu0 0
        %4764 = vmatpush1.bf16.msra.mxu0 0
        %4765 = vmatprep.subr.bf16.mxu0 0
        %4766 = vmatpush1.bf16.msra.mxu0 0
        %4767 = vmatprep.subr.bf16.mxu0 0
        %4768 = vmatpush1.bf16.msra.mxu0 0
        %4769 = vmatprep.subr.bf16.mxu0 0
        %4770 = vmatpush1.bf16.msra.mxu0 0
        %4771 = vmatprep.subr.bf16.mxu0 0
        %4772 = vmatpush1.bf16.msra.mxu0 0
        %4773 = vmatprep.subr.bf16.mxu0 0
        %4774 = vmatpush1.bf16.msra.mxu0 0
        %4775 = vmatprep.subr.bf16.mxu0 0
        %4776 = vmatpush1.bf16.msra.mxu0 0
        %4777 = vmatprep.subr.bf16.mxu0 0
        %4778 = vmatpush1.bf16.msra.mxu0 0
        %4779 = vmatprep.mubr.bf16.mxu0 0
        %4780 = vmatmul.mubr.bf16.gmra.mrb[0].mxu0 %v4622
        %v4781 = vpop.f32.mrb[0].mxu0
        %v4782 = vadd.f32 0.0, %v4781
        %v4783 = vpop.f32.mrb[0].mxu0
        %v4784 = vadd.f32 0.0, %v4783
        %v4785 = vpop.f32.mrb[0].mxu0
        %v4786 = vpop.f32.mrb[0].mxu0
        %4787 = vdwg.mxu0
        %v4788 = vadd.f32 %v4506, %v4659
        %v4789 = vadd.f32 %v4507, %v4661
        %v4790 = vadd.f32 %v4508, %v4700
        %v4791 = vadd.f32 %v4509, %v4702
        %v4792 = vadd.f32 %v4510, %v4741
        %v4793 = vadd.f32 %v4511, %v4743
        %v4794 = vadd.f32 %v4512, %v4782
        %v4795 = vadd.f32 %v4513, %v4784
        %s4796 = scalar_lea.vmem %s5, 60
        %v4797 = vld [vmem:[%s4796] sm:$0xf]
        %4798 = vrot.lane.b32.xlu0 %v4516, 119
        %v4799 = vpop.permute.xlu0 %4798
        %4800 = vrot.lane.b32.xlu0 %v4517, 119
        %v4801 = vpop.permute.xlu0 %4800
        %4802 = vrot.lane.b32.xlu0 %v4518, 119
        %v4803 = vpop.permute.xlu0 %4802
        %4804 = vrot.lane.b32.xlu0 %v4519, 119
        %v4805 = vpop.permute.xlu0 %4804
        %4806 = vrot.lane.b32.xlu0 %v4520, 119
        %v4807 = vpop.permute.xlu0 %4806
        %4808 = vrot.lane.b32.xlu0 %v4521, 119
        %v4809 = vpop.permute.xlu0 %4808
        %4810 = vrot.lane.b32.xlu0 %v4522, 119
        %v4811 = vpop.permute.xlu0 %4810
        %4812 = vrot.lane.b32.xlu0 %v4523, 119
        %v4813 = vpop.permute.xlu0 %4812
        %4814 = vrot.lane.b32.xlu0 %v4524, 119
        %v4815 = vpop.permute.xlu0 %4814
        %4816 = vrot.lane.b32.xlu0 %v4525, 119
        %v4817 = vpop.permute.xlu0 %4816
        %4818 = vrot.lane.b32.xlu0 %v4526, 119
        %v4819 = vpop.permute.xlu0 %4818
        %4820 = vrot.lane.b32.xlu0 %v4527, 119
        %v4821 = vpop.permute.xlu0 %4820
        %4822 = vrot.lane.b32.xlu0 %v4528, 119
        %v4823 = vpop.permute.xlu0 %4822
        %4824 = vrot.lane.b32.xlu0 %v4529, 119
        %v4825 = vpop.permute.xlu0 %4824
        %4826 = vrot.lane.b32.xlu0 %v4530, 119
        %v4827 = vpop.permute.xlu0 %4826
        %4828 = vrot.lane.b32.xlu0 %v4531, 119
        %v4829 = vpop.permute.xlu0 %4828
        %4830 = vrot.lane.b32.xlu0 %v4532, 119
        %v4831 = vpop.permute.xlu0 %4830
        %4832 = vrot.lane.b32.xlu0 %v4533, 119
        %v4833 = vpop.permute.xlu0 %4832
        %vm4834 = vcmask 973824
        %v4835 = vsel %vm4834, %v4799, %v4801
        %v4836 = vsel %vm4834, %v4801, %v4803
        %v4837 = vsel %vm4834, %v4803, %v4805
        %v4838 = vsel %vm4834, %v4805, %v4807
        %v4839 = vsel %vm4834, %v4807, %v4809
        %v4840 = vsel %vm4834, %v4809, %v4811
        %v4841 = vsel %vm4834, %v4811, %v4813
        %v4842 = vsel %vm4834, %v4813, %v4815
        %v4843 = vsel %vm4834, %v4817, %v4819
        %v4844 = vsel %vm4834, %v4819, %v4821
        %v4845 = vsel %vm4834, %v4821, %v4823
        %v4846 = vsel %vm4834, %v4823, %v4825
        %v4847 = vsel %vm4834, %v4825, %v4827
        %v4848 = vsel %vm4834, %v4827, %v4829
        %v4849 = vsel %vm4834, %v4829, %v4831
        %v4850 = vsel %vm4834, %v4831, %v4833
        %v4868 = vsel %vm1227, %v4797, 0
        %4870 = vmatprep.subr.bf16.mxu0 %v4836
        %4871 = vmatpush1.bf16.msra.mxu0 %v4835
        %4872 = vmatprep.subr.bf16.mxu0 %v4844
        %4873 = vmatpush1.bf16.msra.mxu0 %v4843
        %4874 = vmatprep.subr.bf16.mxu0 0
        %4875 = vmatpush1.bf16.msra.mxu0 0
        %4876 = vmatprep.subr.bf16.mxu0 0
        %4877 = vmatpush1.bf16.msra.mxu0 0
        %4878 = vmatprep.subr.bf16.mxu0 0
        %4879 = vmatpush1.bf16.msra.mxu0 0
        %4880 = vmatprep.subr.bf16.mxu0 0
        %4881 = vmatpush1.bf16.msra.mxu0 0
        %4882 = vmatprep.subr.bf16.mxu0 0
        %4883 = vmatpush1.bf16.msra.mxu0 0
        %4884 = vmatprep.subr.bf16.mxu0 0
        %4885 = vmatpush1.bf16.msra.mxu0 0
        %4886 = vmatprep.subr.bf16.mxu0 0
        %4887 = vmatpush1.bf16.msra.mxu0 0
        %4888 = vmatprep.subr.bf16.mxu0 0
        %4889 = vmatpush1.bf16.msra.mxu0 0
        %4890 = vmatprep.subr.bf16.mxu0 0
        %4891 = vmatpush1.bf16.msra.mxu0 0
        %4892 = vmatprep.subr.bf16.mxu0 0
        %4893 = vmatpush1.bf16.msra.mxu0 0
        %4894 = vmatprep.subr.bf16.mxu0 0
        %4895 = vmatpush1.bf16.msra.mxu0 0
        %4896 = vmatprep.subr.bf16.mxu0 0
        %4897 = vmatpush1.bf16.msra.mxu0 0
        %4898 = vmatprep.subr.bf16.mxu0 0
        %4899 = vmatpush1.bf16.msra.mxu0 0
        %4900 = vmatprep.subr.bf16.mxu0 0
        %4901 = vmatpush1.bf16.msra.mxu0 0
        %4902 = vmatprep.mubr.bf16.mxu0 0
        %4903 = vmatmul.mubr.bf16.gmra.mrb[0].mxu0 %v4868
        %v4904 = vpop.f32.mrb[0].mxu0
        %v4905 = vadd.f32 0.0, %v4904
        %v4906 = vpop.f32.mrb[0].mxu0
        %v4907 = vadd.f32 0.0, %v4906
        %v4908 = vpop.f32.mrb[0].mxu0
        %v4909 = vpop.f32.mrb[0].mxu0
        %4910 = vdwg.mxu0
        %4911 = vmatprep.subr.bf16.mxu0 %v4838
        %4912 = vmatpush1.bf16.msra.mxu0 %v4837
        %4913 = vmatprep.subr.bf16.mxu0 %v4846
        %4914 = vmatpush1.bf16.msra.mxu0 %v4845
        %4915 = vmatprep.subr.bf16.mxu0 0
        %4916 = vmatpush1.bf16.msra.mxu0 0
        %4917 = vmatprep.subr.bf16.mxu0 0
        %4918 = vmatpush1.bf16.msra.mxu0 0
        %4919 = vmatprep.subr.bf16.mxu0 0
        %4920 = vmatpush1.bf16.msra.mxu0 0
        %4921 = vmatprep.subr.bf16.mxu0 0
        %4922 = vmatpush1.bf16.msra.mxu0 0
        %4923 = vmatprep.subr.bf16.mxu0 0
        %4924 = vmatpush1.bf16.msra.mxu0 0
        %4925 = vmatprep.subr.bf16.mxu0 0
        %4926 = vmatpush1.bf16.msra.mxu0 0
        %4927 = vmatprep.subr.bf16.mxu0 0
        %4928 = vmatpush1.bf16.msra.mxu0 0
        %4929 = vmatprep.subr.bf16.mxu0 0
        %4930 = vmatpush1.bf16.msra.mxu0 0
        %4931 = vmatprep.subr.bf16.mxu0 0
        %4932 = vmatpush1.bf16.msra.mxu0 0
        %4933 = vmatprep.subr.bf16.mxu0 0
        %4934 = vmatpush1.bf16.msra.mxu0 0
        %4935 = vmatprep.subr.bf16.mxu0 0
        %4936 = vmatpush1.bf16.msra.mxu0 0
        %4937 = vmatprep.subr.bf16.mxu0 0
        %4938 = vmatpush1.bf16.msra.mxu0 0
        %4939 = vmatprep.subr.bf16.mxu0 0
        %4940 = vmatpush1.bf16.msra.mxu0 0
        %4941 = vmatprep.subr.bf16.mxu0 0
        %4942 = vmatpush1.bf16.msra.mxu0 0
        %4943 = vmatprep.mubr.bf16.mxu0 0
        %4944 = vmatmul.mubr.bf16.gmra.mrb[0].mxu0 %v4868
        %v4945 = vpop.f32.mrb[0].mxu0
        %v4946 = vadd.f32 0.0, %v4945
        %v4947 = vpop.f32.mrb[0].mxu0
        %v4948 = vadd.f32 0.0, %v4947
        %v4949 = vpop.f32.mrb[0].mxu0
        %v4950 = vpop.f32.mrb[0].mxu0
        %4951 = vdwg.mxu0
        %4952 = vmatprep.subr.bf16.mxu0 %v4840
        %4953 = vmatpush1.bf16.msra.mxu0 %v4839
        %4954 = vmatprep.subr.bf16.mxu0 %v4848
        %4955 = vmatpush1.bf16.msra.mxu0 %v4847
        %4956 = vmatprep.subr.bf16.mxu0 0
        %4957 = vmatpush1.bf16.msra.mxu0 0
        %4958 = vmatprep.subr.bf16.mxu0 0
        %4959 = vmatpush1.bf16.msra.mxu0 0
        %4960 = vmatprep.subr.bf16.mxu0 0
        %4961 = vmatpush1.bf16.msra.mxu0 0
        %4962 = vmatprep.subr.bf16.mxu0 0
        %4963 = vmatpush1.bf16.msra.mxu0 0
        %4964 = vmatprep.subr.bf16.mxu0 0
        %4965 = vmatpush1.bf16.msra.mxu0 0
        %4966 = vmatprep.subr.bf16.mxu0 0
        %4967 = vmatpush1.bf16.msra.mxu0 0
        %4968 = vmatprep.subr.bf16.mxu0 0
        %4969 = vmatpush1.bf16.msra.mxu0 0
        %4970 = vmatprep.subr.bf16.mxu0 0
        %4971 = vmatpush1.bf16.msra.mxu0 0
        %4972 = vmatprep.subr.bf16.mxu0 0
        %4973 = vmatpush1.bf16.msra.mxu0 0
        %4974 = vmatprep.subr.bf16.mxu0 0
        %4975 = vmatpush1.bf16.msra.mxu0 0
        %4976 = vmatprep.subr.bf16.mxu0 0
        %4977 = vmatpush1.bf16.msra.mxu0 0
        %4978 = vmatprep.subr.bf16.mxu0 0
        %4979 = vmatpush1.bf16.msra.mxu0 0
        %4980 = vmatprep.subr.bf16.mxu0 0
        %4981 = vmatpush1.bf16.msra.mxu0 0
        %4982 = vmatprep.subr.bf16.mxu0 0
        %4983 = vmatpush1.bf16.msra.mxu0 0
        %4984 = vmatprep.mubr.bf16.mxu0 0
        %4985 = vmatmul.mubr.bf16.gmra.mrb[0].mxu0 %v4868
        %v4986 = vpop.f32.mrb[0].mxu0
        %v4987 = vadd.f32 0.0, %v4986
        %v4988 = vpop.f32.mrb[0].mxu0
        %v4989 = vadd.f32 0.0, %v4988
        %v4990 = vpop.f32.mrb[0].mxu0
        %v4991 = vpop.f32.mrb[0].mxu0
        %4992 = vdwg.mxu0
        %4993 = vmatprep.subr.bf16.mxu0 %v4842
        %4994 = vmatpush1.bf16.msra.mxu0 %v4841
        %4995 = vmatprep.subr.bf16.mxu0 %v4850
        %4996 = vmatpush1.bf16.msra.mxu0 %v4849
        %4997 = vmatprep.subr.bf16.mxu0 0
        %4998 = vmatpush1.bf16.msra.mxu0 0
        %4999 = vmatprep.subr.bf16.mxu0 0
        %5000 = vmatpush1.bf16.msra.mxu0 0
        %5001 = vmatprep.subr.bf16.mxu0 0
        %5002 = vmatpush1.bf16.msra.mxu0 0
        %5003 = vmatprep.subr.bf16.mxu0 0
        %5004 = vmatpush1.bf16.msra.mxu0 0
        %5005 = vmatprep.subr.bf16.mxu0 0
        %5006 = vmatpush1.bf16.msra.mxu0 0
        %5007 = vmatprep.subr.bf16.mxu0 0
        %5008 = vmatpush1.bf16.msra.mxu0 0
        %5009 = vmatprep.subr.bf16.mxu0 0
        %5010 = vmatpush1.bf16.msra.mxu0 0
        %5011 = vmatprep.subr.bf16.mxu0 0
        %5012 = vmatpush1.bf16.msra.mxu0 0
        %5013 = vmatprep.subr.bf16.mxu0 0
        %5014 = vmatpush1.bf16.msra.mxu0 0
        %5015 = vmatprep.subr.bf16.mxu0 0
        %5016 = vmatpush1.bf16.msra.mxu0 0
        %5017 = vmatprep.subr.bf16.mxu0 0
        %5018 = vmatpush1.bf16.msra.mxu0 0
        %5019 = vmatprep.subr.bf16.mxu0 0
        %5020 = vmatpush1.bf16.msra.mxu0 0
        %5021 = vmatprep.subr.bf16.mxu0 0
        %5022 = vmatpush1.bf16.msra.mxu0 0
        %5023 = vmatprep.subr.bf16.mxu0 0
        %5024 = vmatpush1.bf16.msra.mxu0 0
        %5025 = vmatprep.mubr.bf16.mxu0 0
        %5026 = vmatmul.mubr.bf16.gmra.mrb[0].mxu0 %v4868
        %v5027 = vpop.f32.mrb[0].mxu0
        %v5028 = vadd.f32 0.0, %v5027
        %v5029 = vpop.f32.mrb[0].mxu0
        %v5030 = vadd.f32 0.0, %v5029
        %v5031 = vpop.f32.mrb[0].mxu0
        %v5032 = vpop.f32.mrb[0].mxu0
        %5033 = vdwg.mxu0
        %v5034 = vadd.f32 %v4788, %v4905
        %v5035 = vadd.f32 %v4789, %v4907
        %v5036 = vadd.f32 %v4790, %v4946
        %v5037 = vadd.f32 %v4791, %v4948
        %v5038 = vadd.f32 %v4792, %v4987
        %v5039 = vadd.f32 %v4793, %v4989
        %v5040 = vadd.f32 %v4794, %v5028
        %v5041 = vadd.f32 %v4795, %v5030
        %s5042 = scalar_lea.vmem %s5, 64
        %v5043 = vld [vmem:[%s5042] sm:$0xf]
        %5044 = vrot.lane.b32.xlu0 %v4516, 118
        %v5045 = vpop.permute.xlu0 %5044
        %5046 = vrot.lane.b32.xlu0 %v4517, 118
        %v5047 = vpop.permute.xlu0 %5046
        %5048 = vrot.lane.b32.xlu0 %v4518, 118
        %v5049 = vpop.permute.xlu0 %5048
        %5050 = vrot.lane.b32.xlu0 %v4519, 118
        %v5051 = vpop.permute.xlu0 %5050
        %5052 = vrot.lane.b32.xlu0 %v4520, 118
        %v5053 = vpop.permute.xlu0 %5052
        %5054 = vrot.lane.b32.xlu0 %v4521, 118
        %v5055 = vpop.permute.xlu0 %5054
        %5056 = vrot.lane.b32.xlu0 %v4522, 118
        %v5057 = vpop.permute.xlu0 %5056
        %5058 = vrot.lane.b32.xlu0 %v4523, 118
        %v5059 = vpop.permute.xlu0 %5058
        %5060 = vrot.lane.b32.xlu0 %v4524, 118
        %v5061 = vpop.permute.xlu0 %5060
        %5062 = vrot.lane.b32.xlu0 %v4525, 118
        %v5063 = vpop.permute.xlu0 %5062
        %5064 = vrot.lane.b32.xlu0 %v4526, 118
        %v5065 = vpop.permute.xlu0 %5064
        %5066 = vrot.lane.b32.xlu0 %v4527, 118
        %v5067 = vpop.permute.xlu0 %5066
        %5068 = vrot.lane.b32.xlu0 %v4528, 118
        %v5069 = vpop.permute.xlu0 %5068
        %5070 = vrot.lane.b32.xlu0 %v4529, 118
        %v5071 = vpop.permute.xlu0 %5070
        %5072 = vrot.lane.b32.xlu0 %v4530, 118
        %v5073 = vpop.permute.xlu0 %5072
        %5074 = vrot.lane.b32.xlu0 %v4531, 118
        %v5075 = vpop.permute.xlu0 %5074
        %5076 = vrot.lane.b32.xlu0 %v4532, 118
        %v5077 = vpop.permute.xlu0 %5076
        %5078 = vrot.lane.b32.xlu0 %v4533, 118
        %v5079 = vpop.permute.xlu0 %5078
        %vm5080 = vcmask 965632
        %v5081 = vsel %vm5080, %v5045, %v5047
        %v5082 = vsel %vm5080, %v5047, %v5049
        %v5083 = vsel %vm5080, %v5049, %v5051
        %v5084 = vsel %vm5080, %v5051, %v5053
        %v5085 = vsel %vm5080, %v5053, %v5055
        %v5086 = vsel %vm5080, %v5055, %v5057
        %v5087 = vsel %vm5080, %v5057, %v5059
        %v5088 = vsel %vm5080, %v5059, %v5061
        %v5089 = vsel %vm5080, %v5063, %v5065
        %v5090 = vsel %vm5080, %v5065, %v5067
        %v5091 = vsel %vm5080, %v5067, %v5069
        %v5092 = vsel %vm5080, %v5069, %v5071
        %v5093 = vsel %vm5080, %v5071, %v5073
        %v5094 = vsel %vm5080, %v5073, %v5075
        %v5095 = vsel %vm5080, %v5075, %v5077
        %v5096 = vsel %vm5080, %v5077, %v5079
        %v5114 = vsel %vm1227, %v5043, 0
        %5116 = vmatprep.subr.bf16.mxu0 %v5082
        %5117 = vmatpush1.bf16.msra.mxu0 %v5081
        %5118 = vmatprep.subr.bf16.mxu0 %v5090
        %5119 = vmatpush1.bf16.msra.mxu0 %v5089
        %5120 = vmatprep.subr.bf16.mxu0 0
        %5121 = vmatpush1.bf16.msra.mxu0 0
        %5122 = vmatprep.subr.bf16.mxu0 0
        %5123 = vmatpush1.bf16.msra.mxu0 0
        %5124 = vmatprep.subr.bf16.mxu0 0
        %5125 = vmatpush1.bf16.msra.mxu0 0
        %5126 = vmatprep.subr.bf16.mxu0 0
        %5127 = vmatpush1.bf16.msra.mxu0 0
        %5128 = vmatprep.subr.bf16.mxu0 0
        %5129 = vmatpush1.bf16.msra.mxu0 0
        %5130 = vmatprep.subr.bf16.mxu0 0
        %5131 = vmatpush1.bf16.msra.mxu0 0
        %5132 = vmatprep.subr.bf16.mxu0 0
        %5133 = vmatpush1.bf16.msra.mxu0 0
        %5134 = vmatprep.subr.bf16.mxu0 0
        %5135 = vmatpush1.bf16.msra.mxu0 0
        %5136 = vmatprep.subr.bf16.mxu0 0
        %5137 = vmatpush1.bf16.msra.mxu0 0
        %5138 = vmatprep.subr.bf16.mxu0 0
        %5139 = vmatpush1.bf16.msra.mxu0 0
        %5140 = vmatprep.subr.bf16.mxu0 0
        %5141 = vmatpush1.bf16.msra.mxu0 0
        %5142 = vmatprep.subr.bf16.mxu0 0
        %5143 = vmatpush1.bf16.msra.mxu0 0
        %5144 = vmatprep.subr.bf16.mxu0 0
        %5145 = vmatpush1.bf16.msra.mxu0 0
        %5146 = vmatprep.subr.bf16.mxu0 0
        %5147 = vmatpush1.bf16.msra.mxu0 0
        %5148 = vmatprep.mubr.bf16.mxu0 0
        %5149 = vmatmul.mubr.bf16.gmra.mrb[0].mxu0 %v5114
        %v5150 = vpop.f32.mrb[0].mxu0
        %v5151 = vadd.f32 0.0, %v5150
        %v5152 = vpop.f32.mrb[0].mxu0
        %v5153 = vadd.f32 0.0, %v5152
        %v5154 = vpop.f32.mrb[0].mxu0
        %v5155 = vpop.f32.mrb[0].mxu0
        %5156 = vdwg.mxu0
        %5157 = vmatprep.subr.bf16.mxu0 %v5084
        %5158 = vmatpush1.bf16.msra.mxu0 %v5083
        %5159 = vmatprep.subr.bf16.mxu0 %v5092
        %5160 = vmatpush1.bf16.msra.mxu0 %v5091
        %5161 = vmatprep.subr.bf16.mxu0 0
        %5162 = vmatpush1.bf16.msra.mxu0 0
        %5163 = vmatprep.subr.bf16.mxu0 0
        %5164 = vmatpush1.bf16.msra.mxu0 0
        %5165 = vmatprep.subr.bf16.mxu0 0
        %5166 = vmatpush1.bf16.msra.mxu0 0
        %5167 = vmatprep.subr.bf16.mxu0 0
        %5168 = vmatpush1.bf16.msra.mxu0 0
        %5169 = vmatprep.subr.bf16.mxu0 0
        %5170 = vmatpush1.bf16.msra.mxu0 0
        %5171 = vmatprep.subr.bf16.mxu0 0
        %5172 = vmatpush1.bf16.msra.mxu0 0
        %5173 = vmatprep.subr.bf16.mxu0 0
        %5174 = vmatpush1.bf16.msra.mxu0 0
        %5175 = vmatprep.subr.bf16.mxu0 0
        %5176 = vmatpush1.bf16.msra.mxu0 0
        %5177 = vmatprep.subr.bf16.mxu0 0
        %5178 = vmatpush1.bf16.msra.mxu0 0
        %5179 = vmatprep.subr.bf16.mxu0 0
        %5180 = vmatpush1.bf16.msra.mxu0 0
        %5181 = vmatprep.subr.bf16.mxu0 0
        %5182 = vmatpush1.bf16.msra.mxu0 0
        %5183 = vmatprep.subr.bf16.mxu0 0
        %5184 = vmatpush1.bf16.msra.mxu0 0
        %5185 = vmatprep.subr.bf16.mxu0 0
        %5186 = vmatpush1.bf16.msra.mxu0 0
        %5187 = vmatprep.subr.bf16.mxu0 0
        %5188 = vmatpush1.bf16.msra.mxu0 0
        %5189 = vmatprep.mubr.bf16.mxu0 0
        %5190 = vmatmul.mubr.bf16.gmra.mrb[0].mxu0 %v5114
        %v5191 = vpop.f32.mrb[0].mxu0
        %v5192 = vadd.f32 0.0, %v5191
        %v5193 = vpop.f32.mrb[0].mxu0
        %v5194 = vadd.f32 0.0, %v5193
        %v5195 = vpop.f32.mrb[0].mxu0
        %v5196 = vpop.f32.mrb[0].mxu0
        %5197 = vdwg.mxu0
        %5198 = vmatprep.subr.bf16.mxu0 %v5086
        %5199 = vmatpush1.bf16.msra.mxu0 %v5085
        %5200 = vmatprep.subr.bf16.mxu0 %v5094
        %5201 = vmatpush1.bf16.msra.mxu0 %v5093
        %5202 = vmatprep.subr.bf16.mxu0 0
        %5203 = vmatpush1.bf16.msra.mxu0 0
        %5204 = vmatprep.subr.bf16.mxu0 0
        %5205 = vmatpush1.bf16.msra.mxu0 0
        %5206 = vmatprep.subr.bf16.mxu0 0
        %5207 = vmatpush1.bf16.msra.mxu0 0
        %5208 = vmatprep.subr.bf16.mxu0 0
        %5209 = vmatpush1.bf16.msra.mxu0 0
        %5210 = vmatprep.subr.bf16.mxu0 0
        %5211 = vmatpush1.bf16.msra.mxu0 0
        %5212 = vmatprep.subr.bf16.mxu0 0
        %5213 = vmatpush1.bf16.msra.mxu0 0
        %5214 = vmatprep.subr.bf16.mxu0 0
        %5215 = vmatpush1.bf16.msra.mxu0 0
        %5216 = vmatprep.subr.bf16.mxu0 0
        %5217 = vmatpush1.bf16.msra.mxu0 0
        %5218 = vmatprep.subr.bf16.mxu0 0
        %5219 = vmatpush1.bf16.msra.mxu0 0
        %5220 = vmatprep.subr.bf16.mxu0 0
        %5221 = vmatpush1.bf16.msra.mxu0 0
        %5222 = vmatprep.subr.bf16.mxu0 0
        %5223 = vmatpush1.bf16.msra.mxu0 0
        %5224 = vmatprep.subr.bf16.mxu0 0
        %5225 = vmatpush1.bf16.msra.mxu0 0
        %5226 = vmatprep.subr.bf16.mxu0 0
        %5227 = vmatpush1.bf16.msra.mxu0 0
        %5228 = vmatprep.subr.bf16.mxu0 0
        %5229 = vmatpush1.bf16.msra.mxu0 0
        %5230 = vmatprep.mubr.bf16.mxu0 0
        %5231 = vmatmul.mubr.bf16.gmra.mrb[0].mxu0 %v5114
        %v5232 = vpop.f32.mrb[0].mxu0
        %v5233 = vadd.f32 0.0, %v5232
        %v5234 = vpop.f32.mrb[0].mxu0
        %v5235 = vadd.f32 0.0, %v5234
        %v5236 = vpop.f32.mrb[0].mxu0
        %v5237 = vpop.f32.mrb[0].mxu0
        %5238 = vdwg.mxu0
        %5239 = vmatprep.subr.bf16.mxu0 %v5088
        %5240 = vmatpush1.bf16.msra.mxu0 %v5087
        %5241 = vmatprep.subr.bf16.mxu0 %v5096
        %5242 = vmatpush1.bf16.msra.mxu0 %v5095
        %5243 = vmatprep.subr.bf16.mxu0 0
        %5244 = vmatpush1.bf16.msra.mxu0 0
        %5245 = vmatprep.subr.bf16.mxu0 0
        %5246 = vmatpush1.bf16.msra.mxu0 0
        %5247 = vmatprep.subr.bf16.mxu0 0
        %5248 = vmatpush1.bf16.msra.mxu0 0
        %5249 = vmatprep.subr.bf16.mxu0 0
        %5250 = vmatpush1.bf16.msra.mxu0 0
        %5251 = vmatprep.subr.bf16.mxu0 0
        %5252 = vmatpush1.bf16.msra.mxu0 0
        %5253 = vmatprep.subr.bf16.mxu0 0
        %5254 = vmatpush1.bf16.msra.mxu0 0
        %5255 = vmatprep.subr.bf16.mxu0 0
        %5256 = vmatpush1.bf16.msra.mxu0 0
        %5257 = vmatprep.subr.bf16.mxu0 0
        %5258 = vmatpush1.bf16.msra.mxu0 0
        %5259 = vmatprep.subr.bf16.mxu0 0
        %5260 = vmatpush1.bf16.msra.mxu0 0
        %5261 = vmatprep.subr.bf16.mxu0 0
        %5262 = vmatpush1.bf16.msra.mxu0 0
        %5263 = vmatprep.subr.bf16.mxu0 0
        %5264 = vmatpush1.bf16.msra.mxu0 0
        %5265 = vmatprep.subr.bf16.mxu0 0
        %5266 = vmatpush1.bf16.msra.mxu0 0
        %5267 = vmatprep.subr.bf16.mxu0 0
        %5268 = vmatpush1.bf16.msra.mxu0 0
        %5269 = vmatprep.subr.bf16.mxu0 0
        %5270 = vmatpush1.bf16.msra.mxu0 0
        %5271 = vmatprep.mubr.bf16.mxu0 0
        %5272 = vmatmul.mubr.bf16.gmra.mrb[0].mxu0 %v5114
        %v5273 = vpop.f32.mrb[0].mxu0
        %v5274 = vadd.f32 0.0, %v5273
        %v5275 = vpop.f32.mrb[0].mxu0
        %v5276 = vadd.f32 0.0, %v5275
        %v5277 = vpop.f32.mrb[0].mxu0
        %v5278 = vpop.f32.mrb[0].mxu0
        %5279 = vdwg.mxu0
        %v5280 = vadd.f32 %v5034, %v5151
        %v5281 = vadd.f32 %v5035, %v5153
        %v5282 = vadd.f32 %v5036, %v5192
        %v5283 = vadd.f32 %v5037, %v5194
        %v5284 = vadd.f32 %v5038, %v5233
        %v5285 = vadd.f32 %v5039, %v5235
        %v5286 = vadd.f32 %v5040, %v5274
        %v5287 = vadd.f32 %v5041, %v5276
        %s5288 = scalar_lea.vmem %s5, 68
        %v5289 = vld [vmem:[%s5288] sm:$0xf]
        %5290 = vrot.lane.b32.xlu0 %v4516, 117
        %v5291 = vpop.permute.xlu0 %5290
        %5292 = vrot.lane.b32.xlu0 %v4517, 117
        %v5293 = vpop.permute.xlu0 %5292
        %5294 = vrot.lane.b32.xlu0 %v4518, 117
        %v5295 = vpop.permute.xlu0 %5294
        %5296 = vrot.lane.b32.xlu0 %v4519, 117
        %v5297 = vpop.permute.xlu0 %5296
        %5298 = vrot.lane.b32.xlu0 %v4520, 117
        %v5299 = vpop.permute.xlu0 %5298
        %5300 = vrot.lane.b32.xlu0 %v4521, 117
        %v5301 = vpop.permute.xlu0 %5300
        %5302 = vrot.lane.b32.xlu0 %v4522, 117
        %v5303 = vpop.permute.xlu0 %5302
        %5304 = vrot.lane.b32.xlu0 %v4523, 117
        %v5305 = vpop.permute.xlu0 %5304
        %5306 = vrot.lane.b32.xlu0 %v4524, 117
        %v5307 = vpop.permute.xlu0 %5306
        %5308 = vrot.lane.b32.xlu0 %v4525, 117
        %v5309 = vpop.permute.xlu0 %5308
        %5310 = vrot.lane.b32.xlu0 %v4526, 117
        %v5311 = vpop.permute.xlu0 %5310
        %5312 = vrot.lane.b32.xlu0 %v4527, 117
        %v5313 = vpop.permute.xlu0 %5312
        %5314 = vrot.lane.b32.xlu0 %v4528, 117
        %v5315 = vpop.permute.xlu0 %5314
        %5316 = vrot.lane.b32.xlu0 %v4529, 117
        %v5317 = vpop.permute.xlu0 %5316
        %5318 = vrot.lane.b32.xlu0 %v4530, 117
        %v5319 = vpop.permute.xlu0 %5318
        %5320 = vrot.lane.b32.xlu0 %v4531, 117
        %v5321 = vpop.permute.xlu0 %5320
        %5322 = vrot.lane.b32.xlu0 %v4532, 117
        %v5323 = vpop.permute.xlu0 %5322
        %5324 = vrot.lane.b32.xlu0 %v4533, 117
        %v5325 = vpop.permute.xlu0 %5324
        %vm5326 = vcmask 957440
        %v5327 = vsel %vm5326, %v5291, %v5293
        %v5328 = vsel %vm5326, %v5293, %v5295
        %v5329 = vsel %vm5326, %v5295, %v5297
        %v5330 = vsel %vm5326, %v5297, %v5299
        %v5331 = vsel %vm5326, %v5299, %v5301
        %v5332 = vsel %vm5326, %v5301, %v5303
        %v5333 = vsel %vm5326, %v5303, %v5305
        %v5334 = vsel %vm5326, %v5305, %v5307
        %v5335 = vsel %vm5326, %v5309, %v5311
        %v5336 = vsel %vm5326, %v5311, %v5313
        %v5337 = vsel %vm5326, %v5313, %v5315
        %v5338 = vsel %vm5326, %v5315, %v5317
        %v5339 = vsel %vm5326, %v5317, %v5319
        %v5340 = vsel %vm5326, %v5319, %v5321
        %v5341 = vsel %vm5326, %v5321, %v5323
        %v5342 = vsel %vm5326, %v5323, %v5325
        %v5360 = vsel %vm1227, %v5289, 0
        %5362 = vmatprep.subr.bf16.mxu0 %v5328
        %5363 = vmatpush1.bf16.msra.mxu0 %v5327
        %5364 = vmatprep.subr.bf16.mxu0 %v5336
        %5365 = vmatpush1.bf16.msra.mxu0 %v5335
        %5366 = vmatprep.subr.bf16.mxu0 0
        %5367 = vmatpush1.bf16.msra.mxu0 0
        %5368 = vmatprep.subr.bf16.mxu0 0
        %5369 = vmatpush1.bf16.msra.mxu0 0
        %5370 = vmatprep.subr.bf16.mxu0 0
        %5371 = vmatpush1.bf16.msra.mxu0 0
        %5372 = vmatprep.subr.bf16.mxu0 0
        %5373 = vmatpush1.bf16.msra.mxu0 0
        %5374 = vmatprep.subr.bf16.mxu0 0
        %5375 = vmatpush1.bf16.msra.mxu0 0
        %5376 = vmatprep.subr.bf16.mxu0 0
        %5377 = vmatpush1.bf16.msra.mxu0 0
        %5378 = vmatprep.subr.bf16.mxu0 0
        %5379 = vmatpush1.bf16.msra.mxu0 0
        %5380 = vmatprep.subr.bf16.mxu0 0
        %5381 = vmatpush1.bf16.msra.mxu0 0
        %5382 = vmatprep.subr.bf16.mxu0 0
        %5383 = vmatpush1.bf16.msra.mxu0 0
        %5384 = vmatprep.subr.bf16.mxu0 0
        %5385 = vmatpush1.bf16.msra.mxu0 0
        %5386 = vmatprep.subr.bf16.mxu0 0
        %5387 = vmatpush1.bf16.msra.mxu0 0
        %5388 = vmatprep.subr.bf16.mxu0 0
        %5389 = vmatpush1.bf16.msra.mxu0 0
        %5390 = vmatprep.subr.bf16.mxu0 0
        %5391 = vmatpush1.bf16.msra.mxu0 0
        %5392 = vmatprep.subr.bf16.mxu0 0
        %5393 = vmatpush1.bf16.msra.mxu0 0
        %5394 = vmatprep.mubr.bf16.mxu0 0
        %5395 = vmatmul.mubr.bf16.gmra.mrb[0].mxu0 %v5360
        %v5396 = vpop.f32.mrb[0].mxu0
        %v5397 = vadd.f32 0.0, %v5396
        %v5398 = vpop.f32.mrb[0].mxu0
        %v5399 = vadd.f32 0.0, %v5398
        %v5400 = vpop.f32.mrb[0].mxu0
        %v5401 = vpop.f32.mrb[0].mxu0
        %5402 = vdwg.mxu0
        %5403 = vmatprep.subr.bf16.mxu0 %v5330
        %5404 = vmatpush1.bf16.msra.mxu0 %v5329
        %5405 = vmatprep.subr.bf16.mxu0 %v5338
        %5406 = vmatpush1.bf16.msra.mxu0 %v5337
        %5407 = vmatprep.subr.bf16.mxu0 0
        %5408 = vmatpush1.bf16.msra.mxu0 0
        %5409 = vmatprep.subr.bf16.mxu0 0
        %5410 = vmatpush1.bf16.msra.mxu0 0
        %5411 = vmatprep.subr.bf16.mxu0 0
        %5412 = vmatpush1.bf16.msra.mxu0 0
        %5413 = vmatprep.subr.bf16.mxu0 0
        %5414 = vmatpush1.bf16.msra.mxu0 0
        %5415 = vmatprep.subr.bf16.mxu0 0
        %5416 = vmatpush1.bf16.msra.mxu0 0
        %5417 = vmatprep.subr.bf16.mxu0 0
        %5418 = vmatpush1.bf16.msra.mxu0 0
        %5419 = vmatprep.subr.bf16.mxu0 0
        %5420 = vmatpush1.bf16.msra.mxu0 0
        %5421 = vmatprep.subr.bf16.mxu0 0
        %5422 = vmatpush1.bf16.msra.mxu0 0
        %5423 = vmatprep.subr.bf16.mxu0 0
        %5424 = vmatpush1.bf16.msra.mxu0 0
        %5425 = vmatprep.subr.bf16.mxu0 0
        %5426 = vmatpush1.bf16.msra.mxu0 0
        %5427 = vmatprep.subr.bf16.mxu0 0
        %5428 = vmatpush1.bf16.msra.mxu0 0
        %5429 = vmatprep.subr.bf16.mxu0 0
        %5430 = vmatpush1.bf16.msra.mxu0 0
        %5431 = vmatprep.subr.bf16.mxu0 0
        %5432 = vmatpush1.bf16.msra.mxu0 0
        %5433 = vmatprep.subr.bf16.mxu0 0
        %5434 = vmatpush1.bf16.msra.mxu0 0
        %5435 = vmatprep.mubr.bf16.mxu0 0
        %5436 = vmatmul.mubr.bf16.gmra.mrb[0].mxu0 %v5360
        %v5437 = vpop.f32.mrb[0].mxu0
        %v5438 = vadd.f32 0.0, %v5437
        %v5439 = vpop.f32.mrb[0].mxu0
        %v5440 = vadd.f32 0.0, %v5439
        %v5441 = vpop.f32.mrb[0].mxu0
        %v5442 = vpop.f32.mrb[0].mxu0
        %5443 = vdwg.mxu0
        %5444 = vmatprep.subr.bf16.mxu0 %v5332
        %5445 = vmatpush1.bf16.msra.mxu0 %v5331
        %5446 = vmatprep.subr.bf16.mxu0 %v5340
        %5447 = vmatpush1.bf16.msra.mxu0 %v5339
        %5448 = vmatprep.subr.bf16.mxu0 0
        %5449 = vmatpush1.bf16.msra.mxu0 0
        %5450 = vmatprep.subr.bf16.mxu0 0
        %5451 = vmatpush1.bf16.msra.mxu0 0
        %5452 = vmatprep.subr.bf16.mxu0 0
        %5453 = vmatpush1.bf16.msra.mxu0 0
        %5454 = vmatprep.subr.bf16.mxu0 0
        %5455 = vmatpush1.bf16.msra.mxu0 0
        %5456 = vmatprep.subr.bf16.mxu0 0
        %5457 = vmatpush1.bf16.msra.mxu0 0
        %5458 = vmatprep.subr.bf16.mxu0 0
        %5459 = vmatpush1.bf16.msra.mxu0 0
        %5460 = vmatprep.subr.bf16.mxu0 0
        %5461 = vmatpush1.bf16.msra.mxu0 0
        %5462 = vmatprep.subr.bf16.mxu0 0
        %5463 = vmatpush1.bf16.msra.mxu0 0
        %5464 = vmatprep.subr.bf16.mxu0 0
        %5465 = vmatpush1.bf16.msra.mxu0 0
        %5466 = vmatprep.subr.bf16.mxu0 0
        %5467 = vmatpush1.bf16.msra.mxu0 0
        %5468 = vmatprep.subr.bf16.mxu0 0
        %5469 = vmatpush1.bf16.msra.mxu0 0
        %5470 = vmatprep.subr.bf16.mxu0 0
        %5471 = vmatpush1.bf16.msra.mxu0 0
        %5472 = vmatprep.subr.bf16.mxu0 0
        %5473 = vmatpush1.bf16.msra.mxu0 0
        %5474 = vmatprep.subr.bf16.mxu0 0
        %5475 = vmatpush1.bf16.msra.mxu0 0
        %5476 = vmatprep.mubr.bf16.mxu0 0
        %5477 = vmatmul.mubr.bf16.gmra.mrb[0].mxu0 %v5360
        %v5478 = vpop.f32.mrb[0].mxu0
        %v5479 = vadd.f32 0.0, %v5478
        %v5480 = vpop.f32.mrb[0].mxu0
        %v5481 = vadd.f32 0.0, %v5480
        %v5482 = vpop.f32.mrb[0].mxu0
        %v5483 = vpop.f32.mrb[0].mxu0
        %5484 = vdwg.mxu0
        %5485 = vmatprep.subr.bf16.mxu0 %v5334
        %5486 = vmatpush1.bf16.msra.mxu0 %v5333
        %5487 = vmatprep.subr.bf16.mxu0 %v5342
        %5488 = vmatpush1.bf16.msra.mxu0 %v5341
        %5489 = vmatprep.subr.bf16.mxu0 0
        %5490 = vmatpush1.bf16.msra.mxu0 0
        %5491 = vmatprep.subr.bf16.mxu0 0
        %5492 = vmatpush1.bf16.msra.mxu0 0
        %5493 = vmatprep.subr.bf16.mxu0 0
        %5494 = vmatpush1.bf16.msra.mxu0 0
        %5495 = vmatprep.subr.bf16.mxu0 0
        %5496 = vmatpush1.bf16.msra.mxu0 0
        %5497 = vmatprep.subr.bf16.mxu0 0
        %5498 = vmatpush1.bf16.msra.mxu0 0
        %5499 = vmatprep.subr.bf16.mxu0 0
        %5500 = vmatpush1.bf16.msra.mxu0 0
        %5501 = vmatprep.subr.bf16.mxu0 0
        %5502 = vmatpush1.bf16.msra.mxu0 0
        %5503 = vmatprep.subr.bf16.mxu0 0
        %5504 = vmatpush1.bf16.msra.mxu0 0
        %5505 = vmatprep.subr.bf16.mxu0 0
        %5506 = vmatpush1.bf16.msra.mxu0 0
        %5507 = vmatprep.subr.bf16.mxu0 0
        %5508 = vmatpush1.bf16.msra.mxu0 0
        %5509 = vmatprep.subr.bf16.mxu0 0
        %5510 = vmatpush1.bf16.msra.mxu0 0
        %5511 = vmatprep.subr.bf16.mxu0 0
        %5512 = vmatpush1.bf16.msra.mxu0 0
        %5513 = vmatprep.subr.bf16.mxu0 0
        %5514 = vmatpush1.bf16.msra.mxu0 0
        %5515 = vmatprep.subr.bf16.mxu0 0
        %5516 = vmatpush1.bf16.msra.mxu0 0
        %5517 = vmatprep.mubr.bf16.mxu0 0
        %5518 = vmatmul.mubr.bf16.gmra.mrb[0].mxu0 %v5360
        %v5519 = vpop.f32.mrb[0].mxu0
        %v5520 = vadd.f32 0.0, %v5519
        %v5521 = vpop.f32.mrb[0].mxu0
        %v5522 = vadd.f32 0.0, %v5521
        %v5523 = vpop.f32.mrb[0].mxu0
        %v5524 = vpop.f32.mrb[0].mxu0
        %5525 = vdwg.mxu0
        %v5526 = vadd.f32 %v5280, %v5397
        %v5527 = vadd.f32 %v5281, %v5399
        %v5528 = vadd.f32 %v5282, %v5438
        %v5529 = vadd.f32 %v5283, %v5440
        %v5530 = vadd.f32 %v5284, %v5479
        %v5531 = vadd.f32 %v5285, %v5481
        %v5532 = vadd.f32 %v5286, %v5520
        %v5533 = vadd.f32 %v5287, %v5522
        %s5534 = scalar_lea.vmem %s5, 72
        %v5535 = vld [vmem:[%s5534] sm:$0xf]
        %5536 = vrot.lane.b32.xlu0 %v4516, 39
        %v5537 = vpop.permute.xlu0 %5536
        %5538 = vrot.lane.b32.xlu0 %v4517, 39
        %v5539 = vpop.permute.xlu0 %5538
        %5540 = vrot.lane.b32.xlu0 %v4518, 39
        %v5541 = vpop.permute.xlu0 %5540
        %5542 = vrot.lane.b32.xlu0 %v4519, 39
        %v5543 = vpop.permute.xlu0 %5542
        %5544 = vrot.lane.b32.xlu0 %v4520, 39
        %v5545 = vpop.permute.xlu0 %5544
        %5546 = vrot.lane.b32.xlu0 %v4521, 39
        %v5547 = vpop.permute.xlu0 %5546
        %5548 = vrot.lane.b32.xlu0 %v4522, 39
        %v5549 = vpop.permute.xlu0 %5548
        %5550 = vrot.lane.b32.xlu0 %v4523, 39
        %v5551 = vpop.permute.xlu0 %5550
        %5552 = vrot.lane.b32.xlu0 %v4524, 39
        %v5553 = vpop.permute.xlu0 %5552
        %5554 = vrot.lane.b32.xlu0 %v4525, 39
        %v5555 = vpop.permute.xlu0 %5554
        %5556 = vrot.lane.b32.xlu0 %v4526, 39
        %v5557 = vpop.permute.xlu0 %5556
        %5558 = vrot.lane.b32.xlu0 %v4527, 39
        %v5559 = vpop.permute.xlu0 %5558
        %5560 = vrot.lane.b32.xlu0 %v4528, 39
        %v5561 = vpop.permute.xlu0 %5560
        %5562 = vrot.lane.b32.xlu0 %v4529, 39
        %v5563 = vpop.permute.xlu0 %5562
        %5564 = vrot.lane.b32.xlu0 %v4530, 39
        %v5565 = vpop.permute.xlu0 %5564
        %5566 = vrot.lane.b32.xlu0 %v4531, 39
        %v5567 = vpop.permute.xlu0 %5566
        %5568 = vrot.lane.b32.xlu0 %v4532, 39
        %v5569 = vpop.permute.xlu0 %5568
        %5570 = vrot.lane.b32.xlu0 %v4533, 39
        %v5571 = vpop.permute.xlu0 %5570
        %vm5572 = vcmask 318464
        %v5573 = vsel %vm5572, %v5537, %v5539
        %v5574 = vsel %vm5572, %v5539, %v5541
        %v5575 = vsel %vm5572, %v5541, %v5543
        %v5576 = vsel %vm5572, %v5543, %v5545
        %v5577 = vsel %vm5572, %v5545, %v5547
        %v5578 = vsel %vm5572, %v5547, %v5549
        %v5579 = vsel %vm5572, %v5549, %v5551
        %v5580 = vsel %vm5572, %v5551, %v5553
        %v5581 = vsel %vm5572, %v5555, %v5557
        %v5582 = vsel %vm5572, %v5557, %v5559
        %v5583 = vsel %vm5572, %v5559, %v5561
        %v5584 = vsel %vm5572, %v5561, %v5563
        %v5585 = vsel %vm5572, %v5563, %v5565
        %v5586 = vsel %vm5572, %v5565, %v5567
        %v5587 = vsel %vm5572, %v5567, %v5569
        %v5588 = vsel %vm5572, %v5569, %v5571
        %v5606 = vsel %vm1227, %v5535, 0
        %5608 = vmatprep.subr.bf16.mxu0 %v5574
        %5609 = vmatpush1.bf16.msra.mxu0 %v5573
        %5610 = vmatprep.subr.bf16.mxu0 %v5582
        %5611 = vmatpush1.bf16.msra.mxu0 %v5581
        %5612 = vmatprep.subr.bf16.mxu0 0
        %5613 = vmatpush1.bf16.msra.mxu0 0
        %5614 = vmatprep.subr.bf16.mxu0 0
        %5615 = vmatpush1.bf16.msra.mxu0 0
        %5616 = vmatprep.subr.bf16.mxu0 0
        %5617 = vmatpush1.bf16.msra.mxu0 0
        %5618 = vmatprep.subr.bf16.mxu0 0
        %5619 = vmatpush1.bf16.msra.mxu0 0
        %5620 = vmatprep.subr.bf16.mxu0 0
        %5621 = vmatpush1.bf16.msra.mxu0 0
        %5622 = vmatprep.subr.bf16.mxu0 0
        %5623 = vmatpush1.bf16.msra.mxu0 0
        %5624 = vmatprep.subr.bf16.mxu0 0
        %5625 = vmatpush1.bf16.msra.mxu0 0
        %5626 = vmatprep.subr.bf16.mxu0 0
        %5627 = vmatpush1.bf16.msra.mxu0 0
        %5628 = vmatprep.subr.bf16.mxu0 0
        %5629 = vmatpush1.bf16.msra.mxu0 0
        %5630 = vmatprep.subr.bf16.mxu0 0
        %5631 = vmatpush1.bf16.msra.mxu0 0
        %5632 = vmatprep.subr.bf16.mxu0 0
        %5633 = vmatpush1.bf16.msra.mxu0 0
        %5634 = vmatprep.subr.bf16.mxu0 0
        %5635 = vmatpush1.bf16.msra.mxu0 0
        %5636 = vmatprep.subr.bf16.mxu0 0
        %5637 = vmatpush1.bf16.msra.mxu0 0
        %5638 = vmatprep.subr.bf16.mxu0 0
        %5639 = vmatpush1.bf16.msra.mxu0 0
        %5640 = vmatprep.mubr.bf16.mxu0 0
        %5641 = vmatmul.mubr.bf16.gmra.mrb[0].mxu0 %v5606
        %v5642 = vpop.f32.mrb[0].mxu0
        %v5643 = vadd.f32 0.0, %v5642
        %v5644 = vpop.f32.mrb[0].mxu0
        %v5645 = vadd.f32 0.0, %v5644
        %v5646 = vpop.f32.mrb[0].mxu0
        %v5647 = vpop.f32.mrb[0].mxu0
        %5648 = vdwg.mxu0
        %5649 = vmatprep.subr.bf16.mxu0 %v5576
        %5650 = vmatpush1.bf16.msra.mxu0 %v5575
        %5651 = vmatprep.subr.bf16.mxu0 %v5584
        %5652 = vmatpush1.bf16.msra.mxu0 %v5583
        %5653 = vmatprep.subr.bf16.mxu0 0
        %5654 = vmatpush1.bf16.msra.mxu0 0
        %5655 = vmatprep.subr.bf16.mxu0 0
        %5656 = vmatpush1.bf16.msra.mxu0 0
        %5657 = vmatprep.subr.bf16.mxu0 0
        %5658 = vmatpush1.bf16.msra.mxu0 0
        %5659 = vmatprep.subr.bf16.mxu0 0
        %5660 = vmatpush1.bf16.msra.mxu0 0
        %5661 = vmatprep.subr.bf16.mxu0 0
        %5662 = vmatpush1.bf16.msra.mxu0 0
        %5663 = vmatprep.subr.bf16.mxu0 0
        %5664 = vmatpush1.bf16.msra.mxu0 0
        %5665 = vmatprep.subr.bf16.mxu0 0
        %5666 = vmatpush1.bf16.msra.mxu0 0
        %5667 = vmatprep.subr.bf16.mxu0 0
        %5668 = vmatpush1.bf16.msra.mxu0 0
        %5669 = vmatprep.subr.bf16.mxu0 0
        %5670 = vmatpush1.bf16.msra.mxu0 0
        %5671 = vmatprep.subr.bf16.mxu0 0
        %5672 = vmatpush1.bf16.msra.mxu0 0
        %5673 = vmatprep.subr.bf16.mxu0 0
        %5674 = vmatpush1.bf16.msra.mxu0 0
        %5675 = vmatprep.subr.bf16.mxu0 0
        %5676 = vmatpush1.bf16.msra.mxu0 0
        %5677 = vmatprep.subr.bf16.mxu0 0
        %5678 = vmatpush1.bf16.msra.mxu0 0
        %5679 = vmatprep.subr.bf16.mxu0 0
        %5680 = vmatpush1.bf16.msra.mxu0 0
        %5681 = vmatprep.mubr.bf16.mxu0 0
        %5682 = vmatmul.mubr.bf16.gmra.mrb[0].mxu0 %v5606
        %v5683 = vpop.f32.mrb[0].mxu0
        %v5684 = vadd.f32 0.0, %v5683
        %v5685 = vpop.f32.mrb[0].mxu0
        %v5686 = vadd.f32 0.0, %v5685
        %v5687 = vpop.f32.mrb[0].mxu0
        %v5688 = vpop.f32.mrb[0].mxu0
        %5689 = vdwg.mxu0
        %5690 = vmatprep.subr.bf16.mxu0 %v5578
        %5691 = vmatpush1.bf16.msra.mxu0 %v5577
        %5692 = vmatprep.subr.bf16.mxu0 %v5586
        %5693 = vmatpush1.bf16.msra.mxu0 %v5585
        %5694 = vmatprep.subr.bf16.mxu0 0
        %5695 = vmatpush1.bf16.msra.mxu0 0
        %5696 = vmatprep.subr.bf16.mxu0 0
        %5697 = vmatpush1.bf16.msra.mxu0 0
        %5698 = vmatprep.subr.bf16.mxu0 0
        %5699 = vmatpush1.bf16.msra.mxu0 0
        %5700 = vmatprep.subr.bf16.mxu0 0
        %5701 = vmatpush1.bf16.msra.mxu0 0
        %5702 = vmatprep.subr.bf16.mxu0 0
        %5703 = vmatpush1.bf16.msra.mxu0 0
        %5704 = vmatprep.subr.bf16.mxu0 0
        %5705 = vmatpush1.bf16.msra.mxu0 0
        %5706 = vmatprep.subr.bf16.mxu0 0
        %5707 = vmatpush1.bf16.msra.mxu0 0
        %5708 = vmatprep.subr.bf16.mxu0 0
        %5709 = vmatpush1.bf16.msra.mxu0 0
        %5710 = vmatprep.subr.bf16.mxu0 0
        %5711 = vmatpush1.bf16.msra.mxu0 0
        %5712 = vmatprep.subr.bf16.mxu0 0
        %5713 = vmatpush1.bf16.msra.mxu0 0
        %5714 = vmatprep.subr.bf16.mxu0 0
        %5715 = vmatpush1.bf16.msra.mxu0 0
        %5716 = vmatprep.subr.bf16.mxu0 0
        %5717 = vmatpush1.bf16.msra.mxu0 0
        %5718 = vmatprep.subr.bf16.mxu0 0
        %5719 = vmatpush1.bf16.msra.mxu0 0
        %5720 = vmatprep.subr.bf16.mxu0 0
        %5721 = vmatpush1.bf16.msra.mxu0 0
        %5722 = vmatprep.mubr.bf16.mxu0 0
        %5723 = vmatmul.mubr.bf16.gmra.mrb[0].mxu0 %v5606
        %v5724 = vpop.f32.mrb[0].mxu0
        %v5725 = vadd.f32 0.0, %v5724
        %v5726 = vpop.f32.mrb[0].mxu0
        %v5727 = vadd.f32 0.0, %v5726
        %v5728 = vpop.f32.mrb[0].mxu0
        %v5729 = vpop.f32.mrb[0].mxu0
        %5730 = vdwg.mxu0
        %5731 = vmatprep.subr.bf16.mxu0 %v5580
        %5732 = vmatpush1.bf16.msra.mxu0 %v5579
        %5733 = vmatprep.subr.bf16.mxu0 %v5588
        %5734 = vmatpush1.bf16.msra.mxu0 %v5587
        %5735 = vmatprep.subr.bf16.mxu0 0
        %5736 = vmatpush1.bf16.msra.mxu0 0
        %5737 = vmatprep.subr.bf16.mxu0 0
        %5738 = vmatpush1.bf16.msra.mxu0 0
        %5739 = vmatprep.subr.bf16.mxu0 0
        %5740 = vmatpush1.bf16.msra.mxu0 0
        %5741 = vmatprep.subr.bf16.mxu0 0
        %5742 = vmatpush1.bf16.msra.mxu0 0
        %5743 = vmatprep.subr.bf16.mxu0 0
        %5744 = vmatpush1.bf16.msra.mxu0 0
        %5745 = vmatprep.subr.bf16.mxu0 0
        %5746 = vmatpush1.bf16.msra.mxu0 0
        %5747 = vmatprep.subr.bf16.mxu0 0
        %5748 = vmatpush1.bf16.msra.mxu0 0
        %5749 = vmatprep.subr.bf16.mxu0 0
        %5750 = vmatpush1.bf16.msra.mxu0 0
        %5751 = vmatprep.subr.bf16.mxu0 0
        %5752 = vmatpush1.bf16.msra.mxu0 0
        %5753 = vmatprep.subr.bf16.mxu0 0
        %5754 = vmatpush1.bf16.msra.mxu0 0
        %5755 = vmatprep.subr.bf16.mxu0 0
        %5756 = vmatpush1.bf16.msra.mxu0 0
        %5757 = vmatprep.subr.bf16.mxu0 0
        %5758 = vmatpush1.bf16.msra.mxu0 0
        %5759 = vmatprep.subr.bf16.mxu0 0
        %5760 = vmatpush1.bf16.msra.mxu0 0
        %5761 = vmatprep.subr.bf16.mxu0 0
        %5762 = vmatpush1.bf16.msra.mxu0 0
        %5763 = vmatprep.mubr.bf16.mxu0 0
        %5764 = vmatmul.mubr.bf16.gmra.mrb[0].mxu0 %v5606
        %v5765 = vpop.f32.mrb[0].mxu0
        %v5766 = vadd.f32 0.0, %v5765
        %v5767 = vpop.f32.mrb[0].mxu0
        %v5768 = vadd.f32 0.0, %v5767
        %v5769 = vpop.f32.mrb[0].mxu0
        %v5770 = vpop.f32.mrb[0].mxu0
        %5771 = vdwg.mxu0
        %v5772 = vadd.f32 %v5526, %v5643
        %v5773 = vadd.f32 %v5527, %v5645
        %v5774 = vadd.f32 %v5528, %v5684
        %v5775 = vadd.f32 %v5529, %v5686
        %v5776 = vadd.f32 %v5530, %v5725
        %v5777 = vadd.f32 %v5531, %v5727
        %v5778 = vadd.f32 %v5532, %v5766
        %v5779 = vadd.f32 %v5533, %v5768
        %s5780 = scalar_lea.vmem %s5, 76
        %v5781 = vld [vmem:[%s5780] sm:$0xf]
        %5782 = vrot.lane.b32.xlu0 %v4516, 38
        %v5783 = vpop.permute.xlu0 %5782
        %5784 = vrot.lane.b32.xlu0 %v4517, 38
        %v5785 = vpop.permute.xlu0 %5784
        %5786 = vrot.lane.b32.xlu0 %v4518, 38
        %v5787 = vpop.permute.xlu0 %5786
        %5788 = vrot.lane.b32.xlu0 %v4519, 38
        %v5789 = vpop.permute.xlu0 %5788
        %5790 = vrot.lane.b32.xlu0 %v4520, 38
        %v5791 = vpop.permute.xlu0 %5790
        %5792 = vrot.lane.b32.xlu0 %v4521, 38
        %v5793 = vpop.permute.xlu0 %5792
        %5794 = vrot.lane.b32.xlu0 %v4522, 38
        %v5795 = vpop.permute.xlu0 %5794
        %5796 = vrot.lane.b32.xlu0 %v4523, 38
        %v5797 = vpop.permute.xlu0 %5796
        %5798 = vrot.lane.b32.xlu0 %v4524, 38
        %v5799 = vpop.permute.xlu0 %5798
        %5800 = vrot.lane.b32.xlu0 %v4525, 38
        %v5801 = vpop.permute.xlu0 %5800
        %5802 = vrot.lane.b32.xlu0 %v4526, 38
        %v5803 = vpop.permute.xlu0 %5802
        %5804 = vrot.lane.b32.xlu0 %v4527, 38
        %v5805 = vpop.permute.xlu0 %5804
        %5806 = vrot.lane.b32.xlu0 %v4528, 38
        %v5807 = vpop.permute.xlu0 %5806
        %5808 = vrot.lane.b32.xlu0 %v4529, 38
        %v5809 = vpop.permute.xlu0 %5808
        %5810 = vrot.lane.b32.xlu0 %v4530, 38
        %v5811 = vpop.permute.xlu0 %5810
        %5812 = vrot.lane.b32.xlu0 %v4531, 38
        %v5813 = vpop.permute.xlu0 %5812
        %5814 = vrot.lane.b32.xlu0 %v4532, 38
        %v5815 = vpop.permute.xlu0 %5814
        %5816 = vrot.lane.b32.xlu0 %v4533, 38
        %v5817 = vpop.permute.xlu0 %5816
        %vm5818 = vcmask 310272
        %v5819 = vsel %vm5818, %v5783, %v5785
        %v5820 = vsel %vm5818, %v5785, %v5787
        %v5821 = vsel %vm5818, %v5787, %v5789
        %v5822 = vsel %vm5818, %v5789, %v5791
        %v5823 = vsel %vm5818, %v5791, %v5793
        %v5824 = vsel %vm5818, %v5793, %v5795
        %v5825 = vsel %vm5818, %v5795, %v5797
        %v5826 = vsel %vm5818, %v5797, %v5799
        %v5827 = vsel %vm5818, %v5801, %v5803
        %v5828 = vsel %vm5818, %v5803, %v5805
        %v5829 = vsel %vm5818, %v5805, %v5807
        %v5830 = vsel %vm5818, %v5807, %v5809
        %v5831 = vsel %vm5818, %v5809, %v5811
        %v5832 = vsel %vm5818, %v5811, %v5813
        %v5833 = vsel %vm5818, %v5813, %v5815
        %v5834 = vsel %vm5818, %v5815, %v5817
        %v5852 = vsel %vm1227, %v5781, 0
        %5854 = vmatprep.subr.bf16.mxu0 %v5820
        %5855 = vmatpush1.bf16.msra.mxu0 %v5819
        %5856 = vmatprep.subr.bf16.mxu0 %v5828
        %5857 = vmatpush1.bf16.msra.mxu0 %v5827
        %5858 = vmatprep.subr.bf16.mxu0 0
        %5859 = vmatpush1.bf16.msra.mxu0 0
        %5860 = vmatprep.subr.bf16.mxu0 0
        %5861 = vmatpush1.bf16.msra.mxu0 0
        %5862 = vmatprep.subr.bf16.mxu0 0
        %5863 = vmatpush1.bf16.msra.mxu0 0
        %5864 = vmatprep.subr.bf16.mxu0 0
        %5865 = vmatpush1.bf16.msra.mxu0 0
        %5866 = vmatprep.subr.bf16.mxu0 0
        %5867 = vmatpush1.bf16.msra.mxu0 0
        %5868 = vmatprep.subr.bf16.mxu0 0
        %5869 = vmatpush1.bf16.msra.mxu0 0
        %5870 = vmatprep.subr.bf16.mxu0 0
        %5871 = vmatpush1.bf16.msra.mxu0 0
        %5872 = vmatprep.subr.bf16.mxu0 0
        %5873 = vmatpush1.bf16.msra.mxu0 0
        %5874 = vmatprep.subr.bf16.mxu0 0
        %5875 = vmatpush1.bf16.msra.mxu0 0
        %5876 = vmatprep.subr.bf16.mxu0 0
        %5877 = vmatpush1.bf16.msra.mxu0 0
        %5878 = vmatprep.subr.bf16.mxu0 0
        %5879 = vmatpush1.bf16.msra.mxu0 0
        %5880 = vmatprep.subr.bf16.mxu0 0
        %5881 = vmatpush1.bf16.msra.mxu0 0
        %5882 = vmatprep.subr.bf16.mxu0 0
        %5883 = vmatpush1.bf16.msra.mxu0 0
        %5884 = vmatprep.subr.bf16.mxu0 0
        %5885 = vmatpush1.bf16.msra.mxu0 0
        %5886 = vmatprep.mubr.bf16.mxu0 0
        %5887 = vmatmul.mubr.bf16.gmra.mrb[0].mxu0 %v5852
        %v5888 = vpop.f32.mrb[0].mxu0
        %v5889 = vadd.f32 0.0, %v5888
        %v5890 = vpop.f32.mrb[0].mxu0
        %v5891 = vadd.f32 0.0, %v5890
        %v5892 = vpop.f32.mrb[0].mxu0
        %v5893 = vpop.f32.mrb[0].mxu0
        %5894 = vdwg.mxu0
        %5895 = vmatprep.subr.bf16.mxu0 %v5822
        %5896 = vmatpush1.bf16.msra.mxu0 %v5821
        %5897 = vmatprep.subr.bf16.mxu0 %v5830
        %5898 = vmatpush1.bf16.msra.mxu0 %v5829
        %5899 = vmatprep.subr.bf16.mxu0 0
        %5900 = vmatpush1.bf16.msra.mxu0 0
        %5901 = vmatprep.subr.bf16.mxu0 0
        %5902 = vmatpush1.bf16.msra.mxu0 0
        %5903 = vmatprep.subr.bf16.mxu0 0
        %5904 = vmatpush1.bf16.msra.mxu0 0
        %5905 = vmatprep.subr.bf16.mxu0 0
        %5906 = vmatpush1.bf16.msra.mxu0 0
        %5907 = vmatprep.subr.bf16.mxu0 0
        %5908 = vmatpush1.bf16.msra.mxu0 0
        %5909 = vmatprep.subr.bf16.mxu0 0
        %5910 = vmatpush1.bf16.msra.mxu0 0
        %5911 = vmatprep.subr.bf16.mxu0 0
        %5912 = vmatpush1.bf16.msra.mxu0 0
        %5913 = vmatprep.subr.bf16.mxu0 0
        %5914 = vmatpush1.bf16.msra.mxu0 0
        %5915 = vmatprep.subr.bf16.mxu0 0
        %5916 = vmatpush1.bf16.msra.mxu0 0
        %5917 = vmatprep.subr.bf16.mxu0 0
        %5918 = vmatpush1.bf16.msra.mxu0 0
        %5919 = vmatprep.subr.bf16.mxu0 0
        %5920 = vmatpush1.bf16.msra.mxu0 0
        %5921 = vmatprep.subr.bf16.mxu0 0
        %5922 = vmatpush1.bf16.msra.mxu0 0
        %5923 = vmatprep.subr.bf16.mxu0 0
        %5924 = vmatpush1.bf16.msra.mxu0 0
        %5925 = vmatprep.subr.bf16.mxu0 0
        %5926 = vmatpush1.bf16.msra.mxu0 0
        %5927 = vmatprep.mubr.bf16.mxu0 0
        %5928 = vmatmul.mubr.bf16.gmra.mrb[0].mxu0 %v5852
        %v5929 = vpop.f32.mrb[0].mxu0
        %v5930 = vadd.f32 0.0, %v5929
        %v5931 = vpop.f32.mrb[0].mxu0
        %v5932 = vadd.f32 0.0, %v5931
        %v5933 = vpop.f32.mrb[0].mxu0
        %v5934 = vpop.f32.mrb[0].mxu0
        %5935 = vdwg.mxu0
        %5936 = vmatprep.subr.bf16.mxu0 %v5824
        %5937 = vmatpush1.bf16.msra.mxu0 %v5823
        %5938 = vmatprep.subr.bf16.mxu0 %v5832
        %5939 = vmatpush1.bf16.msra.mxu0 %v5831
        %5940 = vmatprep.subr.bf16.mxu0 0
        %5941 = vmatpush1.bf16.msra.mxu0 0
        %5942 = vmatprep.subr.bf16.mxu0 0
        %5943 = vmatpush1.bf16.msra.mxu0 0
        %5944 = vmatprep.subr.bf16.mxu0 0
        %5945 = vmatpush1.bf16.msra.mxu0 0
        %5946 = vmatprep.subr.bf16.mxu0 0
        %5947 = vmatpush1.bf16.msra.mxu0 0
        %5948 = vmatprep.subr.bf16.mxu0 0
        %5949 = vmatpush1.bf16.msra.mxu0 0
        %5950 = vmatprep.subr.bf16.mxu0 0
        %5951 = vmatpush1.bf16.msra.mxu0 0
        %5952 = vmatprep.subr.bf16.mxu0 0
        %5953 = vmatpush1.bf16.msra.mxu0 0
        %5954 = vmatprep.subr.bf16.mxu0 0
        %5955 = vmatpush1.bf16.msra.mxu0 0
        %5956 = vmatprep.subr.bf16.mxu0 0
        %5957 = vmatpush1.bf16.msra.mxu0 0
        %5958 = vmatprep.subr.bf16.mxu0 0
        %5959 = vmatpush1.bf16.msra.mxu0 0
        %5960 = vmatprep.subr.bf16.mxu0 0
        %5961 = vmatpush1.bf16.msra.mxu0 0
        %5962 = vmatprep.subr.bf16.mxu0 0
        %5963 = vmatpush1.bf16.msra.mxu0 0
        %5964 = vmatprep.subr.bf16.mxu0 0
        %5965 = vmatpush1.bf16.msra.mxu0 0
        %5966 = vmatprep.subr.bf16.mxu0 0
        %5967 = vmatpush1.bf16.msra.mxu0 0
        %5968 = vmatprep.mubr.bf16.mxu0 0
        %5969 = vmatmul.mubr.bf16.gmra.mrb[0].mxu0 %v5852
        %v5970 = vpop.f32.mrb[0].mxu0
        %v5971 = vadd.f32 0.0, %v5970
        %v5972 = vpop.f32.mrb[0].mxu0
        %v5973 = vadd.f32 0.0, %v5972
        %v5974 = vpop.f32.mrb[0].mxu0
        %v5975 = vpop.f32.mrb[0].mxu0
        %5976 = vdwg.mxu0
        %5977 = vmatprep.subr.bf16.mxu0 %v5826
        %5978 = vmatpush1.bf16.msra.mxu0 %v5825
        %5979 = vmatprep.subr.bf16.mxu0 %v5834
        %5980 = vmatpush1.bf16.msra.mxu0 %v5833
        %5981 = vmatprep.subr.bf16.mxu0 0
        %5982 = vmatpush1.bf16.msra.mxu0 0
        %5983 = vmatprep.subr.bf16.mxu0 0
        %5984 = vmatpush1.bf16.msra.mxu0 0
        %5985 = vmatprep.subr.bf16.mxu0 0
        %5986 = vmatpush1.bf16.msra.mxu0 0
        %5987 = vmatprep.subr.bf16.mxu0 0
        %5988 = vmatpush1.bf16.msra.mxu0 0
        %5989 = vmatprep.subr.bf16.mxu0 0
        %5990 = vmatpush1.bf16.msra.mxu0 0
        %5991 = vmatprep.subr.bf16.mxu0 0
        %5992 = vmatpush1.bf16.msra.mxu0 0
        %5993 = vmatprep.subr.bf16.mxu0 0
        %5994 = vmatpush1.bf16.msra.mxu0 0
        %5995 = vmatprep.subr.bf16.mxu0 0
        %5996 = vmatpush1.bf16.msra.mxu0 0
        %5997 = vmatprep.subr.bf16.mxu0 0
        %5998 = vmatpush1.bf16.msra.mxu0 0
        %5999 = vmatprep.subr.bf16.mxu0 0
        %6000 = vmatpush1.bf16.msra.mxu0 0
        %6001 = vmatprep.subr.bf16.mxu0 0
        %6002 = vmatpush1.bf16.msra.mxu0 0
        %6003 = vmatprep.subr.bf16.mxu0 0
        %6004 = vmatpush1.bf16.msra.mxu0 0
        %6005 = vmatprep.subr.bf16.mxu0 0
        %6006 = vmatpush1.bf16.msra.mxu0 0
        %6007 = vmatprep.subr.bf16.mxu0 0
        %6008 = vmatpush1.bf16.msra.mxu0 0
        %6009 = vmatprep.mubr.bf16.mxu0 0
        %6010 = vmatmul.mubr.bf16.gmra.mrb[0].mxu0 %v5852
        %v6011 = vpop.f32.mrb[0].mxu0
        %v6012 = vadd.f32 0.0, %v6011
        %v6013 = vpop.f32.mrb[0].mxu0
        %v6014 = vadd.f32 0.0, %v6013
        %v6015 = vpop.f32.mrb[0].mxu0
        %v6016 = vpop.f32.mrb[0].mxu0
        %6017 = vdwg.mxu0
        %v6018 = vadd.f32 %v5772, %v5889
        %v6019 = vadd.f32 %v5773, %v5891
        %v6020 = vadd.f32 %v5774, %v5930
        %v6021 = vadd.f32 %v5775, %v5932
        %v6022 = vadd.f32 %v5776, %v5971
        %v6023 = vadd.f32 %v5777, %v5973
        %v6024 = vadd.f32 %v5778, %v6012
        %v6025 = vadd.f32 %v5779, %v6014
        %s6026 = scalar_lea.vmem %s5, 80
        %v6027 = vld [vmem:[%s6026] sm:$0xf]
        %6028 = vrot.lane.b32.xlu0 %v4516, 37
        %v6029 = vpop.permute.xlu0 %6028
        %6030 = vrot.lane.b32.xlu0 %v4517, 37
        %v6031 = vpop.permute.xlu0 %6030
        %6032 = vrot.lane.b32.xlu0 %v4518, 37
        %v6033 = vpop.permute.xlu0 %6032
        %6034 = vrot.lane.b32.xlu0 %v4519, 37
        %v6035 = vpop.permute.xlu0 %6034
        %6036 = vrot.lane.b32.xlu0 %v4520, 37
        %v6037 = vpop.permute.xlu0 %6036
        %6038 = vrot.lane.b32.xlu0 %v4521, 37
        %v6039 = vpop.permute.xlu0 %6038
        %6040 = vrot.lane.b32.xlu0 %v4522, 37
        %v6041 = vpop.permute.xlu0 %6040
        %6042 = vrot.lane.b32.xlu0 %v4523, 37
        %v6043 = vpop.permute.xlu0 %6042
        %6044 = vrot.lane.b32.xlu0 %v4524, 37
        %v6045 = vpop.permute.xlu0 %6044
        %6046 = vrot.lane.b32.xlu0 %v4525, 37
        %v6047 = vpop.permute.xlu0 %6046
        %6048 = vrot.lane.b32.xlu0 %v4526, 37
        %v6049 = vpop.permute.xlu0 %6048
        %6050 = vrot.lane.b32.xlu0 %v4527, 37
        %v6051 = vpop.permute.xlu0 %6050
        %6052 = vrot.lane.b32.xlu0 %v4528, 37
        %v6053 = vpop.permute.xlu0 %6052
        %6054 = vrot.lane.b32.xlu0 %v4529, 37
        %v6055 = vpop.permute.xlu0 %6054
        %6056 = vrot.lane.b32.xlu0 %v4530, 37
        %v6057 = vpop.permute.xlu0 %6056
        %6058 = vrot.lane.b32.xlu0 %v4531, 37
        %v6059 = vpop.permute.xlu0 %6058
        %6060 = vrot.lane.b32.xlu0 %v4532, 37
        %v6061 = vpop.permute.xlu0 %6060
        %6062 = vrot.lane.b32.xlu0 %v4533, 37
        %v6063 = vpop.permute.xlu0 %6062
        %vm6064 = vcmask 302080
        %v6065 = vsel %vm6064, %v6029, %v6031
        %v6066 = vsel %vm6064, %v6031, %v6033
        %v6067 = vsel %vm6064, %v6033, %v6035
        %v6068 = vsel %vm6064, %v6035, %v6037
        %v6069 = vsel %vm6064, %v6037, %v6039
        %v6070 = vsel %vm6064, %v6039, %v6041
        %v6071 = vsel %vm6064, %v6041, %v6043
        %v6072 = vsel %vm6064, %v6043, %v6045
        %v6073 = vsel %vm6064, %v6047, %v6049
        %v6074 = vsel %vm6064, %v6049, %v6051
        %v6075 = vsel %vm6064, %v6051, %v6053
        %v6076 = vsel %vm6064, %v6053, %v6055
        %v6077 = vsel %vm6064, %v6055, %v6057
        %v6078 = vsel %vm6064, %v6057, %v6059
        %v6079 = vsel %vm6064, %v6059, %v6061
        %v6080 = vsel %vm6064, %v6061, %v6063
        %v6098 = vsel %vm1227, %v6027, 0
        %6100 = vmatprep.subr.bf16.mxu0 %v6066
        %6101 = vmatpush1.bf16.msra.mxu0 %v6065
        %6102 = vmatprep.subr.bf16.mxu0 %v6074
        %6103 = vmatpush1.bf16.msra.mxu0 %v6073
        %6104 = vmatprep.subr.bf16.mxu0 0
        %6105 = vmatpush1.bf16.msra.mxu0 0
        %6106 = vmatprep.subr.bf16.mxu0 0
        %6107 = vmatpush1.bf16.msra.mxu0 0
        %6108 = vmatprep.subr.bf16.mxu0 0
        %6109 = vmatpush1.bf16.msra.mxu0 0
        %6110 = vmatprep.subr.bf16.mxu0 0
        %6111 = vmatpush1.bf16.msra.mxu0 0
        %6112 = vmatprep.subr.bf16.mxu0 0
        %6113 = vmatpush1.bf16.msra.mxu0 0
        %6114 = vmatprep.subr.bf16.mxu0 0
        %6115 = vmatpush1.bf16.msra.mxu0 0
        %6116 = vmatprep.subr.bf16.mxu0 0
        %6117 = vmatpush1.bf16.msra.mxu0 0
        %6118 = vmatprep.subr.bf16.mxu0 0
        %6119 = vmatpush1.bf16.msra.mxu0 0
        %6120 = vmatprep.subr.bf16.mxu0 0
        %6121 = vmatpush1.bf16.msra.mxu0 0
        %6122 = vmatprep.subr.bf16.mxu0 0
        %6123 = vmatpush1.bf16.msra.mxu0 0
        %6124 = vmatprep.subr.bf16.mxu0 0
        %6125 = vmatpush1.bf16.msra.mxu0 0
        %6126 = vmatprep.subr.bf16.mxu0 0
        %6127 = vmatpush1.bf16.msra.mxu0 0
        %6128 = vmatprep.subr.bf16.mxu0 0
        %6129 = vmatpush1.bf16.msra.mxu0 0
        %6130 = vmatprep.subr.bf16.mxu0 0
        %6131 = vmatpush1.bf16.msra.mxu0 0
        %6132 = vmatprep.mubr.bf16.mxu0 0
        %6133 = vmatmul.mubr.bf16.gmra.mrb[0].mxu0 %v6098
        %v6134 = vpop.f32.mrb[0].mxu0
        %v6135 = vadd.f32 0.0, %v6134
        %v6136 = vpop.f32.mrb[0].mxu0
        %v6137 = vadd.f32 0.0, %v6136
        %v6138 = vpop.f32.mrb[0].mxu0
        %v6139 = vpop.f32.mrb[0].mxu0
        %6140 = vdwg.mxu0
        %6141 = vmatprep.subr.bf16.mxu0 %v6068
        %6142 = vmatpush1.bf16.msra.mxu0 %v6067
        %6143 = vmatprep.subr.bf16.mxu0 %v6076
        %6144 = vmatpush1.bf16.msra.mxu0 %v6075
        %6145 = vmatprep.subr.bf16.mxu0 0
        %6146 = vmatpush1.bf16.msra.mxu0 0
        %6147 = vmatprep.subr.bf16.mxu0 0
        %6148 = vmatpush1.bf16.msra.mxu0 0
        %6149 = vmatprep.subr.bf16.mxu0 0
        %6150 = vmatpush1.bf16.msra.mxu0 0
        %6151 = vmatprep.subr.bf16.mxu0 0
        %6152 = vmatpush1.bf16.msra.mxu0 0
        %6153 = vmatprep.subr.bf16.mxu0 0
        %6154 = vmatpush1.bf16.msra.mxu0 0
        %6155 = vmatprep.subr.bf16.mxu0 0
        %6156 = vmatpush1.bf16.msra.mxu0 0
        %6157 = vmatprep.subr.bf16.mxu0 0
        %6158 = vmatpush1.bf16.msra.mxu0 0
        %6159 = vmatprep.subr.bf16.mxu0 0
        %6160 = vmatpush1.bf16.msra.mxu0 0
        %6161 = vmatprep.subr.bf16.mxu0 0
        %6162 = vmatpush1.bf16.msra.mxu0 0
        %6163 = vmatprep.subr.bf16.mxu0 0
        %6164 = vmatpush1.bf16.msra.mxu0 0
        %6165 = vmatprep.subr.bf16.mxu0 0
        %6166 = vmatpush1.bf16.msra.mxu0 0
        %6167 = vmatprep.subr.bf16.mxu0 0
        %6168 = vmatpush1.bf16.msra.mxu0 0
        %6169 = vmatprep.subr.bf16.mxu0 0
        %6170 = vmatpush1.bf16.msra.mxu0 0
        %6171 = vmatprep.subr.bf16.mxu0 0
        %6172 = vmatpush1.bf16.msra.mxu0 0
        %6173 = vmatprep.mubr.bf16.mxu0 0
        %6174 = vmatmul.mubr.bf16.gmra.mrb[0].mxu0 %v6098
        %v6175 = vpop.f32.mrb[0].mxu0
        %v6176 = vadd.f32 0.0, %v6175
        %v6177 = vpop.f32.mrb[0].mxu0
        %v6178 = vadd.f32 0.0, %v6177
        %v6179 = vpop.f32.mrb[0].mxu0
        %v6180 = vpop.f32.mrb[0].mxu0
        %6181 = vdwg.mxu0
        %6182 = vmatprep.subr.bf16.mxu0 %v6070
        %6183 = vmatpush1.bf16.msra.mxu0 %v6069
        %6184 = vmatprep.subr.bf16.mxu0 %v6078
        %6185 = vmatpush1.bf16.msra.mxu0 %v6077
        %6186 = vmatprep.subr.bf16.mxu0 0
        %6187 = vmatpush1.bf16.msra.mxu0 0
        %6188 = vmatprep.subr.bf16.mxu0 0
        %6189 = vmatpush1.bf16.msra.mxu0 0
        %6190 = vmatprep.subr.bf16.mxu0 0
        %6191 = vmatpush1.bf16.msra.mxu0 0
        %6192 = vmatprep.subr.bf16.mxu0 0
        %6193 = vmatpush1.bf16.msra.mxu0 0
        %6194 = vmatprep.subr.bf16.mxu0 0
        %6195 = vmatpush1.bf16.msra.mxu0 0
        %6196 = vmatprep.subr.bf16.mxu0 0
        %6197 = vmatpush1.bf16.msra.mxu0 0
        %6198 = vmatprep.subr.bf16.mxu0 0
        %6199 = vmatpush1.bf16.msra.mxu0 0
        %6200 = vmatprep.subr.bf16.mxu0 0
        %6201 = vmatpush1.bf16.msra.mxu0 0
        %6202 = vmatprep.subr.bf16.mxu0 0
        %6203 = vmatpush1.bf16.msra.mxu0 0
        %6204 = vmatprep.subr.bf16.mxu0 0
        %6205 = vmatpush1.bf16.msra.mxu0 0
        %6206 = vmatprep.subr.bf16.mxu0 0
        %6207 = vmatpush1.bf16.msra.mxu0 0
        %6208 = vmatprep.subr.bf16.mxu0 0
        %6209 = vmatpush1.bf16.msra.mxu0 0
        %6210 = vmatprep.subr.bf16.mxu0 0
        %6211 = vmatpush1.bf16.msra.mxu0 0
        %6212 = vmatprep.subr.bf16.mxu0 0
        %6213 = vmatpush1.bf16.msra.mxu0 0
        %6214 = vmatprep.mubr.bf16.mxu0 0
        %6215 = vmatmul.mubr.bf16.gmra.mrb[0].mxu0 %v6098
        %v6216 = vpop.f32.mrb[0].mxu0
        %v6217 = vadd.f32 0.0, %v6216
        %v6218 = vpop.f32.mrb[0].mxu0
        %v6219 = vadd.f32 0.0, %v6218
        %v6220 = vpop.f32.mrb[0].mxu0
        %v6221 = vpop.f32.mrb[0].mxu0
        %6222 = vdwg.mxu0
        %6223 = vmatprep.subr.bf16.mxu0 %v6072
        %6224 = vmatpush1.bf16.msra.mxu0 %v6071
        %6225 = vmatprep.subr.bf16.mxu0 %v6080
        %6226 = vmatpush1.bf16.msra.mxu0 %v6079
        %6227 = vmatprep.subr.bf16.mxu0 0
        %6228 = vmatpush1.bf16.msra.mxu0 0
        %6229 = vmatprep.subr.bf16.mxu0 0
        %6230 = vmatpush1.bf16.msra.mxu0 0
        %6231 = vmatprep.subr.bf16.mxu0 0
        %6232 = vmatpush1.bf16.msra.mxu0 0
        %6233 = vmatprep.subr.bf16.mxu0 0
        %6234 = vmatpush1.bf16.msra.mxu0 0
        %6235 = vmatprep.subr.bf16.mxu0 0
        %6236 = vmatpush1.bf16.msra.mxu0 0
        %6237 = vmatprep.subr.bf16.mxu0 0
        %6238 = vmatpush1.bf16.msra.mxu0 0
        %6239 = vmatprep.subr.bf16.mxu0 0
        %6240 = vmatpush1.bf16.msra.mxu0 0
        %6241 = vmatprep.subr.bf16.mxu0 0
        %6242 = vmatpush1.bf16.msra.mxu0 0
        %6243 = vmatprep.subr.bf16.mxu0 0
        %6244 = vmatpush1.bf16.msra.mxu0 0
        %6245 = vmatprep.subr.bf16.mxu0 0
        %6246 = vmatpush1.bf16.msra.mxu0 0
        %6247 = vmatprep.subr.bf16.mxu0 0
        %6248 = vmatpush1.bf16.msra.mxu0 0
        %6249 = vmatprep.subr.bf16.mxu0 0
        %6250 = vmatpush1.bf16.msra.mxu0 0
        %6251 = vmatprep.subr.bf16.mxu0 0
        %6252 = vmatpush1.bf16.msra.mxu0 0
        %6253 = vmatprep.subr.bf16.mxu0 0
        %6254 = vmatpush1.bf16.msra.mxu0 0
        %6255 = vmatprep.mubr.bf16.mxu0 0
        %6256 = vmatmul.mubr.bf16.gmra.mrb[0].mxu0 %v6098
        %v6257 = vpop.f32.mrb[0].mxu0
        %v6258 = vadd.f32 0.0, %v6257
        %v6259 = vpop.f32.mrb[0].mxu0
        %v6260 = vadd.f32 0.0, %v6259
        %v6261 = vpop.f32.mrb[0].mxu0
        %v6262 = vpop.f32.mrb[0].mxu0
        %6263 = vdwg.mxu0
        %v6264 = vadd.f32 %v6018, %v6135
        %v6265 = vadd.f32 %v6019, %v6137
        %v6266 = vadd.f32 %v6020, %v6176
        %v6267 = vadd.f32 %v6021, %v6178
        %v6268 = vadd.f32 %v6022, %v6217
        %v6269 = vadd.f32 %v6023, %v6219
        %v6270 = vadd.f32 %v6024, %v6258
        %v6271 = vadd.f32 %v6025, %v6260
        %s6272 = scalar_lea.vmem %s5, 84
        %v6273 = vld [vmem:[%s6272] sm:$0xf]
        %6274 = vrot.lane.b32.xlu0 %v4516, 29
        %v6275 = vpop.permute.xlu0 %6274
        %6276 = vrot.lane.b32.xlu0 %v4517, 29
        %v6277 = vpop.permute.xlu0 %6276
        %6278 = vrot.lane.b32.xlu0 %v4518, 29
        %v6279 = vpop.permute.xlu0 %6278
        %6280 = vrot.lane.b32.xlu0 %v4519, 29
        %v6281 = vpop.permute.xlu0 %6280
        %6282 = vrot.lane.b32.xlu0 %v4520, 29
        %v6283 = vpop.permute.xlu0 %6282
        %6284 = vrot.lane.b32.xlu0 %v4521, 29
        %v6285 = vpop.permute.xlu0 %6284
        %6286 = vrot.lane.b32.xlu0 %v4522, 29
        %v6287 = vpop.permute.xlu0 %6286
        %6288 = vrot.lane.b32.xlu0 %v4523, 29
        %v6289 = vpop.permute.xlu0 %6288
        %6290 = vrot.lane.b32.xlu0 %v4524, 29
        %v6291 = vpop.permute.xlu0 %6290
        %6292 = vrot.lane.b32.xlu0 %v4525, 29
        %v6293 = vpop.permute.xlu0 %6292
        %6294 = vrot.lane.b32.xlu0 %v4526, 29
        %v6295 = vpop.permute.xlu0 %6294
        %6296 = vrot.lane.b32.xlu0 %v4527, 29
        %v6297 = vpop.permute.xlu0 %6296
        %6298 = vrot.lane.b32.xlu0 %v4528, 29
        %v6299 = vpop.permute.xlu0 %6298
        %6300 = vrot.lane.b32.xlu0 %v4529, 29
        %v6301 = vpop.permute.xlu0 %6300
        %6302 = vrot.lane.b32.xlu0 %v4530, 29
        %v6303 = vpop.permute.xlu0 %6302
        %6304 = vrot.lane.b32.xlu0 %v4531, 29
        %v6305 = vpop.permute.xlu0 %6304
        %6306 = vrot.lane.b32.xlu0 %v4532, 29
        %v6307 = vpop.permute.xlu0 %6306
        %6308 = vrot.lane.b32.xlu0 %v4533, 29
        %v6309 = vpop.permute.xlu0 %6308
        %vm6310 = vcmask 236544
        %v6311 = vsel %vm6310, %v6275, %v6277
        %v6312 = vsel %vm6310, %v6277, %v6279
        %v6313 = vsel %vm6310, %v6279, %v6281
        %v6314 = vsel %vm6310, %v6281, %v6283
        %v6315 = vsel %vm6310, %v6283, %v6285
        %v6316 = vsel %vm6310, %v6285, %v6287
        %v6317 = vsel %vm6310, %v6287, %v6289
        %v6318 = vsel %vm6310, %v6289, %v6291
        %v6319 = vsel %vm6310, %v6293, %v6295
        %v6320 = vsel %vm6310, %v6295, %v6297
        %v6321 = vsel %vm6310, %v6297, %v6299
        %v6322 = vsel %vm6310, %v6299, %v6301
        %v6323 = vsel %vm6310, %v6301, %v6303
        %v6324 = vsel %vm6310, %v6303, %v6305
        %v6325 = vsel %vm6310, %v6305, %v6307
        %v6326 = vsel %vm6310, %v6307, %v6309
        %v6344 = vsel %vm1227, %v6273, 0
        %6346 = vmatprep.subr.bf16.mxu0 %v6312
        %6347 = vmatpush1.bf16.msra.mxu0 %v6311
        %6348 = vmatprep.subr.bf16.mxu0 %v6320
        %6349 = vmatpush1.bf16.msra.mxu0 %v6319
        %6350 = vmatprep.subr.bf16.mxu0 0
        %6351 = vmatpush1.bf16.msra.mxu0 0
        %6352 = vmatprep.subr.bf16.mxu0 0
        %6353 = vmatpush1.bf16.msra.mxu0 0
        %6354 = vmatprep.subr.bf16.mxu0 0
        %6355 = vmatpush1.bf16.msra.mxu0 0
        %6356 = vmatprep.subr.bf16.mxu0 0
        %6357 = vmatpush1.bf16.msra.mxu0 0
        %6358 = vmatprep.subr.bf16.mxu0 0
        %6359 = vmatpush1.bf16.msra.mxu0 0
        %6360 = vmatprep.subr.bf16.mxu0 0
        %6361 = vmatpush1.bf16.msra.mxu0 0
        %6362 = vmatprep.subr.bf16.mxu0 0
        %6363 = vmatpush1.bf16.msra.mxu0 0
        %6364 = vmatprep.subr.bf16.mxu0 0
        %6365 = vmatpush1.bf16.msra.mxu0 0
        %6366 = vmatprep.subr.bf16.mxu0 0
        %6367 = vmatpush1.bf16.msra.mxu0 0
        %6368 = vmatprep.subr.bf16.mxu0 0
        %6369 = vmatpush1.bf16.msra.mxu0 0
        %6370 = vmatprep.subr.bf16.mxu0 0
        %6371 = vmatpush1.bf16.msra.mxu0 0
        %6372 = vmatprep.subr.bf16.mxu0 0
        %6373 = vmatpush1.bf16.msra.mxu0 0
        %6374 = vmatprep.subr.bf16.mxu0 0
        %6375 = vmatpush1.bf16.msra.mxu0 0
        %6376 = vmatprep.subr.bf16.mxu0 0
        %6377 = vmatpush1.bf16.msra.mxu0 0
        %6378 = vmatprep.mubr.bf16.mxu0 0
        %6379 = vmatmul.mubr.bf16.gmra.mrb[0].mxu0 %v6344
        %v6380 = vpop.f32.mrb[0].mxu0
        %v6381 = vadd.f32 0.0, %v6380
        %v6382 = vpop.f32.mrb[0].mxu0
        %v6383 = vadd.f32 0.0, %v6382
        %v6384 = vpop.f32.mrb[0].mxu0
        %v6385 = vpop.f32.mrb[0].mxu0
        %6386 = vdwg.mxu0
        %6387 = vmatprep.subr.bf16.mxu0 %v6314
        %6388 = vmatpush1.bf16.msra.mxu0 %v6313
        %6389 = vmatprep.subr.bf16.mxu0 %v6322
        %6390 = vmatpush1.bf16.msra.mxu0 %v6321
        %6391 = vmatprep.subr.bf16.mxu0 0
        %6392 = vmatpush1.bf16.msra.mxu0 0
        %6393 = vmatprep.subr.bf16.mxu0 0
        %6394 = vmatpush1.bf16.msra.mxu0 0
        %6395 = vmatprep.subr.bf16.mxu0 0
        %6396 = vmatpush1.bf16.msra.mxu0 0
        %6397 = vmatprep.subr.bf16.mxu0 0
        %6398 = vmatpush1.bf16.msra.mxu0 0
        %6399 = vmatprep.subr.bf16.mxu0 0
        %6400 = vmatpush1.bf16.msra.mxu0 0
        %6401 = vmatprep.subr.bf16.mxu0 0
        %6402 = vmatpush1.bf16.msra.mxu0 0
        %6403 = vmatprep.subr.bf16.mxu0 0
        %6404 = vmatpush1.bf16.msra.mxu0 0
        %6405 = vmatprep.subr.bf16.mxu0 0
        %6406 = vmatpush1.bf16.msra.mxu0 0
        %6407 = vmatprep.subr.bf16.mxu0 0
        %6408 = vmatpush1.bf16.msra.mxu0 0
        %6409 = vmatprep.subr.bf16.mxu0 0
        %6410 = vmatpush1.bf16.msra.mxu0 0
        %6411 = vmatprep.subr.bf16.mxu0 0
        %6412 = vmatpush1.bf16.msra.mxu0 0
        %6413 = vmatprep.subr.bf16.mxu0 0
        %6414 = vmatpush1.bf16.msra.mxu0 0
        %6415 = vmatprep.subr.bf16.mxu0 0
        %6416 = vmatpush1.bf16.msra.mxu0 0
        %6417 = vmatprep.subr.bf16.mxu0 0
        %6418 = vmatpush1.bf16.msra.mxu0 0
        %6419 = vmatprep.mubr.bf16.mxu0 0
        %6420 = vmatmul.mubr.bf16.gmra.mrb[0].mxu0 %v6344
        %v6421 = vpop.f32.mrb[0].mxu0
        %v6422 = vadd.f32 0.0, %v6421
        %v6423 = vpop.f32.mrb[0].mxu0
        %v6424 = vadd.f32 0.0, %v6423
        %v6425 = vpop.f32.mrb[0].mxu0
        %v6426 = vpop.f32.mrb[0].mxu0
        %6427 = vdwg.mxu0
        %6428 = vmatprep.subr.bf16.mxu0 %v6316
        %6429 = vmatpush1.bf16.msra.mxu0 %v6315
        %6430 = vmatprep.subr.bf16.mxu0 %v6324
        %6431 = vmatpush1.bf16.msra.mxu0 %v6323
        %6432 = vmatprep.subr.bf16.mxu0 0
        %6433 = vmatpush1.bf16.msra.mxu0 0
        %6434 = vmatprep.subr.bf16.mxu0 0
        %6435 = vmatpush1.bf16.msra.mxu0 0
        %6436 = vmatprep.subr.bf16.mxu0 0
        %6437 = vmatpush1.bf16.msra.mxu0 0
        %6438 = vmatprep.subr.bf16.mxu0 0
        %6439 = vmatpush1.bf16.msra.mxu0 0
        %6440 = vmatprep.subr.bf16.mxu0 0
        %6441 = vmatpush1.bf16.msra.mxu0 0
        %6442 = vmatprep.subr.bf16.mxu0 0
        %6443 = vmatpush1.bf16.msra.mxu0 0
        %6444 = vmatprep.subr.bf16.mxu0 0
        %6445 = vmatpush1.bf16.msra.mxu0 0
        %6446 = vmatprep.subr.bf16.mxu0 0
        %6447 = vmatpush1.bf16.msra.mxu0 0
        %6448 = vmatprep.subr.bf16.mxu0 0
        %6449 = vmatpush1.bf16.msra.mxu0 0
        %6450 = vmatprep.subr.bf16.mxu0 0
        %6451 = vmatpush1.bf16.msra.mxu0 0
        %6452 = vmatprep.subr.bf16.mxu0 0
        %6453 = vmatpush1.bf16.msra.mxu0 0
        %6454 = vmatprep.subr.bf16.mxu0 0
        %6455 = vmatpush1.bf16.msra.mxu0 0
        %6456 = vmatprep.subr.bf16.mxu0 0
        %6457 = vmatpush1.bf16.msra.mxu0 0
        %6458 = vmatprep.subr.bf16.mxu0 0
        %6459 = vmatpush1.bf16.msra.mxu0 0
        %6460 = vmatprep.mubr.bf16.mxu0 0
        %6461 = vmatmul.mubr.bf16.gmra.mrb[0].mxu0 %v6344
        %v6462 = vpop.f32.mrb[0].mxu0
        %v6463 = vadd.f32 0.0, %v6462
        %v6464 = vpop.f32.mrb[0].mxu0
        %v6465 = vadd.f32 0.0, %v6464
        %v6466 = vpop.f32.mrb[0].mxu0
        %v6467 = vpop.f32.mrb[0].mxu0
        %6468 = vdwg.mxu0
        %6469 = vmatprep.subr.bf16.mxu0 %v6318
        %6470 = vmatpush1.bf16.msra.mxu0 %v6317
        %6471 = vmatprep.subr.bf16.mxu0 %v6326
        %6472 = vmatpush1.bf16.msra.mxu0 %v6325
        %6473 = vmatprep.subr.bf16.mxu0 0
        %6474 = vmatpush1.bf16.msra.mxu0 0
        %6475 = vmatprep.subr.bf16.mxu0 0
        %6476 = vmatpush1.bf16.msra.mxu0 0
        %6477 = vmatprep.subr.bf16.mxu0 0
        %6478 = vmatpush1.bf16.msra.mxu0 0
        %6479 = vmatprep.subr.bf16.mxu0 0
        %6480 = vmatpush1.bf16.msra.mxu0 0
        %6481 = vmatprep.subr.bf16.mxu0 0
        %6482 = vmatpush1.bf16.msra.mxu0 0
        %6483 = vmatprep.subr.bf16.mxu0 0
        %6484 = vmatpush1.bf16.msra.mxu0 0
        %6485 = vmatprep.subr.bf16.mxu0 0
        %6486 = vmatpush1.bf16.msra.mxu0 0
        %6487 = vmatprep.subr.bf16.mxu0 0
        %6488 = vmatpush1.bf16.msra.mxu0 0
        %6489 = vmatprep.subr.bf16.mxu0 0
        %6490 = vmatpush1.bf16.msra.mxu0 0
        %6491 = vmatprep.subr.bf16.mxu0 0
        %6492 = vmatpush1.bf16.msra.mxu0 0
        %6493 = vmatprep.subr.bf16.mxu0 0
        %6494 = vmatpush1.bf16.msra.mxu0 0
        %6495 = vmatprep.subr.bf16.mxu0 0
        %6496 = vmatpush1.bf16.msra.mxu0 0
        %6497 = vmatprep.subr.bf16.mxu0 0
        %6498 = vmatpush1.bf16.msra.mxu0 0
        %6499 = vmatprep.subr.bf16.mxu0 0
        %6500 = vmatpush1.bf16.msra.mxu0 0
        %6501 = vmatprep.mubr.bf16.mxu0 0
        %6502 = vmatmul.mubr.bf16.gmra.mrb[0].mxu0 %v6344
        %v6503 = vpop.f32.mrb[0].mxu0
        %v6504 = vadd.f32 0.0, %v6503
        %v6505 = vpop.f32.mrb[0].mxu0
        %v6506 = vadd.f32 0.0, %v6505
        %v6507 = vpop.f32.mrb[0].mxu0
        %v6508 = vpop.f32.mrb[0].mxu0
        %6509 = vdwg.mxu0
        %v6510 = vadd.f32 %v6264, %v6381
        %v6511 = vadd.f32 %v6265, %v6383
        %v6512 = vadd.f32 %v6266, %v6422
        %v6513 = vadd.f32 %v6267, %v6424
        %v6514 = vadd.f32 %v6268, %v6463
        %v6515 = vadd.f32 %v6269, %v6465
        %v6516 = vadd.f32 %v6270, %v6504
        %v6517 = vadd.f32 %v6271, %v6506
        %s6518 = scalar_lea.vmem %s5, 88
        %v6519 = vld [vmem:[%s6518] sm:$0xf]
        %6520 = vrot.lane.b32.xlu0 %v4516, 28
        %v6521 = vpop.permute.xlu0 %6520
        %6522 = vrot.lane.b32.xlu0 %v4517, 28
        %v6523 = vpop.permute.xlu0 %6522
        %6524 = vrot.lane.b32.xlu0 %v4518, 28
        %v6525 = vpop.permute.xlu0 %6524
        %6526 = vrot.lane.b32.xlu0 %v4519, 28
        %v6527 = vpop.permute.xlu0 %6526
        %6528 = vrot.lane.b32.xlu0 %v4520, 28
        %v6529 = vpop.permute.xlu0 %6528
        %6530 = vrot.lane.b32.xlu0 %v4521, 28
        %v6531 = vpop.permute.xlu0 %6530
        %6532 = vrot.lane.b32.xlu0 %v4522, 28
        %v6533 = vpop.permute.xlu0 %6532
        %6534 = vrot.lane.b32.xlu0 %v4523, 28
        %v6535 = vpop.permute.xlu0 %6534
        %6536 = vrot.lane.b32.xlu0 %v4524, 28
        %v6537 = vpop.permute.xlu0 %6536
        %6538 = vrot.lane.b32.xlu0 %v4525, 28
        %v6539 = vpop.permute.xlu0 %6538
        %6540 = vrot.lane.b32.xlu0 %v4526, 28
        %v6541 = vpop.permute.xlu0 %6540
        %6542 = vrot.lane.b32.xlu0 %v4527, 28
        %v6543 = vpop.permute.xlu0 %6542
        %6544 = vrot.lane.b32.xlu0 %v4528, 28
        %v6545 = vpop.permute.xlu0 %6544
        %6546 = vrot.lane.b32.xlu0 %v4529, 28
        %v6547 = vpop.permute.xlu0 %6546
        %6548 = vrot.lane.b32.xlu0 %v4530, 28
        %v6549 = vpop.permute.xlu0 %6548
        %6550 = vrot.lane.b32.xlu0 %v4531, 28
        %v6551 = vpop.permute.xlu0 %6550
        %6552 = vrot.lane.b32.xlu0 %v4532, 28
        %v6553 = vpop.permute.xlu0 %6552
        %6554 = vrot.lane.b32.xlu0 %v4533, 28
        %v6555 = vpop.permute.xlu0 %6554
        %vm6556 = vcmask 228352
        %v6557 = vsel %vm6556, %v6521, %v6523
        %v6558 = vsel %vm6556, %v6523, %v6525
        %v6559 = vsel %vm6556, %v6525, %v6527
        %v6560 = vsel %vm6556, %v6527, %v6529
        %v6561 = vsel %vm6556, %v6529, %v6531
        %v6562 = vsel %vm6556, %v6531, %v6533
        %v6563 = vsel %vm6556, %v6533, %v6535
        %v6564 = vsel %vm6556, %v6535, %v6537
        %v6565 = vsel %vm6556, %v6539, %v6541
        %v6566 = vsel %vm6556, %v6541, %v6543
        %v6567 = vsel %vm6556, %v6543, %v6545
        %v6568 = vsel %vm6556, %v6545, %v6547
        %v6569 = vsel %vm6556, %v6547, %v6549
        %v6570 = vsel %vm6556, %v6549, %v6551
        %v6571 = vsel %vm6556, %v6551, %v6553
        %v6572 = vsel %vm6556, %v6553, %v6555
        %v6590 = vsel %vm1227, %v6519, 0
        %6592 = vmatprep.subr.bf16.mxu0 %v6558
        %6593 = vmatpush1.bf16.msra.mxu0 %v6557
        %6594 = vmatprep.subr.bf16.mxu0 %v6566
        %6595 = vmatpush1.bf16.msra.mxu0 %v6565
        %6596 = vmatprep.subr.bf16.mxu0 0
        %6597 = vmatpush1.bf16.msra.mxu0 0
        %6598 = vmatprep.subr.bf16.mxu0 0
        %6599 = vmatpush1.bf16.msra.mxu0 0
        %6600 = vmatprep.subr.bf16.mxu0 0
        %6601 = vmatpush1.bf16.msra.mxu0 0
        %6602 = vmatprep.subr.bf16.mxu0 0
        %6603 = vmatpush1.bf16.msra.mxu0 0
        %6604 = vmatprep.subr.bf16.mxu0 0
        %6605 = vmatpush1.bf16.msra.mxu0 0
        %6606 = vmatprep.subr.bf16.mxu0 0
        %6607 = vmatpush1.bf16.msra.mxu0 0
        %6608 = vmatprep.subr.bf16.mxu0 0
        %6609 = vmatpush1.bf16.msra.mxu0 0
        %6610 = vmatprep.subr.bf16.mxu0 0
        %6611 = vmatpush1.bf16.msra.mxu0 0
        %6612 = vmatprep.subr.bf16.mxu0 0
        %6613 = vmatpush1.bf16.msra.mxu0 0
        %6614 = vmatprep.subr.bf16.mxu0 0
        %6615 = vmatpush1.bf16.msra.mxu0 0
        %6616 = vmatprep.subr.bf16.mxu0 0
        %6617 = vmatpush1.bf16.msra.mxu0 0
        %6618 = vmatprep.subr.bf16.mxu0 0
        %6619 = vmatpush1.bf16.msra.mxu0 0
        %6620 = vmatprep.subr.bf16.mxu0 0
        %6621 = vmatpush1.bf16.msra.mxu0 0
        %6622 = vmatprep.subr.bf16.mxu0 0
        %6623 = vmatpush1.bf16.msra.mxu0 0
        %6624 = vmatprep.mubr.bf16.mxu0 0
        %6625 = vmatmul.mubr.bf16.gmra.mrb[0].mxu0 %v6590
        %v6626 = vpop.f32.mrb[0].mxu0
        %v6627 = vadd.f32 0.0, %v6626
        %v6628 = vpop.f32.mrb[0].mxu0
        %v6629 = vadd.f32 0.0, %v6628
        %v6630 = vpop.f32.mrb[0].mxu0
        %v6631 = vpop.f32.mrb[0].mxu0
        %6632 = vdwg.mxu0
        %6633 = vmatprep.subr.bf16.mxu0 %v6560
        %6634 = vmatpush1.bf16.msra.mxu0 %v6559
        %6635 = vmatprep.subr.bf16.mxu0 %v6568
        %6636 = vmatpush1.bf16.msra.mxu0 %v6567
        %6637 = vmatprep.subr.bf16.mxu0 0
        %6638 = vmatpush1.bf16.msra.mxu0 0
        %6639 = vmatprep.subr.bf16.mxu0 0
        %6640 = vmatpush1.bf16.msra.mxu0 0
        %6641 = vmatprep.subr.bf16.mxu0 0
        %6642 = vmatpush1.bf16.msra.mxu0 0
        %6643 = vmatprep.subr.bf16.mxu0 0
        %6644 = vmatpush1.bf16.msra.mxu0 0
        %6645 = vmatprep.subr.bf16.mxu0 0
        %6646 = vmatpush1.bf16.msra.mxu0 0
        %6647 = vmatprep.subr.bf16.mxu0 0
        %6648 = vmatpush1.bf16.msra.mxu0 0
        %6649 = vmatprep.subr.bf16.mxu0 0
        %6650 = vmatpush1.bf16.msra.mxu0 0
        %6651 = vmatprep.subr.bf16.mxu0 0
        %6652 = vmatpush1.bf16.msra.mxu0 0
        %6653 = vmatprep.subr.bf16.mxu0 0
        %6654 = vmatpush1.bf16.msra.mxu0 0
        %6655 = vmatprep.subr.bf16.mxu0 0
        %6656 = vmatpush1.bf16.msra.mxu0 0
        %6657 = vmatprep.subr.bf16.mxu0 0
        %6658 = vmatpush1.bf16.msra.mxu0 0
        %6659 = vmatprep.subr.bf16.mxu0 0
        %6660 = vmatpush1.bf16.msra.mxu0 0
        %6661 = vmatprep.subr.bf16.mxu0 0
        %6662 = vmatpush1.bf16.msra.mxu0 0
        %6663 = vmatprep.subr.bf16.mxu0 0
        %6664 = vmatpush1.bf16.msra.mxu0 0
        %6665 = vmatprep.mubr.bf16.mxu0 0
        %6666 = vmatmul.mubr.bf16.gmra.mrb[0].mxu0 %v6590
        %v6667 = vpop.f32.mrb[0].mxu0
        %v6668 = vadd.f32 0.0, %v6667
        %v6669 = vpop.f32.mrb[0].mxu0
        %v6670 = vadd.f32 0.0, %v6669
        %v6671 = vpop.f32.mrb[0].mxu0
        %v6672 = vpop.f32.mrb[0].mxu0
        %6673 = vdwg.mxu0
        %6674 = vmatprep.subr.bf16.mxu0 %v6562
        %6675 = vmatpush1.bf16.msra.mxu0 %v6561
        %6676 = vmatprep.subr.bf16.mxu0 %v6570
        %6677 = vmatpush1.bf16.msra.mxu0 %v6569
        %6678 = vmatprep.subr.bf16.mxu0 0
        %6679 = vmatpush1.bf16.msra.mxu0 0
        %6680 = vmatprep.subr.bf16.mxu0 0
        %6681 = vmatpush1.bf16.msra.mxu0 0
        %6682 = vmatprep.subr.bf16.mxu0 0
        %6683 = vmatpush1.bf16.msra.mxu0 0
        %6684 = vmatprep.subr.bf16.mxu0 0
        %6685 = vmatpush1.bf16.msra.mxu0 0
        %6686 = vmatprep.subr.bf16.mxu0 0
        %6687 = vmatpush1.bf16.msra.mxu0 0
        %6688 = vmatprep.subr.bf16.mxu0 0
        %6689 = vmatpush1.bf16.msra.mxu0 0
        %6690 = vmatprep.subr.bf16.mxu0 0
        %6691 = vmatpush1.bf16.msra.mxu0 0
        %6692 = vmatprep.subr.bf16.mxu0 0
        %6693 = vmatpush1.bf16.msra.mxu0 0
        %6694 = vmatprep.subr.bf16.mxu0 0
        %6695 = vmatpush1.bf16.msra.mxu0 0
        %6696 = vmatprep.subr.bf16.mxu0 0
        %6697 = vmatpush1.bf16.msra.mxu0 0
        %6698 = vmatprep.subr.bf16.mxu0 0
        %6699 = vmatpush1.bf16.msra.mxu0 0
        %6700 = vmatprep.subr.bf16.mxu0 0
        %6701 = vmatpush1.bf16.msra.mxu0 0
        %6702 = vmatprep.subr.bf16.mxu0 0
        %6703 = vmatpush1.bf16.msra.mxu0 0
        %6704 = vmatprep.subr.bf16.mxu0 0
        %6705 = vmatpush1.bf16.msra.mxu0 0
        %6706 = vmatprep.mubr.bf16.mxu0 0
        %6707 = vmatmul.mubr.bf16.gmra.mrb[0].mxu0 %v6590
        %v6708 = vpop.f32.mrb[0].mxu0
        %v6709 = vadd.f32 0.0, %v6708
        %v6710 = vpop.f32.mrb[0].mxu0
        %v6711 = vadd.f32 0.0, %v6710
        %v6712 = vpop.f32.mrb[0].mxu0
        %v6713 = vpop.f32.mrb[0].mxu0
        %6714 = vdwg.mxu0
        %6715 = vmatprep.subr.bf16.mxu0 %v6564
        %6716 = vmatpush1.bf16.msra.mxu0 %v6563
        %6717 = vmatprep.subr.bf16.mxu0 %v6572
        %6718 = vmatpush1.bf16.msra.mxu0 %v6571
        %6719 = vmatprep.subr.bf16.mxu0 0
        %6720 = vmatpush1.bf16.msra.mxu0 0
        %6721 = vmatprep.subr.bf16.mxu0 0
        %6722 = vmatpush1.bf16.msra.mxu0 0
        %6723 = vmatprep.subr.bf16.mxu0 0
        %6724 = vmatpush1.bf16.msra.mxu0 0
        %6725 = vmatprep.subr.bf16.mxu0 0
        %6726 = vmatpush1.bf16.msra.mxu0 0
        %6727 = vmatprep.subr.bf16.mxu0 0
        %6728 = vmatpush1.bf16.msra.mxu0 0
        %6729 = vmatprep.subr.bf16.mxu0 0
        %6730 = vmatpush1.bf16.msra.mxu0 0
        %6731 = vmatprep.subr.bf16.mxu0 0
        %6732 = vmatpush1.bf16.msra.mxu0 0
        %6733 = vmatprep.subr.bf16.mxu0 0
        %6734 = vmatpush1.bf16.msra.mxu0 0
        %6735 = vmatprep.subr.bf16.mxu0 0
        %6736 = vmatpush1.bf16.msra.mxu0 0
        %6737 = vmatprep.subr.bf16.mxu0 0
        %6738 = vmatpush1.bf16.msra.mxu0 0
        %6739 = vmatprep.subr.bf16.mxu0 0
        %6740 = vmatpush1.bf16.msra.mxu0 0
        %6741 = vmatprep.subr.bf16.mxu0 0
        %6742 = vmatpush1.bf16.msra.mxu0 0
        %6743 = vmatprep.subr.bf16.mxu0 0
        %6744 = vmatpush1.bf16.msra.mxu0 0
        %6745 = vmatprep.subr.bf16.mxu0 0
        %6746 = vmatpush1.bf16.msra.mxu0 0
        %6747 = vmatprep.mubr.bf16.mxu0 0
        %6748 = vmatmul.mubr.bf16.gmra.mrb[0].mxu0 %v6590
        %v6749 = vpop.f32.mrb[0].mxu0
        %v6750 = vadd.f32 0.0, %v6749
        %v6751 = vpop.f32.mrb[0].mxu0
        %v6752 = vadd.f32 0.0, %v6751
        %v6753 = vpop.f32.mrb[0].mxu0
        %v6754 = vpop.f32.mrb[0].mxu0
        %6755 = vdwg.mxu0
        %v6756 = vadd.f32 %v6510, %v6627
        %v6757 = vadd.f32 %v6511, %v6629
        %v6758 = vadd.f32 %v6512, %v6668
        %v6759 = vadd.f32 %v6513, %v6670
        %v6760 = vadd.f32 %v6514, %v6709
        %v6761 = vadd.f32 %v6515, %v6711
        %v6762 = vadd.f32 %v6516, %v6750
        %v6763 = vadd.f32 %v6517, %v6752
        %s6764 = scalar_lea.vmem %s5, 92
        %v6765 = vld [vmem:[%s6764] sm:$0xf]
        %6766 = vrot.lane.b32.xlu0 %v4516, 27
        %v6767 = vpop.permute.xlu0 %6766
        %6768 = vrot.lane.b32.xlu0 %v4517, 27
        %v6769 = vpop.permute.xlu0 %6768
        %6770 = vrot.lane.b32.xlu0 %v4518, 27
        %v6771 = vpop.permute.xlu0 %6770
        %6772 = vrot.lane.b32.xlu0 %v4519, 27
        %v6773 = vpop.permute.xlu0 %6772
        %6774 = vrot.lane.b32.xlu0 %v4520, 27
        %v6775 = vpop.permute.xlu0 %6774
        %6776 = vrot.lane.b32.xlu0 %v4521, 27
        %v6777 = vpop.permute.xlu0 %6776
        %6778 = vrot.lane.b32.xlu0 %v4522, 27
        %v6779 = vpop.permute.xlu0 %6778
        %6780 = vrot.lane.b32.xlu0 %v4523, 27
        %v6781 = vpop.permute.xlu0 %6780
        %6782 = vrot.lane.b32.xlu0 %v4524, 27
        %v6783 = vpop.permute.xlu0 %6782
        %6784 = vrot.lane.b32.xlu0 %v4525, 27
        %v6785 = vpop.permute.xlu0 %6784
        %6786 = vrot.lane.b32.xlu0 %v4526, 27
        %v6787 = vpop.permute.xlu0 %6786
        %6788 = vrot.lane.b32.xlu0 %v4527, 27
        %v6789 = vpop.permute.xlu0 %6788
        %6790 = vrot.lane.b32.xlu0 %v4528, 27
        %v6791 = vpop.permute.xlu0 %6790
        %6792 = vrot.lane.b32.xlu0 %v4529, 27
        %v6793 = vpop.permute.xlu0 %6792
        %6794 = vrot.lane.b32.xlu0 %v4530, 27
        %v6795 = vpop.permute.xlu0 %6794
        %6796 = vrot.lane.b32.xlu0 %v4531, 27
        %v6797 = vpop.permute.xlu0 %6796
        %6798 = vrot.lane.b32.xlu0 %v4532, 27
        %v6799 = vpop.permute.xlu0 %6798
        %6800 = vrot.lane.b32.xlu0 %v4533, 27
        %v6801 = vpop.permute.xlu0 %6800
        %vm6802 = vcmask 220160
        %v6803 = vsel %vm6802, %v6767, %v6769
        %v6804 = vsel %vm6802, %v6769, %v6771
        %v6805 = vsel %vm6802, %v6771, %v6773
        %v6806 = vsel %vm6802, %v6773, %v6775
        %v6807 = vsel %vm6802, %v6775, %v6777
        %v6808 = vsel %vm6802, %v6777, %v6779
        %v6809 = vsel %vm6802, %v6779, %v6781
        %v6810 = vsel %vm6802, %v6781, %v6783
        %v6811 = vsel %vm6802, %v6785, %v6787
        %v6812 = vsel %vm6802, %v6787, %v6789
        %v6813 = vsel %vm6802, %v6789, %v6791
        %v6814 = vsel %vm6802, %v6791, %v6793
        %v6815 = vsel %vm6802, %v6793, %v6795
        %v6816 = vsel %vm6802, %v6795, %v6797
        %v6817 = vsel %vm6802, %v6797, %v6799
        %v6818 = vsel %vm6802, %v6799, %v6801
        %v6836 = vsel %vm1227, %v6765, 0
        %6838 = vmatprep.subr.bf16.mxu0 %v6804
        %6839 = vmatpush1.bf16.msra.mxu0 %v6803
        %6840 = vmatprep.subr.bf16.mxu0 %v6812
        %6841 = vmatpush1.bf16.msra.mxu0 %v6811
        %6842 = vmatprep.subr.bf16.mxu0 0
        %6843 = vmatpush1.bf16.msra.mxu0 0
        %6844 = vmatprep.subr.bf16.mxu0 0
        %6845 = vmatpush1.bf16.msra.mxu0 0
        %6846 = vmatprep.subr.bf16.mxu0 0
        %6847 = vmatpush1.bf16.msra.mxu0 0
        %6848 = vmatprep.subr.bf16.mxu0 0
        %6849 = vmatpush1.bf16.msra.mxu0 0
        %6850 = vmatprep.subr.bf16.mxu0 0
        %6851 = vmatpush1.bf16.msra.mxu0 0
        %6852 = vmatprep.subr.bf16.mxu0 0
        %6853 = vmatpush1.bf16.msra.mxu0 0
        %6854 = vmatprep.subr.bf16.mxu0 0
        %6855 = vmatpush1.bf16.msra.mxu0 0
        %6856 = vmatprep.subr.bf16.mxu0 0
        %6857 = vmatpush1.bf16.msra.mxu0 0
        %6858 = vmatprep.subr.bf16.mxu0 0
        %6859 = vmatpush1.bf16.msra.mxu0 0
        %6860 = vmatprep.subr.bf16.mxu0 0
        %6861 = vmatpush1.bf16.msra.mxu0 0
        %6862 = vmatprep.subr.bf16.mxu0 0
        %6863 = vmatpush1.bf16.msra.mxu0 0
        %6864 = vmatprep.subr.bf16.mxu0 0
        %6865 = vmatpush1.bf16.msra.mxu0 0
        %6866 = vmatprep.subr.bf16.mxu0 0
        %6867 = vmatpush1.bf16.msra.mxu0 0
        %6868 = vmatprep.subr.bf16.mxu0 0
        %6869 = vmatpush1.bf16.msra.mxu0 0
        %6870 = vmatprep.mubr.bf16.mxu0 0
        %6871 = vmatmul.mubr.bf16.gmra.mrb[0].mxu0 %v6836
        %v6872 = vpop.f32.mrb[0].mxu0
        %v6873 = vadd.f32 0.0, %v6872
        %v6874 = vpop.f32.mrb[0].mxu0
        %v6875 = vadd.f32 0.0, %v6874
        %v6876 = vpop.f32.mrb[0].mxu0
        %v6877 = vpop.f32.mrb[0].mxu0
        %6878 = vdwg.mxu0
        %6879 = vmatprep.subr.bf16.mxu0 %v6806
        %6880 = vmatpush1.bf16.msra.mxu0 %v6805
        %6881 = vmatprep.subr.bf16.mxu0 %v6814
        %6882 = vmatpush1.bf16.msra.mxu0 %v6813
        %6883 = vmatprep.subr.bf16.mxu0 0
        %6884 = vmatpush1.bf16.msra.mxu0 0
        %6885 = vmatprep.subr.bf16.mxu0 0
        %6886 = vmatpush1.bf16.msra.mxu0 0
        %6887 = vmatprep.subr.bf16.mxu0 0
        %6888 = vmatpush1.bf16.msra.mxu0 0
        %6889 = vmatprep.subr.bf16.mxu0 0
        %6890 = vmatpush1.bf16.msra.mxu0 0
        %6891 = vmatprep.subr.bf16.mxu0 0
        %6892 = vmatpush1.bf16.msra.mxu0 0
        %6893 = vmatprep.subr.bf16.mxu0 0
        %6894 = vmatpush1.bf16.msra.mxu0 0
        %6895 = vmatprep.subr.bf16.mxu0 0
        %6896 = vmatpush1.bf16.msra.mxu0 0
        %6897 = vmatprep.subr.bf16.mxu0 0
        %6898 = vmatpush1.bf16.msra.mxu0 0
        %6899 = vmatprep.subr.bf16.mxu0 0
        %6900 = vmatpush1.bf16.msra.mxu0 0
        %6901 = vmatprep.subr.bf16.mxu0 0
        %6902 = vmatpush1.bf16.msra.mxu0 0
        %6903 = vmatprep.subr.bf16.mxu0 0
        %6904 = vmatpush1.bf16.msra.mxu0 0
        %6905 = vmatprep.subr.bf16.mxu0 0
        %6906 = vmatpush1.bf16.msra.mxu0 0
        %6907 = vmatprep.subr.bf16.mxu0 0
        %6908 = vmatpush1.bf16.msra.mxu0 0
        %6909 = vmatprep.subr.bf16.mxu0 0
        %6910 = vmatpush1.bf16.msra.mxu0 0
        %6911 = vmatprep.mubr.bf16.mxu0 0
        %6912 = vmatmul.mubr.bf16.gmra.mrb[0].mxu0 %v6836
        %v6913 = vpop.f32.mrb[0].mxu0
        %v6914 = vadd.f32 0.0, %v6913
        %v6915 = vpop.f32.mrb[0].mxu0
        %v6916 = vadd.f32 0.0, %v6915
        %v6917 = vpop.f32.mrb[0].mxu0
        %v6918 = vpop.f32.mrb[0].mxu0
        %6919 = vdwg.mxu0
        %6920 = vmatprep.subr.bf16.mxu0 %v6808
        %6921 = vmatpush1.bf16.msra.mxu0 %v6807
        %6922 = vmatprep.subr.bf16.mxu0 %v6816
        %6923 = vmatpush1.bf16.msra.mxu0 %v6815
        %6924 = vmatprep.subr.bf16.mxu0 0
        %6925 = vmatpush1.bf16.msra.mxu0 0
        %6926 = vmatprep.subr.bf16.mxu0 0
        %6927 = vmatpush1.bf16.msra.mxu0 0
        %6928 = vmatprep.subr.bf16.mxu0 0
        %6929 = vmatpush1.bf16.msra.mxu0 0
        %6930 = vmatprep.subr.bf16.mxu0 0
        %6931 = vmatpush1.bf16.msra.mxu0 0
        %6932 = vmatprep.subr.bf16.mxu0 0
        %6933 = vmatpush1.bf16.msra.mxu0 0
        %6934 = vmatprep.subr.bf16.mxu0 0
        %6935 = vmatpush1.bf16.msra.mxu0 0
        %6936 = vmatprep.subr.bf16.mxu0 0
        %6937 = vmatpush1.bf16.msra.mxu0 0
        %6938 = vmatprep.subr.bf16.mxu0 0
        %6939 = vmatpush1.bf16.msra.mxu0 0
        %6940 = vmatprep.subr.bf16.mxu0 0
        %6941 = vmatpush1.bf16.msra.mxu0 0
        %6942 = vmatprep.subr.bf16.mxu0 0
        %6943 = vmatpush1.bf16.msra.mxu0 0
        %6944 = vmatprep.subr.bf16.mxu0 0
        %6945 = vmatpush1.bf16.msra.mxu0 0
        %6946 = vmatprep.subr.bf16.mxu0 0
        %6947 = vmatpush1.bf16.msra.mxu0 0
        %6948 = vmatprep.subr.bf16.mxu0 0
        %6949 = vmatpush1.bf16.msra.mxu0 0
        %6950 = vmatprep.subr.bf16.mxu0 0
        %6951 = vmatpush1.bf16.msra.mxu0 0
        %6952 = vmatprep.mubr.bf16.mxu0 0
        %6953 = vmatmul.mubr.bf16.gmra.mrb[0].mxu0 %v6836
        %v6954 = vpop.f32.mrb[0].mxu0
        %v6955 = vadd.f32 0.0, %v6954
        %v6956 = vpop.f32.mrb[0].mxu0
        %v6957 = vadd.f32 0.0, %v6956
        %v6958 = vpop.f32.mrb[0].mxu0
        %v6959 = vpop.f32.mrb[0].mxu0
        %6960 = vdwg.mxu0
        %6961 = vmatprep.subr.bf16.mxu0 %v6810
        %6962 = vmatpush1.bf16.msra.mxu0 %v6809
        %6963 = vmatprep.subr.bf16.mxu0 %v6818
        %6964 = vmatpush1.bf16.msra.mxu0 %v6817
        %6965 = vmatprep.subr.bf16.mxu0 0
        %6966 = vmatpush1.bf16.msra.mxu0 0
        %6967 = vmatprep.subr.bf16.mxu0 0
        %6968 = vmatpush1.bf16.msra.mxu0 0
        %6969 = vmatprep.subr.bf16.mxu0 0
        %6970 = vmatpush1.bf16.msra.mxu0 0
        %6971 = vmatprep.subr.bf16.mxu0 0
        %6972 = vmatpush1.bf16.msra.mxu0 0
        %6973 = vmatprep.subr.bf16.mxu0 0
        %6974 = vmatpush1.bf16.msra.mxu0 0
        %6975 = vmatprep.subr.bf16.mxu0 0
        %6976 = vmatpush1.bf16.msra.mxu0 0
        %6977 = vmatprep.subr.bf16.mxu0 0
        %6978 = vmatpush1.bf16.msra.mxu0 0
        %6979 = vmatprep.subr.bf16.mxu0 0
        %6980 = vmatpush1.bf16.msra.mxu0 0
        %6981 = vmatprep.subr.bf16.mxu0 0
        %6982 = vmatpush1.bf16.msra.mxu0 0
        %6983 = vmatprep.subr.bf16.mxu0 0
        %6984 = vmatpush1.bf16.msra.mxu0 0
        %6985 = vmatprep.subr.bf16.mxu0 0
        %6986 = vmatpush1.bf16.msra.mxu0 0
        %6987 = vmatprep.subr.bf16.mxu0 0
        %6988 = vmatpush1.bf16.msra.mxu0 0
        %6989 = vmatprep.subr.bf16.mxu0 0
        %6990 = vmatpush1.bf16.msra.mxu0 0
        %6991 = vmatprep.subr.bf16.mxu0 0
        %6992 = vmatpush1.bf16.msra.mxu0 0
        %6993 = vmatprep.mubr.bf16.mxu0 0
        %6994 = vmatmul.mubr.bf16.gmra.mrb[0].mxu0 %v6836
        %v6995 = vpop.f32.mrb[0].mxu0
        %v6996 = vadd.f32 0.0, %v6995
        %v6997 = vpop.f32.mrb[0].mxu0
        %v6998 = vadd.f32 0.0, %v6997
        %v6999 = vpop.f32.mrb[0].mxu0
        %v7000 = vpop.f32.mrb[0].mxu0
        %7001 = vdwg.mxu0
        %v7002 = vadd.f32 %v6756, %v6873
        %v7003 = vadd.f32 %v6757, %v6875
        %v7004 = vadd.f32 %v6758, %v6914
        %v7005 = vadd.f32 %v6759, %v6916
        %v7006 = vadd.f32 %v6760, %v6955
        %v7007 = vadd.f32 %v6761, %v6957
        %v7008 = vadd.f32 %v6762, %v6996
        %v7009 = vadd.f32 %v6763, %v6998
        %s7010 = scalar_lea.vmem %s5, 96
        %v7011 = vld [vmem:[%s7010] sm:$0xf]
        %7012 = vrot.lane.b32.xlu0 %v4516, 19
        %v7013 = vpop.permute.xlu0 %7012
        %7014 = vrot.lane.b32.xlu0 %v4517, 19
        %v7015 = vpop.permute.xlu0 %7014
        %7016 = vrot.lane.b32.xlu0 %v4518, 19
        %v7017 = vpop.permute.xlu0 %7016
        %7018 = vrot.lane.b32.xlu0 %v4519, 19
        %v7019 = vpop.permute.xlu0 %7018
        %7020 = vrot.lane.b32.xlu0 %v4520, 19
        %v7021 = vpop.permute.xlu0 %7020
        %7022 = vrot.lane.b32.xlu0 %v4521, 19
        %v7023 = vpop.permute.xlu0 %7022
        %7024 = vrot.lane.b32.xlu0 %v4522, 19
        %v7025 = vpop.permute.xlu0 %7024
        %7026 = vrot.lane.b32.xlu0 %v4523, 19
        %v7027 = vpop.permute.xlu0 %7026
        %7028 = vrot.lane.b32.xlu0 %v4524, 19
        %v7029 = vpop.permute.xlu0 %7028
        %7030 = vrot.lane.b32.xlu0 %v4525, 19
        %v7031 = vpop.permute.xlu0 %7030
        %7032 = vrot.lane.b32.xlu0 %v4526, 19
        %v7033 = vpop.permute.xlu0 %7032
        %7034 = vrot.lane.b32.xlu0 %v4527, 19
        %v7035 = vpop.permute.xlu0 %7034
        %7036 = vrot.lane.b32.xlu0 %v4528, 19
        %v7037 = vpop.permute.xlu0 %7036
        %7038 = vrot.lane.b32.xlu0 %v4529, 19
        %v7039 = vpop.permute.xlu0 %7038
        %7040 = vrot.lane.b32.xlu0 %v4530, 19
        %v7041 = vpop.permute.xlu0 %7040
        %7042 = vrot.lane.b32.xlu0 %v4531, 19
        %v7043 = vpop.permute.xlu0 %7042
        %7044 = vrot.lane.b32.xlu0 %v4532, 19
        %v7045 = vpop.permute.xlu0 %7044
        %7046 = vrot.lane.b32.xlu0 %v4533, 19
        %v7047 = vpop.permute.xlu0 %7046
        %vm7048 = vcmask 154624
        %v7049 = vsel %vm7048, %v7013, %v7015
        %v7050 = vsel %vm7048, %v7015, %v7017
        %v7051 = vsel %vm7048, %v7017, %v7019
        %v7052 = vsel %vm7048, %v7019, %v7021
        %v7053 = vsel %vm7048, %v7021, %v7023
        %v7054 = vsel %vm7048, %v7023, %v7025
        %v7055 = vsel %vm7048, %v7025, %v7027
        %v7056 = vsel %vm7048, %v7027, %v7029
        %v7057 = vsel %vm7048, %v7031, %v7033
        %v7058 = vsel %vm7048, %v7033, %v7035
        %v7059 = vsel %vm7048, %v7035, %v7037
        %v7060 = vsel %vm7048, %v7037, %v7039
        %v7061 = vsel %vm7048, %v7039, %v7041
        %v7062 = vsel %vm7048, %v7041, %v7043
        %v7063 = vsel %vm7048, %v7043, %v7045
        %v7064 = vsel %vm7048, %v7045, %v7047
        %v7082 = vsel %vm1227, %v7011, 0
        %7084 = vmatprep.subr.bf16.mxu0 %v7050
        %7085 = vmatpush1.bf16.msra.mxu0 %v7049
        %7086 = vmatprep.subr.bf16.mxu0 %v7058
        %7087 = vmatpush1.bf16.msra.mxu0 %v7057
        %7088 = vmatprep.subr.bf16.mxu0 0
        %7089 = vmatpush1.bf16.msra.mxu0 0
        %7090 = vmatprep.subr.bf16.mxu0 0
        %7091 = vmatpush1.bf16.msra.mxu0 0
        %7092 = vmatprep.subr.bf16.mxu0 0
        %7093 = vmatpush1.bf16.msra.mxu0 0
        %7094 = vmatprep.subr.bf16.mxu0 0
        %7095 = vmatpush1.bf16.msra.mxu0 0
        %7096 = vmatprep.subr.bf16.mxu0 0
        %7097 = vmatpush1.bf16.msra.mxu0 0
        %7098 = vmatprep.subr.bf16.mxu0 0
        %7099 = vmatpush1.bf16.msra.mxu0 0
        %7100 = vmatprep.subr.bf16.mxu0 0
        %7101 = vmatpush1.bf16.msra.mxu0 0
        %7102 = vmatprep.subr.bf16.mxu0 0
        %7103 = vmatpush1.bf16.msra.mxu0 0
        %7104 = vmatprep.subr.bf16.mxu0 0
        %7105 = vmatpush1.bf16.msra.mxu0 0
        %7106 = vmatprep.subr.bf16.mxu0 0
        %7107 = vmatpush1.bf16.msra.mxu0 0
        %7108 = vmatprep.subr.bf16.mxu0 0
        %7109 = vmatpush1.bf16.msra.mxu0 0
        %7110 = vmatprep.subr.bf16.mxu0 0
        %7111 = vmatpush1.bf16.msra.mxu0 0
        %7112 = vmatprep.subr.bf16.mxu0 0
        %7113 = vmatpush1.bf16.msra.mxu0 0
        %7114 = vmatprep.subr.bf16.mxu0 0
        %7115 = vmatpush1.bf16.msra.mxu0 0
        %7116 = vmatprep.mubr.bf16.mxu0 0
        %7117 = vmatmul.mubr.bf16.gmra.mrb[0].mxu0 %v7082
        %v7118 = vpop.f32.mrb[0].mxu0
        %v7119 = vadd.f32 0.0, %v7118
        %v7120 = vpop.f32.mrb[0].mxu0
        %v7121 = vadd.f32 0.0, %v7120
        %v7122 = vpop.f32.mrb[0].mxu0
        %v7123 = vpop.f32.mrb[0].mxu0
        %7124 = vdwg.mxu0
        %7125 = vmatprep.subr.bf16.mxu0 %v7052
        %7126 = vmatpush1.bf16.msra.mxu0 %v7051
        %7127 = vmatprep.subr.bf16.mxu0 %v7060
        %7128 = vmatpush1.bf16.msra.mxu0 %v7059
        %7129 = vmatprep.subr.bf16.mxu0 0
        %7130 = vmatpush1.bf16.msra.mxu0 0
        %7131 = vmatprep.subr.bf16.mxu0 0
        %7132 = vmatpush1.bf16.msra.mxu0 0
        %7133 = vmatprep.subr.bf16.mxu0 0
        %7134 = vmatpush1.bf16.msra.mxu0 0
        %7135 = vmatprep.subr.bf16.mxu0 0
        %7136 = vmatpush1.bf16.msra.mxu0 0
        %7137 = vmatprep.subr.bf16.mxu0 0
        %7138 = vmatpush1.bf16.msra.mxu0 0
        %7139 = vmatprep.subr.bf16.mxu0 0
        %7140 = vmatpush1.bf16.msra.mxu0 0
        %7141 = vmatprep.subr.bf16.mxu0 0
        %7142 = vmatpush1.bf16.msra.mxu0 0
        %7143 = vmatprep.subr.bf16.mxu0 0
        %7144 = vmatpush1.bf16.msra.mxu0 0
        %7145 = vmatprep.subr.bf16.mxu0 0
        %7146 = vmatpush1.bf16.msra.mxu0 0
        %7147 = vmatprep.subr.bf16.mxu0 0
        %7148 = vmatpush1.bf16.msra.mxu0 0
        %7149 = vmatprep.subr.bf16.mxu0 0
        %7150 = vmatpush1.bf16.msra.mxu0 0
        %7151 = vmatprep.subr.bf16.mxu0 0
        %7152 = vmatpush1.bf16.msra.mxu0 0
        %7153 = vmatprep.subr.bf16.mxu0 0
        %7154 = vmatpush1.bf16.msra.mxu0 0
        %7155 = vmatprep.subr.bf16.mxu0 0
        %7156 = vmatpush1.bf16.msra.mxu0 0
        %7157 = vmatprep.mubr.bf16.mxu0 0
        %7158 = vmatmul.mubr.bf16.gmra.mrb[0].mxu0 %v7082
        %v7159 = vpop.f32.mrb[0].mxu0
        %v7160 = vadd.f32 0.0, %v7159
        %v7161 = vpop.f32.mrb[0].mxu0
        %v7162 = vadd.f32 0.0, %v7161
        %v7163 = vpop.f32.mrb[0].mxu0
        %v7164 = vpop.f32.mrb[0].mxu0
        %7165 = vdwg.mxu0
        %7166 = vmatprep.subr.bf16.mxu0 %v7054
        %7167 = vmatpush1.bf16.msra.mxu0 %v7053
        %7168 = vmatprep.subr.bf16.mxu0 %v7062
        %7169 = vmatpush1.bf16.msra.mxu0 %v7061
        %7170 = vmatprep.subr.bf16.mxu0 0
        %7171 = vmatpush1.bf16.msra.mxu0 0
        %7172 = vmatprep.subr.bf16.mxu0 0
        %7173 = vmatpush1.bf16.msra.mxu0 0
        %7174 = vmatprep.subr.bf16.mxu0 0
        %7175 = vmatpush1.bf16.msra.mxu0 0
        %7176 = vmatprep.subr.bf16.mxu0 0
        %7177 = vmatpush1.bf16.msra.mxu0 0
        %7178 = vmatprep.subr.bf16.mxu0 0
        %7179 = vmatpush1.bf16.msra.mxu0 0
        %7180 = vmatprep.subr.bf16.mxu0 0
        %7181 = vmatpush1.bf16.msra.mxu0 0
        %7182 = vmatprep.subr.bf16.mxu0 0
        %7183 = vmatpush1.bf16.msra.mxu0 0
        %7184 = vmatprep.subr.bf16.mxu0 0
        %7185 = vmatpush1.bf16.msra.mxu0 0
        %7186 = vmatprep.subr.bf16.mxu0 0
        %7187 = vmatpush1.bf16.msra.mxu0 0
        %7188 = vmatprep.subr.bf16.mxu0 0
        %7189 = vmatpush1.bf16.msra.mxu0 0
        %7190 = vmatprep.subr.bf16.mxu0 0
        %7191 = vmatpush1.bf16.msra.mxu0 0
        %7192 = vmatprep.subr.bf16.mxu0 0
        %7193 = vmatpush1.bf16.msra.mxu0 0
        %7194 = vmatprep.subr.bf16.mxu0 0
        %7195 = vmatpush1.bf16.msra.mxu0 0
        %7196 = vmatprep.subr.bf16.mxu0 0
        %7197 = vmatpush1.bf16.msra.mxu0 0
        %7198 = vmatprep.mubr.bf16.mxu0 0
        %7199 = vmatmul.mubr.bf16.gmra.mrb[0].mxu0 %v7082
        %v7200 = vpop.f32.mrb[0].mxu0
        %v7201 = vadd.f32 0.0, %v7200
        %v7202 = vpop.f32.mrb[0].mxu0
        %v7203 = vadd.f32 0.0, %v7202
        %v7204 = vpop.f32.mrb[0].mxu0
        %v7205 = vpop.f32.mrb[0].mxu0
        %7206 = vdwg.mxu0
        %7207 = vmatprep.subr.bf16.mxu0 %v7056
        %7208 = vmatpush1.bf16.msra.mxu0 %v7055
        %7209 = vmatprep.subr.bf16.mxu0 %v7064
        %7210 = vmatpush1.bf16.msra.mxu0 %v7063
        %7211 = vmatprep.subr.bf16.mxu0 0
        %7212 = vmatpush1.bf16.msra.mxu0 0
        %7213 = vmatprep.subr.bf16.mxu0 0
        %7214 = vmatpush1.bf16.msra.mxu0 0
        %7215 = vmatprep.subr.bf16.mxu0 0
        %7216 = vmatpush1.bf16.msra.mxu0 0
        %7217 = vmatprep.subr.bf16.mxu0 0
        %7218 = vmatpush1.bf16.msra.mxu0 0
        %7219 = vmatprep.subr.bf16.mxu0 0
        %7220 = vmatpush1.bf16.msra.mxu0 0
        %7221 = vmatprep.subr.bf16.mxu0 0
        %7222 = vmatpush1.bf16.msra.mxu0 0
        %7223 = vmatprep.subr.bf16.mxu0 0
        %7224 = vmatpush1.bf16.msra.mxu0 0
        %7225 = vmatprep.subr.bf16.mxu0 0
        %7226 = vmatpush1.bf16.msra.mxu0 0
        %7227 = vmatprep.subr.bf16.mxu0 0
        %7228 = vmatpush1.bf16.msra.mxu0 0
        %7229 = vmatprep.subr.bf16.mxu0 0
        %7230 = vmatpush1.bf16.msra.mxu0 0
        %7231 = vmatprep.subr.bf16.mxu0 0
        %7232 = vmatpush1.bf16.msra.mxu0 0
        %7233 = vmatprep.subr.bf16.mxu0 0
        %7234 = vmatpush1.bf16.msra.mxu0 0
        %7235 = vmatprep.subr.bf16.mxu0 0
        %7236 = vmatpush1.bf16.msra.mxu0 0
        %7237 = vmatprep.subr.bf16.mxu0 0
        %7238 = vmatpush1.bf16.msra.mxu0 0
        %7239 = vmatprep.mubr.bf16.mxu0 0
        %7240 = vmatmul.mubr.bf16.gmra.mrb[0].mxu0 %v7082
        %v7241 = vpop.f32.mrb[0].mxu0
        %v7242 = vadd.f32 0.0, %v7241
        %v7243 = vpop.f32.mrb[0].mxu0
        %v7244 = vadd.f32 0.0, %v7243
        %v7245 = vpop.f32.mrb[0].mxu0
        %v7246 = vpop.f32.mrb[0].mxu0
        %7247 = vdwg.mxu0
        %v7248 = vadd.f32 %v7002, %v7119
        %v7249 = vadd.f32 %v7003, %v7121
        %v7250 = vadd.f32 %v7004, %v7160
        %v7251 = vadd.f32 %v7005, %v7162
        %v7252 = vadd.f32 %v7006, %v7201
        %v7253 = vadd.f32 %v7007, %v7203
        %v7254 = vadd.f32 %v7008, %v7242
        %v7255 = vadd.f32 %v7009, %v7244
        %s7256 = scalar_lea.vmem %s5, 100
        %v7257 = vld [vmem:[%s7256] sm:$0xf]
        %7258 = vrot.lane.b32.xlu0 %v4516, 18
        %v7259 = vpop.permute.xlu0 %7258
        %7260 = vrot.lane.b32.xlu0 %v4517, 18
        %v7261 = vpop.permute.xlu0 %7260
        %7262 = vrot.lane.b32.xlu0 %v4518, 18
        %v7263 = vpop.permute.xlu0 %7262
        %7264 = vrot.lane.b32.xlu0 %v4519, 18
        %v7265 = vpop.permute.xlu0 %7264
        %7266 = vrot.lane.b32.xlu0 %v4520, 18
        %v7267 = vpop.permute.xlu0 %7266
        %7268 = vrot.lane.b32.xlu0 %v4521, 18
        %v7269 = vpop.permute.xlu0 %7268
        %7270 = vrot.lane.b32.xlu0 %v4522, 18
        %v7271 = vpop.permute.xlu0 %7270
        %7272 = vrot.lane.b32.xlu0 %v4523, 18
        %v7273 = vpop.permute.xlu0 %7272
        %7274 = vrot.lane.b32.xlu0 %v4524, 18
        %v7275 = vpop.permute.xlu0 %7274
        %7276 = vrot.lane.b32.xlu0 %v4525, 18
        %v7277 = vpop.permute.xlu0 %7276
        %7278 = vrot.lane.b32.xlu0 %v4526, 18
        %v7279 = vpop.permute.xlu0 %7278
        %7280 = vrot.lane.b32.xlu0 %v4527, 18
        %v7281 = vpop.permute.xlu0 %7280
        %7282 = vrot.lane.b32.xlu0 %v4528, 18
        %v7283 = vpop.permute.xlu0 %7282
        %7284 = vrot.lane.b32.xlu0 %v4529, 18
        %v7285 = vpop.permute.xlu0 %7284
        %7286 = vrot.lane.b32.xlu0 %v4530, 18
        %v7287 = vpop.permute.xlu0 %7286
        %7288 = vrot.lane.b32.xlu0 %v4531, 18
        %v7289 = vpop.permute.xlu0 %7288
        %7290 = vrot.lane.b32.xlu0 %v4532, 18
        %v7291 = vpop.permute.xlu0 %7290
        %7292 = vrot.lane.b32.xlu0 %v4533, 18
        %v7293 = vpop.permute.xlu0 %7292
        %vm7294 = vcmask 146432
        %v7295 = vsel %vm7294, %v7259, %v7261
        %v7296 = vsel %vm7294, %v7261, %v7263
        %v7297 = vsel %vm7294, %v7263, %v7265
        %v7298 = vsel %vm7294, %v7265, %v7267
        %v7299 = vsel %vm7294, %v7267, %v7269
        %v7300 = vsel %vm7294, %v7269, %v7271
        %v7301 = vsel %vm7294, %v7271, %v7273
        %v7302 = vsel %vm7294, %v7273, %v7275
        %v7303 = vsel %vm7294, %v7277, %v7279
        %v7304 = vsel %vm7294, %v7279, %v7281
        %v7305 = vsel %vm7294, %v7281, %v7283
        %v7306 = vsel %vm7294, %v7283, %v7285
        %v7307 = vsel %vm7294, %v7285, %v7287
        %v7308 = vsel %vm7294, %v7287, %v7289
        %v7309 = vsel %vm7294, %v7289, %v7291
        %v7310 = vsel %vm7294, %v7291, %v7293
        %v7328 = vsel %vm1227, %v7257, 0
        %7330 = vmatprep.subr.bf16.mxu0 %v7296
        %7331 = vmatpush1.bf16.msra.mxu0 %v7295
        %7332 = vmatprep.subr.bf16.mxu0 %v7304
        %7333 = vmatpush1.bf16.msra.mxu0 %v7303
        %7334 = vmatprep.subr.bf16.mxu0 0
        %7335 = vmatpush1.bf16.msra.mxu0 0
        %7336 = vmatprep.subr.bf16.mxu0 0
        %7337 = vmatpush1.bf16.msra.mxu0 0
        %7338 = vmatprep.subr.bf16.mxu0 0
        %7339 = vmatpush1.bf16.msra.mxu0 0
        %7340 = vmatprep.subr.bf16.mxu0 0
        %7341 = vmatpush1.bf16.msra.mxu0 0
        %7342 = vmatprep.subr.bf16.mxu0 0
        %7343 = vmatpush1.bf16.msra.mxu0 0
        %7344 = vmatprep.subr.bf16.mxu0 0
        %7345 = vmatpush1.bf16.msra.mxu0 0
        %7346 = vmatprep.subr.bf16.mxu0 0
        %7347 = vmatpush1.bf16.msra.mxu0 0
        %7348 = vmatprep.subr.bf16.mxu0 0
        %7349 = vmatpush1.bf16.msra.mxu0 0
        %7350 = vmatprep.subr.bf16.mxu0 0
        %7351 = vmatpush1.bf16.msra.mxu0 0
        %7352 = vmatprep.subr.bf16.mxu0 0
        %7353 = vmatpush1.bf16.msra.mxu0 0
        %7354 = vmatprep.subr.bf16.mxu0 0
        %7355 = vmatpush1.bf16.msra.mxu0 0
        %7356 = vmatprep.subr.bf16.mxu0 0
        %7357 = vmatpush1.bf16.msra.mxu0 0
        %7358 = vmatprep.subr.bf16.mxu0 0
        %7359 = vmatpush1.bf16.msra.mxu0 0
        %7360 = vmatprep.subr.bf16.mxu0 0
        %7361 = vmatpush1.bf16.msra.mxu0 0
        %7362 = vmatprep.mubr.bf16.mxu0 0
        %7363 = vmatmul.mubr.bf16.gmra.mrb[0].mxu0 %v7328
        %v7364 = vpop.f32.mrb[0].mxu0
        %v7365 = vadd.f32 0.0, %v7364
        %v7366 = vpop.f32.mrb[0].mxu0
        %v7367 = vadd.f32 0.0, %v7366
        %v7368 = vpop.f32.mrb[0].mxu0
        %v7369 = vpop.f32.mrb[0].mxu0
        %7370 = vdwg.mxu0
        %7371 = vmatprep.subr.bf16.mxu0 %v7298
        %7372 = vmatpush1.bf16.msra.mxu0 %v7297
        %7373 = vmatprep.subr.bf16.mxu0 %v7306
        %7374 = vmatpush1.bf16.msra.mxu0 %v7305
        %7375 = vmatprep.subr.bf16.mxu0 0
        %7376 = vmatpush1.bf16.msra.mxu0 0
        %7377 = vmatprep.subr.bf16.mxu0 0
        %7378 = vmatpush1.bf16.msra.mxu0 0
        %7379 = vmatprep.subr.bf16.mxu0 0
        %7380 = vmatpush1.bf16.msra.mxu0 0
        %7381 = vmatprep.subr.bf16.mxu0 0
        %7382 = vmatpush1.bf16.msra.mxu0 0
        %7383 = vmatprep.subr.bf16.mxu0 0
        %7384 = vmatpush1.bf16.msra.mxu0 0
        %7385 = vmatprep.subr.bf16.mxu0 0
        %7386 = vmatpush1.bf16.msra.mxu0 0
        %7387 = vmatprep.subr.bf16.mxu0 0
        %7388 = vmatpush1.bf16.msra.mxu0 0
        %7389 = vmatprep.subr.bf16.mxu0 0
        %7390 = vmatpush1.bf16.msra.mxu0 0
        %7391 = vmatprep.subr.bf16.mxu0 0
        %7392 = vmatpush1.bf16.msra.mxu0 0
        %7393 = vmatprep.subr.bf16.mxu0 0
        %7394 = vmatpush1.bf16.msra.mxu0 0
        %7395 = vmatprep.subr.bf16.mxu0 0
        %7396 = vmatpush1.bf16.msra.mxu0 0
        %7397 = vmatprep.subr.bf16.mxu0 0
        %7398 = vmatpush1.bf16.msra.mxu0 0
        %7399 = vmatprep.subr.bf16.mxu0 0
        %7400 = vmatpush1.bf16.msra.mxu0 0
        %7401 = vmatprep.subr.bf16.mxu0 0
        %7402 = vmatpush1.bf16.msra.mxu0 0
        %7403 = vmatprep.mubr.bf16.mxu0 0
        %7404 = vmatmul.mubr.bf16.gmra.mrb[0].mxu0 %v7328
        %v7405 = vpop.f32.mrb[0].mxu0
        %v7406 = vadd.f32 0.0, %v7405
        %v7407 = vpop.f32.mrb[0].mxu0
        %v7408 = vadd.f32 0.0, %v7407
        %v7409 = vpop.f32.mrb[0].mxu0
        %v7410 = vpop.f32.mrb[0].mxu0
        %7411 = vdwg.mxu0
        %7412 = vmatprep.subr.bf16.mxu0 %v7300
        %7413 = vmatpush1.bf16.msra.mxu0 %v7299
        %7414 = vmatprep.subr.bf16.mxu0 %v7308
        %7415 = vmatpush1.bf16.msra.mxu0 %v7307
        %7416 = vmatprep.subr.bf16.mxu0 0
        %7417 = vmatpush1.bf16.msra.mxu0 0
        %7418 = vmatprep.subr.bf16.mxu0 0
        %7419 = vmatpush1.bf16.msra.mxu0 0
        %7420 = vmatprep.subr.bf16.mxu0 0
        %7421 = vmatpush1.bf16.msra.mxu0 0
        %7422 = vmatprep.subr.bf16.mxu0 0
        %7423 = vmatpush1.bf16.msra.mxu0 0
        %7424 = vmatprep.subr.bf16.mxu0 0
        %7425 = vmatpush1.bf16.msra.mxu0 0
        %7426 = vmatprep.subr.bf16.mxu0 0
        %7427 = vmatpush1.bf16.msra.mxu0 0
        %7428 = vmatprep.subr.bf16.mxu0 0
        %7429 = vmatpush1.bf16.msra.mxu0 0
        %7430 = vmatprep.subr.bf16.mxu0 0
        %7431 = vmatpush1.bf16.msra.mxu0 0
        %7432 = vmatprep.subr.bf16.mxu0 0
        %7433 = vmatpush1.bf16.msra.mxu0 0
        %7434 = vmatprep.subr.bf16.mxu0 0
        %7435 = vmatpush1.bf16.msra.mxu0 0
        %7436 = vmatprep.subr.bf16.mxu0 0
        %7437 = vmatpush1.bf16.msra.mxu0 0
        %7438 = vmatprep.subr.bf16.mxu0 0
        %7439 = vmatpush1.bf16.msra.mxu0 0
        %7440 = vmatprep.subr.bf16.mxu0 0
        %7441 = vmatpush1.bf16.msra.mxu0 0
        %7442 = vmatprep.subr.bf16.mxu0 0
        %7443 = vmatpush1.bf16.msra.mxu0 0
        %7444 = vmatprep.mubr.bf16.mxu0 0
        %7445 = vmatmul.mubr.bf16.gmra.mrb[0].mxu0 %v7328
        %v7446 = vpop.f32.mrb[0].mxu0
        %v7447 = vadd.f32 0.0, %v7446
        %v7448 = vpop.f32.mrb[0].mxu0
        %v7449 = vadd.f32 0.0, %v7448
        %v7450 = vpop.f32.mrb[0].mxu0
        %v7451 = vpop.f32.mrb[0].mxu0
        %7452 = vdwg.mxu0
        %7453 = vmatprep.subr.bf16.mxu0 %v7302
        %7454 = vmatpush1.bf16.msra.mxu0 %v7301
        %7455 = vmatprep.subr.bf16.mxu0 %v7310
        %7456 = vmatpush1.bf16.msra.mxu0 %v7309
        %7457 = vmatprep.subr.bf16.mxu0 0
        %7458 = vmatpush1.bf16.msra.mxu0 0
        %7459 = vmatprep.subr.bf16.mxu0 0
        %7460 = vmatpush1.bf16.msra.mxu0 0
        %7461 = vmatprep.subr.bf16.mxu0 0
        %7462 = vmatpush1.bf16.msra.mxu0 0
        %7463 = vmatprep.subr.bf16.mxu0 0
        %7464 = vmatpush1.bf16.msra.mxu0 0
        %7465 = vmatprep.subr.bf16.mxu0 0
        %7466 = vmatpush1.bf16.msra.mxu0 0
        %7467 = vmatprep.subr.bf16.mxu0 0
        %7468 = vmatpush1.bf16.msra.mxu0 0
        %7469 = vmatprep.subr.bf16.mxu0 0
        %7470 = vmatpush1.bf16.msra.mxu0 0
        %7471 = vmatprep.subr.bf16.mxu0 0
        %7472 = vmatpush1.bf16.msra.mxu0 0
        %7473 = vmatprep.subr.bf16.mxu0 0
        %7474 = vmatpush1.bf16.msra.mxu0 0
        %7475 = vmatprep.subr.bf16.mxu0 0
        %7476 = vmatpush1.bf16.msra.mxu0 0
        %7477 = vmatprep.subr.bf16.mxu0 0
        %7478 = vmatpush1.bf16.msra.mxu0 0
        %7479 = vmatprep.subr.bf16.mxu0 0
        %7480 = vmatpush1.bf16.msra.mxu0 0
        %7481 = vmatprep.subr.bf16.mxu0 0
        %7482 = vmatpush1.bf16.msra.mxu0 0
        %7483 = vmatprep.subr.bf16.mxu0 0
        %7484 = vmatpush1.bf16.msra.mxu0 0
        %7485 = vmatprep.mubr.bf16.mxu0 0
        %7486 = vmatmul.mubr.bf16.gmra.mrb[0].mxu0 %v7328
        %v7487 = vpop.f32.mrb[0].mxu0
        %v7488 = vadd.f32 0.0, %v7487
        %v7489 = vpop.f32.mrb[0].mxu0
        %v7490 = vadd.f32 0.0, %v7489
        %v7491 = vpop.f32.mrb[0].mxu0
        %v7492 = vpop.f32.mrb[0].mxu0
        %7493 = vdwg.mxu0
        %v7494 = vadd.f32 %v7248, %v7365
        %v7495 = vadd.f32 %v7249, %v7367
        %v7496 = vadd.f32 %v7250, %v7406
        %v7497 = vadd.f32 %v7251, %v7408
        %v7498 = vadd.f32 %v7252, %v7447
        %v7499 = vadd.f32 %v7253, %v7449
        %v7500 = vadd.f32 %v7254, %v7488
        %v7501 = vadd.f32 %v7255, %v7490
        %s7502 = scalar_lea.vmem %s5, 104
        %v7503 = vld [vmem:[%s7502] sm:$0xf]
        %7504 = vrot.lane.b32.xlu0 %v4516, 17
        %v7505 = vpop.permute.xlu0 %7504
        %7506 = vrot.lane.b32.xlu0 %v4517, 17
        %v7507 = vpop.permute.xlu0 %7506
        %7508 = vrot.lane.b32.xlu0 %v4518, 17
        %v7509 = vpop.permute.xlu0 %7508
        %7510 = vrot.lane.b32.xlu0 %v4519, 17
        %v7511 = vpop.permute.xlu0 %7510
        %7512 = vrot.lane.b32.xlu0 %v4520, 17
        %v7513 = vpop.permute.xlu0 %7512
        %7514 = vrot.lane.b32.xlu0 %v4521, 17
        %v7515 = vpop.permute.xlu0 %7514
        %7516 = vrot.lane.b32.xlu0 %v4522, 17
        %v7517 = vpop.permute.xlu0 %7516
        %7518 = vrot.lane.b32.xlu0 %v4523, 17
        %v7519 = vpop.permute.xlu0 %7518
        %7520 = vrot.lane.b32.xlu0 %v4524, 17
        %v7521 = vpop.permute.xlu0 %7520
        %7522 = vrot.lane.b32.xlu0 %v4525, 17
        %v7523 = vpop.permute.xlu0 %7522
        %7524 = vrot.lane.b32.xlu0 %v4526, 17
        %v7525 = vpop.permute.xlu0 %7524
        %7526 = vrot.lane.b32.xlu0 %v4527, 17
        %v7527 = vpop.permute.xlu0 %7526
        %7528 = vrot.lane.b32.xlu0 %v4528, 17
        %v7529 = vpop.permute.xlu0 %7528
        %7530 = vrot.lane.b32.xlu0 %v4529, 17
        %v7531 = vpop.permute.xlu0 %7530
        %7532 = vrot.lane.b32.xlu0 %v4530, 17
        %v7533 = vpop.permute.xlu0 %7532
        %7534 = vrot.lane.b32.xlu0 %v4531, 17
        %v7535 = vpop.permute.xlu0 %7534
        %7536 = vrot.lane.b32.xlu0 %v4532, 17
        %v7537 = vpop.permute.xlu0 %7536
        %7538 = vrot.lane.b32.xlu0 %v4533, 17
        %v7539 = vpop.permute.xlu0 %7538
        %vm7540 = vcmask 138240
        %v7541 = vsel %vm7540, %v7505, %v7507
        %v7542 = vsel %vm7540, %v7507, %v7509
        %v7543 = vsel %vm7540, %v7509, %v7511
        %v7544 = vsel %vm7540, %v7511, %v7513
        %v7545 = vsel %vm7540, %v7513, %v7515
        %v7546 = vsel %vm7540, %v7515, %v7517
        %v7547 = vsel %vm7540, %v7517, %v7519
        %v7548 = vsel %vm7540, %v7519, %v7521
        %v7549 = vsel %vm7540, %v7523, %v7525
        %v7550 = vsel %vm7540, %v7525, %v7527
        %v7551 = vsel %vm7540, %v7527, %v7529
        %v7552 = vsel %vm7540, %v7529, %v7531
        %v7553 = vsel %vm7540, %v7531, %v7533
        %v7554 = vsel %vm7540, %v7533, %v7535
        %v7555 = vsel %vm7540, %v7535, %v7537
        %v7556 = vsel %vm7540, %v7537, %v7539
        %v7574 = vsel %vm1227, %v7503, 0
        %7576 = vmatprep.subr.bf16.mxu0 %v7542
        %7577 = vmatpush1.bf16.msra.mxu0 %v7541
        %7578 = vmatprep.subr.bf16.mxu0 %v7550
        %7579 = vmatpush1.bf16.msra.mxu0 %v7549
        %7580 = vmatprep.subr.bf16.mxu0 0
        %7581 = vmatpush1.bf16.msra.mxu0 0
        %7582 = vmatprep.subr.bf16.mxu0 0
        %7583 = vmatpush1.bf16.msra.mxu0 0
        %7584 = vmatprep.subr.bf16.mxu0 0
        %7585 = vmatpush1.bf16.msra.mxu0 0
        %7586 = vmatprep.subr.bf16.mxu0 0
        %7587 = vmatpush1.bf16.msra.mxu0 0
        %7588 = vmatprep.subr.bf16.mxu0 0
        %7589 = vmatpush1.bf16.msra.mxu0 0
        %7590 = vmatprep.subr.bf16.mxu0 0
        %7591 = vmatpush1.bf16.msra.mxu0 0
        %7592 = vmatprep.subr.bf16.mxu0 0
        %7593 = vmatpush1.bf16.msra.mxu0 0
        %7594 = vmatprep.subr.bf16.mxu0 0
        %7595 = vmatpush1.bf16.msra.mxu0 0
        %7596 = vmatprep.subr.bf16.mxu0 0
        %7597 = vmatpush1.bf16.msra.mxu0 0
        %7598 = vmatprep.subr.bf16.mxu0 0
        %7599 = vmatpush1.bf16.msra.mxu0 0
        %7600 = vmatprep.subr.bf16.mxu0 0
        %7601 = vmatpush1.bf16.msra.mxu0 0
        %7602 = vmatprep.subr.bf16.mxu0 0
        %7603 = vmatpush1.bf16.msra.mxu0 0
        %7604 = vmatprep.subr.bf16.mxu0 0
        %7605 = vmatpush1.bf16.msra.mxu0 0
        %7606 = vmatprep.subr.bf16.mxu0 0
        %7607 = vmatpush1.bf16.msra.mxu0 0
        %7608 = vmatprep.mubr.bf16.mxu0 0
        %7609 = vmatmul.mubr.bf16.gmra.mrb[0].mxu0 %v7574
        %v7610 = vpop.f32.mrb[0].mxu0
        %v7611 = vadd.f32 0.0, %v7610
        %v7612 = vpop.f32.mrb[0].mxu0
        %v7613 = vadd.f32 0.0, %v7612
        %v7614 = vpop.f32.mrb[0].mxu0
        %v7615 = vpop.f32.mrb[0].mxu0
        %7616 = vdwg.mxu0
        %7617 = vmatprep.subr.bf16.mxu0 %v7544
        %7618 = vmatpush1.bf16.msra.mxu0 %v7543
        %7619 = vmatprep.subr.bf16.mxu0 %v7552
        %7620 = vmatpush1.bf16.msra.mxu0 %v7551
        %7621 = vmatprep.subr.bf16.mxu0 0
        %7622 = vmatpush1.bf16.msra.mxu0 0
        %7623 = vmatprep.subr.bf16.mxu0 0
        %7624 = vmatpush1.bf16.msra.mxu0 0
        %7625 = vmatprep.subr.bf16.mxu0 0
        %7626 = vmatpush1.bf16.msra.mxu0 0
        %7627 = vmatprep.subr.bf16.mxu0 0
        %7628 = vmatpush1.bf16.msra.mxu0 0
        %7629 = vmatprep.subr.bf16.mxu0 0
        %7630 = vmatpush1.bf16.msra.mxu0 0
        %7631 = vmatprep.subr.bf16.mxu0 0
        %7632 = vmatpush1.bf16.msra.mxu0 0
        %7633 = vmatprep.subr.bf16.mxu0 0
        %7634 = vmatpush1.bf16.msra.mxu0 0
        %7635 = vmatprep.subr.bf16.mxu0 0
        %7636 = vmatpush1.bf16.msra.mxu0 0
        %7637 = vmatprep.subr.bf16.mxu0 0
        %7638 = vmatpush1.bf16.msra.mxu0 0
        %7639 = vmatprep.subr.bf16.mxu0 0
        %7640 = vmatpush1.bf16.msra.mxu0 0
        %7641 = vmatprep.subr.bf16.mxu0 0
        %7642 = vmatpush1.bf16.msra.mxu0 0
        %7643 = vmatprep.subr.bf16.mxu0 0
        %7644 = vmatpush1.bf16.msra.mxu0 0
        %7645 = vmatprep.subr.bf16.mxu0 0
        %7646 = vmatpush1.bf16.msra.mxu0 0
        %7647 = vmatprep.subr.bf16.mxu0 0
        %7648 = vmatpush1.bf16.msra.mxu0 0
        %7649 = vmatprep.mubr.bf16.mxu0 0
        %7650 = vmatmul.mubr.bf16.gmra.mrb[0].mxu0 %v7574
        %v7651 = vpop.f32.mrb[0].mxu0
        %v7652 = vadd.f32 0.0, %v7651
        %v7653 = vpop.f32.mrb[0].mxu0
        %v7654 = vadd.f32 0.0, %v7653
        %v7655 = vpop.f32.mrb[0].mxu0
        %v7656 = vpop.f32.mrb[0].mxu0
        %7657 = vdwg.mxu0
        %7658 = vmatprep.subr.bf16.mxu0 %v7546
        %7659 = vmatpush1.bf16.msra.mxu0 %v7545
        %7660 = vmatprep.subr.bf16.mxu0 %v7554
        %7661 = vmatpush1.bf16.msra.mxu0 %v7553
        %7662 = vmatprep.subr.bf16.mxu0 0
        %7663 = vmatpush1.bf16.msra.mxu0 0
        %7664 = vmatprep.subr.bf16.mxu0 0
        %7665 = vmatpush1.bf16.msra.mxu0 0
        %7666 = vmatprep.subr.bf16.mxu0 0
        %7667 = vmatpush1.bf16.msra.mxu0 0
        %7668 = vmatprep.subr.bf16.mxu0 0
        %7669 = vmatpush1.bf16.msra.mxu0 0
        %7670 = vmatprep.subr.bf16.mxu0 0
        %7671 = vmatpush1.bf16.msra.mxu0 0
        %7672 = vmatprep.subr.bf16.mxu0 0
        %7673 = vmatpush1.bf16.msra.mxu0 0
        %7674 = vmatprep.subr.bf16.mxu0 0
        %7675 = vmatpush1.bf16.msra.mxu0 0
        %7676 = vmatprep.subr.bf16.mxu0 0
        %7677 = vmatpush1.bf16.msra.mxu0 0
        %7678 = vmatprep.subr.bf16.mxu0 0
        %7679 = vmatpush1.bf16.msra.mxu0 0
        %7680 = vmatprep.subr.bf16.mxu0 0
        %7681 = vmatpush1.bf16.msra.mxu0 0
        %7682 = vmatprep.subr.bf16.mxu0 0
        %7683 = vmatpush1.bf16.msra.mxu0 0
        %7684 = vmatprep.subr.bf16.mxu0 0
        %7685 = vmatpush1.bf16.msra.mxu0 0
        %7686 = vmatprep.subr.bf16.mxu0 0
        %7687 = vmatpush1.bf16.msra.mxu0 0
        %7688 = vmatprep.subr.bf16.mxu0 0
        %7689 = vmatpush1.bf16.msra.mxu0 0
        %7690 = vmatprep.mubr.bf16.mxu0 0
        %7691 = vmatmul.mubr.bf16.gmra.mrb[0].mxu0 %v7574
        %v7692 = vpop.f32.mrb[0].mxu0
        %v7693 = vadd.f32 0.0, %v7692
        %v7694 = vpop.f32.mrb[0].mxu0
        %v7695 = vadd.f32 0.0, %v7694
        %v7696 = vpop.f32.mrb[0].mxu0
        %v7697 = vpop.f32.mrb[0].mxu0
        %7698 = vdwg.mxu0
        %7699 = vmatprep.subr.bf16.mxu0 %v7548
        %7700 = vmatpush1.bf16.msra.mxu0 %v7547
        %7701 = vmatprep.subr.bf16.mxu0 %v7556
        %7702 = vmatpush1.bf16.msra.mxu0 %v7555
        %7703 = vmatprep.subr.bf16.mxu0 0
        %7704 = vmatpush1.bf16.msra.mxu0 0
        %7705 = vmatprep.subr.bf16.mxu0 0
        %7706 = vmatpush1.bf16.msra.mxu0 0
        %7707 = vmatprep.subr.bf16.mxu0 0
        %7708 = vmatpush1.bf16.msra.mxu0 0
        %7709 = vmatprep.subr.bf16.mxu0 0
        %7710 = vmatpush1.bf16.msra.mxu0 0
        %7711 = vmatprep.subr.bf16.mxu0 0
        %7712 = vmatpush1.bf16.msra.mxu0 0
        %7713 = vmatprep.subr.bf16.mxu0 0
        %7714 = vmatpush1.bf16.msra.mxu0 0
        %7715 = vmatprep.subr.bf16.mxu0 0
        %7716 = vmatpush1.bf16.msra.mxu0 0
        %7717 = vmatprep.subr.bf16.mxu0 0
        %7718 = vmatpush1.bf16.msra.mxu0 0
        %7719 = vmatprep.subr.bf16.mxu0 0
        %7720 = vmatpush1.bf16.msra.mxu0 0
        %7721 = vmatprep.subr.bf16.mxu0 0
        %7722 = vmatpush1.bf16.msra.mxu0 0
        %7723 = vmatprep.subr.bf16.mxu0 0
        %7724 = vmatpush1.bf16.msra.mxu0 0
        %7725 = vmatprep.subr.bf16.mxu0 0
        %7726 = vmatpush1.bf16.msra.mxu0 0
        %7727 = vmatprep.subr.bf16.mxu0 0
        %7728 = vmatpush1.bf16.msra.mxu0 0
        %7729 = vmatprep.subr.bf16.mxu0 0
        %7730 = vmatpush1.bf16.msra.mxu0 0
        %7731 = vmatprep.mubr.bf16.mxu0 0
        %7732 = vmatmul.mubr.bf16.gmra.mrb[0].mxu0 %v7574
        %v7733 = vpop.f32.mrb[0].mxu0
        %v7734 = vadd.f32 0.0, %v7733
        %v7735 = vpop.f32.mrb[0].mxu0
        %v7736 = vadd.f32 0.0, %v7735
        %v7737 = vpop.f32.mrb[0].mxu0
        %v7738 = vpop.f32.mrb[0].mxu0
        %7739 = vdwg.mxu0
        %v7740 = vadd.f32 %v7494, %v7611
        %v7741 = vadd.f32 %v7495, %v7613
        %v7742 = vadd.f32 %v7496, %v7652
        %v7743 = vadd.f32 %v7497, %v7654
        %v7744 = vadd.f32 %v7498, %v7693
        %v7745 = vadd.f32 %v7499, %v7695
        %v7746 = vadd.f32 %v7500, %v7734
        %v7747 = vadd.f32 %v7501, %v7736
        %7748 = vst [vmem:[%s440] sm:$0xff] %v7740
        %7749 = vst [vmem:[%s440 + $0x8] sm:$0xff] %v7741
        %7750 = vst [vmem:[%s440 + $0x10] sm:$0xff] %v7742
        %7751 = vst [vmem:[%s440 + $0x18] sm:$0xff] %v7743
        %7752 = vst [vmem:[%s440 + $0x20] sm:$0xff] %v7744
        %7753 = vst [vmem:[%s440 + $0x28] sm:$0xff] %v7745
        %7754 = vst [vmem:[%s440 + $0x30] sm:$0xff] %v7746
        %7755 = vst [vmem:[%s440 + $0x38] sm:$0xff] %v7747
        %s7756 = smul.u32 8, %s17
        %p7757 = scmp.lt.s32.totalorder %s7756, 15
        %s7758 = scalar_select %p7757, %s7756, 15
        %s7759 = smul.addr %s7758, 8
        %s7760 = scalar_lea.vmem %s6, %s7759
        // Predicated region
        $region150: #{dense_layer_forward.3} parent=136 // pred_check
          %p7761 = pneg %p188
        $region151: #{dense_layer_forward.3} parent=136 // pred_check_branch
          %7763 = sbr.rel (%p7761) target = $region153
        $region152: #{dense_layer_forward.3} parent=136 // pred_region
          %s7764 = smul.u32 8, %s17
        $region153: #{dense_layer_forward.3} parent=136 // pred_fallthru
          _
      $region137: #{dense_layer_forward.3} parent=5 // pred_fallthru
        _
      %p7765 = scmp.le.s32.totalorder 2, %s12
      // Predicated region
      $region154: #{dense_layer_forward.3} parent=5 // pred_check
        %p7766 = pneg %p7765
      $region155: #{dense_layer_forward.3} parent=5 // pred_check_branch
        %7768 = sbr.rel (%p7766) target = $region157
      $region156: #{dense_layer_forward.3} parent=5 // pred_region
        %s7769 = ssub.s32 %s12, 2
        // Predicated region
        $region158: #{dense_layer_forward.3} parent=156 // pred_check
          %p7770 = pneg %p194
        $region159: #{dense_layer_forward.3} parent=156 // pred_check_branch
          %7772 = sbr.rel (%p7770) target = $region161
        $region160: #{dense_layer_forward.3} parent=156 // pred_region
          %s7773 = smul.u32 8, %s18
          %p7774 = scmp.lt.s32.totalorder %s7773, 15
          %s7775 = scalar_select %p7774, %s7773, 15
          %s7776 = smul.addr %s7775, 8
          %s7777 = scalar_lea.vmem %s6, %s7776
        $region161: #{dense_layer_forward.3} parent=156 // pred_fallthru
          _
      $region157: #{dense_layer_forward.3} parent=5 // pred_fallthru
        _
    $region6: #{dense_layer_forward.3} parent=1 // loop_footer
      %s16 = sadd.s32 1, %s12
    $region7: #{dense_layer_forward.3} parent=1 // loop_footer_branch
      %11 = sbr.rel target = $region3
    $region8: #{dense_layer_forward.3} parent=1 // loop_exit
      _

</llo_original>
